<compile_context>
chip_gen: v6e
topology: v6e:2x2x1
jax: 0.10.0
libtpu: 0.0.40
codegen_flags: <defaults>
</compile_context>

<pallas_src>
import functools

import jax
import jax.numpy as jnp
from jax import lax
from jax.experimental import pallas as pl
from jax.experimental.pallas import tpu as pltpu


PAD = 3  # minimal spatial zero-pad ring required by the +/-3 taps

_CONV_ORDER = ("b1", "b7a", "b7b", "b7c", "d1", "d2", "d3", "d4", "d5", "bp")


def _round_up(v, m):
    return ((v + m - 1) // m) * m


# --------------------------------------------------------------------------
# Fused Pallas kernel (one batch image per grid step)
# --------------------------------------------------------------------------
def _inception_c_kernel(
    x_ref, m_ref,
    w_b1, s_b1,
    w_b7a, s_b7a, w_b7b, s_b7b, w_b7c, s_b7c,
    w_d1, s_d1, w_d2, s_d2, w_d3, s_d3, w_d4, s_d4, w_d5, s_d5,
    w_bp, s_bp,
    o_ref,
    buf_a, buf_b,
    *, Rp, Sx, Sb, Wp,
):
    mask = m_ref[...]                         # (Rp, 1) f32: 1 on real pixels, 0 on pad
    bf16 = jnp.bfloat16

    def img(ref, slack, off=0):
        # Full padded image, shifted by `off` flattened pixels (static offset).
        return ref[pl.ds(slack + off, Rp), :]

    def epilogue(acc, s_ref, apply_mask):
        y = jnp.maximum(acc + s_ref[...], 0.0)            # BN shift + ReLU (f32)
        return y * mask if apply_mask else y

    def conv1x1(src_ref, slack, w_ref, s_ref, apply_mask):
        acc = jnp.dot(img(src_ref, slack), w_ref[...],
                      preferred_element_type=jnp.float32)
        return epilogue(acc, s_ref, apply_mask)

    def conv7(src_ref, w_ref, s_ref, step, apply_mask):
        # step = 1  -> kernel_size=(1,7): taps shift along W
        # step = Wp -> kernel_size=(7,1): taps shift along H
        # 7 shifted reads stacked along the lane axis -> single K=7*c7 matmul.
        lhs = jnp.concatenate(
            [img(src_ref, Sb, (t - 3) * step) for t in range(7)], axis=-1)
        acc = jnp.dot(lhs, w_ref[...], preferred_element_type=jnp.float32)
        return epilogue(acc, s_ref, apply_mask)

    # Zero only the slack slices of the scratch buffers.  Done unconditionally:
    # under v7x megacore sharding the second core starts at a non-zero program_id,
    # so gating on program_id==0 would leave its core-local scratch uninitialized.
    zero = jnp.zeros((Sb, buf_a.shape[1]), buf_a.dtype)
    buf_a[pl.ds(0, Sb), :] = zero
    buf_a[pl.ds(Sb + Rp, Sb), :] = zero
    buf_b[pl.ds(0, Sb), :] = zero
    buf_b[pl.ds(Sb + Rp, Sb), :] = zero

    body = pl.ds(Sb, Rp)      # (padded) image rows inside a scratch buffer

    # --- branch1x1 ---------------------------------------------------------
    o_ref[0] = conv1x1(x_ref, Sx, w_b1, s_b1, False).astype(o_ref.dtype)

    # --- branch7x7: 1x1 -> (1,7) -> (7,1) ----------------------------------
    buf_a[body, :] = conv1x1(x_ref, Sx, w_b7a, s_b7a, True).astype(bf16)
    buf_b[body, :] = conv7(buf_a, w_b7b, s_b7b, 1, True).astype(bf16)
    o_ref[1] = conv7(buf_b, w_b7c, s_b7c, Wp, False).astype(o_ref.dtype)

    # --- branch7x7dbl: 1x1 -> (7,1) -> (1,7) -> (7,1) -> (1,7) --------------
    buf_a[body, :] = conv1x1(x_ref, Sx, w_d1, s_d1, True).astype(bf16)
    buf_b[body, :] = conv7(buf_a, w_d2, s_d2, Wp, True).astype(bf16)
    buf_a[body, :] = conv7(buf_b, w_d3, s_d3, 1, True).astype(bf16)
    buf_b[body, :] = conv7(buf_a, w_d4, s_d4, Wp, True).astype(bf16)
    o_ref[2] = conv7(buf_b, w_d5, s_d5, 1, False).astype(o_ref.dtype)

    # --- branch_pool: 3x3/s1/p1 avg-pool (count_include_pad) then 1x1 -------
    pooled = None
    for dh in (-1, 0, 1):
        for dw in (-1, 0, 1):
            v = img(x_ref, Sx, dh * Wp + dw).astype(jnp.float32)
            pooled = v if pooled is None else pooled + v
    pooled = (pooled * jnp.float32(1.0 / 9.0)).astype(bf16)
    acc = jnp.dot(pooled, w_bp[...], preferred_element_type=jnp.float32)
    o_ref[3] = epilogue(acc, s_bp, False).astype(o_ref.dtype)


# --------------------------------------------------------------------------
# Host wrapper
# --------------------------------------------------------------------------
def inception_c_forward(x_nchw, params):
    N, Cin, H, W = x_nchw.shape

    # Minimal pad ring (3); right pad chosen so Wp is a multiple of 8
    # (sublane-aligned +/-k*Wp shifts for (7,1) convs and the pool).
    ph_t = ph_b = PAD
    pw_l = PAD
    Wp = _round_up(W + 2 * PAD, 8)
    pw_r = Wp - W - pw_l                      # >= PAD by construction
    Hp = H + ph_t + ph_b
    Rp = Hp * Wp

    Sb = _round_up(3 * Wp, 8)                 # scratch slack: conv7 H-taps reach +/-3*Wp
    Sx = _round_up(Wp + 1, 8)                 # input slack: pool taps reach +/-(Wp+1)
    Tb = Rp + 2 * Sb
    Tx = Rp + 2 * Sx
    c7 = params["b7a"]["w_kern"].shape[1]

    # NCHW -> NHWC (channels-last / lane-dense), zero-pad the spatial ring,
    # flatten pixels, add slack rows, cast to bf16 (halves input DMA, feeds MXU).
    x = jnp.transpose(x_nchw, (0, 2, 3, 1))
    x = jnp.pad(x, ((0, 0), (ph_t, ph_b), (pw_l, pw_r), (0, 0)))
    x = x.reshape(N, Rp, Cin)
    x = jnp.pad(x, ((0, 0), (Sx, Sx), (0, 0))).astype(jnp.bfloat16)   # (N, Tx, Cin)

    hh = jnp.arange(Hp)[:, None]
    ww = jnp.arange(Wp)[None, :]
    mask = ((hh >= ph_t) & (hh < ph_t + H) & (ww >= pw_l) & (ww < pw_l + W))
    mask = mask.astype(jnp.float32).reshape(Rp, 1)

    conv_inputs = []
    for name in _CONV_ORDER:
        conv_inputs += [params[name]["w_kern"], params[name]["s_kern"]]

    # Constants (weights / shifts / mask) live whole in VMEM, not pipelined.
    vmem_spec = pl.BlockSpec(memory_space=pltpu.MemorySpace.VMEM)
    in_specs = ([pl.BlockSpec((None, Tx, Cin), lambda n: (n, 0, 0)), vmem_spec]
                + [vmem_spec] * len(conv_inputs))
    out_specs = pl.BlockSpec((None, 4, Rp, 192), lambda n: (n, 0, 0, 0))
    out_shape = jax.ShapeDtypeStruct((N, 4, Rp, 192), jnp.bfloat16)

    kernel = functools.partial(_inception_c_kernel, Rp=Rp, Sx=Sx, Sb=Sb, Wp=Wp)
    out = pl.pallas_call(
        kernel,
        out_shape=out_shape,
        grid=(N,),
        in_specs=in_specs,
        out_specs=out_specs,
        scratch_shapes=[pltpu.VMEM((Tb, c7), jnp.bfloat16),
                        pltpu.VMEM((Tb, c7), jnp.bfloat16)],
        compiler_params=pltpu.CompilerParams(
            dimension_semantics=("parallel",),
            vmem_limit_bytes=32 * 1024 * 1024),
    )(x, mask, *conv_inputs)

    # (N, 4, Rp, 192) -> crop the pad ring -> NCHW (N, 768, H, W)
    out = out.reshape(N, 4, Hp, Wp, 192)[:, :, ph_t:ph_t + H, pw_l:pw_l + W, :]
    out = jnp.transpose(out, (0, 1, 4, 2, 3)).reshape(N, 4 * 192, H, W)
    return out.astype(jnp.float32)


# --------------------------------------------------------------------------
# Deterministic parameter init (shapes from the PyTorch module __init__)
# --------------------------------------------------------------------------
def _init_basic_conv(key, cin, cout, kh, kw):
    ks = jax.random.split(key, 5)
    sigma = (cin * kh * kw) ** -0.5
    w = sigma * jax.random.normal(ks[0], (cout, cin, kh, kw), jnp.float32)
    gamma = 1.0 + 0.1 * jax.random.normal(ks[1], (cout,), jnp.float32)
    beta = 0.1 * jax.random.normal(ks[2], (cout,), jnp.float32)
    mean = 0.1 * jax.random.normal(ks[3], (cout,), jnp.float32)
    var = 1.0 + 0.1 * jnp.abs(jax.random.normal(ks[4], (cout,), jnp.float32))
    eps = 1e-3                                   # BatchNorm2d(eps=0.001)
    scale = gamma / jnp.sqrt(var + eps)
    shift = beta - mean * scale
    wf = w * scale[:, None, None, None]          # fold BN scale into the conv weight
    if kh == 1 and kw == 1:
        w_kern = jnp.transpose(wf[:, :, 0, 0], (1, 0))                        # (cin, cout)
    elif kh == 1:                                                             # kernel (1, 7)
        w_kern = jnp.transpose(wf[:, :, 0, :], (2, 1, 0)).reshape(7 * cin, cout)
    else:                                                                     # kernel (7, 1)
        w_kern = jnp.transpose(wf[:, :, :, 0], (2, 1, 0)).reshape(7 * cin, cout)
    return dict(w=w, scale=scale, shift=shift,
                w_kern=w_kern.astype(jnp.bfloat16),
                s_kern=shift.reshape(1, cout).astype(jnp.float32))


def init_params(key, in_channels, channels_7x7):
    c7 = channels_7x7
    cfg = [
        ("b1",  in_channels, 192, 1, 1),
        ("b7a", in_channels, c7, 1, 1),
        ("b7b", c7, c7, 1, 7),
        ("b7c", c7, 192, 7, 1),
        ("d1",  in_channels, c7, 1, 1),
        ("d2",  c7, c7, 7, 1),
        ("d3",  c7, c7, 1, 7),
        ("d4",  c7, c7, 7, 1),
        ("d5",  c7, 192, 1, 7),
        ("bp",  in_channels, 192, 1, 1),
    ]
    keys = jax.random.split(key, len(cfg))
    return {name: _init_basic_conv(k, cin, cout, kh, kw)
            for k, (name, cin, cout, kh, kw) in zip(keys, cfg)}


# --------------------------------------------------------------------------
# Pure-JAX reference (mirrors the PyTorch forward in f32, NCHW convs)
# --------------------------------------------------------------------------
def _basic_conv_ref(x, p, pad_hw):
    dn = ("NCHW", "OIHW", "NCHW")
    y = lax.conv_general_dilated(x, p["w"], (1, 1), pad_hw, dimension_numbers=dn,
                                 precision=lax.Precision.HIGHEST)
    y = y * p["scale"][None, :, None, None] + p["shift"][None, :, None, None]
    return jnp.maximum(y, 0.0)


def reference_forward(x, p):
    b1 = _basic_conv_ref(x, p["b1"], [(0, 0), (0, 0)])
    b7 = _basic_conv_ref(x, p["b7a"], [(0, 0), (0, 0)])
    b7 = _basic_conv_ref(b7, p["b7b"], [(0, 0), (3, 3)])
    b7 = _basic_conv_ref(b7, p["b7c"], [(3, 3), (0, 0)])
    d = _basic_conv_ref(x, p["d1"], [(0, 0), (0, 0)])
    d = _basic_conv_ref(d, p["d2"], [(3, 3), (0, 0)])
    d = _basic_conv_ref(d, p["d3"], [(0, 0), (3, 3)])
    d = _basic_conv_ref(d, p["d4"], [(3, 3), (0, 0)])
    d = _basic_conv_ref(d, p["d5"], [(0, 0), (3, 3)])
    pool = lax.reduce_window(x, 0.0, lax.add, (1, 1, 3, 3), (1, 1, 1, 1),
                             [(0, 0), (0, 0), (1, 1), (1, 1)]) / 9.0
    bp = _basic_conv_ref(pool, p["bp"], [(0, 0), (0, 0)])
    return jnp.concatenate([b1, b7, d, bp], axis=1)


# --------------------------------------------------------------------------
if __name__ == "__main__":
    key = jax.random.PRNGKey(0)
    k_x, k_p = jax.random.split(key)

    N, Cin, H, W = 2, 64, 8, 8        # small shapes consistent with InceptionC
    channels_7x7 = 32

    x = jax.random.normal(k_x, (N, Cin, H, W), jnp.float32)
    params = init_params(k_p, Cin, channels_7x7)

    out = jax.block_until_ready(inception_c_forward(x, params))
    ref = jax.block_until_ready(reference_forward(x, params))

    assert out.shape == (N, 4 * 192, H, W), out.shape
    # bf16 weights + bf16 activations (f32 accumulation) vs an f32 HIGHEST-precision
    # reference: inference-grade tolerance.
    max_err = float(jnp.max(jnp.abs(out - ref)))
    if not jnp.allclose(out, ref, rtol=4e-2, atol=4e-2):
        raise AssertionError(f"Pallas kernel mismatch vs JAX reference (max abs err={max_err})")

    print("KERNEL_OK")
</pallas_src>

<mosaic_0001>
module attributes {stable_mosaic.version = 11 : i64} {
  func.func @_inception_c_kernel(%arg0: i32, %arg1: memref<1x272x64xbf16, #tpu.memory_space<vmem>>, %arg2: memref<224x1xf32, #tpu.memory_space<vmem>>, %arg3: memref<64x192xbf16, #tpu.memory_space<vmem>>, %arg4: memref<1x192xf32, #tpu.memory_space<vmem>>, %arg5: memref<64x32xbf16, #tpu.memory_space<vmem>>, %arg6: memref<1x32xf32, #tpu.memory_space<vmem>>, %arg7: memref<224x32xbf16, #tpu.memory_space<vmem>>, %arg8: memref<1x32xf32, #tpu.memory_space<vmem>>, %arg9: memref<224x192xbf16, #tpu.memory_space<vmem>>, %arg10: memref<1x192xf32, #tpu.memory_space<vmem>>, %arg11: memref<64x32xbf16, #tpu.memory_space<vmem>>, %arg12: memref<1x32xf32, #tpu.memory_space<vmem>>, %arg13: memref<224x32xbf16, #tpu.memory_space<vmem>>, %arg14: memref<1x32xf32, #tpu.memory_space<vmem>>, %arg15: memref<224x32xbf16, #tpu.memory_space<vmem>>, %arg16: memref<1x32xf32, #tpu.memory_space<vmem>>, %arg17: memref<224x32xbf16, #tpu.memory_space<vmem>>, %arg18: memref<1x32xf32, #tpu.memory_space<vmem>>, %arg19: memref<224x192xbf16, #tpu.memory_space<vmem>>, %arg20: memref<1x192xf32, #tpu.memory_space<vmem>>, %arg21: memref<64x192xbf16, #tpu.memory_space<vmem>>, %arg22: memref<1x192xf32, #tpu.memory_space<vmem>>, %arg23: memref<1x4x224x192xbf16, #tpu.memory_space<vmem>>, %arg24: memref<320x32xbf16, #tpu.memory_space<vmem>>, %arg25: memref<320x32xbf16, #tpu.memory_space<vmem>>) attributes {dimension_semantics = [#tpu.dimension_semantics<parallel>], iteration_bounds = array<i64: 2>, scalar_prefetch = 0 : i64, scratch_operands = 2 : i64, tpu.core_type = #tpu.core_type<tc>, window_params = [{transform_indices = @transform_0, window_bounds = array<i64: 1, 272, 64>}, {pipeline_mode = #tpu.pipeline_mode<synchronous>, transform_indices = @transform_1, window_bounds = array<i64: 224, 1>}, {pipeline_mode = #tpu.pipeline_mode<synchronous>, transform_indices = @transform_2, window_bounds = array<i64: 64, 192>}, {pipeline_mode = #tpu.pipeline_mode<synchronous>, transform_indices = @transform_3, window_bounds = array<i64: 1, 192>}, {pipeline_mode = #tpu.pipeline_mode<synchronous>, transform_indices = @transform_4, window_bounds = array<i64: 64, 32>}, {pipeline_mode = #tpu.pipeline_mode<synchronous>, transform_indices = @transform_5, window_bounds = array<i64: 1, 32>}, {pipeline_mode = #tpu.pipeline_mode<synchronous>, transform_indices = @transform_6, window_bounds = array<i64: 224, 32>}, {pipeline_mode = #tpu.pipeline_mode<synchronous>, transform_indices = @transform_7, window_bounds = array<i64: 1, 32>}, {pipeline_mode = #tpu.pipeline_mode<synchronous>, transform_indices = @transform_8, window_bounds = array<i64: 224, 192>}, {pipeline_mode = #tpu.pipeline_mode<synchronous>, transform_indices = @transform_9, window_bounds = array<i64: 1, 192>}, {pipeline_mode = #tpu.pipeline_mode<synchronous>, transform_indices = @transform_10, window_bounds = array<i64: 64, 32>}, {pipeline_mode = #tpu.pipeline_mode<synchronous>, transform_indices = @transform_11, window_bounds = array<i64: 1, 32>}, {pipeline_mode = #tpu.pipeline_mode<synchronous>, transform_indices = @transform_12, window_bounds = array<i64: 224, 32>}, {pipeline_mode = #tpu.pipeline_mode<synchronous>, transform_indices = @transform_13, window_bounds = array<i64: 1, 32>}, {pipeline_mode = #tpu.pipeline_mode<synchronous>, transform_indices = @transform_14, window_bounds = array<i64: 224, 32>}, {pipeline_mode = #tpu.pipeline_mode<synchronous>, transform_indices = @transform_15, window_bounds = array<i64: 1, 32>}, {pipeline_mode = #tpu.pipeline_mode<synchronous>, transform_indices = @transform_16, window_bounds = array<i64: 224, 32>}, {pipeline_mode = #tpu.pipeline_mode<synchronous>, transform_indices = @transform_17, window_bounds = array<i64: 1, 32>}, {pipeline_mode = #tpu.pipeline_mode<synchronous>, transform_indices = @transform_18, window_bounds = array<i64: 224, 192>}, {pipeline_mode = #tpu.pipeline_mode<synchronous>, transform_indices = @transform_19, window_bounds = array<i64: 1, 192>}, {pipeline_mode = #tpu.pipeline_mode<synchronous>, transform_indices = @transform_20, window_bounds = array<i64: 64, 192>}, {pipeline_mode = #tpu.pipeline_mode<synchronous>, transform_indices = @transform_21, window_bounds = array<i64: 1, 192>}, {transform_indices = @transform_22, window_bounds = array<i64: 1, 4, 224, 192>}]} {
    %c0 = arith.constant 0 : index
    %c0_0 = arith.constant 0 : index
    %0 = vector.load %arg2[%c0, %c0_0] : memref<224x1xf32, #tpu.memory_space<vmem>>, vector<224x1xf32>
    %cst = arith.constant 0.000000e+00 : bf16
    %1 = vector.broadcast %cst : bf16 to vector<48x32xbf16>
    %c0_1 = arith.constant 0 : index
    %c0_2 = arith.constant 0 : index
    %2 = vector.load %arg24[%c0_1, %c0_2] : memref<320x32xbf16, #tpu.memory_space<vmem>>, vector<48x32xbf16>
    tpu.vector_store %arg24[%c0_1, %c0_2], %1 {strides = array<i32>} : memref<320x32xbf16, #tpu.memory_space<vmem>>, vector<48x32xbf16>,
    %c272 = arith.constant 272 : index
    %c0_3 = arith.constant 0 : index
    %3 = vector.load %arg24[%c272, %c0_3] : memref<320x32xbf16, #tpu.memory_space<vmem>>, vector<48x32xbf16>
    tpu.vector_store %arg24[%c272, %c0_3], %1 {strides = array<i32>} : memref<320x32xbf16, #tpu.memory_space<vmem>>, vector<48x32xbf16>,
    %c0_4 = arith.constant 0 : index
    %c0_5 = arith.constant 0 : index
    %4 = vector.load %arg25[%c0_4, %c0_5] : memref<320x32xbf16, #tpu.memory_space<vmem>>, vector<48x32xbf16>
    tpu.vector_store %arg25[%c0_4, %c0_5], %1 {strides = array<i32>} : memref<320x32xbf16, #tpu.memory_space<vmem>>, vector<48x32xbf16>,
    %c272_6 = arith.constant 272 : index
    %c0_7 = arith.constant 0 : index
    %5 = vector.load %arg25[%c272_6, %c0_7] : memref<320x32xbf16, #tpu.memory_space<vmem>>, vector<48x32xbf16>
    tpu.vector_store %arg25[%c272_6, %c0_7], %1 {strides = array<i32>} : memref<320x32xbf16, #tpu.memory_space<vmem>>, vector<48x32xbf16>,
    %c0_8 = arith.constant 0 : index
    %c24 = arith.constant 24 : index
    %c0_9 = arith.constant 0 : index
    %6 = vector.load %arg1[%c0_8, %c24, %c0_9] : memref<1x272x64xbf16, #tpu.memory_space<vmem>>, vector<1x224x64xbf16>
    %7 = vector.shape_cast %6 : vector<1x224x64xbf16> to vector<224x64xbf16>
    %c0_10 = arith.constant 0 : index
    %c0_11 = arith.constant 0 : index
    %8 = vector.load %arg3[%c0_10, %c0_11] : memref<64x192xbf16, #tpu.memory_space<vmem>>, vector<64x192xbf16>
    %cst_12 = arith.constant dense<0.000000e+00> : vector<224x192xf32>
    %9 = tpu.matmul %7, %8, %cst_12 {dimension_numbers = #tpu.dot_dimension_numbers<[1], [0], [0], [1], [0, 0, 1, 1], [], []>} : vector<224x64xbf16>, vector<64x192xbf16>, vector<224x192xf32> -> vector<224x192xf32>
    %c0_13 = arith.constant 0 : index
    %c0_14 = arith.constant 0 : index
    %10 = vector.load %arg4[%c0_13, %c0_14] : memref<1x192xf32, #tpu.memory_space<vmem>>, vector<1x192xf32>
    %11 = vector.broadcast %10 : vector<1x192xf32> to vector<224x192xf32>
    %12 = arith.addf %9, %11 : vector<224x192xf32>
    %cst_15 = arith.constant 0.000000e+00 : f32
    %13 = vector.broadcast %cst_15 : f32 to vector<224x192xf32>
    %14 = arith.maximumf %12, %13 : vector<224x192xf32>
    %15 = arith.truncf %14 : vector<224x192xf32> to vector<224x192xbf16>
    %c0_16 = arith.constant 0 : index
    %c0_17 = arith.constant 0 : index
    %c0_18 = arith.constant 0 : index
    %c0_19 = arith.constant 0 : index
    %16 = vector.load %arg23[%c0_16, %c0_17, %c0_18, %c0_19] : memref<1x4x224x192xbf16, #tpu.memory_space<vmem>>, vector<1x1x224x192xbf16>
    %17 = vector.shape_cast %16 : vector<1x1x224x192xbf16> to vector<224x192xbf16>
    %18 = vector.shape_cast %15 : vector<224x192xbf16> to vector<1x1x224x192xbf16>
    tpu.vector_store %arg23[%c0_16, %c0_17, %c0_18, %c0_19], %18 {strides = array<i32>} : memref<1x4x224x192xbf16, #tpu.memory_space<vmem>>, vector<1x1x224x192xbf16>,
    %c0_20 = arith.constant 0 : index
    %c24_21 = arith.constant 24 : index
    %c0_22 = arith.constant 0 : index
    %19 = vector.load %arg1[%c0_20, %c24_21, %c0_22] : memref<1x272x64xbf16, #tpu.memory_space<vmem>>, vector<1x224x64xbf16>
    %20 = vector.shape_cast %19 : vector<1x224x64xbf16> to vector<224x64xbf16>
    %c0_23 = arith.constant 0 : index
    %c0_24 = arith.constant 0 : index
    %21 = vector.load %arg5[%c0_23, %c0_24] : memref<64x32xbf16, #tpu.memory_space<vmem>>, vector<64x32xbf16>
    %cst_25 = arith.constant dense<0.000000e+00> : vector<224x32xf32>
    %22 = tpu.matmul %20, %21, %cst_25 {dimension_numbers = #tpu.dot_dimension_numbers<[1], [0], [0], [1], [0, 0, 1, 1], [], []>} : vector<224x64xbf16>, vector<64x32xbf16>, vector<224x32xf32> -> vector<224x32xf32>
    %c0_26 = arith.constant 0 : index
    %c0_27 = arith.constant 0 : index
    %23 = vector.load %arg6[%c0_26, %c0_27] : memref<1x32xf32, #tpu.memory_space<vmem>>, vector<1x32xf32>
    %24 = vector.broadcast %23 : vector<1x32xf32> to vector<224x32xf32>
    %25 = arith.addf %22, %24 : vector<224x32xf32>
    %cst_28 = arith.constant 0.000000e+00 : f32
    %26 = vector.broadcast %cst_28 : f32 to vector<224x32xf32>
    %27 = arith.maximumf %25, %26 : vector<224x32xf32>
    %28 = vector.broadcast %0 : vector<224x1xf32> to vector<224x32xf32>
    %29 = arith.mulf %27, %28 : vector<224x32xf32>
    %30 = arith.truncf %29 : vector<224x32xf32> to vector<224x32xbf16>
    %c48 = arith.constant 48 : index
    %c0_29 = arith.constant 0 : index
    %31 = vector.load %arg24[%c48, %c0_29] : memref<320x32xbf16, #tpu.memory_space<vmem>>, vector<224x32xbf16>
    tpu.vector_store %arg24[%c48, %c0_29], %30 {strides = array<i32>} : memref<320x32xbf16, #tpu.memory_space<vmem>>, vector<224x32xbf16>,
    %c45 = arith.constant 45 : index
    %c0_30 = arith.constant 0 : index
    %32 = vector.load %arg24[%c45, %c0_30] : memref<320x32xbf16, #tpu.memory_space<vmem>>, vector<224x32xbf16>
    %c46 = arith.constant 46 : index
    %c0_31 = arith.constant 0 : index
    %33 = vector.load %arg24[%c46, %c0_31] : memref<320x32xbf16, #tpu.memory_space<vmem>>, vector<224x32xbf16>
    %c47 = arith.constant 47 : index
    %c0_32 = arith.constant 0 : index
    %34 = vector.load %arg24[%c47, %c0_32] : memref<320x32xbf16, #tpu.memory_space<vmem>>, vector<224x32xbf16>
    %c48_33 = arith.constant 48 : index
    %c0_34 = arith.constant 0 : index
    %35 = vector.load %arg24[%c48_33, %c0_34] : memref<320x32xbf16, #tpu.memory_space<vmem>>, vector<224x32xbf16>
    %c49 = arith.constant 49 : index
    %c0_35 = arith.constant 0 : index
    %36 = vector.load %arg24[%c49, %c0_35] : memref<320x32xbf16, #tpu.memory_space<vmem>>, vector<224x32xbf16>
    %c50 = arith.constant 50 : index
    %c0_36 = arith.constant 0 : index
    %37 = vector.load %arg24[%c50, %c0_36] : memref<320x32xbf16, #tpu.memory_space<vmem>>, vector<224x32xbf16>
    %c51 = arith.constant 51 : index
    %c0_37 = arith.constant 0 : index
    %38 = vector.load %arg24[%c51, %c0_37] : memref<320x32xbf16, #tpu.memory_space<vmem>>, vector<224x32xbf16>
    %39 = tpu.concatenate %32, %33, %34, %35, %36, %37, %38 in 1 : vector<224x32xbf16>, vector<224x32xbf16>, vector<224x32xbf16>, vector<224x32xbf16>, vector<224x32xbf16>, vector<224x32xbf16>, vector<224x32xbf16> -> vector<224x224xbf16>
    %c0_38 = arith.constant 0 : index
    %c0_39 = arith.constant 0 : index
    %40 = vector.load %arg7[%c0_38, %c0_39] : memref<224x32xbf16, #tpu.memory_space<vmem>>, vector<224x32xbf16>
    %cst_40 = arith.constant dense<0.000000e+00> : vector<224x32xf32>
    %41 = tpu.matmul %39, %40, %cst_40 {dimension_numbers = #tpu.dot_dimension_numbers<[1], [0], [0], [1], [0, 0, 1, 1], [], []>} : vector<224x224xbf16>, vector<224x32xbf16>, vector<224x32xf32> -> vector<224x32xf32>
    %c0_41 = arith.constant 0 : index
    %c0_42 = arith.constant 0 : index
    %42 = vector.load %arg8[%c0_41, %c0_42] : memref<1x32xf32, #tpu.memory_space<vmem>>, vector<1x32xf32>
    %43 = vector.broadcast %42 : vector<1x32xf32> to vector<224x32xf32>
    %44 = arith.addf %41, %43 : vector<224x32xf32>
    %cst_43 = arith.constant 0.000000e+00 : f32
    %45 = vector.broadcast %cst_43 : f32 to vector<224x32xf32>
    %46 = arith.maximumf %44, %45 : vector<224x32xf32>
    %47 = vector.broadcast %0 : vector<224x1xf32> to vector<224x32xf32>
    %48 = arith.mulf %46, %47 : vector<224x32xf32>
    %49 = arith.truncf %48 : vector<224x32xf32> to vector<224x32xbf16>
    %c48_44 = arith.constant 48 : index
    %c0_45 = arith.constant 0 : index
    %50 = vector.load %arg25[%c48_44, %c0_45] : memref<320x32xbf16, #tpu.memory_space<vmem>>, vector<224x32xbf16>
    tpu.vector_store %arg25[%c48_44, %c0_45], %49 {strides = array<i32>} : memref<320x32xbf16, #tpu.memory_space<vmem>>, vector<224x32xbf16>,
    %c0_46 = arith.constant 0 : index
    %c0_47 = arith.constant 0 : index
    %51 = vector.load %arg25[%c0_46, %c0_47] : memref<320x32xbf16, #tpu.memory_space<vmem>>, vector<224x32xbf16>
    %c16 = arith.constant 16 : index
    %c0_48 = arith.constant 0 : index
    %52 = vector.load %arg25[%c16, %c0_48] : memref<320x32xbf16, #tpu.memory_space<vmem>>, vector<224x32xbf16>
    %c32 = arith.constant 32 : index
    %c0_49 = arith.constant 0 : index
    %53 = vector.load %arg25[%c32, %c0_49] : memref<320x32xbf16, #tpu.memory_space<vmem>>, vector<224x32xbf16>
    %c48_50 = arith.constant 48 : index
    %c0_51 = arith.constant 0 : index
    %54 = vector.load %arg25[%c48_50, %c0_51] : memref<320x32xbf16, #tpu.memory_space<vmem>>, vector<224x32xbf16>
    %c64 = arith.constant 64 : index
    %c0_52 = arith.constant 0 : index
    %55 = vector.load %arg25[%c64, %c0_52] : memref<320x32xbf16, #tpu.memory_space<vmem>>, vector<224x32xbf16>
    %c80 = arith.constant 80 : index
    %c0_53 = arith.constant 0 : index
    %56 = vector.load %arg25[%c80, %c0_53] : memref<320x32xbf16, #tpu.memory_space<vmem>>, vector<224x32xbf16>
    %c96 = arith.constant 96 : index
    %c0_54 = arith.constant 0 : index
    %57 = vector.load %arg25[%c96, %c0_54] : memref<320x32xbf16, #tpu.memory_space<vmem>>, vector<224x32xbf16>
    %58 = tpu.concatenate %51, %52, %53, %54, %55, %56, %57 in 1 : vector<224x32xbf16>, vector<224x32xbf16>, vector<224x32xbf16>, vector<224x32xbf16>, vector<224x32xbf16>, vector<224x32xbf16>, vector<224x32xbf16> -> vector<224x224xbf16>
    %c0_55 = arith.constant 0 : index
    %c0_56 = arith.constant 0 : index
    %59 = vector.load %arg9[%c0_55, %c0_56] : memref<224x192xbf16, #tpu.memory_space<vmem>>, vector<224x192xbf16>
    %cst_57 = arith.constant dense<0.000000e+00> : vector<224x192xf32>
    %60 = tpu.matmul %58, %59, %cst_57 {dimension_numbers = #tpu.dot_dimension_numbers<[1], [0], [0], [1], [0, 0, 1, 1], [], []>} : vector<224x224xbf16>, vector<224x192xbf16>, vector<224x192xf32> -> vector<224x192xf32>
    %c0_58 = arith.constant 0 : index
    %c0_59 = arith.constant 0 : index
    %61 = vector.load %arg10[%c0_58, %c0_59] : memref<1x192xf32, #tpu.memory_space<vmem>>, vector<1x192xf32>
    %62 = vector.broadcast %61 : vector<1x192xf32> to vector<224x192xf32>
    %63 = arith.addf %60, %62 : vector<224x192xf32>
    %cst_60 = arith.constant 0.000000e+00 : f32
    %64 = vector.broadcast %cst_60 : f32 to vector<224x192xf32>
    %65 = arith.maximumf %63, %64 : vector<224x192xf32>
    %66 = arith.truncf %65 : vector<224x192xf32> to vector<224x192xbf16>
    %c0_61 = arith.constant 0 : index
    %c1 = arith.constant 1 : index
    %c0_62 = arith.constant 0 : index
    %c0_63 = arith.constant 0 : index
    %67 = vector.load %arg23[%c0_61, %c1, %c0_62, %c0_63] : memref<1x4x224x192xbf16, #tpu.memory_space<vmem>>, vector<1x1x224x192xbf16>
    %68 = vector.shape_cast %67 : vector<1x1x224x192xbf16> to vector<224x192xbf16>
    %69 = vector.shape_cast %66 : vector<224x192xbf16> to vector<1x1x224x192xbf16>
    tpu.vector_store %arg23[%c0_61, %c1, %c0_62, %c0_63], %69 {strides = array<i32>} : memref<1x4x224x192xbf16, #tpu.memory_space<vmem>>, vector<1x1x224x192xbf16>,
    %c0_64 = arith.constant 0 : index
    %c24_65 = arith.constant 24 : index
    %c0_66 = arith.constant 0 : index
    %70 = vector.load %arg1[%c0_64, %c24_65, %c0_66] : memref<1x272x64xbf16, #tpu.memory_space<vmem>>, vector<1x224x64xbf16>
    %71 = vector.shape_cast %70 : vector<1x224x64xbf16> to vector<224x64xbf16>
    %c0_67 = arith.constant 0 : index
    %c0_68 = arith.constant 0 : index
    %72 = vector.load %arg11[%c0_67, %c0_68] : memref<64x32xbf16, #tpu.memory_space<vmem>>, vector<64x32xbf16>
    %cst_69 = arith.constant dense<0.000000e+00> : vector<224x32xf32>
    %73 = tpu.matmul %71, %72, %cst_69 {dimension_numbers = #tpu.dot_dimension_numbers<[1], [0], [0], [1], [0, 0, 1, 1], [], []>} : vector<224x64xbf16>, vector<64x32xbf16>, vector<224x32xf32> -> vector<224x32xf32>
    %c0_70 = arith.constant 0 : index
    %c0_71 = arith.constant 0 : index
    %74 = vector.load %arg12[%c0_70, %c0_71] : memref<1x32xf32, #tpu.memory_space<vmem>>, vector<1x32xf32>
    %75 = vector.broadcast %74 : vector<1x32xf32> to vector<224x32xf32>
    %76 = arith.addf %73, %75 : vector<224x32xf32>
    %cst_72 = arith.constant 0.000000e+00 : f32
    %77 = vector.broadcast %cst_72 : f32 to vector<224x32xf32>
    %78 = arith.maximumf %76, %77 : vector<224x32xf32>
    %79 = vector.broadcast %0 : vector<224x1xf32> to vector<224x32xf32>
    %80 = arith.mulf %78, %79 : vector<224x32xf32>
    %81 = arith.truncf %80 : vector<224x32xf32> to vector<224x32xbf16>
    %c48_73 = arith.constant 48 : index
    %c0_74 = arith.constant 0 : index
    %82 = vector.load %arg24[%c48_73, %c0_74] : memref<320x32xbf16, #tpu.memory_space<vmem>>, vector<224x32xbf16>
    tpu.vector_store %arg24[%c48_73, %c0_74], %81 {strides = array<i32>} : memref<320x32xbf16, #tpu.memory_space<vmem>>, vector<224x32xbf16>,
    %c0_75 = arith.constant 0 : index
    %c0_76 = arith.constant 0 : index
    %83 = vector.load %arg24[%c0_75, %c0_76] : memref<320x32xbf16, #tpu.memory_space<vmem>>, vector<224x32xbf16>
    %c16_77 = arith.constant 16 : index
    %c0_78 = arith.constant 0 : index
    %84 = vector.load %arg24[%c16_77, %c0_78] : memref<320x32xbf16, #tpu.memory_space<vmem>>, vector<224x32xbf16>
    %c32_79 = arith.constant 32 : index
    %c0_80 = arith.constant 0 : index
    %85 = vector.load %arg24[%c32_79, %c0_80] : memref<320x32xbf16, #tpu.memory_space<vmem>>, vector<224x32xbf16>
    %c48_81 = arith.constant 48 : index
    %c0_82 = arith.constant 0 : index
    %86 = vector.load %arg24[%c48_81, %c0_82] : memref<320x32xbf16, #tpu.memory_space<vmem>>, vector<224x32xbf16>
    %c64_83 = arith.constant 64 : index
    %c0_84 = arith.constant 0 : index
    %87 = vector.load %arg24[%c64_83, %c0_84] : memref<320x32xbf16, #tpu.memory_space<vmem>>, vector<224x32xbf16>
    %c80_85 = arith.constant 80 : index
    %c0_86 = arith.constant 0 : index
    %88 = vector.load %arg24[%c80_85, %c0_86] : memref<320x32xbf16, #tpu.memory_space<vmem>>, vector<224x32xbf16>
    %c96_87 = arith.constant 96 : index
    %c0_88 = arith.constant 0 : index
    %89 = vector.load %arg24[%c96_87, %c0_88] : memref<320x32xbf16, #tpu.memory_space<vmem>>, vector<224x32xbf16>
    %90 = tpu.concatenate %83, %84, %85, %86, %87, %88, %89 in 1 : vector<224x32xbf16>, vector<224x32xbf16>, vector<224x32xbf16>, vector<224x32xbf16>, vector<224x32xbf16>, vector<224x32xbf16>, vector<224x32xbf16> -> vector<224x224xbf16>
    %c0_89 = arith.constant 0 : index
    %c0_90 = arith.constant 0 : index
    %91 = vector.load %arg13[%c0_89, %c0_90] : memref<224x32xbf16, #tpu.memory_space<vmem>>, vector<224x32xbf16>
    %cst_91 = arith.constant dense<0.000000e+00> : vector<224x32xf32>
    %92 = tpu.matmul %90, %91, %cst_91 {dimension_numbers = #tpu.dot_dimension_numbers<[1], [0], [0], [1], [0, 0, 1, 1], [], []>} : vector<224x224xbf16>, vector<224x32xbf16>, vector<224x32xf32> -> vector<224x32xf32>
    %c0_92 = arith.constant 0 : index
    %c0_93 = arith.constant 0 : index
    %93 = vector.load %arg14[%c0_92, %c0_93] : memref<1x32xf32, #tpu.memory_space<vmem>>, vector<1x32xf32>
    %94 = vector.broadcast %93 : vector<1x32xf32> to vector<224x32xf32>
    %95 = arith.addf %92, %94 : vector<224x32xf32>
    %cst_94 = arith.constant 0.000000e+00 : f32
    %96 = vector.broadcast %cst_94 : f32 to vector<224x32xf32>
    %97 = arith.maximumf %95, %96 : vector<224x32xf32>
    %98 = vector.broadcast %0 : vector<224x1xf32> to vector<224x32xf32>
    %99 = arith.mulf %97, %98 : vector<224x32xf32>
    %100 = arith.truncf %99 : vector<224x32xf32> to vector<224x32xbf16>
    %c48_95 = arith.constant 48 : index
    %c0_96 = arith.constant 0 : index
    %101 = vector.load %arg25[%c48_95, %c0_96] : memref<320x32xbf16, #tpu.memory_space<vmem>>, vector<224x32xbf16>
    tpu.vector_store %arg25[%c48_95, %c0_96], %100 {strides = array<i32>} : memref<320x32xbf16, #tpu.memory_space<vmem>>, vector<224x32xbf16>,
    %c45_97 = arith.constant 45 : index
    %c0_98 = arith.constant 0 : index
    %102 = vector.load %arg25[%c45_97, %c0_98] : memref<320x32xbf16, #tpu.memory_space<vmem>>, vector<224x32xbf16>
    %c46_99 = arith.constant 46 : index
    %c0_100 = arith.constant 0 : index
    %103 = vector.load %arg25[%c46_99, %c0_100] : memref<320x32xbf16, #tpu.memory_space<vmem>>, vector<224x32xbf16>
    %c47_101 = arith.constant 47 : index
    %c0_102 = arith.constant 0 : index
    %104 = vector.load %arg25[%c47_101, %c0_102] : memref<320x32xbf16, #tpu.memory_space<vmem>>, vector<224x32xbf16>
    %c48_103 = arith.constant 48 : index
    %c0_104 = arith.constant 0 : index
    %105 = vector.load %arg25[%c48_103, %c0_104] : memref<320x32xbf16, #tpu.memory_space<vmem>>, vector<224x32xbf16>
    %c49_105 = arith.constant 49 : index
    %c0_106 = arith.constant 0 : index
    %106 = vector.load %arg25[%c49_105, %c0_106] : memref<320x32xbf16, #tpu.memory_space<vmem>>, vector<224x32xbf16>
    %c50_107 = arith.constant 50 : index
    %c0_108 = arith.constant 0 : index
    %107 = vector.load %arg25[%c50_107, %c0_108] : memref<320x32xbf16, #tpu.memory_space<vmem>>, vector<224x32xbf16>
    %c51_109 = arith.constant 51 : index
    %c0_110 = arith.constant 0 : index
    %108 = vector.load %arg25[%c51_109, %c0_110] : memref<320x32xbf16, #tpu.memory_space<vmem>>, vector<224x32xbf16>
    %109 = tpu.concatenate %102, %103, %104, %105, %106, %107, %108 in 1 : vector<224x32xbf16>, vector<224x32xbf16>, vector<224x32xbf16>, vector<224x32xbf16>, vector<224x32xbf16>, vector<224x32xbf16>, vector<224x32xbf16> -> vector<224x224xbf16>
    %c0_111 = arith.constant 0 : index
    %c0_112 = arith.constant 0 : index
    %110 = vector.load %arg15[%c0_111, %c0_112] : memref<224x32xbf16, #tpu.memory_space<vmem>>, vector<224x32xbf16>
    %cst_113 = arith.constant dense<0.000000e+00> : vector<224x32xf32>
    %111 = tpu.matmul %109, %110, %cst_113 {dimension_numbers = #tpu.dot_dimension_numbers<[1], [0], [0], [1], [0, 0, 1, 1], [], []>} : vector<224x224xbf16>, vector<224x32xbf16>, vector<224x32xf32> -> vector<224x32xf32>
    %c0_114 = arith.constant 0 : index
    %c0_115 = arith.constant 0 : index
    %112 = vector.load %arg16[%c0_114, %c0_115] : memref<1x32xf32, #tpu.memory_space<vmem>>, vector<1x32xf32>
    %113 = vector.broadcast %112 : vector<1x32xf32> to vector<224x32xf32>
    %114 = arith.addf %111, %113 : vector<224x32xf32>
    %cst_116 = arith.constant 0.000000e+00 : f32
    %115 = vector.broadcast %cst_116 : f32 to vector<224x32xf32>
    %116 = arith.maximumf %114, %115 : vector<224x32xf32>
    %117 = vector.broadcast %0 : vector<224x1xf32> to vector<224x32xf32>
    %118 = arith.mulf %116, %117 : vector<224x32xf32>
    %119 = arith.truncf %118 : vector<224x32xf32> to vector<224x32xbf16>
    %c48_117 = arith.constant 48 : index
    %c0_118 = arith.constant 0 : index
    %120 = vector.load %arg24[%c48_117, %c0_118] : memref<320x32xbf16, #tpu.memory_space<vmem>>, vector<224x32xbf16>
    tpu.vector_store %arg24[%c48_117, %c0_118], %119 {strides = array<i32>} : memref<320x32xbf16, #tpu.memory_space<vmem>>, vector<224x32xbf16>,
    %c0_119 = arith.constant 0 : index
    %c0_120 = arith.constant 0 : index
    %121 = vector.load %arg24[%c0_119, %c0_120] : memref<320x32xbf16, #tpu.memory_space<vmem>>, vector<224x32xbf16>
    %c16_121 = arith.constant 16 : index
    %c0_122 = arith.constant 0 : index
    %122 = vector.load %arg24[%c16_121, %c0_122] : memref<320x32xbf16, #tpu.memory_space<vmem>>, vector<224x32xbf16>
    %c32_123 = arith.constant 32 : index
    %c0_124 = arith.constant 0 : index
    %123 = vector.load %arg24[%c32_123, %c0_124] : memref<320x32xbf16, #tpu.memory_space<vmem>>, vector<224x32xbf16>
    %c48_125 = arith.constant 48 : index
    %c0_126 = arith.constant 0 : index
    %124 = vector.load %arg24[%c48_125, %c0_126] : memref<320x32xbf16, #tpu.memory_space<vmem>>, vector<224x32xbf16>
    %c64_127 = arith.constant 64 : index
    %c0_128 = arith.constant 0 : index
    %125 = vector.load %arg24[%c64_127, %c0_128] : memref<320x32xbf16, #tpu.memory_space<vmem>>, vector<224x32xbf16>
    %c80_129 = arith.constant 80 : index
    %c0_130 = arith.constant 0 : index
    %126 = vector.load %arg24[%c80_129, %c0_130] : memref<320x32xbf16, #tpu.memory_space<vmem>>, vector<224x32xbf16>
    %c96_131 = arith.constant 96 : index
    %c0_132 = arith.constant 0 : index
    %127 = vector.load %arg24[%c96_131, %c0_132] : memref<320x32xbf16, #tpu.memory_space<vmem>>, vector<224x32xbf16>
    %128 = tpu.concatenate %121, %122, %123, %124, %125, %126, %127 in 1 : vector<224x32xbf16>, vector<224x32xbf16>, vector<224x32xbf16>, vector<224x32xbf16>, vector<224x32xbf16>, vector<224x32xbf16>, vector<224x32xbf16> -> vector<224x224xbf16>
    %c0_133 = arith.constant 0 : index
    %c0_134 = arith.constant 0 : index
    %129 = vector.load %arg17[%c0_133, %c0_134] : memref<224x32xbf16, #tpu.memory_space<vmem>>, vector<224x32xbf16>
    %cst_135 = arith.constant dense<0.000000e+00> : vector<224x32xf32>
    %130 = tpu.matmul %128, %129, %cst_135 {dimension_numbers = #tpu.dot_dimension_numbers<[1], [0], [0], [1], [0, 0, 1, 1], [], []>} : vector<224x224xbf16>, vector<224x32xbf16>, vector<224x32xf32> -> vector<224x32xf32>
    %c0_136 = arith.constant 0 : index
    %c0_137 = arith.constant 0 : index
    %131 = vector.load %arg18[%c0_136, %c0_137] : memref<1x32xf32, #tpu.memory_space<vmem>>, vector<1x32xf32>
    %132 = vector.broadcast %131 : vector<1x32xf32> to vector<224x32xf32>
    %133 = arith.addf %130, %132 : vector<224x32xf32>
    %cst_138 = arith.constant 0.000000e+00 : f32
    %134 = vector.broadcast %cst_138 : f32 to vector<224x32xf32>
    %135 = arith.maximumf %133, %134 : vector<224x32xf32>
    %136 = vector.broadcast %0 : vector<224x1xf32> to vector<224x32xf32>
    %137 = arith.mulf %135, %136 : vector<224x32xf32>
    %138 = arith.truncf %137 : vector<224x32xf32> to vector<224x32xbf16>
    %c48_139 = arith.constant 48 : index
    %c0_140 = arith.constant 0 : index
    %139 = vector.load %arg25[%c48_139, %c0_140] : memref<320x32xbf16, #tpu.memory_space<vmem>>, vector<224x32xbf16>
    tpu.vector_store %arg25[%c48_139, %c0_140], %138 {strides = array<i32>} : memref<320x32xbf16, #tpu.memory_space<vmem>>, vector<224x32xbf16>,
    %c45_141 = arith.constant 45 : index
    %c0_142 = arith.constant 0 : index
    %140 = vector.load %arg25[%c45_141, %c0_142] : memref<320x32xbf16, #tpu.memory_space<vmem>>, vector<224x32xbf16>
    %c46_143 = arith.constant 46 : index
    %c0_144 = arith.constant 0 : index
    %141 = vector.load %arg25[%c46_143, %c0_144] : memref<320x32xbf16, #tpu.memory_space<vmem>>, vector<224x32xbf16>
    %c47_145 = arith.constant 47 : index
    %c0_146 = arith.constant 0 : index
    %142 = vector.load %arg25[%c47_145, %c0_146] : memref<320x32xbf16, #tpu.memory_space<vmem>>, vector<224x32xbf16>
    %c48_147 = arith.constant 48 : index
    %c0_148 = arith.constant 0 : index
    %143 = vector.load %arg25[%c48_147, %c0_148] : memref<320x32xbf16, #tpu.memory_space<vmem>>, vector<224x32xbf16>
    %c49_149 = arith.constant 49 : index
    %c0_150 = arith.constant 0 : index
    %144 = vector.load %arg25[%c49_149, %c0_150] : memref<320x32xbf16, #tpu.memory_space<vmem>>, vector<224x32xbf16>
    %c50_151 = arith.constant 50 : index
    %c0_152 = arith.constant 0 : index
    %145 = vector.load %arg25[%c50_151, %c0_152] : memref<320x32xbf16, #tpu.memory_space<vmem>>, vector<224x32xbf16>
    %c51_153 = arith.constant 51 : index
    %c0_154 = arith.constant 0 : index
    %146 = vector.load %arg25[%c51_153, %c0_154] : memref<320x32xbf16, #tpu.memory_space<vmem>>, vector<224x32xbf16>
    %147 = tpu.concatenate %140, %141, %142, %143, %144, %145, %146 in 1 : vector<224x32xbf16>, vector<224x32xbf16>, vector<224x32xbf16>, vector<224x32xbf16>, vector<224x32xbf16>, vector<224x32xbf16>, vector<224x32xbf16> -> vector<224x224xbf16>
    %c0_155 = arith.constant 0 : index
    %c0_156 = arith.constant 0 : index
    %148 = vector.load %arg19[%c0_155, %c0_156] : memref<224x192xbf16, #tpu.memory_space<vmem>>, vector<224x192xbf16>
    %cst_157 = arith.constant dense<0.000000e+00> : vector<224x192xf32>
    %149 = tpu.matmul %147, %148, %cst_157 {dimension_numbers = #tpu.dot_dimension_numbers<[1], [0], [0], [1], [0, 0, 1, 1], [], []>} : vector<224x224xbf16>, vector<224x192xbf16>, vector<224x192xf32> -> vector<224x192xf32>
    %c0_158 = arith.constant 0 : index
    %c0_159 = arith.constant 0 : index
    %150 = vector.load %arg20[%c0_158, %c0_159] : memref<1x192xf32, #tpu.memory_space<vmem>>, vector<1x192xf32>
    %151 = vector.broadcast %150 : vector<1x192xf32> to vector<224x192xf32>
    %152 = arith.addf %149, %151 : vector<224x192xf32>
    %cst_160 = arith.constant 0.000000e+00 : f32
    %153 = vector.broadcast %cst_160 : f32 to vector<224x192xf32>
    %154 = arith.maximumf %152, %153 : vector<224x192xf32>
    %155 = arith.truncf %154 : vector<224x192xf32> to vector<224x192xbf16>
    %c0_161 = arith.constant 0 : index
    %c2 = arith.constant 2 : index
    %c0_162 = arith.constant 0 : index
    %c0_163 = arith.constant 0 : index
    %156 = vector.load %arg23[%c0_161, %c2, %c0_162, %c0_163] : memref<1x4x224x192xbf16, #tpu.memory_space<vmem>>, vector<1x1x224x192xbf16>
    %157 = vector.shape_cast %156 : vector<1x1x224x192xbf16> to vector<224x192xbf16>
    %158 = vector.shape_cast %155 : vector<224x192xbf16> to vector<1x1x224x192xbf16>
    tpu.vector_store %arg23[%c0_161, %c2, %c0_162, %c0_163], %158 {strides = array<i32>} : memref<1x4x224x192xbf16, #tpu.memory_space<vmem>>, vector<1x1x224x192xbf16>,
    %c0_164 = arith.constant 0 : index
    %c7 = arith.constant 7 : index
    %c0_165 = arith.constant 0 : index
    %159 = vector.load %arg1[%c0_164, %c7, %c0_165] : memref<1x272x64xbf16, #tpu.memory_space<vmem>>, vector<1x224x64xbf16>
    %160 = vector.shape_cast %159 : vector<1x224x64xbf16> to vector<224x64xbf16>
    %161 = arith.extf %160 : vector<224x64xbf16> to vector<224x64xf32>
    %c0_166 = arith.constant 0 : index
    %c8 = arith.constant 8 : index
    %c0_167 = arith.constant 0 : index
    %162 = vector.load %arg1[%c0_166, %c8, %c0_167] : memref<1x272x64xbf16, #tpu.memory_space<vmem>>, vector<1x224x64xbf16>
    %163 = vector.shape_cast %162 : vector<1x224x64xbf16> to vector<224x64xbf16>
    %164 = arith.extf %163 : vector<224x64xbf16> to vector<224x64xf32>
    %165 = arith.addf %161, %164 : vector<224x64xf32>
    %c0_168 = arith.constant 0 : index
    %c9 = arith.constant 9 : index
    %c0_169 = arith.constant 0 : index
    %166 = vector.load %arg1[%c0_168, %c9, %c0_169] : memref<1x272x64xbf16, #tpu.memory_space<vmem>>, vector<1x224x64xbf16>
    %167 = vector.shape_cast %166 : vector<1x224x64xbf16> to vector<224x64xbf16>
    %168 = arith.extf %167 : vector<224x64xbf16> to vector<224x64xf32>
    %169 = arith.addf %165, %168 : vector<224x64xf32>
    %c0_170 = arith.constant 0 : index
    %c23 = arith.constant 23 : index
    %c0_171 = arith.constant 0 : index
    %170 = vector.load %arg1[%c0_170, %c23, %c0_171] : memref<1x272x64xbf16, #tpu.memory_space<vmem>>, vector<1x224x64xbf16>
    %171 = vector.shape_cast %170 : vector<1x224x64xbf16> to vector<224x64xbf16>
    %172 = arith.extf %171 : vector<224x64xbf16> to vector<224x64xf32>
    %173 = arith.addf %169, %172 : vector<224x64xf32>
    %c0_172 = arith.constant 0 : index
    %c24_173 = arith.constant 24 : index
    %c0_174 = arith.constant 0 : index
    %174 = vector.load %arg1[%c0_172, %c24_173, %c0_174] : memref<1x272x64xbf16, #tpu.memory_space<vmem>>, vector<1x224x64xbf16>
    %175 = vector.shape_cast %174 : vector<1x224x64xbf16> to vector<224x64xbf16>
    %176 = arith.extf %175 : vector<224x64xbf16> to vector<224x64xf32>
    %177 = arith.addf %173, %176 : vector<224x64xf32>
    %c0_175 = arith.constant 0 : index
    %c25 = arith.constant 25 : index
    %c0_176 = arith.constant 0 : index
    %178 = vector.load %arg1[%c0_175, %c25, %c0_176] : memref<1x272x64xbf16, #tpu.memory_space<vmem>>, vector<1x224x64xbf16>
    %179 = vector.shape_cast %178 : vector<1x224x64xbf16> to vector<224x64xbf16>
    %180 = arith.extf %179 : vector<224x64xbf16> to vector<224x64xf32>
    %181 = arith.addf %177, %180 : vector<224x64xf32>
    %c0_177 = arith.constant 0 : index
    %c39 = arith.constant 39 : index
    %c0_178 = arith.constant 0 : index
    %182 = vector.load %arg1[%c0_177, %c39, %c0_178] : memref<1x272x64xbf16, #tpu.memory_space<vmem>>, vector<1x224x64xbf16>
    %183 = vector.shape_cast %182 : vector<1x224x64xbf16> to vector<224x64xbf16>
    %184 = arith.extf %183 : vector<224x64xbf16> to vector<224x64xf32>
    %185 = arith.addf %181, %184 : vector<224x64xf32>
    %c0_179 = arith.constant 0 : index
    %c40 = arith.constant 40 : index
    %c0_180 = arith.constant 0 : index
    %186 = vector.load %arg1[%c0_179, %c40, %c0_180] : memref<1x272x64xbf16, #tpu.memory_space<vmem>>, vector<1x224x64xbf16>
    %187 = vector.shape_cast %186 : vector<1x224x64xbf16> to vector<224x64xbf16>
    %188 = arith.extf %187 : vector<224x64xbf16> to vector<224x64xf32>
    %189 = arith.addf %185, %188 : vector<224x64xf32>
    %c0_181 = arith.constant 0 : index
    %c41 = arith.constant 41 : index
    %c0_182 = arith.constant 0 : index
    %190 = vector.load %arg1[%c0_181, %c41, %c0_182] : memref<1x272x64xbf16, #tpu.memory_space<vmem>>, vector<1x224x64xbf16>
    %191 = vector.shape_cast %190 : vector<1x224x64xbf16> to vector<224x64xbf16>
    %192 = arith.extf %191 : vector<224x64xbf16> to vector<224x64xf32>
    %193 = arith.addf %189, %192 : vector<224x64xf32>
    %cst_183 = arith.constant 0.111111112 : f32
    %194 = vector.broadcast %cst_183 : f32 to vector<224x64xf32>
    %195 = arith.mulf %193, %194 : vector<224x64xf32>
    %196 = arith.truncf %195 : vector<224x64xf32> to vector<224x64xbf16>
    %c0_184 = arith.constant 0 : index
    %c0_185 = arith.constant 0 : index
    %197 = vector.load %arg21[%c0_184, %c0_185] : memref<64x192xbf16, #tpu.memory_space<vmem>>, vector<64x192xbf16>
    %cst_186 = arith.constant dense<0.000000e+00> : vector<224x192xf32>
    %198 = tpu.matmul %196, %197, %cst_186 {dimension_numbers = #tpu.dot_dimension_numbers<[1], [0], [0], [1], [0, 0, 1, 1], [], []>} : vector<224x64xbf16>, vector<64x192xbf16>, vector<224x192xf32> -> vector<224x192xf32>
    %c0_187 = arith.constant 0 : index
    %c0_188 = arith.constant 0 : index
    %199 = vector.load %arg22[%c0_187, %c0_188] : memref<1x192xf32, #tpu.memory_space<vmem>>, vector<1x192xf32>
    %200 = vector.broadcast %199 : vector<1x192xf32> to vector<224x192xf32>
    %201 = arith.addf %198, %200 : vector<224x192xf32>
    %cst_189 = arith.constant 0.000000e+00 : f32
    %202 = vector.broadcast %cst_189 : f32 to vector<224x192xf32>
    %203 = arith.maximumf %201, %202 : vector<224x192xf32>
    %204 = arith.truncf %203 : vector<224x192xf32> to vector<224x192xbf16>
    %c0_190 = arith.constant 0 : index
    %c3 = arith.constant 3 : index
    %c0_191 = arith.constant 0 : index
    %c0_192 = arith.constant 0 : index
    %205 = vector.load %arg23[%c0_190, %c3, %c0_191, %c0_192] : memref<1x4x224x192xbf16, #tpu.memory_space<vmem>>, vector<1x1x224x192xbf16>
    %206 = vector.shape_cast %205 : vector<1x1x224x192xbf16> to vector<224x192xbf16>
    %207 = vector.shape_cast %204 : vector<224x192xbf16> to vector<1x1x224x192xbf16>
    tpu.vector_store %arg23[%c0_190, %c3, %c0_191, %c0_192], %207 {strides = array<i32>} : memref<1x4x224x192xbf16, #tpu.memory_space<vmem>>, vector<1x1x224x192xbf16>,
    return
  }
  func.func @transform_0(%arg0: i32) -> (i32, i32, i32) {
    %c0_i32 = arith.constant 0 : i32
    %c0_i32_0 = arith.constant 0 : i32
    %c0_i32_1 = arith.constant 0 : i32
    return %arg0, %c0_i32, %c0_i32_0 : i32, i32, i32
  }
  func.func @transform_1(%arg0: i32) -> (i32, i32) {
    %c0_i32 = arith.constant 0 : i32
    %c0_i32_0 = arith.constant 0 : i32
    %c0_i32_1 = arith.constant 0 : i32
    return %c0_i32, %c0_i32_0 : i32, i32
  }
  func.func @transform_2(%arg0: i32) -> (i32, i32) {
    %c0_i32 = arith.constant 0 : i32
    %c0_i32_0 = arith.constant 0 : i32
    %c0_i32_1 = arith.constant 0 : i32
    return %c0_i32, %c0_i32_0 : i32, i32
  }
  func.func @transform_3(%arg0: i32) -> (i32, i32) {
    %c0_i32 = arith.constant 0 : i32
    %c0_i32_0 = arith.constant 0 : i32
    %c0_i32_1 = arith.constant 0 : i32
    return %c0_i32, %c0_i32_0 : i32, i32
  }
  func.func @transform_4(%arg0: i32) -> (i32, i32) {
    %c0_i32 = arith.constant 0 : i32
    %c0_i32_0 = arith.constant 0 : i32
    %c0_i32_1 = arith.constant 0 : i32
    return %c0_i32, %c0_i32_0 : i32, i32
  }
  func.func @transform_5(%arg0: i32) -> (i32, i32) {
    %c0_i32 = arith.constant 0 : i32
    %c0_i32_0 = arith.constant 0 : i32
    %c0_i32_1 = arith.constant 0 : i32
    return %c0_i32, %c0_i32_0 : i32, i32
  }
  func.func @transform_6(%arg0: i32) -> (i32, i32) {
    %c0_i32 = arith.constant 0 : i32
    %c0_i32_0 = arith.constant 0 : i32
    %c0_i32_1 = arith.constant 0 : i32
    return %c0_i32, %c0_i32_0 : i32, i32
  }
  func.func @transform_7(%arg0: i32) -> (i32, i32) {
    %c0_i32 = arith.constant 0 : i32
    %c0_i32_0 = arith.constant 0 : i32
    %c0_i32_1 = arith.constant 0 : i32
    return %c0_i32, %c0_i32_0 : i32, i32
  }
  func.func @transform_8(%arg0: i32) -> (i32, i32) {
    %c0_i32 = arith.constant 0 : i32
    %c0_i32_0 = arith.constant 0 : i32
    %c0_i32_1 = arith.constant 0 : i32
    return %c0_i32, %c0_i32_0 : i32, i32
  }
  func.func @transform_9(%arg0: i32) -> (i32, i32) {
    %c0_i32 = arith.constant 0 : i32
    %c0_i32_0 = arith.constant 0 : i32
    %c0_i32_1 = arith.constant 0 : i32
    return %c0_i32, %c0_i32_0 : i32, i32
  }
  func.func @transform_10(%arg0: i32) -> (i32, i32) {
    %c0_i32 = arith.constant 0 : i32
    %c0_i32_0 = arith.constant 0 : i32
    %c0_i32_1 = arith.constant 0 : i32
    return %c0_i32, %c0_i32_0 : i32, i32
  }
  func.func @transform_11(%arg0: i32) -> (i32, i32) {
    %c0_i32 = arith.constant 0 : i32
    %c0_i32_0 = arith.constant 0 : i32
    %c0_i32_1 = arith.constant 0 : i32
    return %c0_i32, %c0_i32_0 : i32, i32
  }
  func.func @transform_12(%arg0: i32) -> (i32, i32) {
    %c0_i32 = arith.constant 0 : i32
    %c0_i32_0 = arith.constant 0 : i32
    %c0_i32_1 = arith.constant 0 : i32
    return %c0_i32, %c0_i32_0 : i32, i32
  }
  func.func @transform_13(%arg0: i32) -> (i32, i32) {
    %c0_i32 = arith.constant 0 : i32
    %c0_i32_0 = arith.constant 0 : i32
    %c0_i32_1 = arith.constant 0 : i32
    return %c0_i32, %c0_i32_0 : i32, i32
  }
  func.func @transform_14(%arg0: i32) -> (i32, i32) {
    %c0_i32 = arith.constant 0 : i32
    %c0_i32_0 = arith.constant 0 : i32
    %c0_i32_1 = arith.constant 0 : i32
    return %c0_i32, %c0_i32_0 : i32, i32
  }
  func.func @transform_15(%arg0: i32) -> (i32, i32) {
    %c0_i32 = arith.constant 0 : i32
    %c0_i32_0 = arith.constant 0 : i32
    %c0_i32_1 = arith.constant 0 : i32
    return %c0_i32, %c0_i32_0 : i32, i32
  }
  func.func @transform_16(%arg0: i32) -> (i32, i32) {
    %c0_i32 = arith.constant 0 : i32
    %c0_i32_0 = arith.constant 0 : i32
    %c0_i32_1 = arith.constant 0 : i32
    return %c0_i32, %c0_i32_0 : i32, i32
  }
  func.func @transform_17(%arg0: i32) -> (i32, i32) {
    %c0_i32 = arith.constant 0 : i32
    %c0_i32_0 = arith.constant 0 : i32
    %c0_i32_1 = arith.constant 0 : i32
    return %c0_i32, %c0_i32_0 : i32, i32
  }
  func.func @transform_18(%arg0: i32) -> (i32, i32) {
    %c0_i32 = arith.constant 0 : i32
    %c0_i32_0 = arith.constant 0 : i32
    %c0_i32_1 = arith.constant 0 : i32
    return %c0_i32, %c0_i32_0 : i32, i32
  }
  func.func @transform_19(%arg0: i32) -> (i32, i32) {
    %c0_i32 = arith.constant 0 : i32
    %c0_i32_0 = arith.constant 0 : i32
    %c0_i32_1 = arith.constant 0 : i32
    return %c0_i32, %c0_i32_0 : i32, i32
  }
  func.func @transform_20(%arg0: i32) -> (i32, i32) {
    %c0_i32 = arith.constant 0 : i32
    %c0_i32_0 = arith.constant 0 : i32
    %c0_i32_1 = arith.constant 0 : i32
    return %c0_i32, %c0_i32_0 : i32, i32
  }
  func.func @transform_21(%arg0: i32) -> (i32, i32) {
    %c0_i32 = arith.constant 0 : i32
    %c0_i32_0 = arith.constant 0 : i32
    %c0_i32_1 = arith.constant 0 : i32
    return %c0_i32, %c0_i32_0 : i32, i32
  }
  func.func @transform_22(%arg0: i32) -> (i32, i32, i32, i32) {
    %c0_i32 = arith.constant 0 : i32
    %c0_i32_0 = arith.constant 0 : i32
    %c0_i32_1 = arith.constant 0 : i32
    %c0_i32_2 = arith.constant 0 : i32
    return %arg0, %c0_i32, %c0_i32_0, %c0_i32_1 : i32, i32, i32, i32
  }
}

</mosaic_0001>

<llo_original>
// kernel: tpu_custom_call.1
$region0: #{tpu_custom_call.1}
  #allocation0 [shape = 'u32[]', space=smem, size = 0x4, offset = 0x4, fixed_abs, tag = 'smem constant byte address 0x4 - core index']
  #allocation1 [shape = 'u32[144,128]{1,0:T(1,128)}', space=vmem, size = 0x12000, scoped, tag = 'internal scratch']
  #allocation2 [shape = 'bf16[320,32]{1,0:T(8,128)(2,1)}', space=vmem, size = 0x14000, scoped, tag = 'scratch operand']
  #allocation3 [shape = 'bf16[320,32]{1,0:T(8,128)(2,1)}', space=vmem, size = 0x14000, scoped, tag = 'scratch operand']
  %s0 = inlined_call_operand.vmem [shape: bf16[2,272,64], index: 0, kind: input, shape index: {}]
  %s1 = inlined_call_operand.vmem [shape: f32[224,1], index: 1, kind: input, shape index: {}]
  %s2 = inlined_call_operand.vmem [shape: bf16[64,192], index: 2, kind: input, shape index: {}]
  %s3 = inlined_call_operand.vmem [shape: f32[1,192], index: 3, kind: input, shape index: {}]
  %s4 = inlined_call_operand.vmem [shape: bf16[64,32], index: 4, kind: input, shape index: {}]
  %s5 = inlined_call_operand.vmem [shape: f32[1,32], index: 5, kind: input, shape index: {}]
  %s6 = inlined_call_operand.vmem [shape: bf16[224,32], index: 6, kind: input, shape index: {}]
  %s7 = inlined_call_operand.vmem [shape: f32[1,32], index: 7, kind: input, shape index: {}]
  %s8 = inlined_call_operand.vmem [shape: bf16[224,192], index: 8, kind: input, shape index: {}]
  %s9 = inlined_call_operand.vmem [shape: f32[1,192], index: 9, kind: input, shape index: {}]
  %s10 = inlined_call_operand.vmem [shape: bf16[64,32], index: 10, kind: input, shape index: {}]
  %s11 = inlined_call_operand.vmem [shape: f32[1,32], index: 11, kind: input, shape index: {}]
  %s12 = inlined_call_operand.vmem [shape: bf16[224,32], index: 12, kind: input, shape index: {}]
  %s13 = inlined_call_operand.vmem [shape: f32[1,32], index: 13, kind: input, shape index: {}]
  %s14 = inlined_call_operand.vmem [shape: bf16[224,32], index: 14, kind: input, shape index: {}]
  %s15 = inlined_call_operand.vmem [shape: f32[1,32], index: 15, kind: input, shape index: {}]
  %s16 = inlined_call_operand.vmem [shape: bf16[224,32], index: 16, kind: input, shape index: {}]
  %s17 = inlined_call_operand.vmem [shape: f32[1,32], index: 17, kind: input, shape index: {}]
  %s18 = inlined_call_operand.vmem [shape: bf16[224,192], index: 18, kind: input, shape index: {}]
  %s19 = inlined_call_operand.vmem [shape: f32[1,192], index: 19, kind: input, shape index: {}]
  %s20 = inlined_call_operand.vmem [shape: bf16[64,192], index: 20, kind: input, shape index: {}]
  %s21 = inlined_call_operand.vmem [shape: f32[1,192], index: 21, kind: input, shape index: {}]
  %s22 = inlined_call_operand.vmem [shape: bf16[2,4,224,192], index: 22, kind: output, shape index: {}]
  %s23 = sld [smem:[#allocation0]]
  $region121: #{tpu_custom_call.1} parent=0
    _
  %s25 = ssub.s32 1, %s23
  %s26 = scalar_select 0, %s25, %s23
  loop: start=0, step=1, limit=4
  $region2: #{tpu_custom_call.1} parent=0 // loop_pre_header
    _
  $region3: #{tpu_custom_call.1} parent=0 // loop_header
    %s28 = sphi 0, %s32
    %p29 = scmp.ge.s32.totalorder %s28, 4
    %s38 = sphi 0, %s40
    %s41 = sphi 0, %s38
    %s42 = sphi 0, %s41
    %s58 = sphi 0, %s42
    %s62 = sphi 0, %s62
    %s64 = sphi 0, %s62
    %s65 = sphi 0, %s64
    %s79 = sphi 0, %s65
    %s83 = sphi 0, %s83
    %s85 = sphi 0, %s83
    %s86 = sphi 0, %s85
    %s100 = sphi 0, %s86
    %s104 = sphi 0, %s104
    %s106 = sphi 0, %s104
    %s107 = sphi 0, %s106
    %s121 = sphi 0, %s107
    %s125 = sphi 0, %s125
    %s127 = sphi 0, %s125
    %s128 = sphi 0, %s127
    %s142 = sphi 0, %s128
    %s146 = sphi 0, %s146
    %s148 = sphi 0, %s146
    %s149 = sphi 0, %s148
    %s163 = sphi 0, %s149
    %s167 = sphi 0, %s167
    %s169 = sphi 0, %s167
    %s170 = sphi 0, %s169
    %s184 = sphi 0, %s170
    %s188 = sphi 0, %s188
    %s190 = sphi 0, %s188
    %s191 = sphi 0, %s190
    %s205 = sphi 0, %s191
    %s209 = sphi 0, %s209
    %s211 = sphi 0, %s209
    %s212 = sphi 0, %s211
    %s226 = sphi 0, %s212
    %s230 = sphi 0, %s230
    %s232 = sphi 0, %s230
    %s233 = sphi 0, %s232
    %s247 = sphi 0, %s233
    %s251 = sphi 0, %s251
    %s253 = sphi 0, %s251
    %s254 = sphi 0, %s253
    %s268 = sphi 0, %s254
    %s272 = sphi 0, %s272
    %s274 = sphi 0, %s272
    %s275 = sphi 0, %s274
    %s289 = sphi 0, %s275
    %s293 = sphi 0, %s293
    %s295 = sphi 0, %s293
    %s296 = sphi 0, %s295
    %s310 = sphi 0, %s296
    %s314 = sphi 0, %s314
    %s316 = sphi 0, %s314
    %s317 = sphi 0, %s316
    %s331 = sphi 0, %s317
    %s335 = sphi 0, %s335
    %s337 = sphi 0, %s335
    %s338 = sphi 0, %s337
    %s352 = sphi 0, %s338
    %s356 = sphi 0, %s356
    %s358 = sphi 0, %s356
    %s359 = sphi 0, %s358
    %s373 = sphi 0, %s359
    %s377 = sphi 0, %s377
    %s379 = sphi 0, %s377
    %s380 = sphi 0, %s379
    %s394 = sphi 0, %s380
    %s398 = sphi 0, %s398
    %s400 = sphi 0, %s398
    %s401 = sphi 0, %s400
    %s415 = sphi 0, %s401
    %s419 = sphi 0, %s419
    %s421 = sphi 0, %s419
    %s422 = sphi 0, %s421
    %s436 = sphi 0, %s422
    %s440 = sphi 0, %s440
    %s442 = sphi 0, %s440
    %s443 = sphi 0, %s442
    %s457 = sphi 0, %s443
    %s461 = sphi 0, %s461
    %s463 = sphi 0, %s461
    %s464 = sphi 0, %s463
    %s478 = sphi 0, %s464
    %s482 = sphi 0, %s482
    %s484 = sphi 0, %s482
    %s485 = sphi 0, %s484
    %s499 = sphi 0, %s485
    %s505 = sphi 0, %s507
    %s508 = sphi 0, %s505
    %s509 = sphi 0, %s508
    %s525 = sphi 0, %s509
  $region4: #{tpu_custom_call.1} parent=0 // loop_header_branch
    %31 = sbr.rel (%p29) target = $region8
  $region5: #{tpu_custom_call.1} parent=0 // loop_body
    %s33 = ssub.s32 %s28, 1
    %s34 = ssub.s32 %s28, 2
    %s35 = sadd.s32 %s28, 1
    %s36 = ssub.s32 %s28, %s35
    %p37 = scmp.eq.s32.totalorder %s36, 0
    %s39 = sadd.s32 %s38, 1
    %s40 = scalar_select %p37, %s38, %s39
    %p43 = pneg %p37
    %p44 = scmp.eq.s32.totalorder %s28, 1
    %p45 = por %p43, %p44
    %p46 = scmp.ne.s32.totalorder %s38, %s41
    %p47 = scmp.eq.s32.totalorder %s28, 0
    %p48 = por %p46, %p47
    %p49 = scmp.ne.s32.totalorder %s38, %s41
    %p50 = scmp.eq.s32.totalorder %s33, 1
    %p51 = por %p49, %p50
    %p52 = scmp.ne.s32.totalorder %s41, %s42
    %p53 = scmp.eq.s32.totalorder %s33, 0
    %p54 = por %p52, %p53
    %p55 = scmp.ne.s32.totalorder %s41, %s42
    %p56 = scmp.eq.s32.totalorder %s34, 1
    %p57 = por %p55, %p56
    %p59 = scmp.ne.s32.totalorder %s42, %s58
    %p60 = scmp.eq.s32.totalorder %s34, 0
    %p61 = por %p59, %p60
    %s63 = sadd.s32 %s62, 1
    %p66 = scmp.eq.s32.totalorder %s28, 1
    %p67 = scmp.ne.s32.totalorder %s62, %s64
    %p68 = scmp.eq.s32.totalorder %s28, 0
    %p69 = por %p67, %p68
    %p70 = scmp.ne.s32.totalorder %s62, %s64
    %p71 = scmp.eq.s32.totalorder %s33, 1
    %p72 = por %p70, %p71
    %p73 = scmp.ne.s32.totalorder %s64, %s65
    %p74 = scmp.eq.s32.totalorder %s33, 0
    %p75 = por %p73, %p74
    %p76 = scmp.ne.s32.totalorder %s64, %s65
    %p77 = scmp.eq.s32.totalorder %s34, 1
    %p78 = por %p76, %p77
    %p80 = scmp.ne.s32.totalorder %s65, %s79
    %p81 = scmp.eq.s32.totalorder %s34, 0
    %p82 = por %p80, %p81
    %s84 = sadd.s32 %s83, 1
    %p87 = scmp.eq.s32.totalorder %s28, 1
    %p88 = scmp.ne.s32.totalorder %s83, %s85
    %p89 = scmp.eq.s32.totalorder %s28, 0
    %p90 = por %p88, %p89
    %p91 = scmp.ne.s32.totalorder %s83, %s85
    %p92 = scmp.eq.s32.totalorder %s33, 1
    %p93 = por %p91, %p92
    %p94 = scmp.ne.s32.totalorder %s85, %s86
    %p95 = scmp.eq.s32.totalorder %s33, 0
    %p96 = por %p94, %p95
    %p97 = scmp.ne.s32.totalorder %s85, %s86
    %p98 = scmp.eq.s32.totalorder %s34, 1
    %p99 = por %p97, %p98
    %p101 = scmp.ne.s32.totalorder %s86, %s100
    %p102 = scmp.eq.s32.totalorder %s34, 0
    %p103 = por %p101, %p102
    %s105 = sadd.s32 %s104, 1
    %p108 = scmp.eq.s32.totalorder %s28, 1
    %p109 = scmp.ne.s32.totalorder %s104, %s106
    %p110 = scmp.eq.s32.totalorder %s28, 0
    %p111 = por %p109, %p110
    %p112 = scmp.ne.s32.totalorder %s104, %s106
    %p113 = scmp.eq.s32.totalorder %s33, 1
    %p114 = por %p112, %p113
    %p115 = scmp.ne.s32.totalorder %s106, %s107
    %p116 = scmp.eq.s32.totalorder %s33, 0
    %p117 = por %p115, %p116
    %p118 = scmp.ne.s32.totalorder %s106, %s107
    %p119 = scmp.eq.s32.totalorder %s34, 1
    %p120 = por %p118, %p119
    %p122 = scmp.ne.s32.totalorder %s107, %s121
    %p123 = scmp.eq.s32.totalorder %s34, 0
    %p124 = por %p122, %p123
    %s126 = sadd.s32 %s125, 1
    %p129 = scmp.eq.s32.totalorder %s28, 1
    %p130 = scmp.ne.s32.totalorder %s125, %s127
    %p131 = scmp.eq.s32.totalorder %s28, 0
    %p132 = por %p130, %p131
    %p133 = scmp.ne.s32.totalorder %s125, %s127
    %p134 = scmp.eq.s32.totalorder %s33, 1
    %p135 = por %p133, %p134
    %p136 = scmp.ne.s32.totalorder %s127, %s128
    %p137 = scmp.eq.s32.totalorder %s33, 0
    %p138 = por %p136, %p137
    %p139 = scmp.ne.s32.totalorder %s127, %s128
    %p140 = scmp.eq.s32.totalorder %s34, 1
    %p141 = por %p139, %p140
    %p143 = scmp.ne.s32.totalorder %s128, %s142
    %p144 = scmp.eq.s32.totalorder %s34, 0
    %p145 = por %p143, %p144
    %s147 = sadd.s32 %s146, 1
    %p150 = scmp.eq.s32.totalorder %s28, 1
    %p151 = scmp.ne.s32.totalorder %s146, %s148
    %p152 = scmp.eq.s32.totalorder %s28, 0
    %p153 = por %p151, %p152
    %p154 = scmp.ne.s32.totalorder %s146, %s148
    %p155 = scmp.eq.s32.totalorder %s33, 1
    %p156 = por %p154, %p155
    %p157 = scmp.ne.s32.totalorder %s148, %s149
    %p158 = scmp.eq.s32.totalorder %s33, 0
    %p159 = por %p157, %p158
    %p160 = scmp.ne.s32.totalorder %s148, %s149
    %p161 = scmp.eq.s32.totalorder %s34, 1
    %p162 = por %p160, %p161
    %p164 = scmp.ne.s32.totalorder %s149, %s163
    %p165 = scmp.eq.s32.totalorder %s34, 0
    %p166 = por %p164, %p165
    %s168 = sadd.s32 %s167, 1
    %p171 = scmp.eq.s32.totalorder %s28, 1
    %p172 = scmp.ne.s32.totalorder %s167, %s169
    %p173 = scmp.eq.s32.totalorder %s28, 0
    %p174 = por %p172, %p173
    %p175 = scmp.ne.s32.totalorder %s167, %s169
    %p176 = scmp.eq.s32.totalorder %s33, 1
    %p177 = por %p175, %p176
    %p178 = scmp.ne.s32.totalorder %s169, %s170
    %p179 = scmp.eq.s32.totalorder %s33, 0
    %p180 = por %p178, %p179
    %p181 = scmp.ne.s32.totalorder %s169, %s170
    %p182 = scmp.eq.s32.totalorder %s34, 1
    %p183 = por %p181, %p182
    %p185 = scmp.ne.s32.totalorder %s170, %s184
    %p186 = scmp.eq.s32.totalorder %s34, 0
    %p187 = por %p185, %p186
    %s189 = sadd.s32 %s188, 1
    %p192 = scmp.eq.s32.totalorder %s28, 1
    %p193 = scmp.ne.s32.totalorder %s188, %s190
    %p194 = scmp.eq.s32.totalorder %s28, 0
    %p195 = por %p193, %p194
    %p196 = scmp.ne.s32.totalorder %s188, %s190
    %p197 = scmp.eq.s32.totalorder %s33, 1
    %p198 = por %p196, %p197
    %p199 = scmp.ne.s32.totalorder %s190, %s191
    %p200 = scmp.eq.s32.totalorder %s33, 0
    %p201 = por %p199, %p200
    %p202 = scmp.ne.s32.totalorder %s190, %s191
    %p203 = scmp.eq.s32.totalorder %s34, 1
    %p204 = por %p202, %p203
    %p206 = scmp.ne.s32.totalorder %s191, %s205
    %p207 = scmp.eq.s32.totalorder %s34, 0
    %p208 = por %p206, %p207
    %s210 = sadd.s32 %s209, 1
    %p213 = scmp.eq.s32.totalorder %s28, 1
    %p214 = scmp.ne.s32.totalorder %s209, %s211
    %p215 = scmp.eq.s32.totalorder %s28, 0
    %p216 = por %p214, %p215
    %p217 = scmp.ne.s32.totalorder %s209, %s211
    %p218 = scmp.eq.s32.totalorder %s33, 1
    %p219 = por %p217, %p218
    %p220 = scmp.ne.s32.totalorder %s211, %s212
    %p221 = scmp.eq.s32.totalorder %s33, 0
    %p222 = por %p220, %p221
    %p223 = scmp.ne.s32.totalorder %s211, %s212
    %p224 = scmp.eq.s32.totalorder %s34, 1
    %p225 = por %p223, %p224
    %p227 = scmp.ne.s32.totalorder %s212, %s226
    %p228 = scmp.eq.s32.totalorder %s34, 0
    %p229 = por %p227, %p228
    %s231 = sadd.s32 %s230, 1
    %p234 = scmp.eq.s32.totalorder %s28, 1
    %p235 = scmp.ne.s32.totalorder %s230, %s232
    %p236 = scmp.eq.s32.totalorder %s28, 0
    %p237 = por %p235, %p236
    %p238 = scmp.ne.s32.totalorder %s230, %s232
    %p239 = scmp.eq.s32.totalorder %s33, 1
    %p240 = por %p238, %p239
    %p241 = scmp.ne.s32.totalorder %s232, %s233
    %p242 = scmp.eq.s32.totalorder %s33, 0
    %p243 = por %p241, %p242
    %p244 = scmp.ne.s32.totalorder %s232, %s233
    %p245 = scmp.eq.s32.totalorder %s34, 1
    %p246 = por %p244, %p245
    %p248 = scmp.ne.s32.totalorder %s233, %s247
    %p249 = scmp.eq.s32.totalorder %s34, 0
    %p250 = por %p248, %p249
    %s252 = sadd.s32 %s251, 1
    %p255 = scmp.eq.s32.totalorder %s28, 1
    %p256 = scmp.ne.s32.totalorder %s251, %s253
    %p257 = scmp.eq.s32.totalorder %s28, 0
    %p258 = por %p256, %p257
    %p259 = scmp.ne.s32.totalorder %s251, %s253
    %p260 = scmp.eq.s32.totalorder %s33, 1
    %p261 = por %p259, %p260
    %p262 = scmp.ne.s32.totalorder %s253, %s254
    %p263 = scmp.eq.s32.totalorder %s33, 0
    %p264 = por %p262, %p263
    %p265 = scmp.ne.s32.totalorder %s253, %s254
    %p266 = scmp.eq.s32.totalorder %s34, 1
    %p267 = por %p265, %p266
    %p269 = scmp.ne.s32.totalorder %s254, %s268
    %p270 = scmp.eq.s32.totalorder %s34, 0
    %p271 = por %p269, %p270
    %s273 = sadd.s32 %s272, 1
    %p276 = scmp.eq.s32.totalorder %s28, 1
    %p277 = scmp.ne.s32.totalorder %s272, %s274
    %p278 = scmp.eq.s32.totalorder %s28, 0
    %p279 = por %p277, %p278
    %p280 = scmp.ne.s32.totalorder %s272, %s274
    %p281 = scmp.eq.s32.totalorder %s33, 1
    %p282 = por %p280, %p281
    %p283 = scmp.ne.s32.totalorder %s274, %s275
    %p284 = scmp.eq.s32.totalorder %s33, 0
    %p285 = por %p283, %p284
    %p286 = scmp.ne.s32.totalorder %s274, %s275
    %p287 = scmp.eq.s32.totalorder %s34, 1
    %p288 = por %p286, %p287
    %p290 = scmp.ne.s32.totalorder %s275, %s289
    %p291 = scmp.eq.s32.totalorder %s34, 0
    %p292 = por %p290, %p291
    %s294 = sadd.s32 %s293, 1
    %p297 = scmp.eq.s32.totalorder %s28, 1
    %p298 = scmp.ne.s32.totalorder %s293, %s295
    %p299 = scmp.eq.s32.totalorder %s28, 0
    %p300 = por %p298, %p299
    %p301 = scmp.ne.s32.totalorder %s293, %s295
    %p302 = scmp.eq.s32.totalorder %s33, 1
    %p303 = por %p301, %p302
    %p304 = scmp.ne.s32.totalorder %s295, %s296
    %p305 = scmp.eq.s32.totalorder %s33, 0
    %p306 = por %p304, %p305
    %p307 = scmp.ne.s32.totalorder %s295, %s296
    %p308 = scmp.eq.s32.totalorder %s34, 1
    %p309 = por %p307, %p308
    %p311 = scmp.ne.s32.totalorder %s296, %s310
    %p312 = scmp.eq.s32.totalorder %s34, 0
    %p313 = por %p311, %p312
    %s315 = sadd.s32 %s314, 1
    %p318 = scmp.eq.s32.totalorder %s28, 1
    %p319 = scmp.ne.s32.totalorder %s314, %s316
    %p320 = scmp.eq.s32.totalorder %s28, 0
    %p321 = por %p319, %p320
    %p322 = scmp.ne.s32.totalorder %s314, %s316
    %p323 = scmp.eq.s32.totalorder %s33, 1
    %p324 = por %p322, %p323
    %p325 = scmp.ne.s32.totalorder %s316, %s317
    %p326 = scmp.eq.s32.totalorder %s33, 0
    %p327 = por %p325, %p326
    %p328 = scmp.ne.s32.totalorder %s316, %s317
    %p329 = scmp.eq.s32.totalorder %s34, 1
    %p330 = por %p328, %p329
    %p332 = scmp.ne.s32.totalorder %s317, %s331
    %p333 = scmp.eq.s32.totalorder %s34, 0
    %p334 = por %p332, %p333
    %s336 = sadd.s32 %s335, 1
    %p339 = scmp.eq.s32.totalorder %s28, 1
    %p340 = scmp.ne.s32.totalorder %s335, %s337
    %p341 = scmp.eq.s32.totalorder %s28, 0
    %p342 = por %p340, %p341
    %p343 = scmp.ne.s32.totalorder %s335, %s337
    %p344 = scmp.eq.s32.totalorder %s33, 1
    %p345 = por %p343, %p344
    %p346 = scmp.ne.s32.totalorder %s337, %s338
    %p347 = scmp.eq.s32.totalorder %s33, 0
    %p348 = por %p346, %p347
    %p349 = scmp.ne.s32.totalorder %s337, %s338
    %p350 = scmp.eq.s32.totalorder %s34, 1
    %p351 = por %p349, %p350
    %p353 = scmp.ne.s32.totalorder %s338, %s352
    %p354 = scmp.eq.s32.totalorder %s34, 0
    %p355 = por %p353, %p354
    %s357 = sadd.s32 %s356, 1
    %p360 = scmp.eq.s32.totalorder %s28, 1
    %p361 = scmp.ne.s32.totalorder %s356, %s358
    %p362 = scmp.eq.s32.totalorder %s28, 0
    %p363 = por %p361, %p362
    %p364 = scmp.ne.s32.totalorder %s356, %s358
    %p365 = scmp.eq.s32.totalorder %s33, 1
    %p366 = por %p364, %p365
    %p367 = scmp.ne.s32.totalorder %s358, %s359
    %p368 = scmp.eq.s32.totalorder %s33, 0
    %p369 = por %p367, %p368
    %p370 = scmp.ne.s32.totalorder %s358, %s359
    %p371 = scmp.eq.s32.totalorder %s34, 1
    %p372 = por %p370, %p371
    %p374 = scmp.ne.s32.totalorder %s359, %s373
    %p375 = scmp.eq.s32.totalorder %s34, 0
    %p376 = por %p374, %p375
    %s378 = sadd.s32 %s377, 1
    %p381 = scmp.eq.s32.totalorder %s28, 1
    %p382 = scmp.ne.s32.totalorder %s377, %s379
    %p383 = scmp.eq.s32.totalorder %s28, 0
    %p384 = por %p382, %p383
    %p385 = scmp.ne.s32.totalorder %s377, %s379
    %p386 = scmp.eq.s32.totalorder %s33, 1
    %p387 = por %p385, %p386
    %p388 = scmp.ne.s32.totalorder %s379, %s380
    %p389 = scmp.eq.s32.totalorder %s33, 0
    %p390 = por %p388, %p389
    %p391 = scmp.ne.s32.totalorder %s379, %s380
    %p392 = scmp.eq.s32.totalorder %s34, 1
    %p393 = por %p391, %p392
    %p395 = scmp.ne.s32.totalorder %s380, %s394
    %p396 = scmp.eq.s32.totalorder %s34, 0
    %p397 = por %p395, %p396
    %s399 = sadd.s32 %s398, 1
    %p402 = scmp.eq.s32.totalorder %s28, 1
    %p403 = scmp.ne.s32.totalorder %s398, %s400
    %p404 = scmp.eq.s32.totalorder %s28, 0
    %p405 = por %p403, %p404
    %p406 = scmp.ne.s32.totalorder %s398, %s400
    %p407 = scmp.eq.s32.totalorder %s33, 1
    %p408 = por %p406, %p407
    %p409 = scmp.ne.s32.totalorder %s400, %s401
    %p410 = scmp.eq.s32.totalorder %s33, 0
    %p411 = por %p409, %p410
    %p412 = scmp.ne.s32.totalorder %s400, %s401
    %p413 = scmp.eq.s32.totalorder %s34, 1
    %p414 = por %p412, %p413
    %p416 = scmp.ne.s32.totalorder %s401, %s415
    %p417 = scmp.eq.s32.totalorder %s34, 0
    %p418 = por %p416, %p417
    %s420 = sadd.s32 %s419, 1
    %p423 = scmp.eq.s32.totalorder %s28, 1
    %p424 = scmp.ne.s32.totalorder %s419, %s421
    %p425 = scmp.eq.s32.totalorder %s28, 0
    %p426 = por %p424, %p425
    %p427 = scmp.ne.s32.totalorder %s419, %s421
    %p428 = scmp.eq.s32.totalorder %s33, 1
    %p429 = por %p427, %p428
    %p430 = scmp.ne.s32.totalorder %s421, %s422
    %p431 = scmp.eq.s32.totalorder %s33, 0
    %p432 = por %p430, %p431
    %p433 = scmp.ne.s32.totalorder %s421, %s422
    %p434 = scmp.eq.s32.totalorder %s34, 1
    %p435 = por %p433, %p434
    %p437 = scmp.ne.s32.totalorder %s422, %s436
    %p438 = scmp.eq.s32.totalorder %s34, 0
    %p439 = por %p437, %p438
    %s441 = sadd.s32 %s440, 1
    %p444 = scmp.eq.s32.totalorder %s28, 1
    %p445 = scmp.ne.s32.totalorder %s440, %s442
    %p446 = scmp.eq.s32.totalorder %s28, 0
    %p447 = por %p445, %p446
    %p448 = scmp.ne.s32.totalorder %s440, %s442
    %p449 = scmp.eq.s32.totalorder %s33, 1
    %p450 = por %p448, %p449
    %p451 = scmp.ne.s32.totalorder %s442, %s443
    %p452 = scmp.eq.s32.totalorder %s33, 0
    %p453 = por %p451, %p452
    %p454 = scmp.ne.s32.totalorder %s442, %s443
    %p455 = scmp.eq.s32.totalorder %s34, 1
    %p456 = por %p454, %p455
    %p458 = scmp.ne.s32.totalorder %s443, %s457
    %p459 = scmp.eq.s32.totalorder %s34, 0
    %p460 = por %p458, %p459
    %s462 = sadd.s32 %s461, 1
    %p465 = scmp.eq.s32.totalorder %s28, 1
    %p466 = scmp.ne.s32.totalorder %s461, %s463
    %p467 = scmp.eq.s32.totalorder %s28, 0
    %p468 = por %p466, %p467
    %p469 = scmp.ne.s32.totalorder %s461, %s463
    %p470 = scmp.eq.s32.totalorder %s33, 1
    %p471 = por %p469, %p470
    %p472 = scmp.ne.s32.totalorder %s463, %s464
    %p473 = scmp.eq.s32.totalorder %s33, 0
    %p474 = por %p472, %p473
    %p475 = scmp.ne.s32.totalorder %s463, %s464
    %p476 = scmp.eq.s32.totalorder %s34, 1
    %p477 = por %p475, %p476
    %p479 = scmp.ne.s32.totalorder %s464, %s478
    %p480 = scmp.eq.s32.totalorder %s34, 0
    %p481 = por %p479, %p480
    %s483 = sadd.s32 %s482, 1
    %p486 = scmp.eq.s32.totalorder %s28, 1
    %p487 = scmp.ne.s32.totalorder %s482, %s484
    %p488 = scmp.eq.s32.totalorder %s28, 0
    %p489 = por %p487, %p488
    %p490 = scmp.ne.s32.totalorder %s482, %s484
    %p491 = scmp.eq.s32.totalorder %s33, 1
    %p492 = por %p490, %p491
    %p493 = scmp.ne.s32.totalorder %s484, %s485
    %p494 = scmp.eq.s32.totalorder %s33, 0
    %p495 = por %p493, %p494
    %p496 = scmp.ne.s32.totalorder %s484, %s485
    %p497 = scmp.eq.s32.totalorder %s34, 1
    %p498 = por %p496, %p497
    %p500 = scmp.ne.s32.totalorder %s485, %s499
    %p501 = scmp.eq.s32.totalorder %s34, 0
    %p502 = por %p500, %p501
    %s503 = ssub.s32 %s28, %s35
    %p504 = scmp.eq.s32.totalorder %s503, 0
    %s506 = sadd.s32 %s505, 1
    %s507 = scalar_select %p504, %s505, %s506
    %p510 = pneg %p504
    %p511 = scmp.eq.s32.totalorder %s28, 1
    %p512 = por %p510, %p511
    %p513 = scmp.ne.s32.totalorder %s505, %s508
    %p514 = scmp.eq.s32.totalorder %s28, 0
    %p515 = por %p513, %p514
    %p516 = scmp.ne.s32.totalorder %s505, %s508
    %p517 = scmp.eq.s32.totalorder %s33, 1
    %p518 = por %p516, %p517
    %p519 = scmp.ne.s32.totalorder %s508, %s509
    %p520 = scmp.eq.s32.totalorder %s33, 0
    %p521 = por %p519, %p520
    %p522 = scmp.ne.s32.totalorder %s508, %s509
    %p523 = scmp.eq.s32.totalorder %s34, 1
    %p524 = por %p522, %p523
    %p526 = scmp.ne.s32.totalorder %s509, %s525
    %p527 = scmp.eq.s32.totalorder %s34, 0
    %p528 = por %p526, %p527
    %p529 = scmp.le.s32.totalorder 1, %s28
    %p530 = scmp.lt.s32.totalorder %s28, 3
    %p531 = pnand %p529, %p530
    %p532 = pneg %p531
    // Predicated region
    $region9: #{tpu_custom_call.1} parent=5 // pred_check
      _
    $region10: #{tpu_custom_call.1} parent=5 // pred_check_branch
      %534 = sbr.rel (%p531) target = $region12
    $region11: #{tpu_custom_call.1} parent=5 // pred_region
      %s535 = ssub.s32 %s28, 1
      // Predicated region
      $region13: #{tpu_custom_call.1} parent=11 // pred_check
        %p536 = pneg %p75
      $region14: #{tpu_custom_call.1} parent=11 // pred_check_branch
        %538 = sbr.rel (%p536) target = $region16
      $region15: #{tpu_custom_call.1} parent=11 // pred_region
        _
      $region16: #{tpu_custom_call.1} parent=11 // pred_fallthru
        _
      // Predicated region
      $region17: #{tpu_custom_call.1} parent=11 // pred_check
        %p539 = pneg %p96
      $region18: #{tpu_custom_call.1} parent=11 // pred_check_branch
        %541 = sbr.rel (%p539) target = $region20
      $region19: #{tpu_custom_call.1} parent=11 // pred_region
        _
      $region20: #{tpu_custom_call.1} parent=11 // pred_fallthru
        _
      // Predicated region
      $region21: #{tpu_custom_call.1} parent=11 // pred_check
        %p542 = pneg %p117
      $region22: #{tpu_custom_call.1} parent=11 // pred_check_branch
        %544 = sbr.rel (%p542) target = $region24
      $region23: #{tpu_custom_call.1} parent=11 // pred_region
        _
      $region24: #{tpu_custom_call.1} parent=11 // pred_fallthru
        _
      // Predicated region
      $region25: #{tpu_custom_call.1} parent=11 // pred_check
        %p545 = pneg %p138
      $region26: #{tpu_custom_call.1} parent=11 // pred_check_branch
        %547 = sbr.rel (%p545) target = $region28
      $region27: #{tpu_custom_call.1} parent=11 // pred_region
        _
      $region28: #{tpu_custom_call.1} parent=11 // pred_fallthru
        _
      // Predicated region
      $region29: #{tpu_custom_call.1} parent=11 // pred_check
        %p548 = pneg %p159
      $region30: #{tpu_custom_call.1} parent=11 // pred_check_branch
        %550 = sbr.rel (%p548) target = $region32
      $region31: #{tpu_custom_call.1} parent=11 // pred_region
        _
      $region32: #{tpu_custom_call.1} parent=11 // pred_fallthru
        _
      // Predicated region
      $region33: #{tpu_custom_call.1} parent=11 // pred_check
        %p551 = pneg %p180
      $region34: #{tpu_custom_call.1} parent=11 // pred_check_branch
        %553 = sbr.rel (%p551) target = $region36
      $region35: #{tpu_custom_call.1} parent=11 // pred_region
        _
      $region36: #{tpu_custom_call.1} parent=11 // pred_fallthru
        _
      // Predicated region
      $region37: #{tpu_custom_call.1} parent=11 // pred_check
        %p554 = pneg %p201
      $region38: #{tpu_custom_call.1} parent=11 // pred_check_branch
        %556 = sbr.rel (%p554) target = $region40
      $region39: #{tpu_custom_call.1} parent=11 // pred_region
        _
      $region40: #{tpu_custom_call.1} parent=11 // pred_fallthru
        _
      // Predicated region
      $region41: #{tpu_custom_call.1} parent=11 // pred_check
        %p557 = pneg %p222
      $region42: #{tpu_custom_call.1} parent=11 // pred_check_branch
        %559 = sbr.rel (%p557) target = $region44
      $region43: #{tpu_custom_call.1} parent=11 // pred_region
        _
      $region44: #{tpu_custom_call.1} parent=11 // pred_fallthru
        _
      // Predicated region
      $region45: #{tpu_custom_call.1} parent=11 // pred_check
        %p560 = pneg %p243
      $region46: #{tpu_custom_call.1} parent=11 // pred_check_branch
        %562 = sbr.rel (%p560) target = $region48
      $region47: #{tpu_custom_call.1} parent=11 // pred_region
        _
      $region48: #{tpu_custom_call.1} parent=11 // pred_fallthru
        _
      // Predicated region
      $region49: #{tpu_custom_call.1} parent=11 // pred_check
        %p563 = pneg %p264
      $region50: #{tpu_custom_call.1} parent=11 // pred_check_branch
        %565 = sbr.rel (%p563) target = $region52
      $region51: #{tpu_custom_call.1} parent=11 // pred_region
        _
      $region52: #{tpu_custom_call.1} parent=11 // pred_fallthru
        _
      // Predicated region
      $region53: #{tpu_custom_call.1} parent=11 // pred_check
        %p566 = pneg %p285
      $region54: #{tpu_custom_call.1} parent=11 // pred_check_branch
        %568 = sbr.rel (%p566) target = $region56
      $region55: #{tpu_custom_call.1} parent=11 // pred_region
        _
      $region56: #{tpu_custom_call.1} parent=11 // pred_fallthru
        _
      // Predicated region
      $region57: #{tpu_custom_call.1} parent=11 // pred_check
        %p569 = pneg %p306
      $region58: #{tpu_custom_call.1} parent=11 // pred_check_branch
        %571 = sbr.rel (%p569) target = $region60
      $region59: #{tpu_custom_call.1} parent=11 // pred_region
        _
      $region60: #{tpu_custom_call.1} parent=11 // pred_fallthru
        _
      // Predicated region
      $region61: #{tpu_custom_call.1} parent=11 // pred_check
        %p572 = pneg %p327
      $region62: #{tpu_custom_call.1} parent=11 // pred_check_branch
        %574 = sbr.rel (%p572) target = $region64
      $region63: #{tpu_custom_call.1} parent=11 // pred_region
        _
      $region64: #{tpu_custom_call.1} parent=11 // pred_fallthru
        _
      // Predicated region
      $region65: #{tpu_custom_call.1} parent=11 // pred_check
        %p575 = pneg %p348
      $region66: #{tpu_custom_call.1} parent=11 // pred_check_branch
        %577 = sbr.rel (%p575) target = $region68
      $region67: #{tpu_custom_call.1} parent=11 // pred_region
        _
      $region68: #{tpu_custom_call.1} parent=11 // pred_fallthru
        _
      // Predicated region
      $region69: #{tpu_custom_call.1} parent=11 // pred_check
        %p578 = pneg %p369
      $region70: #{tpu_custom_call.1} parent=11 // pred_check_branch
        %580 = sbr.rel (%p578) target = $region72
      $region71: #{tpu_custom_call.1} parent=11 // pred_region
        _
      $region72: #{tpu_custom_call.1} parent=11 // pred_fallthru
        _
      // Predicated region
      $region73: #{tpu_custom_call.1} parent=11 // pred_check
        %p581 = pneg %p390
      $region74: #{tpu_custom_call.1} parent=11 // pred_check_branch
        %583 = sbr.rel (%p581) target = $region76
      $region75: #{tpu_custom_call.1} parent=11 // pred_region
        _
      $region76: #{tpu_custom_call.1} parent=11 // pred_fallthru
        _
      // Predicated region
      $region77: #{tpu_custom_call.1} parent=11 // pred_check
        %p584 = pneg %p411
      $region78: #{tpu_custom_call.1} parent=11 // pred_check_branch
        %586 = sbr.rel (%p584) target = $region80
      $region79: #{tpu_custom_call.1} parent=11 // pred_region
        _
      $region80: #{tpu_custom_call.1} parent=11 // pred_fallthru
        _
      // Predicated region
      $region81: #{tpu_custom_call.1} parent=11 // pred_check
        %p587 = pneg %p432
      $region82: #{tpu_custom_call.1} parent=11 // pred_check_branch
        %589 = sbr.rel (%p587) target = $region84
      $region83: #{tpu_custom_call.1} parent=11 // pred_region
        _
      $region84: #{tpu_custom_call.1} parent=11 // pred_fallthru
        _
      // Predicated region
      $region85: #{tpu_custom_call.1} parent=11 // pred_check
        %p590 = pneg %p453
      $region86: #{tpu_custom_call.1} parent=11 // pred_check_branch
        %592 = sbr.rel (%p590) target = $region88
      $region87: #{tpu_custom_call.1} parent=11 // pred_region
        _
      $region88: #{tpu_custom_call.1} parent=11 // pred_fallthru
        _
      // Predicated region
      $region89: #{tpu_custom_call.1} parent=11 // pred_check
        %p593 = pneg %p474
      $region90: #{tpu_custom_call.1} parent=11 // pred_check_branch
        %595 = sbr.rel (%p593) target = $region92
      $region91: #{tpu_custom_call.1} parent=11 // pred_region
        _
      $region92: #{tpu_custom_call.1} parent=11 // pred_fallthru
        _
      // Predicated region
      $region93: #{tpu_custom_call.1} parent=11 // pred_check
        %p596 = pneg %p495
      $region94: #{tpu_custom_call.1} parent=11 // pred_check_branch
        %598 = sbr.rel (%p596) target = $region96
      $region95: #{tpu_custom_call.1} parent=11 // pred_region
        _
      $region96: #{tpu_custom_call.1} parent=11 // pred_fallthru
        _
    $region12: #{tpu_custom_call.1} parent=5 // pred_fallthru
      _
    %p599 = scmp.lt.s32.totalorder %s28, 2
    // Predicated region
    $region97: #{tpu_custom_call.1} parent=5 // pred_check
      %p600 = pneg %p599
    $region98: #{tpu_custom_call.1} parent=5 // pred_check_branch
      %602 = sbr.rel (%p600) target = $region100
    $region99: #{tpu_custom_call.1} parent=5 // pred_region
      // Predicated region
      $region101: #{tpu_custom_call.1} parent=99 // pred_check
        %p603 = pneg %p48
      $region102: #{tpu_custom_call.1} parent=99 // pred_check_branch
        %605 = sbr.rel (%p603) target = $region104
      $region103: #{tpu_custom_call.1} parent=99 // pred_region
        %p606 = scmp.lt.s32.totalorder %s28, 1
        %s607 = scalar_select %p606, %s28, 1
        %s608 = smul.addr %s607, 34
        %s609 = smul.addr %s608, 4
        %s610 = scalar_lea.vmem %s0, %s609
      $region104: #{tpu_custom_call.1} parent=99 // pred_fallthru
        _
    $region100: #{tpu_custom_call.1} parent=5 // pred_fallthru
      _
    %p611 = scmp.le.s32.totalorder 1, %s28
    %p612 = scmp.lt.s32.totalorder %s28, 3
    %p613 = pnand %p611, %p612
    %p614 = pneg %p613
    // Predicated region
    $region105: #{tpu_custom_call.1} parent=5 // pred_check
      _
    $region106: #{tpu_custom_call.1} parent=5 // pred_check_branch
      %616 = sbr.rel (%p613) target = $region108
    $region107: #{tpu_custom_call.1} parent=5 // pred_region
      %s617 = ssub.s32 %s28, 1
      %p618 = scmp.lt.s32.totalorder %s33, 1
      %s619 = scalar_select %p618, %s33, 1
      %s620 = smul.addr %s619, 34
      %s621 = smul.addr %s620, 4
      %s622 = scalar_lea.vmem %s0, %s621
      %p623 = pneg %p54
      %p624 = pneg %p51
      %p625 = pneg %p75
      %p626 = pneg %p72
      %p627 = pneg %p96
      %p628 = pneg %p93
      %p629 = pneg %p117
      %p630 = pneg %p114
      %p631 = pneg %p138
      %p632 = pneg %p135
      %p633 = pneg %p159
      %p634 = pneg %p156
      %p635 = pneg %p180
      %p636 = pneg %p177
      %p637 = pneg %p201
      %p638 = pneg %p198
      %p639 = pneg %p222
      %p640 = pneg %p219
      %p641 = pneg %p243
      %p642 = pneg %p240
      %p643 = pneg %p264
      %p644 = pneg %p261
      %p645 = pneg %p285
      %p646 = pneg %p282
      %p647 = pneg %p306
      %p648 = pneg %p303
      %p649 = pneg %p327
      %p650 = pneg %p324
      %p651 = pneg %p348
      %p652 = pneg %p345
      %p653 = pneg %p369
      %p654 = pneg %p366
      %p655 = pneg %p390
      %p656 = pneg %p387
      %p657 = pneg %p411
      %p658 = pneg %p408
      %p659 = pneg %p432
      %p660 = pneg %p429
      %p661 = pneg %p453
      %p662 = pneg %p450
      %p663 = pneg %p474
      %p664 = pneg %p471
      %p665 = pneg %p495
      %p666 = pneg %p492
      %p667 = pneg %p521
      %p668 = pneg %p518
      %p669 = scmp.lt.s32.totalorder %s33, 1
      %s670 = scalar_select %p669, %s33, 1
      %s671 = smul.addr %s670, 224
      %s672 = smul.addr %s671, 4
      %s673 = scalar_lea.vmem %s22, %s672
      %p674 = scmp.lt.s32.totalorder %s33, 1
      %s675 = scalar_select %p674, %s33, 1
      %s676 = smul.addr %s675, 34
      %s677 = smul.addr %s676, 4
      %s678 = scalar_lea.vmem %s0, %s677
      %p679 = scmp.lt.s32.totalorder %s33, 1
      %s680 = scalar_select %p679, %s33, 1
      %s681 = smul.addr %s680, 224
      %s682 = smul.addr %s681, 4
      %s683 = scalar_lea.vmem %s22, %s682
      %v685 = vld [vmem:[%s1] sm:$0xff]
      %v686 = vld [vmem:[%s1 + $0x8] sm:$0xff]
      %v687 = vld [vmem:[%s1 + $0x10] sm:$0xff]
      %v688 = vld [vmem:[%s1 + $0x18] sm:$0xff]
      %v689 = vld [vmem:[%s1 + $0x20] sm:$0xff]
      %v690 = vld [vmem:[%s1 + $0x28] sm:$0xff]
      %v691 = vld [vmem:[%s1 + $0x30] sm:$0xff]
      %v692 = vld [vmem:[%s1 + $0x38] sm:$0xff]
      %v693 = vld [vmem:[%s1 + $0x40] sm:$0xff]
      %v694 = vld [vmem:[%s1 + $0x48] sm:$0xff]
      %v695 = vld [vmem:[%s1 + $0x50] sm:$0xff]
      %v696 = vld [vmem:[%s1 + $0x58] sm:$0xff]
      %v697 = vld [vmem:[%s1 + $0x60] sm:$0xff]
      %v698 = vld [vmem:[%s1 + $0x68] sm:$0xff]
      %v699 = vld [vmem:[%s1 + $0x70] sm:$0xff]
      %v700 = vld [vmem:[%s1 + $0x78] sm:$0xff]
      %v701 = vld [vmem:[%s1 + $0x80] sm:$0xff]
      %v702 = vld [vmem:[%s1 + $0x88] sm:$0xff]
      %v703 = vld [vmem:[%s1 + $0x90] sm:$0xff]
      %v704 = vld [vmem:[%s1 + $0x98] sm:$0xff]
      %v705 = vld [vmem:[%s1 + $0xa0] sm:$0xff]
      %v706 = vld [vmem:[%s1 + $0xa8] sm:$0xff]
      %v707 = vld [vmem:[%s1 + $0xb0] sm:$0xff]
      %v708 = vld [vmem:[%s1 + $0xb8] sm:$0xff]
      %v709 = vld [vmem:[%s1 + $0xc0] sm:$0xff]
      %v710 = vld [vmem:[%s1 + $0xc8] sm:$0xff]
      %v711 = vld [vmem:[%s1 + $0xd0] sm:$0xff]
      %v712 = vld [vmem:[%s1 + $0xd8] sm:$0xff]
      %vm713 = vcmask 257024
      %714 = vst.msk [vmem:[#allocation2] sm:$0xf] %vm713, 0
      %715 = vst.msk [vmem:[#allocation2 + $0x4] sm:$0xf] %vm713, 0
      %716 = vst.msk [vmem:[#allocation2 + $0x8] sm:$0xf] %vm713, 0
      %717 = vst.msk [vmem:[#allocation2 + $0xc] sm:$0xf] %vm713, 0
      %718 = vst.msk [vmem:[#allocation2 + $0x10] sm:$0xf] %vm713, 0
      %719 = vst.msk [vmem:[#allocation2 + $0x14] sm:$0xf] %vm713, 0
      %720 = vst.msk [vmem:[#allocation2 + $0x88] sm:$0xf] %vm713, 0
      %721 = vst.msk [vmem:[#allocation2 + $0x8c] sm:$0xf] %vm713, 0
      %722 = vst.msk [vmem:[#allocation2 + $0x90] sm:$0xf] %vm713, 0
      %723 = vst.msk [vmem:[#allocation2 + $0x94] sm:$0xf] %vm713, 0
      %724 = vst.msk [vmem:[#allocation2 + $0x98] sm:$0xf] %vm713, 0
      %725 = vst.msk [vmem:[#allocation2 + $0x9c] sm:$0xf] %vm713, 0
      %726 = vst.msk [vmem:[#allocation3] sm:$0xf] %vm713, 0
      %727 = vst.msk [vmem:[#allocation3 + $0x4] sm:$0xf] %vm713, 0
      %728 = vst.msk [vmem:[#allocation3 + $0x8] sm:$0xf] %vm713, 0
      %729 = vst.msk [vmem:[#allocation3 + $0xc] sm:$0xf] %vm713, 0
      %730 = vst.msk [vmem:[#allocation3 + $0x10] sm:$0xf] %vm713, 0
      %731 = vst.msk [vmem:[#allocation3 + $0x14] sm:$0xf] %vm713, 0
      %732 = vst.msk [vmem:[#allocation3 + $0x88] sm:$0xf] %vm713, 0
      %733 = vst.msk [vmem:[#allocation3 + $0x8c] sm:$0xf] %vm713, 0
      %734 = vst.msk [vmem:[#allocation3 + $0x90] sm:$0xf] %vm713, 0
      %735 = vst.msk [vmem:[#allocation3 + $0x94] sm:$0xf] %vm713, 0
      %736 = vst.msk [vmem:[#allocation3 + $0x98] sm:$0xf] %vm713, 0
      %737 = vst.msk [vmem:[#allocation3 + $0x9c] sm:$0xf] %vm713, 0
      %v738 = vld [vmem:[%s678 + $0xc] sm:$0xf]
      %v739 = vld [vmem:[%s678 + $0x10] sm:$0xf]
      %v740 = vld [vmem:[%s678 + $0x14] sm:$0xf]
      %v741 = vld [vmem:[%s678 + $0x18] sm:$0xf]
      %v742 = vld [vmem:[%s678 + $0x1c] sm:$0xf]
      %v743 = vld [vmem:[%s678 + $0x20] sm:$0xf]
      %v744 = vld [vmem:[%s678 + $0x24] sm:$0xf]
      %v745 = vld [vmem:[%s678 + $0x28] sm:$0xf]
      %v746 = vld [vmem:[%s678 + $0x2c] sm:$0xf]
      %v747 = vld [vmem:[%s678 + $0x30] sm:$0xf]
      %v748 = vld [vmem:[%s678 + $0x34] sm:$0xf]
      %v749 = vld [vmem:[%s678 + $0x38] sm:$0xf]
      %v750 = vld [vmem:[%s678 + $0x3c] sm:$0xf]
      %v751 = vld [vmem:[%s678 + $0x40] sm:$0xf]
      %v752 = vld [vmem:[%s678 + $0x44] sm:$0xf]
      %v753 = vld [vmem:[%s678 + $0x48] sm:$0xf]
      %v754 = vld [vmem:[%s678 + $0x4c] sm:$0xf]
      %v755 = vld [vmem:[%s678 + $0x50] sm:$0xf]
      %v756 = vld [vmem:[%s678 + $0x54] sm:$0xf]
      %v757 = vld [vmem:[%s678 + $0x58] sm:$0xf]
      %v758 = vld [vmem:[%s678 + $0x5c] sm:$0xf]
      %v759 = vld [vmem:[%s678 + $0x60] sm:$0xf]
      %v760 = vld [vmem:[%s678 + $0x64] sm:$0xf]
      %v761 = vld [vmem:[%s678 + $0x68] sm:$0xf]
      %v762 = vld [vmem:[%s678 + $0x6c] sm:$0xf]
      %v763 = vld [vmem:[%s678 + $0x70] sm:$0xf]
      %v764 = vld [vmem:[%s678 + $0x74] sm:$0xf]
      %v765 = vld [vmem:[%s678 + $0x78] sm:$0xf]
      %v766 = vld [vmem:[%s2] sm:$0xff]
      %v767 = vld [vmem:[%s2 + $0x8] sm:$0xff]
      %v768 = vld [vmem:[%s2 + $0x10] sm:$0xff]
      %v769 = vld [vmem:[%s2 + $0x18] sm:$0xff]
      %v770 = vld [vmem:[%s2 + $0x20] sm:$0xff]
      %v771 = vld [vmem:[%s2 + $0x28] sm:$0xff]
      %v772 = vld [vmem:[%s2 + $0x30] sm:$0xff]
      %v773 = vld [vmem:[%s2 + $0x38] sm:$0xff]
      %v774 = vld [vmem:[%s3] sm:$0x3]
      %v776 = vlaneseq
      %v777 = vshrl.u32 %v776, 7
      %v778 = vsub.s32 0, %v777
      %v779 = vrot.slane %v774, %v778
      %v780 = vlaneseq
      %v781 = vshrl.u32 %v780, 7
      %v782 = vsub.s32 1, %v781
      %v783 = vrot.slane %v774, %v782
      %v814 = vunpack.c.l.b16 %v738
      %v815 = vunpack.c.l.b16 %v739
      %v816 = vunpack.c.l.b16 %v740
      %v817 = vunpack.c.l.b16 %v741
      %v818 = vunpack.c.l.b16 %v742
      %v819 = vunpack.c.l.b16 %v743
      %v820 = vunpack.c.l.b16 %v744
      %v821 = vunpack.c.l.b16 %v745
      %v822 = vunpack.c.l.b16 %v746
      %v823 = vunpack.c.l.b16 %v747
      %v824 = vunpack.c.l.b16 %v748
      %v825 = vunpack.c.l.b16 %v749
      %v826 = vunpack.c.l.b16 %v750
      %v827 = vunpack.c.l.b16 %v751
      %v828 = vunpack.c.l.b16 %v752
      %v829 = vunpack.c.l.b16 %v753
      %v830 = vunpack.c.l.b16 %v754
      %v831 = vunpack.c.l.b16 %v755
      %v832 = vunpack.c.l.b16 %v756
      %v833 = vunpack.c.l.b16 %v757
      %v834 = vunpack.c.l.b16 %v758
      %v835 = vunpack.c.l.b16 %v759
      %v836 = vunpack.c.l.b16 %v760
      %v837 = vunpack.c.l.b16 %v761
      %v838 = vunpack.c.l.b16 %v762
      %v839 = vunpack.c.l.b16 %v763
      %v840 = vunpack.c.l.b16 %v764
      %v841 = vunpack.c.l.b16 %v765
      %v842 = vpack.c.b16 %v815, %v814
      %v843 = vpack.c.b16 %v817, %v816
      %v844 = vpack.c.b16 %v819, %v818
      %v845 = vpack.c.b16 %v821, %v820
      %v846 = vpack.c.b16 %v823, %v822
      %v847 = vpack.c.b16 %v825, %v824
      %v848 = vpack.c.b16 %v827, %v826
      %v849 = vpack.c.b16 %v829, %v828
      %v850 = vpack.c.b16 %v831, %v830
      %v851 = vpack.c.b16 %v833, %v832
      %v852 = vpack.c.b16 %v835, %v834
      %v853 = vpack.c.b16 %v837, %v836
      %v854 = vpack.c.b16 %v839, %v838
      %v855 = vpack.c.b16 %v841, %v840
      %v864 = vunpack.c.l.b16 %v766
      %v865 = vunpack.c.h.b16 %v766
      %v866 = vunpack.c.l.b16 %v767
      %v867 = vunpack.c.h.b16 %v767
      %v868 = vunpack.c.l.b16 %v768
      %v869 = vunpack.c.h.b16 %v768
      %v870 = vunpack.c.l.b16 %v769
      %v871 = vunpack.c.h.b16 %v769
      %v872 = vunpack.c.l.b16 %v770
      %v873 = vunpack.c.h.b16 %v770
      %v874 = vunpack.c.l.b16 %v771
      %v875 = vunpack.c.h.b16 %v771
      %v876 = vunpack.c.l.b16 %v772
      %v877 = vunpack.c.h.b16 %v772
      %v878 = vunpack.c.l.b16 %v773
      %v879 = vunpack.c.h.b16 %v773
      %v880 = vpack.c.b16 %v866, %v864
      %v881 = vpack.c.b16 %v867, %v865
      %v882 = vpack.c.b16 %v870, %v868
      %v883 = vpack.c.b16 %v871, %v869
      %v884 = vpack.c.b16 %v874, %v872
      %v885 = vpack.c.b16 %v875, %v873
      %v886 = vpack.c.b16 %v878, %v876
      %v887 = vpack.c.b16 %v879, %v877
      %vm896 = vcmask 523264
      %v898 = vsel %vm896, %v842, 0
      %v901 = vsel %vm896, %v843, 0
      %v904 = vsel %vm896, %v844, 0
      %v907 = vsel %vm896, %v845, 0
      %v910 = vsel %vm896, %v846, 0
      %v913 = vsel %vm896, %v847, 0
      %v916 = vsel %vm896, %v848, 0
      %v919 = vsel %vm896, %v849, 0
      %v922 = vsel %vm896, %v850, 0
      %v925 = vsel %vm896, %v851, 0
      %v928 = vsel %vm896, %v852, 0
      %v931 = vsel %vm896, %v853, 0
      %v934 = vsel %vm896, %v854, 0
      %v937 = vsel %vm896, %v855, 0
      %939 = vmatprep.subr.bf16.mxu0 0
      %940 = vmatpush1.bf16.msra.mxu0 0
      %941 = vmatprep.subr.bf16.mxu0 0
      %942 = vmatpush1.bf16.msra.mxu0 0
      %943 = vmatprep.subr.bf16.mxu0 0
      %944 = vmatpush1.bf16.msra.mxu0 0
      %945 = vmatprep.subr.bf16.mxu0 0
      %946 = vmatpush1.bf16.msra.mxu0 0
      %947 = vmatprep.subr.bf16.mxu0 %v887
      %948 = vmatpush1.bf16.msra.mxu0 %v886
      %949 = vmatprep.subr.bf16.mxu0 %v885
      %950 = vmatpush1.bf16.msra.mxu0 %v884
      %951 = vmatprep.subr.bf16.mxu0 %v883
      %952 = vmatpush1.bf16.msra.mxu0 %v882
      %953 = vmatprep.subr.bf16.mxu0 %v881
      %954 = vmatpush1.bf16.msra.mxu0 %v880
      %955 = vmatprep.subr.bf16.mxu0 0
      %956 = vmatpush2.bf16.msra.mxu0 0
      %957 = vmatprep.subr.bf16.mxu0 0
      %958 = vmatpush2.bf16.msra.mxu0 0
      %959 = vmatprep.subr.bf16.mxu0 0
      %960 = vmatpush2.bf16.msra.mxu0 0
      %961 = vmatprep.subr.bf16.mxu0 0
      %962 = vmatpush2.bf16.msra.mxu0 0
      %963 = vmatprep.subr.bf16.mxu0 0
      %964 = vmatpush2.bf16.msra.mxu0 0
      %965 = vmatprep.subr.bf16.mxu0 0
      %966 = vmatpush2.bf16.msra.mxu0 0
      %967 = vmatprep.subr.bf16.mxu0 0
      %968 = vmatpush2.bf16.msra.mxu0 0
      %969 = vmatprep.subr.bf16.mxu0 0
      %970 = vmatpush2.bf16.msra.mxu0 0
      %971 = vmatprep.mubr.bf16.mxu0 0
      %972 = vmatmul.mubr.bf16.gmra.mxu0 %v898
      %v973 = vpop.f32.mrf.mxu0
      %v974 = vadd.f32 %v779, %v973
      %v975 = vpop.f32.mrf.mxu0
      %v976 = vadd.f32 %v783, %v975
      %v977 = vpop.f32.mrf.mxu0
      %v978 = vadd.f32 %v779, %v977
      %v979 = vpop.f32.mrf.mxu0
      %v980 = vadd.f32 %v783, %v979
      %981 = vmatprep.mubr.bf16.mxu0 0
      %982 = vmatmul.mubr.bf16.gmra.mxu0 %v901
      %v983 = vpop.f32.mrf.mxu0
      %v984 = vadd.f32 %v779, %v983
      %v985 = vpop.f32.mrf.mxu0
      %v986 = vadd.f32 %v783, %v985
      %v987 = vpop.f32.mrf.mxu0
      %v988 = vadd.f32 %v779, %v987
      %v989 = vpop.f32.mrf.mxu0
      %v990 = vadd.f32 %v783, %v989
      %991 = vmatprep.mubr.bf16.mxu0 0
      %992 = vmatmul.mubr.bf16.gmra.mxu0 %v904
      %v993 = vpop.f32.mrf.mxu0
      %v994 = vadd.f32 %v779, %v993
      %v995 = vpop.f32.mrf.mxu0
      %v996 = vadd.f32 %v783, %v995
      %v997 = vpop.f32.mrf.mxu0
      %v998 = vadd.f32 %v779, %v997
      %v999 = vpop.f32.mrf.mxu0
      %v1000 = vadd.f32 %v783, %v999
      %1001 = vmatprep.mubr.bf16.mxu0 0
      %1002 = vmatmul.mubr.bf16.gmra.mxu0 %v907
      %v1003 = vpop.f32.mrf.mxu0
      %v1004 = vadd.f32 %v779, %v1003
      %v1005 = vpop.f32.mrf.mxu0
      %v1006 = vadd.f32 %v783, %v1005
      %v1007 = vpop.f32.mrf.mxu0
      %v1008 = vadd.f32 %v779, %v1007
      %v1009 = vpop.f32.mrf.mxu0
      %v1010 = vadd.f32 %v783, %v1009
      %1011 = vmatprep.mubr.bf16.mxu0 0
      %1012 = vmatmul.mubr.bf16.gmra.mxu0 %v910
      %v1013 = vpop.f32.mrf.mxu0
      %v1014 = vadd.f32 %v779, %v1013
      %v1015 = vpop.f32.mrf.mxu0
      %v1016 = vadd.f32 %v783, %v1015
      %v1017 = vpop.f32.mrf.mxu0
      %v1018 = vadd.f32 %v779, %v1017
      %v1019 = vpop.f32.mrf.mxu0
      %v1020 = vadd.f32 %v783, %v1019
      %1021 = vmatprep.mubr.bf16.mxu0 0
      %1022 = vmatmul.mubr.bf16.gmra.mxu0 %v913
      %v1023 = vpop.f32.mrf.mxu0
      %v1024 = vadd.f32 %v779, %v1023
      %v1025 = vpop.f32.mrf.mxu0
      %v1026 = vadd.f32 %v783, %v1025
      %v1027 = vpop.f32.mrf.mxu0
      %v1028 = vadd.f32 %v779, %v1027
      %v1029 = vpop.f32.mrf.mxu0
      %v1030 = vadd.f32 %v783, %v1029
      %1031 = vmatprep.mubr.bf16.mxu0 0
      %1032 = vmatmul.mubr.bf16.gmra.mxu0 %v916
      %v1033 = vpop.f32.mrf.mxu0
      %v1034 = vadd.f32 %v779, %v1033
      %v1035 = vpop.f32.mrf.mxu0
      %v1036 = vadd.f32 %v783, %v1035
      %v1037 = vpop.f32.mrf.mxu0
      %v1038 = vadd.f32 %v779, %v1037
      %v1039 = vpop.f32.mrf.mxu0
      %v1040 = vadd.f32 %v783, %v1039
      %1041 = vmatprep.mubr.bf16.mxu0 0
      %1042 = vmatmul.mubr.bf16.gmra.mxu0 %v919
      %v1043 = vpop.f32.mrf.mxu0
      %v1044 = vadd.f32 %v779, %v1043
      %v1045 = vpop.f32.mrf.mxu0
      %v1046 = vadd.f32 %v783, %v1045
      %v1047 = vpop.f32.mrf.mxu0
      %v1048 = vadd.f32 %v779, %v1047
      %v1049 = vpop.f32.mrf.mxu0
      %v1050 = vadd.f32 %v783, %v1049
      %1051 = vmatprep.mubr.bf16.mxu0 0
      %1052 = vmatmul.mubr.bf16.gmra.mxu0 %v922
      %v1053 = vpop.f32.mrf.mxu0
      %v1054 = vadd.f32 %v779, %v1053
      %v1055 = vpop.f32.mrf.mxu0
      %v1056 = vadd.f32 %v783, %v1055
      %v1057 = vpop.f32.mrf.mxu0
      %v1058 = vadd.f32 %v779, %v1057
      %v1059 = vpop.f32.mrf.mxu0
      %v1060 = vadd.f32 %v783, %v1059
      %1061 = vmatprep.mubr.bf16.mxu0 0
      %1062 = vmatmul.mubr.bf16.gmra.mxu0 %v925
      %v1063 = vpop.f32.mrf.mxu0
      %v1064 = vadd.f32 %v779, %v1063
      %v1065 = vpop.f32.mrf.mxu0
      %v1066 = vadd.f32 %v783, %v1065
      %v1067 = vpop.f32.mrf.mxu0
      %v1068 = vadd.f32 %v779, %v1067
      %v1069 = vpop.f32.mrf.mxu0
      %v1070 = vadd.f32 %v783, %v1069
      %1071 = vmatprep.mubr.bf16.mxu0 0
      %1072 = vmatmul.mubr.bf16.gmra.mxu0 %v928
      %v1073 = vpop.f32.mrf.mxu0
      %v1074 = vadd.f32 %v779, %v1073
      %v1075 = vpop.f32.mrf.mxu0
      %v1076 = vadd.f32 %v783, %v1075
      %v1077 = vpop.f32.mrf.mxu0
      %v1078 = vadd.f32 %v779, %v1077
      %v1079 = vpop.f32.mrf.mxu0
      %v1080 = vadd.f32 %v783, %v1079
      %1081 = vmatprep.mubr.bf16.mxu0 0
      %1082 = vmatmul.mubr.bf16.gmra.mxu0 %v931
      %v1083 = vpop.f32.mrf.mxu0
      %v1084 = vadd.f32 %v779, %v1083
      %v1085 = vpop.f32.mrf.mxu0
      %v1086 = vadd.f32 %v783, %v1085
      %v1087 = vpop.f32.mrf.mxu0
      %v1088 = vadd.f32 %v779, %v1087
      %v1089 = vpop.f32.mrf.mxu0
      %v1090 = vadd.f32 %v783, %v1089
      %1091 = vmatprep.mubr.bf16.mxu0 0
      %1092 = vmatmul.mubr.bf16.gmra.mxu0 %v934
      %v1093 = vpop.f32.mrf.mxu0
      %v1094 = vadd.f32 %v779, %v1093
      %v1095 = vpop.f32.mrf.mxu0
      %v1096 = vadd.f32 %v783, %v1095
      %v1097 = vpop.f32.mrf.mxu0
      %v1098 = vadd.f32 %v779, %v1097
      %v1099 = vpop.f32.mrf.mxu0
      %v1100 = vadd.f32 %v783, %v1099
      %1101 = vmatprep.mubr.bf16.mxu0 0
      %1102 = vmatmul.mubr.bf16.gmra.mxu0 %v937
      %v1103 = vpop.f32.mrf.mxu0
      %v1104 = vadd.f32 %v779, %v1103
      %v1105 = vpop.f32.mrf.mxu0
      %v1106 = vadd.f32 %v783, %v1105
      %v1107 = vpop.f32.mrf.mxu0
      %v1108 = vadd.f32 %v779, %v1107
      %v1109 = vpop.f32.mrf.mxu0
      %v1110 = vadd.f32 %v783, %v1109
      %1111 = vdwg.mxu0
      %v1112 = vmax.f32 %v974, 0.0
      %v1113 = vmax.f32 %v976, 0.0
      %v1114 = vmax.f32 %v978, 0.0
      %v1115 = vmax.f32 %v980, 0.0
      %v1116 = vmax.f32 %v984, 0.0
      %v1117 = vmax.f32 %v986, 0.0
      %v1118 = vmax.f32 %v988, 0.0
      %v1119 = vmax.f32 %v990, 0.0
      %v1120 = vmax.f32 %v994, 0.0
      %v1121 = vmax.f32 %v996, 0.0
      %v1122 = vmax.f32 %v998, 0.0
      %v1123 = vmax.f32 %v1000, 0.0
      %v1124 = vmax.f32 %v1004, 0.0
      %v1125 = vmax.f32 %v1006, 0.0
      %v1126 = vmax.f32 %v1008, 0.0
      %v1127 = vmax.f32 %v1010, 0.0
      %v1128 = vmax.f32 %v1014, 0.0
      %v1129 = vmax.f32 %v1016, 0.0
      %v1130 = vmax.f32 %v1018, 0.0
      %v1131 = vmax.f32 %v1020, 0.0
      %v1132 = vmax.f32 %v1024, 0.0
      %v1133 = vmax.f32 %v1026, 0.0
      %v1134 = vmax.f32 %v1028, 0.0
      %v1135 = vmax.f32 %v1030, 0.0
      %v1136 = vmax.f32 %v1034, 0.0
      %v1137 = vmax.f32 %v1036, 0.0
      %v1138 = vmax.f32 %v1038, 0.0
      %v1139 = vmax.f32 %v1040, 0.0
      %v1140 = vmax.f32 %v1044, 0.0
      %v1141 = vmax.f32 %v1046, 0.0
      %v1142 = vmax.f32 %v1048, 0.0
      %v1143 = vmax.f32 %v1050, 0.0
      %v1144 = vmax.f32 %v1054, 0.0
      %v1145 = vmax.f32 %v1056, 0.0
      %v1146 = vmax.f32 %v1058, 0.0
      %v1147 = vmax.f32 %v1060, 0.0
      %v1148 = vmax.f32 %v1064, 0.0
      %v1149 = vmax.f32 %v1066, 0.0
      %v1150 = vmax.f32 %v1068, 0.0
      %v1151 = vmax.f32 %v1070, 0.0
      %v1152 = vmax.f32 %v1074, 0.0
      %v1153 = vmax.f32 %v1076, 0.0
      %v1154 = vmax.f32 %v1078, 0.0
      %v1155 = vmax.f32 %v1080, 0.0
      %v1156 = vmax.f32 %v1084, 0.0
      %v1157 = vmax.f32 %v1086, 0.0
      %v1158 = vmax.f32 %v1088, 0.0
      %v1159 = vmax.f32 %v1090, 0.0
      %v1160 = vmax.f32 %v1094, 0.0
      %v1161 = vmax.f32 %v1096, 0.0
      %v1162 = vmax.f32 %v1098, 0.0
      %v1163 = vmax.f32 %v1100, 0.0
      %v1164 = vmax.f32 %v1104, 0.0
      %v1165 = vmax.f32 %v1106, 0.0
      %v1166 = vmax.f32 %v1108, 0.0
      %v1167 = vmax.f32 %v1110, 0.0
      %v1168 = vpack.c.bf16 %v1114, %v1112
      %v1169 = vpack.c.bf16 %v1115, %v1113
      %v1170 = vpack.c.bf16 %v1118, %v1116
      %v1171 = vpack.c.bf16 %v1119, %v1117
      %v1172 = vpack.c.bf16 %v1122, %v1120
      %v1173 = vpack.c.bf16 %v1123, %v1121
      %v1174 = vpack.c.bf16 %v1126, %v1124
      %v1175 = vpack.c.bf16 %v1127, %v1125
      %v1176 = vpack.c.bf16 %v1130, %v1128
      %v1177 = vpack.c.bf16 %v1131, %v1129
      %v1178 = vpack.c.bf16 %v1134, %v1132
      %v1179 = vpack.c.bf16 %v1135, %v1133
      %v1180 = vpack.c.bf16 %v1138, %v1136
      %v1181 = vpack.c.bf16 %v1139, %v1137
      %v1182 = vpack.c.bf16 %v1142, %v1140
      %v1183 = vpack.c.bf16 %v1143, %v1141
      %v1184 = vpack.c.bf16 %v1146, %v1144
      %v1185 = vpack.c.bf16 %v1147, %v1145
      %v1186 = vpack.c.bf16 %v1150, %v1148
      %v1187 = vpack.c.bf16 %v1151, %v1149
      %v1188 = vpack.c.bf16 %v1154, %v1152
      %v1189 = vpack.c.bf16 %v1155, %v1153
      %v1190 = vpack.c.bf16 %v1158, %v1156
      %v1191 = vpack.c.bf16 %v1159, %v1157
      %v1192 = vpack.c.bf16 %v1162, %v1160
      %v1193 = vpack.c.bf16 %v1163, %v1161
      %v1194 = vpack.c.bf16 %v1166, %v1164
      %v1195 = vpack.c.bf16 %v1167, %v1165
      %v1224 = vunpack.c.l.b16 %v1168
      %v1225 = vunpack.c.l.b16 %v1169
      %v1226 = vunpack.c.h.b16 %v1168
      %v1227 = vunpack.c.h.b16 %v1169
      %v1228 = vunpack.c.l.b16 %v1170
      %v1229 = vunpack.c.l.b16 %v1171
      %v1230 = vunpack.c.h.b16 %v1170
      %v1231 = vunpack.c.h.b16 %v1171
      %v1232 = vunpack.c.l.b16 %v1172
      %v1233 = vunpack.c.l.b16 %v1173
      %v1234 = vunpack.c.h.b16 %v1172
      %v1235 = vunpack.c.h.b16 %v1173
      %v1236 = vunpack.c.l.b16 %v1174
      %v1237 = vunpack.c.l.b16 %v1175
      %v1238 = vunpack.c.h.b16 %v1174
      %v1239 = vunpack.c.h.b16 %v1175
      %v1240 = vunpack.c.l.b16 %v1176
      %v1241 = vunpack.c.l.b16 %v1177
      %v1242 = vunpack.c.h.b16 %v1176
      %v1243 = vunpack.c.h.b16 %v1177
      %v1244 = vunpack.c.l.b16 %v1178
      %v1245 = vunpack.c.l.b16 %v1179
      %v1246 = vunpack.c.h.b16 %v1178
      %v1247 = vunpack.c.h.b16 %v1179
      %v1248 = vunpack.c.l.b16 %v1180
      %v1249 = vunpack.c.l.b16 %v1181
      %v1250 = vunpack.c.h.b16 %v1180
      %v1251 = vunpack.c.h.b16 %v1181
      %v1252 = vunpack.c.l.b16 %v1182
      %v1253 = vunpack.c.l.b16 %v1183
      %v1254 = vunpack.c.h.b16 %v1182
      %v1255 = vunpack.c.h.b16 %v1183
      %v1256 = vunpack.c.l.b16 %v1184
      %v1257 = vunpack.c.l.b16 %v1185
      %v1258 = vunpack.c.h.b16 %v1184
      %v1259 = vunpack.c.h.b16 %v1185
      %v1260 = vunpack.c.l.b16 %v1186
      %v1261 = vunpack.c.l.b16 %v1187
      %v1262 = vunpack.c.h.b16 %v1186
      %v1263 = vunpack.c.h.b16 %v1187
      %v1264 = vunpack.c.l.b16 %v1188
      %v1265 = vunpack.c.l.b16 %v1189
      %v1266 = vunpack.c.h.b16 %v1188
      %v1267 = vunpack.c.h.b16 %v1189
      %v1268 = vunpack.c.l.b16 %v1190
      %v1269 = vunpack.c.l.b16 %v1191
      %v1270 = vunpack.c.h.b16 %v1190
      %v1271 = vunpack.c.h.b16 %v1191
      %v1272 = vunpack.c.l.b16 %v1192
      %v1273 = vunpack.c.l.b16 %v1193
      %v1274 = vunpack.c.h.b16 %v1192
      %v1275 = vunpack.c.h.b16 %v1193
      %v1276 = vunpack.c.l.b16 %v1194
      %v1277 = vunpack.c.l.b16 %v1195
      %v1278 = vunpack.c.h.b16 %v1194
      %v1279 = vunpack.c.h.b16 %v1195
      %v1280 = vpack.c.b16 %v1225, %v1224
      %v1281 = vpack.c.b16 %v1227, %v1226
      %v1282 = vpack.c.b16 %v1229, %v1228
      %v1283 = vpack.c.b16 %v1231, %v1230
      %v1284 = vpack.c.b16 %v1233, %v1232
      %v1285 = vpack.c.b16 %v1235, %v1234
      %v1286 = vpack.c.b16 %v1237, %v1236
      %v1287 = vpack.c.b16 %v1239, %v1238
      %v1288 = vpack.c.b16 %v1241, %v1240
      %v1289 = vpack.c.b16 %v1243, %v1242
      %v1290 = vpack.c.b16 %v1245, %v1244
      %v1291 = vpack.c.b16 %v1247, %v1246
      %v1292 = vpack.c.b16 %v1249, %v1248
      %v1293 = vpack.c.b16 %v1251, %v1250
      %v1294 = vpack.c.b16 %v1253, %v1252
      %v1295 = vpack.c.b16 %v1255, %v1254
      %v1296 = vpack.c.b16 %v1257, %v1256
      %v1297 = vpack.c.b16 %v1259, %v1258
      %v1298 = vpack.c.b16 %v1261, %v1260
      %v1299 = vpack.c.b16 %v1263, %v1262
      %v1300 = vpack.c.b16 %v1265, %v1264
      %v1301 = vpack.c.b16 %v1267, %v1266
      %v1302 = vpack.c.b16 %v1269, %v1268
      %v1303 = vpack.c.b16 %v1271, %v1270
      %v1304 = vpack.c.b16 %v1273, %v1272
      %v1305 = vpack.c.b16 %v1275, %v1274
      %v1306 = vpack.c.b16 %v1277, %v1276
      %v1307 = vpack.c.b16 %v1279, %v1278
      %vm1336 = vcmask 1043456
      %vm1337 = vcmask 523268
      %vm1338 = vmor %vm1337, %vm1336
      %1339 = vst.msk [vmem:[%s683] sm:$0xff] %vm1338, %v1280
      %1340 = vst.msk [vmem:[%s683 + $0x8] sm:$0xff] %vm1338, %v1281
      %1341 = vst.msk [vmem:[%s683 + $0x10] sm:$0xff] %vm1338, %v1282
      %1342 = vst.msk [vmem:[%s683 + $0x18] sm:$0xff] %vm1338, %v1283
      %1343 = vst.msk [vmem:[%s683 + $0x20] sm:$0xff] %vm1338, %v1284
      %1344 = vst.msk [vmem:[%s683 + $0x28] sm:$0xff] %vm1338, %v1285
      %1345 = vst.msk [vmem:[%s683 + $0x30] sm:$0xff] %vm1338, %v1286
      %1346 = vst.msk [vmem:[%s683 + $0x38] sm:$0xff] %vm1338, %v1287
      %1347 = vst.msk [vmem:[%s683 + $0x40] sm:$0xff] %vm1338, %v1288
      %1348 = vst.msk [vmem:[%s683 + $0x48] sm:$0xff] %vm1338, %v1289
      %1349 = vst.msk [vmem:[%s683 + $0x50] sm:$0xff] %vm1338, %v1290
      %1350 = vst.msk [vmem:[%s683 + $0x58] sm:$0xff] %vm1338, %v1291
      %1351 = vst.msk [vmem:[%s683 + $0x60] sm:$0xff] %vm1338, %v1292
      %1352 = vst.msk [vmem:[%s683 + $0x68] sm:$0xff] %vm1338, %v1293
      %1353 = vst.msk [vmem:[%s683 + $0x70] sm:$0xff] %vm1338, %v1294
      %1354 = vst.msk [vmem:[%s683 + $0x78] sm:$0xff] %vm1338, %v1295
      %1355 = vst.msk [vmem:[%s683 + $0x80] sm:$0xff] %vm1338, %v1296
      %1356 = vst.msk [vmem:[%s683 + $0x88] sm:$0xff] %vm1338, %v1297
      %1357 = vst.msk [vmem:[%s683 + $0x90] sm:$0xff] %vm1338, %v1298
      %1358 = vst.msk [vmem:[%s683 + $0x98] sm:$0xff] %vm1338, %v1299
      %1359 = vst.msk [vmem:[%s683 + $0xa0] sm:$0xff] %vm1338, %v1300
      %1360 = vst.msk [vmem:[%s683 + $0xa8] sm:$0xff] %vm1338, %v1301
      %1361 = vst.msk [vmem:[%s683 + $0xb0] sm:$0xff] %vm1338, %v1302
      %1362 = vst.msk [vmem:[%s683 + $0xb8] sm:$0xff] %vm1338, %v1303
      %1363 = vst.msk [vmem:[%s683 + $0xc0] sm:$0xff] %vm1338, %v1304
      %1364 = vst.msk [vmem:[%s683 + $0xc8] sm:$0xff] %vm1338, %v1305
      %1365 = vst.msk [vmem:[%s683 + $0xd0] sm:$0xff] %vm1338, %v1306
      %1366 = vst.msk [vmem:[%s683 + $0xd8] sm:$0xff] %vm1338, %v1307
      %v1367 = vld [vmem:[%s678 + $0xc] sm:$0xf]
      %v1368 = vld [vmem:[%s678 + $0x10] sm:$0xf]
      %v1369 = vld [vmem:[%s678 + $0x14] sm:$0xf]
      %v1370 = vld [vmem:[%s678 + $0x18] sm:$0xf]
      %v1371 = vld [vmem:[%s678 + $0x1c] sm:$0xf]
      %v1372 = vld [vmem:[%s678 + $0x20] sm:$0xf]
      %v1373 = vld [vmem:[%s678 + $0x24] sm:$0xf]
      %v1374 = vld [vmem:[%s678 + $0x28] sm:$0xf]
      %v1375 = vld [vmem:[%s678 + $0x2c] sm:$0xf]
      %v1376 = vld [vmem:[%s678 + $0x30] sm:$0xf]
      %v1377 = vld [vmem:[%s678 + $0x34] sm:$0xf]
      %v1378 = vld [vmem:[%s678 + $0x38] sm:$0xf]
      %v1379 = vld [vmem:[%s678 + $0x3c] sm:$0xf]
      %v1380 = vld [vmem:[%s678 + $0x40] sm:$0xf]
      %v1381 = vld [vmem:[%s678 + $0x44] sm:$0xf]
      %v1382 = vld [vmem:[%s678 + $0x48] sm:$0xf]
      %v1383 = vld [vmem:[%s678 + $0x4c] sm:$0xf]
      %v1384 = vld [vmem:[%s678 + $0x50] sm:$0xf]
      %v1385 = vld [vmem:[%s678 + $0x54] sm:$0xf]
      %v1386 = vld [vmem:[%s678 + $0x58] sm:$0xf]
      %v1387 = vld [vmem:[%s678 + $0x5c] sm:$0xf]
      %v1388 = vld [vmem:[%s678 + $0x60] sm:$0xf]
      %v1389 = vld [vmem:[%s678 + $0x64] sm:$0xf]
      %v1390 = vld [vmem:[%s678 + $0x68] sm:$0xf]
      %v1391 = vld [vmem:[%s678 + $0x6c] sm:$0xf]
      %v1392 = vld [vmem:[%s678 + $0x70] sm:$0xf]
      %v1393 = vld [vmem:[%s678 + $0x74] sm:$0xf]
      %v1394 = vld [vmem:[%s678 + $0x78] sm:$0xf]
      %v1395 = vld [vmem:[%s4] sm:$0xf]
      %v1396 = vld [vmem:[%s4 + $0x4] sm:$0xf]
      %v1397 = vld [vmem:[%s4 + $0x8] sm:$0xf]
      %v1398 = vld [vmem:[%s4 + $0xc] sm:$0xf]
      %v1399 = vld [vmem:[%s4 + $0x10] sm:$0xf]
      %v1400 = vld [vmem:[%s4 + $0x14] sm:$0xf]
      %v1401 = vld [vmem:[%s4 + $0x18] sm:$0xf]
      %v1402 = vld [vmem:[%s4 + $0x1c] sm:$0xf]
      %v1403 = vld [vmem:[%s5] sm:$0x1]
      %v1405 = vlaneseq
      %v1406 = vshrl.u32 %v1405, 7
      %v1407 = vsub.s32 0, %v1406
      %v1408 = vrot.slane %v1403, %v1407
      %v1438 = vunpack.c.l.b16 %v1367
      %v1439 = vunpack.c.l.b16 %v1368
      %v1440 = vunpack.c.l.b16 %v1369
      %v1441 = vunpack.c.l.b16 %v1370
      %v1442 = vunpack.c.l.b16 %v1371
      %v1443 = vunpack.c.l.b16 %v1372
      %v1444 = vunpack.c.l.b16 %v1373
      %v1445 = vunpack.c.l.b16 %v1374
      %v1446 = vunpack.c.l.b16 %v1375
      %v1447 = vunpack.c.l.b16 %v1376
      %v1448 = vunpack.c.l.b16 %v1377
      %v1449 = vunpack.c.l.b16 %v1378
      %v1450 = vunpack.c.l.b16 %v1379
      %v1451 = vunpack.c.l.b16 %v1380
      %v1452 = vunpack.c.l.b16 %v1381
      %v1453 = vunpack.c.l.b16 %v1382
      %v1454 = vunpack.c.l.b16 %v1383
      %v1455 = vunpack.c.l.b16 %v1384
      %v1456 = vunpack.c.l.b16 %v1385
      %v1457 = vunpack.c.l.b16 %v1386
      %v1458 = vunpack.c.l.b16 %v1387
      %v1459 = vunpack.c.l.b16 %v1388
      %v1460 = vunpack.c.l.b16 %v1389
      %v1461 = vunpack.c.l.b16 %v1390
      %v1462 = vunpack.c.l.b16 %v1391
      %v1463 = vunpack.c.l.b16 %v1392
      %v1464 = vunpack.c.l.b16 %v1393
      %v1465 = vunpack.c.l.b16 %v1394
      %v1466 = vpack.c.b16 %v1439, %v1438
      %v1467 = vpack.c.b16 %v1441, %v1440
      %v1468 = vpack.c.b16 %v1443, %v1442
      %v1469 = vpack.c.b16 %v1445, %v1444
      %v1470 = vpack.c.b16 %v1447, %v1446
      %v1471 = vpack.c.b16 %v1449, %v1448
      %v1472 = vpack.c.b16 %v1451, %v1450
      %v1473 = vpack.c.b16 %v1453, %v1452
      %v1474 = vpack.c.b16 %v1455, %v1454
      %v1475 = vpack.c.b16 %v1457, %v1456
      %v1476 = vpack.c.b16 %v1459, %v1458
      %v1477 = vpack.c.b16 %v1461, %v1460
      %v1478 = vpack.c.b16 %v1463, %v1462
      %v1479 = vpack.c.b16 %v1465, %v1464
      %v1488 = vunpack.c.l.b16 %v1395
      %v1489 = vunpack.c.l.b16 %v1396
      %v1490 = vunpack.c.l.b16 %v1397
      %v1491 = vunpack.c.l.b16 %v1398
      %v1492 = vunpack.c.l.b16 %v1399
      %v1493 = vunpack.c.l.b16 %v1400
      %v1494 = vunpack.c.l.b16 %v1401
      %v1495 = vunpack.c.l.b16 %v1402
      %v1496 = vpack.c.b16 %v1489, %v1488
      %v1497 = vpack.c.b16 %v1491, %v1490
      %v1498 = vpack.c.b16 %v1493, %v1492
      %v1499 = vpack.c.b16 %v1495, %v1494
      %v1505 = vsel %vm896, %v1466, 0
      %v1508 = vsel %vm896, %v1467, 0
      %v1511 = vsel %vm896, %v1468, 0
      %v1514 = vsel %vm896, %v1469, 0
      %v1517 = vsel %vm896, %v1470, 0
      %v1520 = vsel %vm896, %v1471, 0
      %v1523 = vsel %vm896, %v1472, 0
      %v1526 = vsel %vm896, %v1473, 0
      %v1529 = vsel %vm896, %v1474, 0
      %v1532 = vsel %vm896, %v1475, 0
      %v1535 = vsel %vm896, %v1476, 0
      %v1538 = vsel %vm896, %v1477, 0
      %v1541 = vsel %vm896, %v1478, 0
      %v1544 = vsel %vm896, %v1479, 0
      %1546 = vmatprep.subr.bf16.mxu0 0
      %1547 = vmatpush1.bf16.msra.mxu0 0
      %1548 = vmatprep.subr.bf16.mxu0 0
      %1549 = vmatpush1.bf16.msra.mxu0 0
      %1550 = vmatprep.subr.bf16.mxu0 0
      %1551 = vmatpush1.bf16.msra.mxu0 0
      %1552 = vmatprep.subr.bf16.mxu0 0
      %1553 = vmatpush1.bf16.msra.mxu0 0
      %1554 = vmatprep.subr.bf16.mxu0 0
      %1555 = vmatpush1.bf16.msra.mxu0 %v1499
      %1556 = vmatprep.subr.bf16.mxu0 0
      %1557 = vmatpush1.bf16.msra.mxu0 %v1498
      %1558 = vmatprep.subr.bf16.mxu0 0
      %1559 = vmatpush1.bf16.msra.mxu0 %v1497
      %1560 = vmatprep.subr.bf16.mxu0 0
      %1561 = vmatpush1.bf16.msra.mxu0 %v1496
      %1562 = vmatprep.subr.bf16.mxu0 0
      %1563 = vmatpush2.bf16.msra.mxu0 0
      %1564 = vmatprep.subr.bf16.mxu0 0
      %1565 = vmatpush2.bf16.msra.mxu0 0
      %1566 = vmatprep.subr.bf16.mxu0 0
      %1567 = vmatpush2.bf16.msra.mxu0 0
      %1568 = vmatprep.subr.bf16.mxu0 0
      %1569 = vmatpush2.bf16.msra.mxu0 0
      %1570 = vmatprep.subr.bf16.mxu0 0
      %1571 = vmatpush2.bf16.msra.mxu0 0
      %1572 = vmatprep.subr.bf16.mxu0 0
      %1573 = vmatpush2.bf16.msra.mxu0 0
      %1574 = vmatprep.subr.bf16.mxu0 0
      %1575 = vmatpush2.bf16.msra.mxu0 0
      %1576 = vmatprep.subr.bf16.mxu0 0
      %1577 = vmatpush2.bf16.msra.mxu0 0
      %1578 = vmatprep.mubr.bf16.mxu0 0
      %1579 = vmatmul.mubr.bf16.gmra.mxu0 %v1505
      %v1580 = vpop.f32.mrf.mxu0
      %v1581 = vadd.f32 %v1408, %v1580
      %v1582 = vpop.f32.mrf.mxu0
      %v1583 = vpop.f32.mrf.mxu0
      %v1584 = vadd.f32 %v1408, %v1583
      %v1585 = vpop.f32.mrf.mxu0
      %1586 = vmatprep.mubr.bf16.mxu0 0
      %1587 = vmatmul.mubr.bf16.gmra.mxu0 %v1508
      %v1588 = vpop.f32.mrf.mxu0
      %v1589 = vadd.f32 %v1408, %v1588
      %v1590 = vpop.f32.mrf.mxu0
      %v1591 = vpop.f32.mrf.mxu0
      %v1592 = vadd.f32 %v1408, %v1591
      %v1593 = vpop.f32.mrf.mxu0
      %1594 = vmatprep.mubr.bf16.mxu0 0
      %1595 = vmatmul.mubr.bf16.gmra.mxu0 %v1511
      %v1596 = vpop.f32.mrf.mxu0
      %v1597 = vadd.f32 %v1408, %v1596
      %v1598 = vpop.f32.mrf.mxu0
      %v1599 = vpop.f32.mrf.mxu0
      %v1600 = vadd.f32 %v1408, %v1599
      %v1601 = vpop.f32.mrf.mxu0
      %1602 = vmatprep.mubr.bf16.mxu0 0
      %1603 = vmatmul.mubr.bf16.gmra.mxu0 %v1514
      %v1604 = vpop.f32.mrf.mxu0
      %v1605 = vadd.f32 %v1408, %v1604
      %v1606 = vpop.f32.mrf.mxu0
      %v1607 = vpop.f32.mrf.mxu0
      %v1608 = vadd.f32 %v1408, %v1607
      %v1609 = vpop.f32.mrf.mxu0
      %1610 = vmatprep.mubr.bf16.mxu0 0
      %1611 = vmatmul.mubr.bf16.gmra.mxu0 %v1517
      %v1612 = vpop.f32.mrf.mxu0
      %v1613 = vadd.f32 %v1408, %v1612
      %v1614 = vpop.f32.mrf.mxu0
      %v1615 = vpop.f32.mrf.mxu0
      %v1616 = vadd.f32 %v1408, %v1615
      %v1617 = vpop.f32.mrf.mxu0
      %1618 = vmatprep.mubr.bf16.mxu0 0
      %1619 = vmatmul.mubr.bf16.gmra.mxu0 %v1520
      %v1620 = vpop.f32.mrf.mxu0
      %v1621 = vadd.f32 %v1408, %v1620
      %v1622 = vpop.f32.mrf.mxu0
      %v1623 = vpop.f32.mrf.mxu0
      %v1624 = vadd.f32 %v1408, %v1623
      %v1625 = vpop.f32.mrf.mxu0
      %1626 = vmatprep.mubr.bf16.mxu0 0
      %1627 = vmatmul.mubr.bf16.gmra.mxu0 %v1523
      %v1628 = vpop.f32.mrf.mxu0
      %v1629 = vadd.f32 %v1408, %v1628
      %v1630 = vpop.f32.mrf.mxu0
      %v1631 = vpop.f32.mrf.mxu0
      %v1632 = vadd.f32 %v1408, %v1631
      %v1633 = vpop.f32.mrf.mxu0
      %1634 = vmatprep.mubr.bf16.mxu0 0
      %1635 = vmatmul.mubr.bf16.gmra.mxu0 %v1526
      %v1636 = vpop.f32.mrf.mxu0
      %v1637 = vadd.f32 %v1408, %v1636
      %v1638 = vpop.f32.mrf.mxu0
      %v1639 = vpop.f32.mrf.mxu0
      %v1640 = vadd.f32 %v1408, %v1639
      %v1641 = vpop.f32.mrf.mxu0
      %1642 = vmatprep.mubr.bf16.mxu0 0
      %1643 = vmatmul.mubr.bf16.gmra.mxu0 %v1529
      %v1644 = vpop.f32.mrf.mxu0
      %v1645 = vadd.f32 %v1408, %v1644
      %v1646 = vpop.f32.mrf.mxu0
      %v1647 = vpop.f32.mrf.mxu0
      %v1648 = vadd.f32 %v1408, %v1647
      %v1649 = vpop.f32.mrf.mxu0
      %1650 = vmatprep.mubr.bf16.mxu0 0
      %1651 = vmatmul.mubr.bf16.gmra.mxu0 %v1532
      %v1652 = vpop.f32.mrf.mxu0
      %v1653 = vadd.f32 %v1408, %v1652
      %v1654 = vpop.f32.mrf.mxu0
      %v1655 = vpop.f32.mrf.mxu0
      %v1656 = vadd.f32 %v1408, %v1655
      %v1657 = vpop.f32.mrf.mxu0
      %1658 = vmatprep.mubr.bf16.mxu0 0
      %1659 = vmatmul.mubr.bf16.gmra.mxu0 %v1535
      %v1660 = vpop.f32.mrf.mxu0
      %v1661 = vadd.f32 %v1408, %v1660
      %v1662 = vpop.f32.mrf.mxu0
      %v1663 = vpop.f32.mrf.mxu0
      %v1664 = vadd.f32 %v1408, %v1663
      %v1665 = vpop.f32.mrf.mxu0
      %1666 = vmatprep.mubr.bf16.mxu0 0
      %1667 = vmatmul.mubr.bf16.gmra.mxu0 %v1538
      %v1668 = vpop.f32.mrf.mxu0
      %v1669 = vadd.f32 %v1408, %v1668
      %v1670 = vpop.f32.mrf.mxu0
      %v1671 = vpop.f32.mrf.mxu0
      %v1672 = vadd.f32 %v1408, %v1671
      %v1673 = vpop.f32.mrf.mxu0
      %1674 = vmatprep.mubr.bf16.mxu0 0
      %1675 = vmatmul.mubr.bf16.gmra.mxu0 %v1541
      %v1676 = vpop.f32.mrf.mxu0
      %v1677 = vadd.f32 %v1408, %v1676
      %v1678 = vpop.f32.mrf.mxu0
      %v1679 = vpop.f32.mrf.mxu0
      %v1680 = vadd.f32 %v1408, %v1679
      %v1681 = vpop.f32.mrf.mxu0
      %1682 = vmatprep.mubr.bf16.mxu0 0
      %1683 = vmatmul.mubr.bf16.gmra.mxu0 %v1544
      %v1684 = vpop.f32.mrf.mxu0
      %v1685 = vadd.f32 %v1408, %v1684
      %v1686 = vpop.f32.mrf.mxu0
      %v1687 = vpop.f32.mrf.mxu0
      %v1688 = vadd.f32 %v1408, %v1687
      %v1689 = vpop.f32.mrf.mxu0
      %1690 = vdwg.mxu0
      %v1691 = vmax.f32 %v1581, 0.0
      %v1692 = vmax.f32 %v1584, 0.0
      %v1693 = vmax.f32 %v1589, 0.0
      %v1694 = vmax.f32 %v1592, 0.0
      %v1695 = vmax.f32 %v1597, 0.0
      %v1696 = vmax.f32 %v1600, 0.0
      %v1697 = vmax.f32 %v1605, 0.0
      %v1698 = vmax.f32 %v1608, 0.0
      %v1699 = vmax.f32 %v1613, 0.0
      %v1700 = vmax.f32 %v1616, 0.0
      %v1701 = vmax.f32 %v1621, 0.0
      %v1702 = vmax.f32 %v1624, 0.0
      %v1703 = vmax.f32 %v1629, 0.0
      %v1704 = vmax.f32 %v1632, 0.0
      %v1705 = vmax.f32 %v1637, 0.0
      %v1706 = vmax.f32 %v1640, 0.0
      %v1707 = vmax.f32 %v1645, 0.0
      %v1708 = vmax.f32 %v1648, 0.0
      %v1709 = vmax.f32 %v1653, 0.0
      %v1710 = vmax.f32 %v1656, 0.0
      %v1711 = vmax.f32 %v1661, 0.0
      %v1712 = vmax.f32 %v1664, 0.0
      %v1713 = vmax.f32 %v1669, 0.0
      %v1714 = vmax.f32 %v1672, 0.0
      %v1715 = vmax.f32 %v1677, 0.0
      %v1716 = vmax.f32 %v1680, 0.0
      %v1717 = vmax.f32 %v1685, 0.0
      %v1718 = vmax.f32 %v1688, 0.0
      %1720 = vset.pattern.permute.xlu0 0
      %1721 = vperm.xlu0 %1720, %v685
      %v1722 = vpop.permute.xlu0 %1721
      %1725 = vset.pattern.permute.xlu0 0
      %1726 = vperm.xlu0 %1725, %v686
      %v1727 = vpop.permute.xlu0 %1726
      %1730 = vset.pattern.permute.xlu0 0
      %1731 = vperm.xlu0 %1730, %v687
      %v1732 = vpop.permute.xlu0 %1731
      %1735 = vset.pattern.permute.xlu0 0
      %1736 = vperm.xlu0 %1735, %v688
      %v1737 = vpop.permute.xlu0 %1736
      %1740 = vset.pattern.permute.xlu0 0
      %1741 = vperm.xlu0 %1740, %v689
      %v1742 = vpop.permute.xlu0 %1741
      %1745 = vset.pattern.permute.xlu0 0
      %1746 = vperm.xlu0 %1745, %v690
      %v1747 = vpop.permute.xlu0 %1746
      %1750 = vset.pattern.permute.xlu0 0
      %1751 = vperm.xlu0 %1750, %v691
      %v1752 = vpop.permute.xlu0 %1751
      %1755 = vset.pattern.permute.xlu0 0
      %1756 = vperm.xlu0 %1755, %v692
      %v1757 = vpop.permute.xlu0 %1756
      %1760 = vset.pattern.permute.xlu0 0
      %1761 = vperm.xlu0 %1760, %v693
      %v1762 = vpop.permute.xlu0 %1761
      %1765 = vset.pattern.permute.xlu0 0
      %1766 = vperm.xlu0 %1765, %v694
      %v1767 = vpop.permute.xlu0 %1766
      %1770 = vset.pattern.permute.xlu0 0
      %1771 = vperm.xlu0 %1770, %v695
      %v1772 = vpop.permute.xlu0 %1771
      %1775 = vset.pattern.permute.xlu0 0
      %1776 = vperm.xlu0 %1775, %v696
      %v1777 = vpop.permute.xlu0 %1776
      %1780 = vset.pattern.permute.xlu0 0
      %1781 = vperm.xlu0 %1780, %v697
      %v1782 = vpop.permute.xlu0 %1781
      %1785 = vset.pattern.permute.xlu0 0
      %1786 = vperm.xlu0 %1785, %v698
      %v1787 = vpop.permute.xlu0 %1786
      %1790 = vset.pattern.permute.xlu0 0
      %1791 = vperm.xlu0 %1790, %v699
      %v1792 = vpop.permute.xlu0 %1791
      %1795 = vset.pattern.permute.xlu0 0
      %1796 = vperm.xlu0 %1795, %v700
      %v1797 = vpop.permute.xlu0 %1796
      %1800 = vset.pattern.permute.xlu0 0
      %1801 = vperm.xlu0 %1800, %v701
      %v1802 = vpop.permute.xlu0 %1801
      %1805 = vset.pattern.permute.xlu0 0
      %1806 = vperm.xlu0 %1805, %v702
      %v1807 = vpop.permute.xlu0 %1806
      %1810 = vset.pattern.permute.xlu0 0
      %1811 = vperm.xlu0 %1810, %v703
      %v1812 = vpop.permute.xlu0 %1811
      %1815 = vset.pattern.permute.xlu0 0
      %1816 = vperm.xlu0 %1815, %v704
      %v1817 = vpop.permute.xlu0 %1816
      %1820 = vset.pattern.permute.xlu0 0
      %1821 = vperm.xlu0 %1820, %v705
      %v1822 = vpop.permute.xlu0 %1821
      %1825 = vset.pattern.permute.xlu0 0
      %1826 = vperm.xlu0 %1825, %v706
      %v1827 = vpop.permute.xlu0 %1826
      %1830 = vset.pattern.permute.xlu0 0
      %1831 = vperm.xlu0 %1830, %v707
      %v1832 = vpop.permute.xlu0 %1831
      %1835 = vset.pattern.permute.xlu0 0
      %1836 = vperm.xlu0 %1835, %v708
      %v1837 = vpop.permute.xlu0 %1836
      %1840 = vset.pattern.permute.xlu0 0
      %1841 = vperm.xlu0 %1840, %v709
      %v1842 = vpop.permute.xlu0 %1841
      %1845 = vset.pattern.permute.xlu0 0
      %1846 = vperm.xlu0 %1845, %v710
      %v1847 = vpop.permute.xlu0 %1846
      %1850 = vset.pattern.permute.xlu0 0
      %1851 = vperm.xlu0 %1850, %v711
      %v1852 = vpop.permute.xlu0 %1851
      %1855 = vset.pattern.permute.xlu0 0
      %1856 = vperm.xlu0 %1855, %v712
      %v1857 = vpop.permute.xlu0 %1856
      %v1859 = vmul.f32 %v1691, %v1722
      %v1860 = vmul.f32 %v1692, %v1727
      %v1861 = vmul.f32 %v1693, %v1732
      %v1862 = vmul.f32 %v1694, %v1737
      %v1863 = vmul.f32 %v1695, %v1742
      %v1864 = vmul.f32 %v1696, %v1747
      %v1865 = vmul.f32 %v1697, %v1752
      %v1866 = vmul.f32 %v1698, %v1757
      %v1867 = vmul.f32 %v1699, %v1762
      %v1868 = vmul.f32 %v1700, %v1767
      %v1869 = vmul.f32 %v1701, %v1772
      %v1870 = vmul.f32 %v1702, %v1777
      %v1871 = vmul.f32 %v1703, %v1782
      %v1872 = vmul.f32 %v1704, %v1787
      %v1873 = vmul.f32 %v1705, %v1792
      %v1874 = vmul.f32 %v1706, %v1797
      %v1875 = vmul.f32 %v1707, %v1802
      %v1876 = vmul.f32 %v1708, %v1807
      %v1877 = vmul.f32 %v1709, %v1812
      %v1878 = vmul.f32 %v1710, %v1817
      %v1879 = vmul.f32 %v1711, %v1822
      %v1880 = vmul.f32 %v1712, %v1827
      %v1881 = vmul.f32 %v1713, %v1832
      %v1882 = vmul.f32 %v1714, %v1837
      %v1883 = vmul.f32 %v1715, %v1842
      %v1884 = vmul.f32 %v1716, %v1847
      %v1885 = vmul.f32 %v1717, %v1852
      %v1886 = vmul.f32 %v1718, %v1857
      %v1887 = vpack.c.bf16 %v1860, %v1859
      %v1888 = vpack.c.bf16 %v1862, %v1861
      %v1889 = vpack.c.bf16 %v1864, %v1863
      %v1890 = vpack.c.bf16 %v1866, %v1865
      %v1891 = vpack.c.bf16 %v1868, %v1867
      %v1892 = vpack.c.bf16 %v1870, %v1869
      %v1893 = vpack.c.bf16 %v1872, %v1871
      %v1894 = vpack.c.bf16 %v1874, %v1873
      %v1895 = vpack.c.bf16 %v1876, %v1875
      %v1896 = vpack.c.bf16 %v1878, %v1877
      %v1897 = vpack.c.bf16 %v1880, %v1879
      %v1898 = vpack.c.bf16 %v1882, %v1881
      %v1899 = vpack.c.bf16 %v1884, %v1883
      %v1900 = vpack.c.bf16 %v1886, %v1885
      %v1915 = vunpack.c.l.b16 %v1887
      %v1916 = vunpack.c.h.b16 %v1887
      %v1917 = vunpack.c.l.b16 %v1888
      %v1918 = vunpack.c.h.b16 %v1888
      %v1919 = vunpack.c.l.b16 %v1889
      %v1920 = vunpack.c.h.b16 %v1889
      %v1921 = vunpack.c.l.b16 %v1890
      %v1922 = vunpack.c.h.b16 %v1890
      %v1923 = vunpack.c.l.b16 %v1891
      %v1924 = vunpack.c.h.b16 %v1891
      %v1925 = vunpack.c.l.b16 %v1892
      %v1926 = vunpack.c.h.b16 %v1892
      %v1927 = vunpack.c.l.b16 %v1893
      %v1928 = vunpack.c.h.b16 %v1893
      %v1929 = vunpack.c.l.b16 %v1894
      %v1930 = vunpack.c.h.b16 %v1894
      %v1931 = vunpack.c.l.b16 %v1895
      %v1932 = vunpack.c.h.b16 %v1895
      %v1933 = vunpack.c.l.b16 %v1896
      %v1934 = vunpack.c.h.b16 %v1896
      %v1935 = vunpack.c.l.b16 %v1897
      %v1936 = vunpack.c.h.b16 %v1897
      %v1937 = vunpack.c.l.b16 %v1898
      %v1938 = vunpack.c.h.b16 %v1898
      %v1939 = vunpack.c.l.b16 %v1899
      %v1940 = vunpack.c.h.b16 %v1899
      %v1941 = vunpack.c.l.b16 %v1900
      %v1942 = vunpack.c.h.b16 %v1900
      %v1943 = vpack.c.b16 %v1915, %v1915
      %v1944 = vpack.c.b16 %v1916, %v1916
      %v1945 = vpack.c.b16 %v1917, %v1917
      %v1946 = vpack.c.b16 %v1918, %v1918
      %v1947 = vpack.c.b16 %v1919, %v1919
      %v1948 = vpack.c.b16 %v1920, %v1920
      %v1949 = vpack.c.b16 %v1921, %v1921
      %v1950 = vpack.c.b16 %v1922, %v1922
      %v1951 = vpack.c.b16 %v1923, %v1923
      %v1952 = vpack.c.b16 %v1924, %v1924
      %v1953 = vpack.c.b16 %v1925, %v1925
      %v1954 = vpack.c.b16 %v1926, %v1926
      %v1955 = vpack.c.b16 %v1927, %v1927
      %v1956 = vpack.c.b16 %v1928, %v1928
      %v1957 = vpack.c.b16 %v1929, %v1929
      %v1958 = vpack.c.b16 %v1930, %v1930
      %v1959 = vpack.c.b16 %v1931, %v1931
      %v1960 = vpack.c.b16 %v1932, %v1932
      %v1961 = vpack.c.b16 %v1933, %v1933
      %v1962 = vpack.c.b16 %v1934, %v1934
      %v1963 = vpack.c.b16 %v1935, %v1935
      %v1964 = vpack.c.b16 %v1936, %v1936
      %v1965 = vpack.c.b16 %v1937, %v1937
      %v1966 = vpack.c.b16 %v1938, %v1938
      %v1967 = vpack.c.b16 %v1939, %v1939
      %v1968 = vpack.c.b16 %v1940, %v1940
      %v1969 = vpack.c.b16 %v1941, %v1941
      %v1970 = vpack.c.b16 %v1942, %v1942
      %1999 = vst.msk [vmem:[#allocation2 + $0x18] sm:$0xf] %vm713, %v1943
      %2000 = vst.msk [vmem:[#allocation2 + $0x1c] sm:$0xf] %vm713, %v1944
      %2001 = vst.msk [vmem:[#allocation2 + $0x20] sm:$0xf] %vm713, %v1945
      %2002 = vst.msk [vmem:[#allocation2 + $0x24] sm:$0xf] %vm713, %v1946
      %2003 = vst.msk [vmem:[#allocation2 + $0x28] sm:$0xf] %vm713, %v1947
      %2004 = vst.msk [vmem:[#allocation2 + $0x2c] sm:$0xf] %vm713, %v1948
      %2005 = vst.msk [vmem:[#allocation2 + $0x30] sm:$0xf] %vm713, %v1949
      %2006 = vst.msk [vmem:[#allocation2 + $0x34] sm:$0xf] %vm713, %v1950
      %2007 = vst.msk [vmem:[#allocation2 + $0x38] sm:$0xf] %vm713, %v1951
      %2008 = vst.msk [vmem:[#allocation2 + $0x3c] sm:$0xf] %vm713, %v1952
      %2009 = vst.msk [vmem:[#allocation2 + $0x40] sm:$0xf] %vm713, %v1953
      %2010 = vst.msk [vmem:[#allocation2 + $0x44] sm:$0xf] %vm713, %v1954
      %2011 = vst.msk [vmem:[#allocation2 + $0x48] sm:$0xf] %vm713, %v1955
      %2012 = vst.msk [vmem:[#allocation2 + $0x4c] sm:$0xf] %vm713, %v1956
      %2013 = vst.msk [vmem:[#allocation2 + $0x50] sm:$0xf] %vm713, %v1957
      %2014 = vst.msk [vmem:[#allocation2 + $0x54] sm:$0xf] %vm713, %v1958
      %2015 = vst.msk [vmem:[#allocation2 + $0x58] sm:$0xf] %vm713, %v1959
      %2016 = vst.msk [vmem:[#allocation2 + $0x5c] sm:$0xf] %vm713, %v1960
      %2017 = vst.msk [vmem:[#allocation2 + $0x60] sm:$0xf] %vm713, %v1961
      %2018 = vst.msk [vmem:[#allocation2 + $0x64] sm:$0xf] %vm713, %v1962
      %2019 = vst.msk [vmem:[#allocation2 + $0x68] sm:$0xf] %vm713, %v1963
      %2020 = vst.msk [vmem:[#allocation2 + $0x6c] sm:$0xf] %vm713, %v1964
      %2021 = vst.msk [vmem:[#allocation2 + $0x70] sm:$0xf] %vm713, %v1965
      %2022 = vst.msk [vmem:[#allocation2 + $0x74] sm:$0xf] %vm713, %v1966
      %2023 = vst.msk [vmem:[#allocation2 + $0x78] sm:$0xf] %vm713, %v1967
      %2024 = vst.msk [vmem:[#allocation2 + $0x7c] sm:$0xf] %vm713, %v1968
      %2025 = vst.msk [vmem:[#allocation2 + $0x80] sm:$0xf] %vm713, %v1969
      %2026 = vst.msk [vmem:[#allocation2 + $0x84] sm:$0xf] %vm713, %v1970
      %v2027 = vld [vmem:[#allocation2 + $0x14] sm:$0xc]
      %v2028 = vld [vmem:[#allocation2 + $0x18] sm:$0xf]
      %v2029 = vld [vmem:[#allocation2 + $0x1c] sm:$0xf]
      %v2030 = vld [vmem:[#allocation2 + $0x20] sm:$0xf]
      %v2031 = vld [vmem:[#allocation2 + $0x24] sm:$0xf]
      %v2032 = vld [vmem:[#allocation2 + $0x28] sm:$0xf]
      %v2033 = vld [vmem:[#allocation2 + $0x2c] sm:$0xf]
      %v2034 = vld [vmem:[#allocation2 + $0x30] sm:$0xf]
      %v2035 = vld [vmem:[#allocation2 + $0x34] sm:$0xf]
      %v2036 = vld [vmem:[#allocation2 + $0x38] sm:$0xf]
      %v2037 = vld [vmem:[#allocation2 + $0x3c] sm:$0xf]
      %v2038 = vld [vmem:[#allocation2 + $0x40] sm:$0xf]
      %v2039 = vld [vmem:[#allocation2 + $0x44] sm:$0xf]
      %v2040 = vld [vmem:[#allocation2 + $0x48] sm:$0xf]
      %v2041 = vld [vmem:[#allocation2 + $0x4c] sm:$0xf]
      %v2042 = vld [vmem:[#allocation2 + $0x50] sm:$0xf]
      %v2043 = vld [vmem:[#allocation2 + $0x54] sm:$0xf]
      %v2044 = vld [vmem:[#allocation2 + $0x58] sm:$0xf]
      %v2045 = vld [vmem:[#allocation2 + $0x5c] sm:$0xf]
      %v2046 = vld [vmem:[#allocation2 + $0x60] sm:$0xf]
      %v2047 = vld [vmem:[#allocation2 + $0x64] sm:$0xf]
      %v2048 = vld [vmem:[#allocation2 + $0x68] sm:$0xf]
      %v2049 = vld [vmem:[#allocation2 + $0x6c] sm:$0xf]
      %v2050 = vld [vmem:[#allocation2 + $0x70] sm:$0xf]
      %v2051 = vld [vmem:[#allocation2 + $0x74] sm:$0xf]
      %v2052 = vld [vmem:[#allocation2 + $0x78] sm:$0xf]
      %v2053 = vld [vmem:[#allocation2 + $0x7c] sm:$0xf]
      %v2054 = vld [vmem:[#allocation2 + $0x80] sm:$0xf]
      %v2055 = vld [vmem:[#allocation2 + $0x84] sm:$0x7]
      %v2056 = vld [vmem:[#allocation2 + $0x14] sm:$0x8]
      %v2057 = vld [vmem:[#allocation2 + $0x84] sm:$0xf]
      %v2058 = vld [vmem:[#allocation2 + $0x88] sm:$0x1]
      %v2059 = vld [vmem:[#allocation2 + $0x18] sm:$0xe]
      %v2060 = vld [vmem:[#allocation2 + $0x88] sm:$0x3]
      %v2090 = vunpack.c.l.b16 %v2027
      %v2091 = vunpack.c.l.b16 %v2028
      %v2092 = vunpack.c.l.b16 %v2029
      %v2093 = vunpack.c.l.b16 %v2030
      %v2094 = vunpack.c.l.b16 %v2031
      %v2095 = vunpack.c.l.b16 %v2032
      %v2096 = vunpack.c.l.b16 %v2033
      %v2097 = vunpack.c.l.b16 %v2034
      %v2098 = vunpack.c.l.b16 %v2035
      %v2099 = vunpack.c.l.b16 %v2036
      %v2100 = vunpack.c.l.b16 %v2037
      %v2101 = vunpack.c.l.b16 %v2038
      %v2102 = vunpack.c.l.b16 %v2039
      %v2103 = vunpack.c.l.b16 %v2040
      %v2104 = vunpack.c.l.b16 %v2041
      %v2105 = vunpack.c.l.b16 %v2042
      %v2106 = vunpack.c.l.b16 %v2043
      %v2107 = vunpack.c.l.b16 %v2044
      %v2108 = vunpack.c.l.b16 %v2045
      %v2109 = vunpack.c.l.b16 %v2046
      %v2110 = vunpack.c.l.b16 %v2047
      %v2111 = vunpack.c.l.b16 %v2048
      %v2112 = vunpack.c.l.b16 %v2049
      %v2113 = vunpack.c.l.b16 %v2050
      %v2114 = vunpack.c.l.b16 %v2051
      %v2115 = vunpack.c.l.b16 %v2052
      %v2116 = vunpack.c.l.b16 %v2053
      %v2117 = vunpack.c.l.b16 %v2054
      %v2118 = vunpack.c.l.b16 %v2055
      %v2119 = vpack.c.b16 %v2091, %v2090
      %v2120 = vpack.c.b16 %v2093, %v2092
      %v2121 = vpack.c.b16 %v2095, %v2094
      %v2122 = vpack.c.b16 %v2097, %v2096
      %v2123 = vpack.c.b16 %v2099, %v2098
      %v2124 = vpack.c.b16 %v2101, %v2100
      %v2125 = vpack.c.b16 %v2103, %v2102
      %v2126 = vpack.c.b16 %v2105, %v2104
      %v2127 = vpack.c.b16 %v2107, %v2106
      %v2128 = vpack.c.b16 %v2109, %v2108
      %v2129 = vpack.c.b16 %v2111, %v2110
      %v2130 = vpack.c.b16 %v2113, %v2112
      %v2131 = vpack.c.b16 %v2115, %v2114
      %v2132 = vpack.c.b16 %v2117, %v2116
      %v2133 = vpack.c.b16 %v2118, %v2118
      %v2135 = vunpack.c.l.b16 %v2056
      %v2136 = vpack.c.b16 %v2091, %v2135
      %vm2137 = vsmask.f32 7424
      %v2139 = vshrl.u32 %v2136, 16
      %v2141 = vshll.u32 %v2136, 16
      %v2143 = vrot.slane %v2141, 1
      %v2144 = vor.u32 %v2139, %v2143
      %v2146 = vshll.u32 %v2120, 16
      %v2148 = vrot.slane %v2146, 1
      %v2149 = vsel %vm2137, %v2144, %v2148
      %v2150 = vshrl.u32 %v2120, 16
      %v2152 = vor.u32 %v2150, %v2148
      %v2154 = vshll.u32 %v2121, 16
      %v2156 = vrot.slane %v2154, 1
      %v2157 = vsel %vm2137, %v2152, %v2156
      %v2158 = vshrl.u32 %v2121, 16
      %v2160 = vor.u32 %v2158, %v2156
      %v2162 = vshll.u32 %v2122, 16
      %v2164 = vrot.slane %v2162, 1
      %v2165 = vsel %vm2137, %v2160, %v2164
      %v2166 = vshrl.u32 %v2122, 16
      %v2168 = vor.u32 %v2166, %v2164
      %v2170 = vshll.u32 %v2123, 16
      %v2172 = vrot.slane %v2170, 1
      %v2173 = vsel %vm2137, %v2168, %v2172
      %v2174 = vshrl.u32 %v2123, 16
      %v2176 = vor.u32 %v2174, %v2172
      %v2178 = vshll.u32 %v2124, 16
      %v2180 = vrot.slane %v2178, 1
      %v2181 = vsel %vm2137, %v2176, %v2180
      %v2182 = vshrl.u32 %v2124, 16
      %v2184 = vor.u32 %v2182, %v2180
      %v2186 = vshll.u32 %v2125, 16
      %v2188 = vrot.slane %v2186, 1
      %v2189 = vsel %vm2137, %v2184, %v2188
      %v2190 = vshrl.u32 %v2125, 16
      %v2192 = vor.u32 %v2190, %v2188
      %v2194 = vshll.u32 %v2126, 16
      %v2196 = vrot.slane %v2194, 1
      %v2197 = vsel %vm2137, %v2192, %v2196
      %v2198 = vshrl.u32 %v2126, 16
      %v2200 = vor.u32 %v2198, %v2196
      %v2202 = vshll.u32 %v2127, 16
      %v2204 = vrot.slane %v2202, 1
      %v2205 = vsel %vm2137, %v2200, %v2204
      %v2206 = vshrl.u32 %v2127, 16
      %v2208 = vor.u32 %v2206, %v2204
      %v2210 = vshll.u32 %v2128, 16
      %v2212 = vrot.slane %v2210, 1
      %v2213 = vsel %vm2137, %v2208, %v2212
      %v2214 = vshrl.u32 %v2128, 16
      %v2216 = vor.u32 %v2214, %v2212
      %v2218 = vshll.u32 %v2129, 16
      %v2220 = vrot.slane %v2218, 1
      %v2221 = vsel %vm2137, %v2216, %v2220
      %v2222 = vshrl.u32 %v2129, 16
      %v2224 = vor.u32 %v2222, %v2220
      %v2226 = vshll.u32 %v2130, 16
      %v2228 = vrot.slane %v2226, 1
      %v2229 = vsel %vm2137, %v2224, %v2228
      %v2230 = vshrl.u32 %v2130, 16
      %v2232 = vor.u32 %v2230, %v2228
      %v2234 = vshll.u32 %v2131, 16
      %v2236 = vrot.slane %v2234, 1
      %v2237 = vsel %vm2137, %v2232, %v2236
      %v2238 = vshrl.u32 %v2131, 16
      %v2240 = vor.u32 %v2238, %v2236
      %v2242 = vshll.u32 %v2132, 16
      %v2244 = vrot.slane %v2242, 1
      %v2245 = vsel %vm2137, %v2240, %v2244
      %v2246 = vshrl.u32 %v2132, 16
      %v2248 = vor.u32 %v2246, %v2244
      %v2250 = vshll.u32 %v2133, 16
      %v2252 = vrot.slane %v2250, 1
      %v2253 = vsel %vm2137, %v2248, %v2252
      %v2254 = vshrl.u32 %v2133, 16
      %v2256 = vor.u32 %v2254, %v2252
      %2257 = vrot.lane.b32.xlu0 %v2149, 32
      %v2258 = vpop.permute.xlu0 %2257
      %2259 = vrot.lane.b32.xlu0 %v2157, 32
      %v2260 = vpop.permute.xlu0 %2259
      %2261 = vrot.lane.b32.xlu0 %v2165, 32
      %v2262 = vpop.permute.xlu0 %2261
      %2263 = vrot.lane.b32.xlu0 %v2173, 32
      %v2264 = vpop.permute.xlu0 %2263
      %2265 = vrot.lane.b32.xlu0 %v2181, 32
      %v2266 = vpop.permute.xlu0 %2265
      %2267 = vrot.lane.b32.xlu0 %v2189, 32
      %v2268 = vpop.permute.xlu0 %2267
      %2269 = vrot.lane.b32.xlu0 %v2197, 32
      %v2270 = vpop.permute.xlu0 %2269
      %2271 = vrot.lane.b32.xlu0 %v2205, 32
      %v2272 = vpop.permute.xlu0 %2271
      %2273 = vrot.lane.b32.xlu0 %v2213, 32
      %v2274 = vpop.permute.xlu0 %2273
      %2275 = vrot.lane.b32.xlu0 %v2221, 32
      %v2276 = vpop.permute.xlu0 %2275
      %2277 = vrot.lane.b32.xlu0 %v2229, 32
      %v2278 = vpop.permute.xlu0 %2277
      %2279 = vrot.lane.b32.xlu0 %v2237, 32
      %v2280 = vpop.permute.xlu0 %2279
      %2281 = vrot.lane.b32.xlu0 %v2245, 32
      %v2282 = vpop.permute.xlu0 %2281
      %2283 = vrot.lane.b32.xlu0 %v2253, 32
      %v2284 = vpop.permute.xlu0 %2283
      %2285 = vrot.lane.b32.xlu0 %v2256, 32
      %v2286 = vpop.permute.xlu0 %2285
      %v2288 = vunpack.c.l.b16 %v2057
      %v2289 = vpack.c.b16 %v2288, %v2288
      %vm2290 = vcmask 1046528
      %v2291 = vrot.slane %v2136, 1
      %v2292 = vrot.slane %v2120, 1
      %v2293 = vsel %vm2290, %v2291, %v2292
      %v2294 = vrot.slane %v2121, 1
      %v2295 = vsel %vm2290, %v2292, %v2294
      %v2296 = vrot.slane %v2122, 1
      %v2297 = vsel %vm2290, %v2294, %v2296
      %v2298 = vrot.slane %v2123, 1
      %v2299 = vsel %vm2290, %v2296, %v2298
      %v2300 = vrot.slane %v2124, 1
      %v2301 = vsel %vm2290, %v2298, %v2300
      %v2302 = vrot.slane %v2125, 1
      %v2303 = vsel %vm2290, %v2300, %v2302
      %v2304 = vrot.slane %v2126, 1
      %v2305 = vsel %vm2290, %v2302, %v2304
      %v2306 = vrot.slane %v2127, 1
      %v2307 = vsel %vm2290, %v2304, %v2306
      %v2308 = vrot.slane %v2128, 1
      %v2309 = vsel %vm2290, %v2306, %v2308
      %v2310 = vrot.slane %v2129, 1
      %v2311 = vsel %vm2290, %v2308, %v2310
      %v2312 = vrot.slane %v2130, 1
      %v2313 = vsel %vm2290, %v2310, %v2312
      %v2314 = vrot.slane %v2131, 1
      %v2315 = vsel %vm2290, %v2312, %v2314
      %v2316 = vrot.slane %v2132, 1
      %v2317 = vsel %vm2290, %v2314, %v2316
      %v2318 = vrot.slane %v2289, 1
      %v2319 = vsel %vm2290, %v2316, %v2318
      %2320 = vrot.lane.b32.xlu0 %v2293, 64
      %v2321 = vpop.permute.xlu0 %2320
      %2322 = vrot.lane.b32.xlu0 %v2295, 64
      %v2323 = vpop.permute.xlu0 %2322
      %2324 = vrot.lane.b32.xlu0 %v2297, 64
      %v2325 = vpop.permute.xlu0 %2324
      %2326 = vrot.lane.b32.xlu0 %v2299, 64
      %v2327 = vpop.permute.xlu0 %2326
      %2328 = vrot.lane.b32.xlu0 %v2301, 64
      %v2329 = vpop.permute.xlu0 %2328
      %2330 = vrot.lane.b32.xlu0 %v2303, 64
      %v2331 = vpop.permute.xlu0 %2330
      %2332 = vrot.lane.b32.xlu0 %v2305, 64
      %v2333 = vpop.permute.xlu0 %2332
      %2334 = vrot.lane.b32.xlu0 %v2307, 64
      %v2335 = vpop.permute.xlu0 %2334
      %2336 = vrot.lane.b32.xlu0 %v2309, 64
      %v2337 = vpop.permute.xlu0 %2336
      %2338 = vrot.lane.b32.xlu0 %v2311, 64
      %v2339 = vpop.permute.xlu0 %2338
      %2340 = vrot.lane.b32.xlu0 %v2313, 64
      %v2341 = vpop.permute.xlu0 %2340
      %2342 = vrot.lane.b32.xlu0 %v2315, 64
      %v2343 = vpop.permute.xlu0 %2342
      %2344 = vrot.lane.b32.xlu0 %v2317, 64
      %v2345 = vpop.permute.xlu0 %2344
      %2346 = vrot.lane.b32.xlu0 %v2319, 64
      %v2347 = vpop.permute.xlu0 %2346
      %2348 = vrot.lane.b32.xlu0 %v2318, 64
      %v2349 = vpop.permute.xlu0 %2348
      %v2350 = vpack.c.b16 %v2092, %v2091
      %v2351 = vpack.c.b16 %v2094, %v2093
      %v2352 = vpack.c.b16 %v2096, %v2095
      %v2353 = vpack.c.b16 %v2098, %v2097
      %v2354 = vpack.c.b16 %v2100, %v2099
      %v2355 = vpack.c.b16 %v2102, %v2101
      %v2356 = vpack.c.b16 %v2104, %v2103
      %v2357 = vpack.c.b16 %v2106, %v2105
      %v2358 = vpack.c.b16 %v2108, %v2107
      %v2359 = vpack.c.b16 %v2110, %v2109
      %v2360 = vpack.c.b16 %v2112, %v2111
      %v2361 = vpack.c.b16 %v2114, %v2113
      %v2362 = vpack.c.b16 %v2116, %v2115
      %v2363 = vpack.c.b16 %v2288, %v2117
      %vm2364 = vsmask.f32 2304
      %v2366 = vshrl.u32 %v2350, 16
      %v2368 = vrot.slane %v2366, 5
      %v2369 = vshll.u32 %v2350, 16
      %v2371 = vrot.slane %v2369, 6
      %v2372 = vor.u32 %v2368, %v2371
      %v2374 = vshrl.u32 %v2351, 16
      %v2376 = vrot.slane %v2374, 5
      %v2377 = vshll.u32 %v2351, 16
      %v2379 = vrot.slane %v2377, 6
      %v2380 = vor.u32 %v2376, %v2379
      %v2381 = vsel %vm2364, %v2372, %v2380
      %v2383 = vshrl.u32 %v2352, 16
      %v2385 = vrot.slane %v2383, 5
      %v2386 = vshll.u32 %v2352, 16
      %v2388 = vrot.slane %v2386, 6
      %v2389 = vor.u32 %v2385, %v2388
      %v2390 = vsel %vm2364, %v2380, %v2389
      %v2392 = vshrl.u32 %v2353, 16
      %v2394 = vrot.slane %v2392, 5
      %v2395 = vshll.u32 %v2353, 16
      %v2397 = vrot.slane %v2395, 6
      %v2398 = vor.u32 %v2394, %v2397
      %v2399 = vsel %vm2364, %v2389, %v2398
      %v2401 = vshrl.u32 %v2354, 16
      %v2403 = vrot.slane %v2401, 5
      %v2404 = vshll.u32 %v2354, 16
      %v2406 = vrot.slane %v2404, 6
      %v2407 = vor.u32 %v2403, %v2406
      %v2408 = vsel %vm2364, %v2398, %v2407
      %v2410 = vshrl.u32 %v2355, 16
      %v2412 = vrot.slane %v2410, 5
      %v2413 = vshll.u32 %v2355, 16
      %v2415 = vrot.slane %v2413, 6
      %v2416 = vor.u32 %v2412, %v2415
      %v2417 = vsel %vm2364, %v2407, %v2416
      %v2419 = vshrl.u32 %v2356, 16
      %v2421 = vrot.slane %v2419, 5
      %v2422 = vshll.u32 %v2356, 16
      %v2424 = vrot.slane %v2422, 6
      %v2425 = vor.u32 %v2421, %v2424
      %v2426 = vsel %vm2364, %v2416, %v2425
      %v2428 = vshrl.u32 %v2357, 16
      %v2430 = vrot.slane %v2428, 5
      %v2431 = vshll.u32 %v2357, 16
      %v2433 = vrot.slane %v2431, 6
      %v2434 = vor.u32 %v2430, %v2433
      %v2435 = vsel %vm2364, %v2425, %v2434
      %v2437 = vshrl.u32 %v2358, 16
      %v2439 = vrot.slane %v2437, 5
      %v2440 = vshll.u32 %v2358, 16
      %v2442 = vrot.slane %v2440, 6
      %v2443 = vor.u32 %v2439, %v2442
      %v2444 = vsel %vm2364, %v2434, %v2443
      %v2446 = vshrl.u32 %v2359, 16
      %v2448 = vrot.slane %v2446, 5
      %v2449 = vshll.u32 %v2359, 16
      %v2451 = vrot.slane %v2449, 6
      %v2452 = vor.u32 %v2448, %v2451
      %v2453 = vsel %vm2364, %v2443, %v2452
      %v2455 = vshrl.u32 %v2360, 16
      %v2457 = vrot.slane %v2455, 5
      %v2458 = vshll.u32 %v2360, 16
      %v2460 = vrot.slane %v2458, 6
      %v2461 = vor.u32 %v2457, %v2460
      %v2462 = vsel %vm2364, %v2452, %v2461
      %v2464 = vshrl.u32 %v2361, 16
      %v2466 = vrot.slane %v2464, 5
      %v2467 = vshll.u32 %v2361, 16
      %v2469 = vrot.slane %v2467, 6
      %v2470 = vor.u32 %v2466, %v2469
      %v2471 = vsel %vm2364, %v2461, %v2470
      %v2473 = vshrl.u32 %v2362, 16
      %v2475 = vrot.slane %v2473, 5
      %v2476 = vshll.u32 %v2362, 16
      %v2478 = vrot.slane %v2476, 6
      %v2479 = vor.u32 %v2475, %v2478
      %v2480 = vsel %vm2364, %v2470, %v2479
      %v2482 = vshrl.u32 %v2363, 16
      %v2484 = vrot.slane %v2482, 5
      %v2485 = vshll.u32 %v2363, 16
      %v2487 = vrot.slane %v2485, 6
      %v2488 = vor.u32 %v2484, %v2487
      %v2489 = vsel %vm2364, %v2479, %v2488
      %2490 = vrot.lane.b32.xlu0 %v2372, 96
      %v2491 = vpop.permute.xlu0 %2490
      %2492 = vrot.lane.b32.xlu0 %v2381, 96
      %v2493 = vpop.permute.xlu0 %2492
      %2494 = vrot.lane.b32.xlu0 %v2390, 96
      %v2495 = vpop.permute.xlu0 %2494
      %2496 = vrot.lane.b32.xlu0 %v2399, 96
      %v2497 = vpop.permute.xlu0 %2496
      %2498 = vrot.lane.b32.xlu0 %v2408, 96
      %v2499 = vpop.permute.xlu0 %2498
      %2500 = vrot.lane.b32.xlu0 %v2417, 96
      %v2501 = vpop.permute.xlu0 %2500
      %2502 = vrot.lane.b32.xlu0 %v2426, 96
      %v2503 = vpop.permute.xlu0 %2502
      %2504 = vrot.lane.b32.xlu0 %v2435, 96
      %v2505 = vpop.permute.xlu0 %2504
      %2506 = vrot.lane.b32.xlu0 %v2444, 96
      %v2507 = vpop.permute.xlu0 %2506
      %2508 = vrot.lane.b32.xlu0 %v2453, 96
      %v2509 = vpop.permute.xlu0 %2508
      %2510 = vrot.lane.b32.xlu0 %v2462, 96
      %v2511 = vpop.permute.xlu0 %2510
      %2512 = vrot.lane.b32.xlu0 %v2471, 96
      %v2513 = vpop.permute.xlu0 %2512
      %2514 = vrot.lane.b32.xlu0 %v2480, 96
      %v2515 = vpop.permute.xlu0 %2514
      %2516 = vrot.lane.b32.xlu0 %v2489, 96
      %v2517 = vpop.permute.xlu0 %2516
      %2518 = vrot.lane.b32.xlu0 %v2488, 96
      %v2519 = vpop.permute.xlu0 %2518
      %v2521 = vunpack.c.l.b16 %v2058
      %v2522 = vpack.c.b16 %v2521, %v2521
      %vm2523 = vcmask 1041408
      %v2524 = vrot.slane %v2350, 6
      %v2525 = vrot.slane %v2351, 6
      %v2526 = vsel %vm2523, %v2524, %v2525
      %v2527 = vrot.slane %v2352, 6
      %v2528 = vsel %vm2523, %v2525, %v2527
      %v2529 = vrot.slane %v2353, 6
      %v2530 = vsel %vm2523, %v2527, %v2529
      %v2531 = vrot.slane %v2354, 6
      %v2532 = vsel %vm2523, %v2529, %v2531
      %v2533 = vrot.slane %v2355, 6
      %v2534 = vsel %vm2523, %v2531, %v2533
      %v2535 = vrot.slane %v2356, 6
      %v2536 = vsel %vm2523, %v2533, %v2535
      %v2537 = vrot.slane %v2357, 6
      %v2538 = vsel %vm2523, %v2535, %v2537
      %v2539 = vrot.slane %v2358, 6
      %v2540 = vsel %vm2523, %v2537, %v2539
      %v2541 = vrot.slane %v2359, 6
      %v2542 = vsel %vm2523, %v2539, %v2541
      %v2543 = vrot.slane %v2360, 6
      %v2544 = vsel %vm2523, %v2541, %v2543
      %v2545 = vrot.slane %v2361, 6
      %v2546 = vsel %vm2523, %v2543, %v2545
      %v2547 = vrot.slane %v2362, 6
      %v2548 = vsel %vm2523, %v2545, %v2547
      %v2549 = vrot.slane %v2363, 6
      %v2550 = vsel %vm2523, %v2547, %v2549
      %v2551 = vrot.slane %v2522, 6
      %v2552 = vsel %vm2523, %v2549, %v2551
      %v2554 = vunpack.c.l.b16 %v2059
      %v2555 = vpack.c.b16 %v2092, %v2554
      %vm2556 = vsmask.f32 1280
      %v2558 = vshrl.u32 %v2555, 16
      %v2560 = vrot.slane %v2558, 6
      %v2561 = vshll.u32 %v2555, 16
      %v2563 = vrot.slane %v2561, 7
      %v2564 = vor.u32 %v2560, %v2563
      %v2565 = vrot.slane %v2374, 6
      %v2566 = vrot.slane %v2377, 7
      %v2567 = vor.u32 %v2565, %v2566
      %v2568 = vsel %vm2556, %v2564, %v2567
      %v2569 = vrot.slane %v2383, 6
      %v2570 = vrot.slane %v2386, 7
      %v2571 = vor.u32 %v2569, %v2570
      %v2572 = vsel %vm2556, %v2567, %v2571
      %v2573 = vrot.slane %v2392, 6
      %v2574 = vrot.slane %v2395, 7
      %v2575 = vor.u32 %v2573, %v2574
      %v2576 = vsel %vm2556, %v2571, %v2575
      %v2577 = vrot.slane %v2401, 6
      %v2578 = vrot.slane %v2404, 7
      %v2579 = vor.u32 %v2577, %v2578
      %v2580 = vsel %vm2556, %v2575, %v2579
      %v2581 = vrot.slane %v2410, 6
      %v2582 = vrot.slane %v2413, 7
      %v2583 = vor.u32 %v2581, %v2582
      %v2584 = vsel %vm2556, %v2579, %v2583
      %v2585 = vrot.slane %v2419, 6
      %v2586 = vrot.slane %v2422, 7
      %v2587 = vor.u32 %v2585, %v2586
      %v2588 = vsel %vm2556, %v2583, %v2587
      %v2589 = vrot.slane %v2428, 6
      %v2590 = vrot.slane %v2431, 7
      %v2591 = vor.u32 %v2589, %v2590
      %v2592 = vsel %vm2556, %v2587, %v2591
      %v2593 = vrot.slane %v2437, 6
      %v2594 = vrot.slane %v2440, 7
      %v2595 = vor.u32 %v2593, %v2594
      %v2596 = vsel %vm2556, %v2591, %v2595
      %v2597 = vrot.slane %v2446, 6
      %v2598 = vrot.slane %v2449, 7
      %v2599 = vor.u32 %v2597, %v2598
      %v2600 = vsel %vm2556, %v2595, %v2599
      %v2601 = vrot.slane %v2455, 6
      %v2602 = vrot.slane %v2458, 7
      %v2603 = vor.u32 %v2601, %v2602
      %v2604 = vsel %vm2556, %v2599, %v2603
      %v2605 = vrot.slane %v2464, 6
      %v2606 = vrot.slane %v2467, 7
      %v2607 = vor.u32 %v2605, %v2606
      %v2608 = vsel %vm2556, %v2603, %v2607
      %v2609 = vrot.slane %v2473, 6
      %v2610 = vrot.slane %v2476, 7
      %v2611 = vor.u32 %v2609, %v2610
      %v2612 = vsel %vm2556, %v2607, %v2611
      %v2613 = vrot.slane %v2482, 6
      %v2614 = vrot.slane %v2485, 7
      %v2615 = vor.u32 %v2613, %v2614
      %v2616 = vsel %vm2556, %v2611, %v2615
      %v2618 = vshrl.u32 %v2522, 16
      %v2620 = vrot.slane %v2618, 6
      %v2621 = vshll.u32 %v2522, 16
      %v2623 = vrot.slane %v2621, 7
      %v2624 = vor.u32 %v2620, %v2623
      %v2625 = vsel %vm2556, %v2615, %v2624
      %2626 = vrot.lane.b32.xlu0 %v2564, 32
      %v2627 = vpop.permute.xlu0 %2626
      %2628 = vrot.lane.b32.xlu0 %v2568, 32
      %v2629 = vpop.permute.xlu0 %2628
      %2630 = vrot.lane.b32.xlu0 %v2572, 32
      %v2631 = vpop.permute.xlu0 %2630
      %2632 = vrot.lane.b32.xlu0 %v2576, 32
      %v2633 = vpop.permute.xlu0 %2632
      %2634 = vrot.lane.b32.xlu0 %v2580, 32
      %v2635 = vpop.permute.xlu0 %2634
      %2636 = vrot.lane.b32.xlu0 %v2584, 32
      %v2637 = vpop.permute.xlu0 %2636
      %2638 = vrot.lane.b32.xlu0 %v2588, 32
      %v2639 = vpop.permute.xlu0 %2638
      %2640 = vrot.lane.b32.xlu0 %v2592, 32
      %v2641 = vpop.permute.xlu0 %2640
      %2642 = vrot.lane.b32.xlu0 %v2596, 32
      %v2643 = vpop.permute.xlu0 %2642
      %2644 = vrot.lane.b32.xlu0 %v2600, 32
      %v2645 = vpop.permute.xlu0 %2644
      %2646 = vrot.lane.b32.xlu0 %v2604, 32
      %v2647 = vpop.permute.xlu0 %2646
      %2648 = vrot.lane.b32.xlu0 %v2608, 32
      %v2649 = vpop.permute.xlu0 %2648
      %2650 = vrot.lane.b32.xlu0 %v2612, 32
      %v2651 = vpop.permute.xlu0 %2650
      %2652 = vrot.lane.b32.xlu0 %v2616, 32
      %v2653 = vpop.permute.xlu0 %2652
      %2654 = vrot.lane.b32.xlu0 %v2625, 32
      %v2655 = vpop.permute.xlu0 %2654
      %v2657 = vunpack.c.l.b16 %v2060
      %v2658 = vpack.c.b16 %v2657, %v2657
      %vm2659 = vcmask 1040384
      %v2660 = vrot.slane %v2555, 7
      %v2661 = vrot.slane %v2351, 7
      %v2662 = vsel %vm2659, %v2660, %v2661
      %v2663 = vrot.slane %v2352, 7
      %v2664 = vsel %vm2659, %v2661, %v2663
      %v2665 = vrot.slane %v2353, 7
      %v2666 = vsel %vm2659, %v2663, %v2665
      %v2667 = vrot.slane %v2354, 7
      %v2668 = vsel %vm2659, %v2665, %v2667
      %v2669 = vrot.slane %v2355, 7
      %v2670 = vsel %vm2659, %v2667, %v2669
      %v2671 = vrot.slane %v2356, 7
      %v2672 = vsel %vm2659, %v2669, %v2671
      %v2673 = vrot.slane %v2357, 7
      %v2674 = vsel %vm2659, %v2671, %v2673
      %v2675 = vrot.slane %v2358, 7
      %v2676 = vsel %vm2659, %v2673, %v2675
      %v2677 = vrot.slane %v2359, 7
      %v2678 = vsel %vm2659, %v2675, %v2677
      %v2679 = vrot.slane %v2360, 7
      %v2680 = vsel %vm2659, %v2677, %v2679
      %v2681 = vrot.slane %v2361, 7
      %v2682 = vsel %vm2659, %v2679, %v2681
      %v2683 = vrot.slane %v2362, 7
      %v2684 = vsel %vm2659, %v2681, %v2683
      %v2685 = vrot.slane %v2363, 7
      %v2686 = vsel %vm2659, %v2683, %v2685
      %v2687 = vrot.slane %v2658, 7
      %v2688 = vsel %vm2659, %v2685, %v2687
      %2689 = vrot.lane.b32.xlu0 %v2660, 64
      %v2690 = vpop.permute.xlu0 %2689
      %2691 = vrot.lane.b32.xlu0 %v2662, 64
      %v2692 = vpop.permute.xlu0 %2691
      %2693 = vrot.lane.b32.xlu0 %v2664, 64
      %v2694 = vpop.permute.xlu0 %2693
      %2695 = vrot.lane.b32.xlu0 %v2666, 64
      %v2696 = vpop.permute.xlu0 %2695
      %2697 = vrot.lane.b32.xlu0 %v2668, 64
      %v2698 = vpop.permute.xlu0 %2697
      %2699 = vrot.lane.b32.xlu0 %v2670, 64
      %v2700 = vpop.permute.xlu0 %2699
      %2701 = vrot.lane.b32.xlu0 %v2672, 64
      %v2702 = vpop.permute.xlu0 %2701
      %2703 = vrot.lane.b32.xlu0 %v2674, 64
      %v2704 = vpop.permute.xlu0 %2703
      %2705 = vrot.lane.b32.xlu0 %v2676, 64
      %v2706 = vpop.permute.xlu0 %2705
      %2707 = vrot.lane.b32.xlu0 %v2678, 64
      %v2708 = vpop.permute.xlu0 %2707
      %2709 = vrot.lane.b32.xlu0 %v2680, 64
      %v2710 = vpop.permute.xlu0 %2709
      %2711 = vrot.lane.b32.xlu0 %v2682, 64
      %v2712 = vpop.permute.xlu0 %2711
      %2713 = vrot.lane.b32.xlu0 %v2684, 64
      %v2714 = vpop.permute.xlu0 %2713
      %2715 = vrot.lane.b32.xlu0 %v2686, 64
      %v2716 = vpop.permute.xlu0 %2715
      %2717 = vrot.lane.b32.xlu0 %v2688, 64
      %v2718 = vpop.permute.xlu0 %2717
      %vm2719 = vcmask 261120
      %v2722 = vsel %vm2719, %v2119, %v2258
      %v2724 = vsel %vm2719, %v2120, %v2260
      %v2726 = vsel %vm2719, %v2121, %v2262
      %v2728 = vsel %vm2719, %v2122, %v2264
      %v2730 = vsel %vm2719, %v2123, %v2266
      %v2732 = vsel %vm2719, %v2124, %v2268
      %v2734 = vsel %vm2719, %v2125, %v2270
      %v2736 = vsel %vm2719, %v2126, %v2272
      %v2738 = vsel %vm2719, %v2127, %v2274
      %v2740 = vsel %vm2719, %v2128, %v2276
      %v2742 = vsel %vm2719, %v2129, %v2278
      %v2744 = vsel %vm2719, %v2130, %v2280
      %v2746 = vsel %vm2719, %v2131, %v2282
      %v2748 = vsel %vm2719, %v2132, %v2284
      %v2750 = vsel %vm2719, %v2133, %v2286
      %v2752 = vsel %vm896, %v2722, %v2321
      %v2754 = vsel %vm896, %v2724, %v2323
      %v2756 = vsel %vm896, %v2726, %v2325
      %v2758 = vsel %vm896, %v2728, %v2327
      %v2760 = vsel %vm896, %v2730, %v2329
      %v2762 = vsel %vm896, %v2732, %v2331
      %v2764 = vsel %vm896, %v2734, %v2333
      %v2766 = vsel %vm896, %v2736, %v2335
      %v2768 = vsel %vm896, %v2738, %v2337
      %v2770 = vsel %vm896, %v2740, %v2339
      %v2772 = vsel %vm896, %v2742, %v2341
      %v2774 = vsel %vm896, %v2744, %v2343
      %v2776 = vsel %vm896, %v2746, %v2345
      %v2778 = vsel %vm896, %v2748, %v2347
      %v2780 = vsel %vm896, %v2750, %v2349
      %vm2781 = vcmask 785408
      %v2783 = vsel %vm2781, %v2752, %v2491
      %v2785 = vsel %vm2781, %v2754, %v2493
      %v2787 = vsel %vm2781, %v2756, %v2495
      %v2789 = vsel %vm2781, %v2758, %v2497
      %v2791 = vsel %vm2781, %v2760, %v2499
      %v2793 = vsel %vm2781, %v2762, %v2501
      %v2795 = vsel %vm2781, %v2764, %v2503
      %v2797 = vsel %vm2781, %v2766, %v2505
      %v2799 = vsel %vm2781, %v2768, %v2507
      %v2801 = vsel %vm2781, %v2770, %v2509
      %v2803 = vsel %vm2781, %v2772, %v2511
      %v2805 = vsel %vm2781, %v2774, %v2513
      %v2807 = vsel %vm2781, %v2776, %v2515
      %v2809 = vsel %vm2781, %v2778, %v2517
      %v2811 = vsel %vm2781, %v2780, %v2519
      %v2814 = vsel %vm2719, %v2524, %v2627
      %v2817 = vsel %vm2719, %v2526, %v2629
      %v2820 = vsel %vm2719, %v2528, %v2631
      %v2823 = vsel %vm2719, %v2530, %v2633
      %v2826 = vsel %vm2719, %v2532, %v2635
      %v2829 = vsel %vm2719, %v2534, %v2637
      %v2832 = vsel %vm2719, %v2536, %v2639
      %v2835 = vsel %vm2719, %v2538, %v2641
      %v2838 = vsel %vm2719, %v2540, %v2643
      %v2841 = vsel %vm2719, %v2542, %v2645
      %v2844 = vsel %vm2719, %v2544, %v2647
      %v2847 = vsel %vm2719, %v2546, %v2649
      %v2850 = vsel %vm2719, %v2548, %v2651
      %v2853 = vsel %vm2719, %v2550, %v2653
      %v2856 = vsel %vm2719, %v2552, %v2655
      %v2858 = vsel %vm896, %v2814, %v2690
      %v2860 = vsel %vm896, %v2817, %v2692
      %v2862 = vsel %vm896, %v2820, %v2694
      %v2864 = vsel %vm896, %v2823, %v2696
      %v2866 = vsel %vm896, %v2826, %v2698
      %v2868 = vsel %vm896, %v2829, %v2700
      %v2870 = vsel %vm896, %v2832, %v2702
      %v2872 = vsel %vm896, %v2835, %v2704
      %v2874 = vsel %vm896, %v2838, %v2706
      %v2876 = vsel %vm896, %v2841, %v2708
      %v2878 = vsel %vm896, %v2844, %v2710
      %v2880 = vsel %vm896, %v2847, %v2712
      %v2882 = vsel %vm896, %v2850, %v2714
      %v2884 = vsel %vm896, %v2853, %v2716
      %v2886 = vsel %vm896, %v2856, %v2718
      %v2887 = vld [vmem:[%s6] sm:$0xf]
      %v2888 = vld [vmem:[%s6 + $0x4] sm:$0xf]
      %v2889 = vld [vmem:[%s6 + $0x8] sm:$0xf]
      %v2890 = vld [vmem:[%s6 + $0xc] sm:$0xf]
      %v2891 = vld [vmem:[%s6 + $0x10] sm:$0xf]
      %v2892 = vld [vmem:[%s6 + $0x14] sm:$0xf]
      %v2893 = vld [vmem:[%s6 + $0x18] sm:$0xf]
      %v2894 = vld [vmem:[%s6 + $0x1c] sm:$0xf]
      %v2895 = vld [vmem:[%s6 + $0x20] sm:$0xf]
      %v2896 = vld [vmem:[%s6 + $0x24] sm:$0xf]
      %v2897 = vld [vmem:[%s6 + $0x28] sm:$0xf]
      %v2898 = vld [vmem:[%s6 + $0x2c] sm:$0xf]
      %v2899 = vld [vmem:[%s6 + $0x30] sm:$0xf]
      %v2900 = vld [vmem:[%s6 + $0x34] sm:$0xf]
      %v2901 = vld [vmem:[%s6 + $0x38] sm:$0xf]
      %v2902 = vld [vmem:[%s6 + $0x3c] sm:$0xf]
      %v2903 = vld [vmem:[%s6 + $0x40] sm:$0xf]
      %v2904 = vld [vmem:[%s6 + $0x44] sm:$0xf]
      %v2905 = vld [vmem:[%s6 + $0x48] sm:$0xf]
      %v2906 = vld [vmem:[%s6 + $0x4c] sm:$0xf]
      %v2907 = vld [vmem:[%s6 + $0x50] sm:$0xf]
      %v2908 = vld [vmem:[%s6 + $0x54] sm:$0xf]
      %v2909 = vld [vmem:[%s6 + $0x58] sm:$0xf]
      %v2910 = vld [vmem:[%s6 + $0x5c] sm:$0xf]
      %v2911 = vld [vmem:[%s6 + $0x60] sm:$0xf]
      %v2912 = vld [vmem:[%s6 + $0x64] sm:$0xf]
      %v2913 = vld [vmem:[%s6 + $0x68] sm:$0xf]
      %v2914 = vld [vmem:[%s6 + $0x6c] sm:$0xf]
      %v2915 = vld [vmem:[%s7] sm:$0x1]
      %v2917 = vlaneseq
      %v2918 = vshrl.u32 %v2917, 7
      %v2919 = vsub.s32 0, %v2918
      %v2920 = vrot.slane %v2915, %v2919
      %vm2922 = vsmask.f32 5376
      %v2923 = vshrl.u32 %v2783, 16
      %v2925 = vrot.slane %v2923, 2
      %v2926 = vshll.u32 %v2783, 16
      %v2928 = vrot.slane %v2926, 3
      %v2929 = vor.u32 %v2925, %v2928
      %v2930 = vshrl.u32 %v2785, 16
      %v2932 = vrot.slane %v2930, 2
      %v2933 = vshll.u32 %v2785, 16
      %v2935 = vrot.slane %v2933, 3
      %v2936 = vor.u32 %v2932, %v2935
      %v2937 = vsel %vm2922, %v2929, %v2936
      %v2938 = vshrl.u32 %v2858, 16
      %v2940 = vrot.slane %v2938, 2
      %v2941 = vshll.u32 %v2858, 16
      %v2943 = vrot.slane %v2941, 3
      %v2944 = vor.u32 %v2940, %v2943
      %v2945 = vshrl.u32 %v2860, 16
      %v2947 = vrot.slane %v2945, 2
      %v2948 = vshll.u32 %v2860, 16
      %v2950 = vrot.slane %v2948, 3
      %v2951 = vor.u32 %v2947, %v2950
      %v2952 = vsel %vm2922, %v2944, %v2951
      %v2953 = vshrl.u32 %v2787, 16
      %v2955 = vrot.slane %v2953, 2
      %v2956 = vshll.u32 %v2787, 16
      %v2958 = vrot.slane %v2956, 3
      %v2959 = vor.u32 %v2955, %v2958
      %v2960 = vsel %vm2922, %v2936, %v2959
      %v2961 = vshrl.u32 %v2862, 16
      %v2963 = vrot.slane %v2961, 2
      %v2964 = vshll.u32 %v2862, 16
      %v2966 = vrot.slane %v2964, 3
      %v2967 = vor.u32 %v2963, %v2966
      %v2968 = vsel %vm2922, %v2951, %v2967
      %v2969 = vshrl.u32 %v2789, 16
      %v2971 = vrot.slane %v2969, 2
      %v2972 = vshll.u32 %v2789, 16
      %v2974 = vrot.slane %v2972, 3
      %v2975 = vor.u32 %v2971, %v2974
      %v2976 = vsel %vm2922, %v2959, %v2975
      %v2977 = vshrl.u32 %v2864, 16
      %v2979 = vrot.slane %v2977, 2
      %v2980 = vshll.u32 %v2864, 16
      %v2982 = vrot.slane %v2980, 3
      %v2983 = vor.u32 %v2979, %v2982
      %v2984 = vsel %vm2922, %v2967, %v2983
      %v2985 = vshrl.u32 %v2791, 16
      %v2987 = vrot.slane %v2985, 2
      %v2988 = vshll.u32 %v2791, 16
      %v2990 = vrot.slane %v2988, 3
      %v2991 = vor.u32 %v2987, %v2990
      %v2992 = vsel %vm2922, %v2975, %v2991
      %v2993 = vshrl.u32 %v2866, 16
      %v2995 = vrot.slane %v2993, 2
      %v2996 = vshll.u32 %v2866, 16
      %v2998 = vrot.slane %v2996, 3
      %v2999 = vor.u32 %v2995, %v2998
      %v3000 = vsel %vm2922, %v2983, %v2999
      %v3001 = vshrl.u32 %v2793, 16
      %v3003 = vrot.slane %v3001, 2
      %v3004 = vshll.u32 %v2793, 16
      %v3006 = vrot.slane %v3004, 3
      %v3007 = vor.u32 %v3003, %v3006
      %v3008 = vsel %vm2922, %v2991, %v3007
      %v3009 = vshrl.u32 %v2868, 16
      %v3011 = vrot.slane %v3009, 2
      %v3012 = vshll.u32 %v2868, 16
      %v3014 = vrot.slane %v3012, 3
      %v3015 = vor.u32 %v3011, %v3014
      %v3016 = vsel %vm2922, %v2999, %v3015
      %v3017 = vshrl.u32 %v2795, 16
      %v3019 = vrot.slane %v3017, 2
      %v3020 = vshll.u32 %v2795, 16
      %v3022 = vrot.slane %v3020, 3
      %v3023 = vor.u32 %v3019, %v3022
      %v3024 = vsel %vm2922, %v3007, %v3023
      %v3025 = vshrl.u32 %v2870, 16
      %v3027 = vrot.slane %v3025, 2
      %v3028 = vshll.u32 %v2870, 16
      %v3030 = vrot.slane %v3028, 3
      %v3031 = vor.u32 %v3027, %v3030
      %v3032 = vsel %vm2922, %v3015, %v3031
      %v3033 = vshrl.u32 %v2797, 16
      %v3035 = vrot.slane %v3033, 2
      %v3036 = vshll.u32 %v2797, 16
      %v3038 = vrot.slane %v3036, 3
      %v3039 = vor.u32 %v3035, %v3038
      %v3040 = vsel %vm2922, %v3023, %v3039
      %v3041 = vshrl.u32 %v2872, 16
      %v3043 = vrot.slane %v3041, 2
      %v3044 = vshll.u32 %v2872, 16
      %v3046 = vrot.slane %v3044, 3
      %v3047 = vor.u32 %v3043, %v3046
      %v3048 = vsel %vm2922, %v3031, %v3047
      %v3049 = vshrl.u32 %v2799, 16
      %v3051 = vrot.slane %v3049, 2
      %v3052 = vshll.u32 %v2799, 16
      %v3054 = vrot.slane %v3052, 3
      %v3055 = vor.u32 %v3051, %v3054
      %v3056 = vsel %vm2922, %v3039, %v3055
      %v3057 = vshrl.u32 %v2874, 16
      %v3059 = vrot.slane %v3057, 2
      %v3060 = vshll.u32 %v2874, 16
      %v3062 = vrot.slane %v3060, 3
      %v3063 = vor.u32 %v3059, %v3062
      %v3064 = vsel %vm2922, %v3047, %v3063
      %v3065 = vshrl.u32 %v2801, 16
      %v3067 = vrot.slane %v3065, 2
      %v3068 = vshll.u32 %v2801, 16
      %v3070 = vrot.slane %v3068, 3
      %v3071 = vor.u32 %v3067, %v3070
      %v3072 = vsel %vm2922, %v3055, %v3071
      %v3073 = vshrl.u32 %v2876, 16
      %v3075 = vrot.slane %v3073, 2
      %v3076 = vshll.u32 %v2876, 16
      %v3078 = vrot.slane %v3076, 3
      %v3079 = vor.u32 %v3075, %v3078
      %v3080 = vsel %vm2922, %v3063, %v3079
      %v3081 = vshrl.u32 %v2803, 16
      %v3083 = vrot.slane %v3081, 2
      %v3084 = vshll.u32 %v2803, 16
      %v3086 = vrot.slane %v3084, 3
      %v3087 = vor.u32 %v3083, %v3086
      %v3088 = vsel %vm2922, %v3071, %v3087
      %v3089 = vshrl.u32 %v2878, 16
      %v3091 = vrot.slane %v3089, 2
      %v3092 = vshll.u32 %v2878, 16
      %v3094 = vrot.slane %v3092, 3
      %v3095 = vor.u32 %v3091, %v3094
      %v3096 = vsel %vm2922, %v3079, %v3095
      %v3097 = vshrl.u32 %v2805, 16
      %v3099 = vrot.slane %v3097, 2
      %v3100 = vshll.u32 %v2805, 16
      %v3102 = vrot.slane %v3100, 3
      %v3103 = vor.u32 %v3099, %v3102
      %v3104 = vsel %vm2922, %v3087, %v3103
      %v3105 = vshrl.u32 %v2880, 16
      %v3107 = vrot.slane %v3105, 2
      %v3108 = vshll.u32 %v2880, 16
      %v3110 = vrot.slane %v3108, 3
      %v3111 = vor.u32 %v3107, %v3110
      %v3112 = vsel %vm2922, %v3095, %v3111
      %v3113 = vshrl.u32 %v2807, 16
      %v3115 = vrot.slane %v3113, 2
      %v3116 = vshll.u32 %v2807, 16
      %v3118 = vrot.slane %v3116, 3
      %v3119 = vor.u32 %v3115, %v3118
      %v3120 = vsel %vm2922, %v3103, %v3119
      %v3121 = vshrl.u32 %v2882, 16
      %v3123 = vrot.slane %v3121, 2
      %v3124 = vshll.u32 %v2882, 16
      %v3126 = vrot.slane %v3124, 3
      %v3127 = vor.u32 %v3123, %v3126
      %v3128 = vsel %vm2922, %v3111, %v3127
      %v3129 = vshrl.u32 %v2809, 16
      %v3131 = vrot.slane %v3129, 2
      %v3132 = vshll.u32 %v2809, 16
      %v3134 = vrot.slane %v3132, 3
      %v3135 = vor.u32 %v3131, %v3134
      %v3136 = vsel %vm2922, %v3119, %v3135
      %v3137 = vshrl.u32 %v2884, 16
      %v3139 = vrot.slane %v3137, 2
      %v3140 = vshll.u32 %v2884, 16
      %v3142 = vrot.slane %v3140, 3
      %v3143 = vor.u32 %v3139, %v3142
      %v3144 = vsel %vm2922, %v3127, %v3143
      %v3145 = vshrl.u32 %v2811, 16
      %v3147 = vrot.slane %v3145, 2
      %v3148 = vshll.u32 %v2811, 16
      %v3150 = vrot.slane %v3148, 3
      %v3151 = vor.u32 %v3147, %v3150
      %v3152 = vsel %vm2922, %v3135, %v3151
      %v3153 = vshrl.u32 %v2886, 16
      %v3155 = vrot.slane %v3153, 2
      %v3156 = vshll.u32 %v2886, 16
      %v3158 = vrot.slane %v3156, 3
      %v3159 = vor.u32 %v3155, %v3158
      %v3160 = vsel %vm2922, %v3143, %v3159
      %v3203 = vunpack.c.l.b16 %v2887
      %v3204 = vunpack.c.l.b16 %v2888
      %v3205 = vunpack.c.l.b16 %v2889
      %v3206 = vunpack.c.l.b16 %v2890
      %v3207 = vunpack.c.l.b16 %v2891
      %v3208 = vunpack.c.l.b16 %v2892
      %v3209 = vunpack.c.l.b16 %v2893
      %v3210 = vunpack.c.l.b16 %v2894
      %v3211 = vunpack.c.l.b16 %v2895
      %v3212 = vunpack.c.l.b16 %v2896
      %v3213 = vunpack.c.l.b16 %v2897
      %v3214 = vunpack.c.l.b16 %v2898
      %v3215 = vunpack.c.l.b16 %v2899
      %v3216 = vunpack.c.l.b16 %v2900
      %v3217 = vunpack.c.l.b16 %v2901
      %v3218 = vunpack.c.l.b16 %v2902
      %v3219 = vunpack.c.l.b16 %v2903
      %v3220 = vunpack.c.l.b16 %v2904
      %v3221 = vunpack.c.l.b16 %v2905
      %v3222 = vunpack.c.l.b16 %v2906
      %v3223 = vunpack.c.l.b16 %v2907
      %v3224 = vunpack.c.l.b16 %v2908
      %v3225 = vunpack.c.l.b16 %v2909
      %v3226 = vunpack.c.l.b16 %v2910
      %v3227 = vunpack.c.l.b16 %v2911
      %v3228 = vunpack.c.l.b16 %v2912
      %v3229 = vunpack.c.l.b16 %v2913
      %v3230 = vunpack.c.l.b16 %v2914
      %v3231 = vpack.c.b16 %v3204, %v3203
      %v3232 = vpack.c.b16 %v3206, %v3205
      %v3233 = vpack.c.b16 %v3208, %v3207
      %v3234 = vpack.c.b16 %v3210, %v3209
      %v3235 = vpack.c.b16 %v3212, %v3211
      %v3236 = vpack.c.b16 %v3214, %v3213
      %v3237 = vpack.c.b16 %v3216, %v3215
      %v3238 = vpack.c.b16 %v3218, %v3217
      %v3239 = vpack.c.b16 %v3220, %v3219
      %v3240 = vpack.c.b16 %v3222, %v3221
      %v3241 = vpack.c.b16 %v3224, %v3223
      %v3242 = vpack.c.b16 %v3226, %v3225
      %v3243 = vpack.c.b16 %v3228, %v3227
      %v3244 = vpack.c.b16 %v3230, %v3229
      %v3260 = vsel %vm2781, %v2952, 0
      %v3263 = vsel %vm2781, %v2968, 0
      %v3266 = vsel %vm2781, %v2984, 0
      %v3269 = vsel %vm2781, %v3000, 0
      %v3272 = vsel %vm2781, %v3016, 0
      %v3275 = vsel %vm2781, %v3032, 0
      %v3278 = vsel %vm2781, %v3048, 0
      %v3281 = vsel %vm2781, %v3064, 0
      %v3284 = vsel %vm2781, %v3080, 0
      %v3287 = vsel %vm2781, %v3096, 0
      %v3290 = vsel %vm2781, %v3112, 0
      %v3293 = vsel %vm2781, %v3128, 0
      %v3296 = vsel %vm2781, %v3144, 0
      %v3299 = vsel %vm2781, %v3160, 0
      %3301 = vmatprep.subr.bf16.mxu0 0
      %3302 = vmatpush1.bf16.msra.mxu0 %v3238
      %3303 = vmatprep.subr.bf16.mxu0 0
      %3304 = vmatpush1.bf16.msra.mxu0 %v3237
      %3305 = vmatprep.subr.bf16.mxu0 0
      %3306 = vmatpush1.bf16.msra.mxu0 %v3236
      %3307 = vmatprep.subr.bf16.mxu0 0
      %3308 = vmatpush1.bf16.msra.mxu0 %v3235
      %3309 = vmatprep.subr.bf16.mxu0 0
      %3310 = vmatpush1.bf16.msra.mxu0 %v3234
      %3311 = vmatprep.subr.bf16.mxu0 0
      %3312 = vmatpush1.bf16.msra.mxu0 %v3233
      %3313 = vmatprep.subr.bf16.mxu0 0
      %3314 = vmatpush1.bf16.msra.mxu0 %v3232
      %3315 = vmatprep.subr.bf16.mxu0 0
      %3316 = vmatpush1.bf16.msra.mxu0 %v3231
      %3317 = vmatprep.subr.bf16.mxu0 0
      %3318 = vmatpush2.bf16.msra.mxu0 0
      %3319 = vmatprep.subr.bf16.mxu0 0
      %3320 = vmatpush2.bf16.msra.mxu0 0
      %3321 = vmatprep.subr.bf16.mxu0 0
      %3322 = vmatpush2.bf16.msra.mxu0 %v3244
      %3323 = vmatprep.subr.bf16.mxu0 0
      %3324 = vmatpush2.bf16.msra.mxu0 %v3243
      %3325 = vmatprep.subr.bf16.mxu0 0
      %3326 = vmatpush2.bf16.msra.mxu0 %v3242
      %3327 = vmatprep.subr.bf16.mxu0 0
      %3328 = vmatpush2.bf16.msra.mxu0 %v3241
      %3329 = vmatprep.subr.bf16.mxu0 0
      %3330 = vmatpush2.bf16.msra.mxu0 %v3240
      %3331 = vmatprep.subr.bf16.mxu0 0
      %3332 = vmatpush2.bf16.msra.mxu0 %v3239
      %3333 = vmatprep.mubr.bf16.mxu0 %v3260
      %3334 = vmatmul.mubr.bf16.gmra.mxu0 %v2937
      %v3335 = vpop.f32.mrf.mxu0
      %v3336 = vadd.f32 %v2920, %v3335
      %v3337 = vpop.f32.mrf.mxu0
      %v3338 = vpop.f32.mrf.mxu0
      %v3339 = vadd.f32 %v2920, %v3338
      %v3340 = vpop.f32.mrf.mxu0
      %3341 = vmatprep.mubr.bf16.mxu0 %v3263
      %3342 = vmatmul.mubr.bf16.gmra.mxu0 %v2960
      %v3343 = vpop.f32.mrf.mxu0
      %v3344 = vadd.f32 %v2920, %v3343
      %v3345 = vpop.f32.mrf.mxu0
      %v3346 = vpop.f32.mrf.mxu0
      %v3347 = vadd.f32 %v2920, %v3346
      %v3348 = vpop.f32.mrf.mxu0
      %3349 = vmatprep.mubr.bf16.mxu0 %v3266
      %3350 = vmatmul.mubr.bf16.gmra.mxu0 %v2976
      %v3351 = vpop.f32.mrf.mxu0
      %v3352 = vadd.f32 %v2920, %v3351
      %v3353 = vpop.f32.mrf.mxu0
      %v3354 = vpop.f32.mrf.mxu0
      %v3355 = vadd.f32 %v2920, %v3354
      %v3356 = vpop.f32.mrf.mxu0
      %3357 = vmatprep.mubr.bf16.mxu0 %v3269
      %3358 = vmatmul.mubr.bf16.gmra.mxu0 %v2992
      %v3359 = vpop.f32.mrf.mxu0
      %v3360 = vadd.f32 %v2920, %v3359
      %v3361 = vpop.f32.mrf.mxu0
      %v3362 = vpop.f32.mrf.mxu0
      %v3363 = vadd.f32 %v2920, %v3362
      %v3364 = vpop.f32.mrf.mxu0
      %3365 = vmatprep.mubr.bf16.mxu0 %v3272
      %3366 = vmatmul.mubr.bf16.gmra.mxu0 %v3008
      %v3367 = vpop.f32.mrf.mxu0
      %v3368 = vadd.f32 %v2920, %v3367
      %v3369 = vpop.f32.mrf.mxu0
      %v3370 = vpop.f32.mrf.mxu0
      %v3371 = vadd.f32 %v2920, %v3370
      %v3372 = vpop.f32.mrf.mxu0
      %3373 = vmatprep.mubr.bf16.mxu0 %v3275
      %3374 = vmatmul.mubr.bf16.gmra.mxu0 %v3024
      %v3375 = vpop.f32.mrf.mxu0
      %v3376 = vadd.f32 %v2920, %v3375
      %v3377 = vpop.f32.mrf.mxu0
      %v3378 = vpop.f32.mrf.mxu0
      %v3379 = vadd.f32 %v2920, %v3378
      %v3380 = vpop.f32.mrf.mxu0
      %3381 = vmatprep.mubr.bf16.mxu0 %v3278
      %3382 = vmatmul.mubr.bf16.gmra.mxu0 %v3040
      %v3383 = vpop.f32.mrf.mxu0
      %v3384 = vadd.f32 %v2920, %v3383
      %v3385 = vpop.f32.mrf.mxu0
      %v3386 = vpop.f32.mrf.mxu0
      %v3387 = vadd.f32 %v2920, %v3386
      %v3388 = vpop.f32.mrf.mxu0
      %3389 = vmatprep.mubr.bf16.mxu0 %v3281
      %3390 = vmatmul.mubr.bf16.gmra.mxu0 %v3056
      %v3391 = vpop.f32.mrf.mxu0
      %v3392 = vadd.f32 %v2920, %v3391
      %v3393 = vpop.f32.mrf.mxu0
      %v3394 = vpop.f32.mrf.mxu0
      %v3395 = vadd.f32 %v2920, %v3394
      %v3396 = vpop.f32.mrf.mxu0
      %3397 = vmatprep.mubr.bf16.mxu0 %v3284
      %3398 = vmatmul.mubr.bf16.gmra.mxu0 %v3072
      %v3399 = vpop.f32.mrf.mxu0
      %v3400 = vadd.f32 %v2920, %v3399
      %v3401 = vpop.f32.mrf.mxu0
      %v3402 = vpop.f32.mrf.mxu0
      %v3403 = vadd.f32 %v2920, %v3402
      %v3404 = vpop.f32.mrf.mxu0
      %3405 = vmatprep.mubr.bf16.mxu0 %v3287
      %3406 = vmatmul.mubr.bf16.gmra.mxu0 %v3088
      %v3407 = vpop.f32.mrf.mxu0
      %v3408 = vadd.f32 %v2920, %v3407
      %v3409 = vpop.f32.mrf.mxu0
      %v3410 = vpop.f32.mrf.mxu0
      %v3411 = vadd.f32 %v2920, %v3410
      %v3412 = vpop.f32.mrf.mxu0
      %3413 = vmatprep.mubr.bf16.mxu0 %v3290
      %3414 = vmatmul.mubr.bf16.gmra.mxu0 %v3104
      %v3415 = vpop.f32.mrf.mxu0
      %v3416 = vadd.f32 %v2920, %v3415
      %v3417 = vpop.f32.mrf.mxu0
      %v3418 = vpop.f32.mrf.mxu0
      %v3419 = vadd.f32 %v2920, %v3418
      %v3420 = vpop.f32.mrf.mxu0
      %3421 = vmatprep.mubr.bf16.mxu0 %v3293
      %3422 = vmatmul.mubr.bf16.gmra.mxu0 %v3120
      %v3423 = vpop.f32.mrf.mxu0
      %v3424 = vadd.f32 %v2920, %v3423
      %v3425 = vpop.f32.mrf.mxu0
      %v3426 = vpop.f32.mrf.mxu0
      %v3427 = vadd.f32 %v2920, %v3426
      %v3428 = vpop.f32.mrf.mxu0
      %3429 = vmatprep.mubr.bf16.mxu0 %v3296
      %3430 = vmatmul.mubr.bf16.gmra.mxu0 %v3136
      %v3431 = vpop.f32.mrf.mxu0
      %v3432 = vadd.f32 %v2920, %v3431
      %v3433 = vpop.f32.mrf.mxu0
      %v3434 = vpop.f32.mrf.mxu0
      %v3435 = vadd.f32 %v2920, %v3434
      %v3436 = vpop.f32.mrf.mxu0
      %3437 = vmatprep.mubr.bf16.mxu0 %v3299
      %3438 = vmatmul.mubr.bf16.gmra.mxu0 %v3152
      %v3439 = vpop.f32.mrf.mxu0
      %v3440 = vadd.f32 %v2920, %v3439
      %v3441 = vpop.f32.mrf.mxu0
      %v3442 = vpop.f32.mrf.mxu0
      %v3443 = vadd.f32 %v2920, %v3442
      %v3444 = vpop.f32.mrf.mxu0
      %3445 = vdwg.mxu0
      %v3446 = vmax.f32 %v3336, 0.0
      %v3447 = vmax.f32 %v3339, 0.0
      %v3448 = vmax.f32 %v3344, 0.0
      %v3449 = vmax.f32 %v3347, 0.0
      %v3450 = vmax.f32 %v3352, 0.0
      %v3451 = vmax.f32 %v3355, 0.0
      %v3452 = vmax.f32 %v3360, 0.0
      %v3453 = vmax.f32 %v3363, 0.0
      %v3454 = vmax.f32 %v3368, 0.0
      %v3455 = vmax.f32 %v3371, 0.0
      %v3456 = vmax.f32 %v3376, 0.0
      %v3457 = vmax.f32 %v3379, 0.0
      %v3458 = vmax.f32 %v3384, 0.0
      %v3459 = vmax.f32 %v3387, 0.0
      %v3460 = vmax.f32 %v3392, 0.0
      %v3461 = vmax.f32 %v3395, 0.0
      %v3462 = vmax.f32 %v3400, 0.0
      %v3463 = vmax.f32 %v3403, 0.0
      %v3464 = vmax.f32 %v3408, 0.0
      %v3465 = vmax.f32 %v3411, 0.0
      %v3466 = vmax.f32 %v3416, 0.0
      %v3467 = vmax.f32 %v3419, 0.0
      %v3468 = vmax.f32 %v3424, 0.0
      %v3469 = vmax.f32 %v3427, 0.0
      %v3470 = vmax.f32 %v3432, 0.0
      %v3471 = vmax.f32 %v3435, 0.0
      %v3472 = vmax.f32 %v3440, 0.0
      %v3473 = vmax.f32 %v3443, 0.0
      %v3474 = vmul.f32 %v3446, %v1722
      %v3475 = vmul.f32 %v3447, %v1727
      %v3476 = vmul.f32 %v3448, %v1732
      %v3477 = vmul.f32 %v3449, %v1737
      %v3478 = vmul.f32 %v3450, %v1742
      %v3479 = vmul.f32 %v3451, %v1747
      %v3480 = vmul.f32 %v3452, %v1752
      %v3481 = vmul.f32 %v3453, %v1757
      %v3482 = vmul.f32 %v3454, %v1762
      %v3483 = vmul.f32 %v3455, %v1767
      %v3484 = vmul.f32 %v3456, %v1772
      %v3485 = vmul.f32 %v3457, %v1777
      %v3486 = vmul.f32 %v3458, %v1782
      %v3487 = vmul.f32 %v3459, %v1787
      %v3488 = vmul.f32 %v3460, %v1792
      %v3489 = vmul.f32 %v3461, %v1797
      %v3490 = vmul.f32 %v3462, %v1802
      %v3491 = vmul.f32 %v3463, %v1807
      %v3492 = vmul.f32 %v3464, %v1812
      %v3493 = vmul.f32 %v3465, %v1817
      %v3494 = vmul.f32 %v3466, %v1822
      %v3495 = vmul.f32 %v3467, %v1827
      %v3496 = vmul.f32 %v3468, %v1832
      %v3497 = vmul.f32 %v3469, %v1837
      %v3498 = vmul.f32 %v3470, %v1842
      %v3499 = vmul.f32 %v3471, %v1847
      %v3500 = vmul.f32 %v3472, %v1852
      %v3501 = vmul.f32 %v3473, %v1857
      %v3502 = vpack.c.bf16 %v3475, %v3474
      %v3503 = vpack.c.bf16 %v3477, %v3476
      %v3504 = vpack.c.bf16 %v3479, %v3478
      %v3505 = vpack.c.bf16 %v3481, %v3480
      %v3506 = vpack.c.bf16 %v3483, %v3482
      %v3507 = vpack.c.bf16 %v3485, %v3484
      %v3508 = vpack.c.bf16 %v3487, %v3486
      %v3509 = vpack.c.bf16 %v3489, %v3488
      %v3510 = vpack.c.bf16 %v3491, %v3490
      %v3511 = vpack.c.bf16 %v3493, %v3492
      %v3512 = vpack.c.bf16 %v3495, %v3494
      %v3513 = vpack.c.bf16 %v3497, %v3496
      %v3514 = vpack.c.bf16 %v3499, %v3498
      %v3515 = vpack.c.bf16 %v3501, %v3500
      %v3530 = vunpack.c.l.b16 %v3502
      %v3531 = vunpack.c.h.b16 %v3502
      %v3532 = vunpack.c.l.b16 %v3503
      %v3533 = vunpack.c.h.b16 %v3503
      %v3534 = vunpack.c.l.b16 %v3504
      %v3535 = vunpack.c.h.b16 %v3504
      %v3536 = vunpack.c.l.b16 %v3505
      %v3537 = vunpack.c.h.b16 %v3505
      %v3538 = vunpack.c.l.b16 %v3506
      %v3539 = vunpack.c.h.b16 %v3506
      %v3540 = vunpack.c.l.b16 %v3507
      %v3541 = vunpack.c.h.b16 %v3507
      %v3542 = vunpack.c.l.b16 %v3508
      %v3543 = vunpack.c.h.b16 %v3508
      %v3544 = vunpack.c.l.b16 %v3509
      %v3545 = vunpack.c.h.b16 %v3509
      %v3546 = vunpack.c.l.b16 %v3510
      %v3547 = vunpack.c.h.b16 %v3510
      %v3548 = vunpack.c.l.b16 %v3511
      %v3549 = vunpack.c.h.b16 %v3511
      %v3550 = vunpack.c.l.b16 %v3512
      %v3551 = vunpack.c.h.b16 %v3512
      %v3552 = vunpack.c.l.b16 %v3513
      %v3553 = vunpack.c.h.b16 %v3513
      %v3554 = vunpack.c.l.b16 %v3514
      %v3555 = vunpack.c.h.b16 %v3514
      %v3556 = vunpack.c.l.b16 %v3515
      %v3557 = vunpack.c.h.b16 %v3515
      %v3558 = vpack.c.b16 %v3530, %v3530
      %v3559 = vpack.c.b16 %v3531, %v3531
      %v3560 = vpack.c.b16 %v3532, %v3532
      %v3561 = vpack.c.b16 %v3533, %v3533
      %v3562 = vpack.c.b16 %v3534, %v3534
      %v3563 = vpack.c.b16 %v3535, %v3535
      %v3564 = vpack.c.b16 %v3536, %v3536
      %v3565 = vpack.c.b16 %v3537, %v3537
      %v3566 = vpack.c.b16 %v3538, %v3538
      %v3567 = vpack.c.b16 %v3539, %v3539
      %v3568 = vpack.c.b16 %v3540, %v3540
      %v3569 = vpack.c.b16 %v3541, %v3541
      %v3570 = vpack.c.b16 %v3542, %v3542
      %v3571 = vpack.c.b16 %v3543, %v3543
      %v3572 = vpack.c.b16 %v3544, %v3544
      %v3573 = vpack.c.b16 %v3545, %v3545
      %v3574 = vpack.c.b16 %v3546, %v3546
      %v3575 = vpack.c.b16 %v3547, %v3547
      %v3576 = vpack.c.b16 %v3548, %v3548
      %v3577 = vpack.c.b16 %v3549, %v3549
      %v3578 = vpack.c.b16 %v3550, %v3550
      %v3579 = vpack.c.b16 %v3551, %v3551
      %v3580 = vpack.c.b16 %v3552, %v3552
      %v3581 = vpack.c.b16 %v3553, %v3553
      %v3582 = vpack.c.b16 %v3554, %v3554
      %v3583 = vpack.c.b16 %v3555, %v3555
      %v3584 = vpack.c.b16 %v3556, %v3556
      %v3585 = vpack.c.b16 %v3557, %v3557
      %3614 = vst.msk [vmem:[#allocation3 + $0x18] sm:$0xf] %vm713, %v3558
      %3615 = vst.msk [vmem:[#allocation3 + $0x1c] sm:$0xf] %vm713, %v3559
      %3616 = vst.msk [vmem:[#allocation3 + $0x20] sm:$0xf] %vm713, %v3560
      %3617 = vst.msk [vmem:[#allocation3 + $0x24] sm:$0xf] %vm713, %v3561
      %3618 = vst.msk [vmem:[#allocation3 + $0x28] sm:$0xf] %vm713, %v3562
      %3619 = vst.msk [vmem:[#allocation3 + $0x2c] sm:$0xf] %vm713, %v3563
      %3620 = vst.msk [vmem:[#allocation3 + $0x30] sm:$0xf] %vm713, %v3564
      %3621 = vst.msk [vmem:[#allocation3 + $0x34] sm:$0xf] %vm713, %v3565
      %3622 = vst.msk [vmem:[#allocation3 + $0x38] sm:$0xf] %vm713, %v3566
      %3623 = vst.msk [vmem:[#allocation3 + $0x3c] sm:$0xf] %vm713, %v3567
      %3624 = vst.msk [vmem:[#allocation3 + $0x40] sm:$0xf] %vm713, %v3568
      %3625 = vst.msk [vmem:[#allocation3 + $0x44] sm:$0xf] %vm713, %v3569
      %3626 = vst.msk [vmem:[#allocation3 + $0x48] sm:$0xf] %vm713, %v3570
      %3627 = vst.msk [vmem:[#allocation3 + $0x4c] sm:$0xf] %vm713, %v3571
      %3628 = vst.msk [vmem:[#allocation3 + $0x50] sm:$0xf] %vm713, %v3572
      %3629 = vst.msk [vmem:[#allocation3 + $0x54] sm:$0xf] %vm713, %v3573
      %3630 = vst.msk [vmem:[#allocation3 + $0x58] sm:$0xf] %vm713, %v3574
      %3631 = vst.msk [vmem:[#allocation3 + $0x5c] sm:$0xf] %vm713, %v3575
      %3632 = vst.msk [vmem:[#allocation3 + $0x60] sm:$0xf] %vm713, %v3576
      %3633 = vst.msk [vmem:[#allocation3 + $0x64] sm:$0xf] %vm713, %v3577
      %3634 = vst.msk [vmem:[#allocation3 + $0x68] sm:$0xf] %vm713, %v3578
      %3635 = vst.msk [vmem:[#allocation3 + $0x6c] sm:$0xf] %vm713, %v3579
      %3636 = vst.msk [vmem:[#allocation3 + $0x70] sm:$0xf] %vm713, %v3580
      %3637 = vst.msk [vmem:[#allocation3 + $0x74] sm:$0xf] %vm713, %v3581
      %3638 = vst.msk [vmem:[#allocation3 + $0x78] sm:$0xf] %vm713, %v3582
      %3639 = vst.msk [vmem:[#allocation3 + $0x7c] sm:$0xf] %vm713, %v3583
      %3640 = vst.msk [vmem:[#allocation3 + $0x80] sm:$0xf] %vm713, %v3584
      %3641 = vst.msk [vmem:[#allocation3 + $0x84] sm:$0xf] %vm713, %v3585
      %v3642 = vld [vmem:[#allocation3] sm:$0xf]
      %v3643 = vld [vmem:[#allocation3 + $0x4] sm:$0xf]
      %v3644 = vld [vmem:[#allocation3 + $0x8] sm:$0xf]
      %v3645 = vld [vmem:[#allocation3 + $0xc] sm:$0xf]
      %v3646 = vld [vmem:[#allocation3 + $0x10] sm:$0xf]
      %v3647 = vld [vmem:[#allocation3 + $0x14] sm:$0xf]
      %v3648 = vld [vmem:[#allocation3 + $0x18] sm:$0xf]
      %v3649 = vld [vmem:[#allocation3 + $0x1c] sm:$0xf]
      %v3650 = vld [vmem:[#allocation3 + $0x20] sm:$0xf]
      %v3651 = vld [vmem:[#allocation3 + $0x24] sm:$0xf]
      %v3652 = vld [vmem:[#allocation3 + $0x28] sm:$0xf]
      %v3653 = vld [vmem:[#allocation3 + $0x2c] sm:$0xf]
      %v3654 = vld [vmem:[#allocation3 + $0x30] sm:$0xf]
      %v3655 = vld [vmem:[#allocation3 + $0x34] sm:$0xf]
      %v3656 = vld [vmem:[#allocation3 + $0x38] sm:$0xf]
      %v3657 = vld [vmem:[#allocation3 + $0x3c] sm:$0xf]
      %v3658 = vld [vmem:[#allocation3 + $0x40] sm:$0xf]
      %v3659 = vld [vmem:[#allocation3 + $0x44] sm:$0xf]
      %v3660 = vld [vmem:[#allocation3 + $0x48] sm:$0xf]
      %v3661 = vld [vmem:[#allocation3 + $0x4c] sm:$0xf]
      %v3662 = vld [vmem:[#allocation3 + $0x50] sm:$0xf]
      %v3663 = vld [vmem:[#allocation3 + $0x54] sm:$0xf]
      %v3664 = vld [vmem:[#allocation3 + $0x58] sm:$0xf]
      %v3665 = vld [vmem:[#allocation3 + $0x5c] sm:$0xf]
      %v3666 = vld [vmem:[#allocation3 + $0x60] sm:$0xf]
      %v3667 = vld [vmem:[#allocation3 + $0x64] sm:$0xf]
      %v3668 = vld [vmem:[#allocation3 + $0x68] sm:$0xf]
      %v3669 = vld [vmem:[#allocation3 + $0x6c] sm:$0xf]
      %v3670 = vld [vmem:[#allocation3 + $0x70] sm:$0xf]
      %v3671 = vld [vmem:[#allocation3 + $0x74] sm:$0xf]
      %v3672 = vld [vmem:[#allocation3 + $0x78] sm:$0xf]
      %v3673 = vld [vmem:[#allocation3 + $0x7c] sm:$0xf]
      %v3674 = vld [vmem:[#allocation3 + $0x80] sm:$0xf]
      %v3675 = vld [vmem:[#allocation3 + $0x84] sm:$0xf]
      %v3676 = vld [vmem:[#allocation3 + $0x88] sm:$0xf]
      %v3677 = vld [vmem:[#allocation3 + $0x8c] sm:$0xf]
      %v3678 = vld [vmem:[#allocation3 + $0x90] sm:$0xf]
      %v3679 = vld [vmem:[#allocation3 + $0x94] sm:$0xf]
      %v3680 = vld [vmem:[#allocation3 + $0x98] sm:$0xf]
      %v3681 = vld [vmem:[#allocation3 + $0x9c] sm:$0xf]
      %v3710 = vunpack.c.l.b16 %v3642
      %v3711 = vunpack.c.l.b16 %v3643
      %v3712 = vunpack.c.l.b16 %v3644
      %v3713 = vunpack.c.l.b16 %v3645
      %v3714 = vunpack.c.l.b16 %v3646
      %v3715 = vunpack.c.l.b16 %v3647
      %v3716 = vunpack.c.l.b16 %v3648
      %v3717 = vunpack.c.l.b16 %v3649
      %v3718 = vunpack.c.l.b16 %v3650
      %v3719 = vunpack.c.l.b16 %v3651
      %v3720 = vunpack.c.l.b16 %v3652
      %v3721 = vunpack.c.l.b16 %v3653
      %v3722 = vunpack.c.l.b16 %v3654
      %v3723 = vunpack.c.l.b16 %v3655
      %v3724 = vunpack.c.l.b16 %v3656
      %v3725 = vunpack.c.l.b16 %v3657
      %v3726 = vunpack.c.l.b16 %v3658
      %v3727 = vunpack.c.l.b16 %v3659
      %v3728 = vunpack.c.l.b16 %v3660
      %v3729 = vunpack.c.l.b16 %v3661
      %v3730 = vunpack.c.l.b16 %v3662
      %v3731 = vunpack.c.l.b16 %v3663
      %v3732 = vunpack.c.l.b16 %v3664
      %v3733 = vunpack.c.l.b16 %v3665
      %v3734 = vunpack.c.l.b16 %v3666
      %v3735 = vunpack.c.l.b16 %v3667
      %v3736 = vunpack.c.l.b16 %v3668
      %v3737 = vunpack.c.l.b16 %v3669
      %v3738 = vpack.c.b16 %v3711, %v3710
      %v3739 = vpack.c.b16 %v3713, %v3712
      %v3740 = vpack.c.b16 %v3715, %v3714
      %v3741 = vpack.c.b16 %v3717, %v3716
      %v3742 = vpack.c.b16 %v3719, %v3718
      %v3743 = vpack.c.b16 %v3721, %v3720
      %v3744 = vpack.c.b16 %v3723, %v3722
      %v3745 = vpack.c.b16 %v3725, %v3724
      %v3746 = vpack.c.b16 %v3727, %v3726
      %v3747 = vpack.c.b16 %v3729, %v3728
      %v3748 = vpack.c.b16 %v3731, %v3730
      %v3749 = vpack.c.b16 %v3733, %v3732
      %v3750 = vpack.c.b16 %v3735, %v3734
      %v3751 = vpack.c.b16 %v3737, %v3736
      %v3754 = vunpack.c.l.b16 %v3670
      %v3755 = vunpack.c.l.b16 %v3671
      %v3756 = vpack.c.b16 %v3755, %v3754
      %3757 = vrot.lane.b32.xlu0 %v3739, 32
      %v3758 = vpop.permute.xlu0 %3757
      %3759 = vrot.lane.b32.xlu0 %v3740, 32
      %v3760 = vpop.permute.xlu0 %3759
      %3761 = vrot.lane.b32.xlu0 %v3741, 32
      %v3762 = vpop.permute.xlu0 %3761
      %3763 = vrot.lane.b32.xlu0 %v3742, 32
      %v3764 = vpop.permute.xlu0 %3763
      %3765 = vrot.lane.b32.xlu0 %v3743, 32
      %v3766 = vpop.permute.xlu0 %3765
      %3767 = vrot.lane.b32.xlu0 %v3744, 32
      %v3768 = vpop.permute.xlu0 %3767
      %3769 = vrot.lane.b32.xlu0 %v3745, 32
      %v3770 = vpop.permute.xlu0 %3769
      %3771 = vrot.lane.b32.xlu0 %v3746, 32
      %v3772 = vpop.permute.xlu0 %3771
      %3773 = vrot.lane.b32.xlu0 %v3747, 32
      %v3774 = vpop.permute.xlu0 %3773
      %3775 = vrot.lane.b32.xlu0 %v3748, 32
      %v3776 = vpop.permute.xlu0 %3775
      %3777 = vrot.lane.b32.xlu0 %v3749, 32
      %v3778 = vpop.permute.xlu0 %3777
      %3779 = vrot.lane.b32.xlu0 %v3750, 32
      %v3780 = vpop.permute.xlu0 %3779
      %3781 = vrot.lane.b32.xlu0 %v3751, 32
      %v3782 = vpop.permute.xlu0 %3781
      %3783 = vrot.lane.b32.xlu0 %v3756, 32
      %v3784 = vpop.permute.xlu0 %3783
      %v3787 = vunpack.c.l.b16 %v3672
      %v3788 = vunpack.c.l.b16 %v3673
      %v3789 = vpack.c.b16 %v3788, %v3787
      %3790 = vrot.lane.b32.xlu0 %v3740, 64
      %v3791 = vpop.permute.xlu0 %3790
      %3792 = vrot.lane.b32.xlu0 %v3741, 64
      %v3793 = vpop.permute.xlu0 %3792
      %3794 = vrot.lane.b32.xlu0 %v3742, 64
      %v3795 = vpop.permute.xlu0 %3794
      %3796 = vrot.lane.b32.xlu0 %v3743, 64
      %v3797 = vpop.permute.xlu0 %3796
      %3798 = vrot.lane.b32.xlu0 %v3744, 64
      %v3799 = vpop.permute.xlu0 %3798
      %3800 = vrot.lane.b32.xlu0 %v3745, 64
      %v3801 = vpop.permute.xlu0 %3800
      %3802 = vrot.lane.b32.xlu0 %v3746, 64
      %v3803 = vpop.permute.xlu0 %3802
      %3804 = vrot.lane.b32.xlu0 %v3747, 64
      %v3805 = vpop.permute.xlu0 %3804
      %3806 = vrot.lane.b32.xlu0 %v3748, 64
      %v3807 = vpop.permute.xlu0 %3806
      %3808 = vrot.lane.b32.xlu0 %v3749, 64
      %v3809 = vpop.permute.xlu0 %3808
      %3810 = vrot.lane.b32.xlu0 %v3750, 64
      %v3811 = vpop.permute.xlu0 %3810
      %3812 = vrot.lane.b32.xlu0 %v3751, 64
      %v3813 = vpop.permute.xlu0 %3812
      %3814 = vrot.lane.b32.xlu0 %v3756, 64
      %v3815 = vpop.permute.xlu0 %3814
      %3816 = vrot.lane.b32.xlu0 %v3789, 64
      %v3817 = vpop.permute.xlu0 %3816
      %v3820 = vunpack.c.l.b16 %v3674
      %v3821 = vunpack.c.l.b16 %v3675
      %v3822 = vpack.c.b16 %v3821, %v3820
      %3823 = vrot.lane.b32.xlu0 %v3741, 96
      %v3824 = vpop.permute.xlu0 %3823
      %3825 = vrot.lane.b32.xlu0 %v3742, 96
      %v3826 = vpop.permute.xlu0 %3825
      %3827 = vrot.lane.b32.xlu0 %v3743, 96
      %v3828 = vpop.permute.xlu0 %3827
      %3829 = vrot.lane.b32.xlu0 %v3744, 96
      %v3830 = vpop.permute.xlu0 %3829
      %3831 = vrot.lane.b32.xlu0 %v3745, 96
      %v3832 = vpop.permute.xlu0 %3831
      %3833 = vrot.lane.b32.xlu0 %v3746, 96
      %v3834 = vpop.permute.xlu0 %3833
      %3835 = vrot.lane.b32.xlu0 %v3747, 96
      %v3836 = vpop.permute.xlu0 %3835
      %3837 = vrot.lane.b32.xlu0 %v3748, 96
      %v3838 = vpop.permute.xlu0 %3837
      %3839 = vrot.lane.b32.xlu0 %v3749, 96
      %v3840 = vpop.permute.xlu0 %3839
      %3841 = vrot.lane.b32.xlu0 %v3750, 96
      %v3842 = vpop.permute.xlu0 %3841
      %3843 = vrot.lane.b32.xlu0 %v3751, 96
      %v3844 = vpop.permute.xlu0 %3843
      %3845 = vrot.lane.b32.xlu0 %v3756, 96
      %v3846 = vpop.permute.xlu0 %3845
      %3847 = vrot.lane.b32.xlu0 %v3789, 96
      %v3848 = vpop.permute.xlu0 %3847
      %3849 = vrot.lane.b32.xlu0 %v3822, 96
      %v3850 = vpop.permute.xlu0 %3849
      %v3853 = vunpack.c.l.b16 %v3676
      %v3854 = vunpack.c.l.b16 %v3677
      %v3855 = vpack.c.b16 %v3854, %v3853
      %v3858 = vunpack.c.l.b16 %v3678
      %v3859 = vunpack.c.l.b16 %v3679
      %v3860 = vpack.c.b16 %v3859, %v3858
      %3861 = vrot.lane.b32.xlu0 %v3789, 32
      %v3862 = vpop.permute.xlu0 %3861
      %3863 = vrot.lane.b32.xlu0 %v3822, 32
      %v3864 = vpop.permute.xlu0 %3863
      %3865 = vrot.lane.b32.xlu0 %v3855, 32
      %v3866 = vpop.permute.xlu0 %3865
      %3867 = vrot.lane.b32.xlu0 %v3860, 32
      %v3868 = vpop.permute.xlu0 %3867
      %v3871 = vunpack.c.l.b16 %v3680
      %v3872 = vunpack.c.l.b16 %v3681
      %v3873 = vpack.c.b16 %v3872, %v3871
      %3874 = vrot.lane.b32.xlu0 %v3822, 64
      %v3875 = vpop.permute.xlu0 %3874
      %3876 = vrot.lane.b32.xlu0 %v3855, 64
      %v3877 = vpop.permute.xlu0 %3876
      %3878 = vrot.lane.b32.xlu0 %v3860, 64
      %v3879 = vpop.permute.xlu0 %3878
      %3880 = vrot.lane.b32.xlu0 %v3873, 64
      %v3881 = vpop.permute.xlu0 %3880
      %v3884 = vsel %vm2719, %v3738, %v3758
      %v3887 = vsel %vm2719, %v3739, %v3760
      %v3890 = vsel %vm2719, %v3740, %v3762
      %v3893 = vsel %vm2719, %v3741, %v3764
      %v3896 = vsel %vm2719, %v3742, %v3766
      %v3899 = vsel %vm2719, %v3743, %v3768
      %v3902 = vsel %vm2719, %v3744, %v3770
      %v3905 = vsel %vm2719, %v3745, %v3772
      %v3908 = vsel %vm2719, %v3746, %v3774
      %v3911 = vsel %vm2719, %v3747, %v3776
      %v3914 = vsel %vm2719, %v3748, %v3778
      %v3917 = vsel %vm2719, %v3749, %v3780
      %v3920 = vsel %vm2719, %v3750, %v3782
      %v3923 = vsel %vm2719, %v3751, %v3784
      %v3925 = vsel %vm896, %v3884, %v3791
      %v3927 = vsel %vm896, %v3887, %v3793
      %v3929 = vsel %vm896, %v3890, %v3795
      %v3931 = vsel %vm896, %v3893, %v3797
      %v3933 = vsel %vm896, %v3896, %v3799
      %v3935 = vsel %vm896, %v3899, %v3801
      %v3937 = vsel %vm896, %v3902, %v3803
      %v3939 = vsel %vm896, %v3905, %v3805
      %v3941 = vsel %vm896, %v3908, %v3807
      %v3943 = vsel %vm896, %v3911, %v3809
      %v3945 = vsel %vm896, %v3914, %v3811
      %v3947 = vsel %vm896, %v3917, %v3813
      %v3949 = vsel %vm896, %v3920, %v3815
      %v3951 = vsel %vm896, %v3923, %v3817
      %v3953 = vsel %vm2781, %v3925, %v3824
      %v3956 = vsel %vm2781, %v3927, %v3826
      %v3959 = vsel %vm2781, %v3929, %v3828
      %v3962 = vsel %vm2781, %v3931, %v3830
      %v3965 = vsel %vm2781, %v3933, %v3832
      %v3968 = vsel %vm2781, %v3935, %v3834
      %v3971 = vsel %vm2781, %v3937, %v3836
      %v3974 = vsel %vm2781, %v3939, %v3838
      %v3977 = vsel %vm2781, %v3941, %v3840
      %v3980 = vsel %vm2781, %v3943, %v3842
      %v3983 = vsel %vm2781, %v3945, %v3844
      %v3986 = vsel %vm2781, %v3947, %v3846
      %v3989 = vsel %vm2781, %v3949, %v3848
      %v3992 = vsel %vm2781, %v3951, %v3850
      %v3996 = vsel %vm2719, %v3756, %v3862
      %v3999 = vsel %vm2719, %v3789, %v3864
      %v4002 = vsel %vm2719, %v3822, %v3866
      %v4005 = vsel %vm2719, %v3855, %v3868
      %v4007 = vsel %vm896, %v3996, %v3875
      %v4009 = vsel %vm896, %v3999, %v3877
      %v4011 = vsel %vm896, %v4002, %v3879
      %v4013 = vsel %vm896, %v4005, %v3881
      %v4014 = vld [vmem:[%s8] sm:$0xff]
      %v4015 = vld [vmem:[%s8 + $0x8] sm:$0xff]
      %v4016 = vld [vmem:[%s8 + $0x10] sm:$0xff]
      %v4017 = vld [vmem:[%s8 + $0x18] sm:$0xff]
      %v4018 = vld [vmem:[%s8 + $0x20] sm:$0xff]
      %v4019 = vld [vmem:[%s8 + $0x28] sm:$0xff]
      %v4020 = vld [vmem:[%s8 + $0x30] sm:$0xff]
      %v4021 = vld [vmem:[%s8 + $0x38] sm:$0xff]
      %v4022 = vld [vmem:[%s8 + $0x40] sm:$0xff]
      %v4023 = vld [vmem:[%s8 + $0x48] sm:$0xff]
      %v4024 = vld [vmem:[%s8 + $0x50] sm:$0xff]
      %v4025 = vld [vmem:[%s8 + $0x58] sm:$0xff]
      %v4026 = vld [vmem:[%s8 + $0x60] sm:$0xff]
      %v4027 = vld [vmem:[%s8 + $0x68] sm:$0xff]
      %v4028 = vld [vmem:[%s8 + $0x70] sm:$0xff]
      %v4029 = vld [vmem:[%s8 + $0x78] sm:$0xff]
      %v4030 = vld [vmem:[%s8 + $0x80] sm:$0xff]
      %v4031 = vld [vmem:[%s8 + $0x88] sm:$0xff]
      %v4032 = vld [vmem:[%s8 + $0x90] sm:$0xff]
      %v4033 = vld [vmem:[%s8 + $0x98] sm:$0xff]
      %v4034 = vld [vmem:[%s8 + $0xa0] sm:$0xff]
      %v4035 = vld [vmem:[%s8 + $0xa8] sm:$0xff]
      %v4036 = vld [vmem:[%s8 + $0xb0] sm:$0xff]
      %v4037 = vld [vmem:[%s8 + $0xb8] sm:$0xff]
      %v4038 = vld [vmem:[%s8 + $0xc0] sm:$0xff]
      %v4039 = vld [vmem:[%s8 + $0xc8] sm:$0xff]
      %v4040 = vld [vmem:[%s8 + $0xd0] sm:$0xff]
      %v4041 = vld [vmem:[%s8 + $0xd8] sm:$0xff]
      %v4042 = vld [vmem:[%s9] sm:$0x3]
      %v4044 = vlaneseq
      %v4045 = vshrl.u32 %v4044, 7
      %v4046 = vsub.s32 0, %v4045
      %v4047 = vrot.slane %v4042, %v4046
      %v4048 = vlaneseq
      %v4049 = vshrl.u32 %v4048, 7
      %v4050 = vsub.s32 1, %v4049
      %v4051 = vrot.slane %v4042, %v4050
      %v4082 = vunpack.c.l.b16 %v4014
      %v4083 = vunpack.c.h.b16 %v4014
      %v4084 = vunpack.c.l.b16 %v4015
      %v4085 = vunpack.c.h.b16 %v4015
      %v4086 = vunpack.c.l.b16 %v4016
      %v4087 = vunpack.c.h.b16 %v4016
      %v4088 = vunpack.c.l.b16 %v4017
      %v4089 = vunpack.c.h.b16 %v4017
      %v4090 = vunpack.c.l.b16 %v4018
      %v4091 = vunpack.c.h.b16 %v4018
      %v4092 = vunpack.c.l.b16 %v4019
      %v4093 = vunpack.c.h.b16 %v4019
      %v4094 = vunpack.c.l.b16 %v4020
      %v4095 = vunpack.c.h.b16 %v4020
      %v4096 = vunpack.c.l.b16 %v4021
      %v4097 = vunpack.c.h.b16 %v4021
      %v4098 = vunpack.c.l.b16 %v4022
      %v4099 = vunpack.c.h.b16 %v4022
      %v4100 = vunpack.c.l.b16 %v4023
      %v4101 = vunpack.c.h.b16 %v4023
      %v4102 = vunpack.c.l.b16 %v4024
      %v4103 = vunpack.c.h.b16 %v4024
      %v4104 = vunpack.c.l.b16 %v4025
      %v4105 = vunpack.c.h.b16 %v4025
      %v4106 = vunpack.c.l.b16 %v4026
      %v4107 = vunpack.c.h.b16 %v4026
      %v4108 = vunpack.c.l.b16 %v4027
      %v4109 = vunpack.c.h.b16 %v4027
      %v4110 = vunpack.c.l.b16 %v4028
      %v4111 = vunpack.c.h.b16 %v4028
      %v4112 = vunpack.c.l.b16 %v4029
      %v4113 = vunpack.c.h.b16 %v4029
      %v4114 = vunpack.c.l.b16 %v4030
      %v4115 = vunpack.c.h.b16 %v4030
      %v4116 = vunpack.c.l.b16 %v4031
      %v4117 = vunpack.c.h.b16 %v4031
      %v4118 = vunpack.c.l.b16 %v4032
      %v4119 = vunpack.c.h.b16 %v4032
      %v4120 = vunpack.c.l.b16 %v4033
      %v4121 = vunpack.c.h.b16 %v4033
      %v4122 = vunpack.c.l.b16 %v4034
      %v4123 = vunpack.c.h.b16 %v4034
      %v4124 = vunpack.c.l.b16 %v4035
      %v4125 = vunpack.c.h.b16 %v4035
      %v4126 = vunpack.c.l.b16 %v4036
      %v4127 = vunpack.c.h.b16 %v4036
      %v4128 = vunpack.c.l.b16 %v4037
      %v4129 = vunpack.c.h.b16 %v4037
      %v4130 = vunpack.c.l.b16 %v4038
      %v4131 = vunpack.c.h.b16 %v4038
      %v4132 = vunpack.c.l.b16 %v4039
      %v4133 = vunpack.c.h.b16 %v4039
      %v4134 = vunpack.c.l.b16 %v4040
      %v4135 = vunpack.c.h.b16 %v4040
      %v4136 = vunpack.c.l.b16 %v4041
      %v4137 = vunpack.c.h.b16 %v4041
      %v4138 = vpack.c.b16 %v4084, %v4082
      %v4139 = vpack.c.b16 %v4085, %v4083
      %v4140 = vpack.c.b16 %v4088, %v4086
      %v4141 = vpack.c.b16 %v4089, %v4087
      %v4142 = vpack.c.b16 %v4092, %v4090
      %v4143 = vpack.c.b16 %v4093, %v4091
      %v4144 = vpack.c.b16 %v4096, %v4094
      %v4145 = vpack.c.b16 %v4097, %v4095
      %v4146 = vpack.c.b16 %v4100, %v4098
      %v4147 = vpack.c.b16 %v4101, %v4099
      %v4148 = vpack.c.b16 %v4104, %v4102
      %v4149 = vpack.c.b16 %v4105, %v4103
      %v4150 = vpack.c.b16 %v4108, %v4106
      %v4151 = vpack.c.b16 %v4109, %v4107
      %v4152 = vpack.c.b16 %v4112, %v4110
      %v4153 = vpack.c.b16 %v4113, %v4111
      %v4154 = vpack.c.b16 %v4116, %v4114
      %v4155 = vpack.c.b16 %v4117, %v4115
      %v4156 = vpack.c.b16 %v4120, %v4118
      %v4157 = vpack.c.b16 %v4121, %v4119
      %v4158 = vpack.c.b16 %v4124, %v4122
      %v4159 = vpack.c.b16 %v4125, %v4123
      %v4160 = vpack.c.b16 %v4128, %v4126
      %v4161 = vpack.c.b16 %v4129, %v4127
      %v4162 = vpack.c.b16 %v4132, %v4130
      %v4163 = vpack.c.b16 %v4133, %v4131
      %v4164 = vpack.c.b16 %v4136, %v4134
      %v4165 = vpack.c.b16 %v4137, %v4135
      %v4194 = vsel %vm2781, %v3933, 0
      %v4196 = vsel %vm2781, %v3935, 0
      %v4198 = vsel %vm2781, %v3937, 0
      %v4200 = vsel %vm2781, %v3939, 0
      %v4202 = vsel %vm2781, %v3941, 0
      %v4204 = vsel %vm2781, %v3943, 0
      %v4206 = vsel %vm2781, %v3945, 0
      %v4208 = vsel %vm2781, %v3947, 0
      %v4210 = vsel %vm2781, %v3949, 0
      %v4212 = vsel %vm2781, %v3951, 0
      %v4214 = vsel %vm2781, %v4007, 0
      %v4216 = vsel %vm2781, %v4009, 0
      %v4218 = vsel %vm2781, %v4011, 0
      %v4220 = vsel %vm2781, %v4013, 0
      %4222 = vmatprep.subr.bf16.mxu0 %v4153
      %4223 = vmatpush1.bf16.msra.mxu0 %v4152
      %4224 = vmatprep.subr.bf16.mxu0 %v4151
      %4225 = vmatpush1.bf16.msra.mxu0 %v4150
      %4226 = vmatprep.subr.bf16.mxu0 %v4149
      %4227 = vmatpush1.bf16.msra.mxu0 %v4148
      %4228 = vmatprep.subr.bf16.mxu0 %v4147
      %4229 = vmatpush1.bf16.msra.mxu0 %v4146
      %4230 = vmatprep.subr.bf16.mxu0 %v4145
      %4231 = vmatpush1.bf16.msra.mxu0 %v4144
      %4232 = vmatprep.subr.bf16.mxu0 %v4143
      %4233 = vmatpush1.bf16.msra.mxu0 %v4142
      %4234 = vmatprep.subr.bf16.mxu0 %v4141
      %4235 = vmatpush1.bf16.msra.mxu0 %v4140
      %4236 = vmatprep.subr.bf16.mxu0 %v4139
      %4237 = vmatpush1.bf16.msra.mxu0 %v4138
      %4238 = vmatprep.subr.bf16.mxu0 0
      %4239 = vmatpush2.bf16.msra.mxu0 0
      %4240 = vmatprep.subr.bf16.mxu0 0
      %4241 = vmatpush2.bf16.msra.mxu0 0
      %4242 = vmatprep.subr.bf16.mxu0 %v4165
      %4243 = vmatpush2.bf16.msra.mxu0 %v4164
      %4244 = vmatprep.subr.bf16.mxu0 %v4163
      %4245 = vmatpush2.bf16.msra.mxu0 %v4162
      %4246 = vmatprep.subr.bf16.mxu0 %v4161
      %4247 = vmatpush2.bf16.msra.mxu0 %v4160
      %4248 = vmatprep.subr.bf16.mxu0 %v4159
      %4249 = vmatpush2.bf16.msra.mxu0 %v4158
      %4250 = vmatprep.subr.bf16.mxu0 %v4157
      %4251 = vmatpush2.bf16.msra.mxu0 %v4156
      %4252 = vmatprep.subr.bf16.mxu0 %v4155
      %4253 = vmatpush2.bf16.msra.mxu0 %v4154
      %4254 = vmatprep.mubr.bf16.mxu0 %v4194
      %4255 = vmatmul.mubr.bf16.gmra.mxu0 %v3953
      %v4256 = vpop.f32.mrf.mxu0
      %v4257 = vadd.f32 %v4047, %v4256
      %v4258 = vpop.f32.mrf.mxu0
      %v4259 = vadd.f32 %v4051, %v4258
      %v4260 = vpop.f32.mrf.mxu0
      %v4261 = vadd.f32 %v4047, %v4260
      %v4262 = vpop.f32.mrf.mxu0
      %v4263 = vadd.f32 %v4051, %v4262
      %4264 = vmatprep.mubr.bf16.mxu0 %v4196
      %4265 = vmatmul.mubr.bf16.gmra.mxu0 %v3956
      %v4266 = vpop.f32.mrf.mxu0
      %v4267 = vadd.f32 %v4047, %v4266
      %v4268 = vpop.f32.mrf.mxu0
      %v4269 = vadd.f32 %v4051, %v4268
      %v4270 = vpop.f32.mrf.mxu0
      %v4271 = vadd.f32 %v4047, %v4270
      %v4272 = vpop.f32.mrf.mxu0
      %v4273 = vadd.f32 %v4051, %v4272
      %4274 = vmatprep.mubr.bf16.mxu0 %v4198
      %4275 = vmatmul.mubr.bf16.gmra.mxu0 %v3959
      %v4276 = vpop.f32.mrf.mxu0
      %v4277 = vadd.f32 %v4047, %v4276
      %v4278 = vpop.f32.mrf.mxu0
      %v4279 = vadd.f32 %v4051, %v4278
      %v4280 = vpop.f32.mrf.mxu0
      %v4281 = vadd.f32 %v4047, %v4280
      %v4282 = vpop.f32.mrf.mxu0
      %v4283 = vadd.f32 %v4051, %v4282
      %4284 = vmatprep.mubr.bf16.mxu0 %v4200
      %4285 = vmatmul.mubr.bf16.gmra.mxu0 %v3962
      %v4286 = vpop.f32.mrf.mxu0
      %v4287 = vadd.f32 %v4047, %v4286
      %v4288 = vpop.f32.mrf.mxu0
      %v4289 = vadd.f32 %v4051, %v4288
      %v4290 = vpop.f32.mrf.mxu0
      %v4291 = vadd.f32 %v4047, %v4290
      %v4292 = vpop.f32.mrf.mxu0
      %v4293 = vadd.f32 %v4051, %v4292
      %4294 = vmatprep.mubr.bf16.mxu0 %v4202
      %4295 = vmatmul.mubr.bf16.gmra.mxu0 %v3965
      %v4296 = vpop.f32.mrf.mxu0
      %v4297 = vadd.f32 %v4047, %v4296
      %v4298 = vpop.f32.mrf.mxu0
      %v4299 = vadd.f32 %v4051, %v4298
      %v4300 = vpop.f32.mrf.mxu0
      %v4301 = vadd.f32 %v4047, %v4300
      %v4302 = vpop.f32.mrf.mxu0
      %v4303 = vadd.f32 %v4051, %v4302
      %4304 = vmatprep.mubr.bf16.mxu0 %v4204
      %4305 = vmatmul.mubr.bf16.gmra.mxu0 %v3968
      %v4306 = vpop.f32.mrf.mxu0
      %v4307 = vadd.f32 %v4047, %v4306
      %v4308 = vpop.f32.mrf.mxu0
      %v4309 = vadd.f32 %v4051, %v4308
      %v4310 = vpop.f32.mrf.mxu0
      %v4311 = vadd.f32 %v4047, %v4310
      %v4312 = vpop.f32.mrf.mxu0
      %v4313 = vadd.f32 %v4051, %v4312
      %4314 = vmatprep.mubr.bf16.mxu0 %v4206
      %4315 = vmatmul.mubr.bf16.gmra.mxu0 %v3971
      %v4316 = vpop.f32.mrf.mxu0
      %v4317 = vadd.f32 %v4047, %v4316
      %v4318 = vpop.f32.mrf.mxu0
      %v4319 = vadd.f32 %v4051, %v4318
      %v4320 = vpop.f32.mrf.mxu0
      %v4321 = vadd.f32 %v4047, %v4320
      %v4322 = vpop.f32.mrf.mxu0
      %v4323 = vadd.f32 %v4051, %v4322
      %4324 = vmatprep.mubr.bf16.mxu0 %v4208
      %4325 = vmatmul.mubr.bf16.gmra.mxu0 %v3974
      %v4326 = vpop.f32.mrf.mxu0
      %v4327 = vadd.f32 %v4047, %v4326
      %v4328 = vpop.f32.mrf.mxu0
      %v4329 = vadd.f32 %v4051, %v4328
      %v4330 = vpop.f32.mrf.mxu0
      %v4331 = vadd.f32 %v4047, %v4330
      %v4332 = vpop.f32.mrf.mxu0
      %v4333 = vadd.f32 %v4051, %v4332
      %4334 = vmatprep.mubr.bf16.mxu0 %v4210
      %4335 = vmatmul.mubr.bf16.gmra.mxu0 %v3977
      %v4336 = vpop.f32.mrf.mxu0
      %v4337 = vadd.f32 %v4047, %v4336
      %v4338 = vpop.f32.mrf.mxu0
      %v4339 = vadd.f32 %v4051, %v4338
      %v4340 = vpop.f32.mrf.mxu0
      %v4341 = vadd.f32 %v4047, %v4340
      %v4342 = vpop.f32.mrf.mxu0
      %v4343 = vadd.f32 %v4051, %v4342
      %4344 = vmatprep.mubr.bf16.mxu0 %v4212
      %4345 = vmatmul.mubr.bf16.gmra.mxu0 %v3980
      %v4346 = vpop.f32.mrf.mxu0
      %v4347 = vadd.f32 %v4047, %v4346
      %v4348 = vpop.f32.mrf.mxu0
      %v4349 = vadd.f32 %v4051, %v4348
      %v4350 = vpop.f32.mrf.mxu0
      %v4351 = vadd.f32 %v4047, %v4350
      %v4352 = vpop.f32.mrf.mxu0
      %v4353 = vadd.f32 %v4051, %v4352
      %4354 = vmatprep.mubr.bf16.mxu0 %v4214
      %4355 = vmatmul.mubr.bf16.gmra.mxu0 %v3983
      %v4356 = vpop.f32.mrf.mxu0
      %v4357 = vadd.f32 %v4047, %v4356
      %v4358 = vpop.f32.mrf.mxu0
      %v4359 = vadd.f32 %v4051, %v4358
      %v4360 = vpop.f32.mrf.mxu0
      %v4361 = vadd.f32 %v4047, %v4360
      %v4362 = vpop.f32.mrf.mxu0
      %v4363 = vadd.f32 %v4051, %v4362
      %4364 = vmatprep.mubr.bf16.mxu0 %v4216
      %4365 = vmatmul.mubr.bf16.gmra.mxu0 %v3986
      %v4366 = vpop.f32.mrf.mxu0
      %v4367 = vadd.f32 %v4047, %v4366
      %v4368 = vpop.f32.mrf.mxu0
      %v4369 = vadd.f32 %v4051, %v4368
      %v4370 = vpop.f32.mrf.mxu0
      %v4371 = vadd.f32 %v4047, %v4370
      %v4372 = vpop.f32.mrf.mxu0
      %v4373 = vadd.f32 %v4051, %v4372
      %4374 = vmatprep.mubr.bf16.mxu0 %v4218
      %4375 = vmatmul.mubr.bf16.gmra.mxu0 %v3989
      %v4376 = vpop.f32.mrf.mxu0
      %v4377 = vadd.f32 %v4047, %v4376
      %v4378 = vpop.f32.mrf.mxu0
      %v4379 = vadd.f32 %v4051, %v4378
      %v4380 = vpop.f32.mrf.mxu0
      %v4381 = vadd.f32 %v4047, %v4380
      %v4382 = vpop.f32.mrf.mxu0
      %v4383 = vadd.f32 %v4051, %v4382
      %4384 = vmatprep.mubr.bf16.mxu0 %v4220
      %4385 = vmatmul.mubr.bf16.gmra.mxu0 %v3992
      %v4386 = vpop.f32.mrf.mxu0
      %v4387 = vadd.f32 %v4047, %v4386
      %v4388 = vpop.f32.mrf.mxu0
      %v4389 = vadd.f32 %v4051, %v4388
      %v4390 = vpop.f32.mrf.mxu0
      %v4391 = vadd.f32 %v4047, %v4390
      %v4392 = vpop.f32.mrf.mxu0
      %v4393 = vadd.f32 %v4051, %v4392
      %4394 = vdwg.mxu0
      %v4395 = vmax.f32 %v4257, 0.0
      %v4396 = vmax.f32 %v4259, 0.0
      %v4397 = vmax.f32 %v4261, 0.0
      %v4398 = vmax.f32 %v4263, 0.0
      %v4399 = vmax.f32 %v4267, 0.0
      %v4400 = vmax.f32 %v4269, 0.0
      %v4401 = vmax.f32 %v4271, 0.0
      %v4402 = vmax.f32 %v4273, 0.0
      %v4403 = vmax.f32 %v4277, 0.0
      %v4404 = vmax.f32 %v4279, 0.0
      %v4405 = vmax.f32 %v4281, 0.0
      %v4406 = vmax.f32 %v4283, 0.0
      %v4407 = vmax.f32 %v4287, 0.0
      %v4408 = vmax.f32 %v4289, 0.0
      %v4409 = vmax.f32 %v4291, 0.0
      %v4410 = vmax.f32 %v4293, 0.0
      %v4411 = vmax.f32 %v4297, 0.0
      %v4412 = vmax.f32 %v4299, 0.0
      %v4413 = vmax.f32 %v4301, 0.0
      %v4414 = vmax.f32 %v4303, 0.0
      %v4415 = vmax.f32 %v4307, 0.0
      %v4416 = vmax.f32 %v4309, 0.0
      %v4417 = vmax.f32 %v4311, 0.0
      %v4418 = vmax.f32 %v4313, 0.0
      %v4419 = vmax.f32 %v4317, 0.0
      %v4420 = vmax.f32 %v4319, 0.0
      %v4421 = vmax.f32 %v4321, 0.0
      %v4422 = vmax.f32 %v4323, 0.0
      %v4423 = vmax.f32 %v4327, 0.0
      %v4424 = vmax.f32 %v4329, 0.0
      %v4425 = vmax.f32 %v4331, 0.0
      %v4426 = vmax.f32 %v4333, 0.0
      %v4427 = vmax.f32 %v4337, 0.0
      %v4428 = vmax.f32 %v4339, 0.0
      %v4429 = vmax.f32 %v4341, 0.0
      %v4430 = vmax.f32 %v4343, 0.0
      %v4431 = vmax.f32 %v4347, 0.0
      %v4432 = vmax.f32 %v4349, 0.0
      %v4433 = vmax.f32 %v4351, 0.0
      %v4434 = vmax.f32 %v4353, 0.0
      %v4435 = vmax.f32 %v4357, 0.0
      %v4436 = vmax.f32 %v4359, 0.0
      %v4437 = vmax.f32 %v4361, 0.0
      %v4438 = vmax.f32 %v4363, 0.0
      %v4439 = vmax.f32 %v4367, 0.0
      %v4440 = vmax.f32 %v4369, 0.0
      %v4441 = vmax.f32 %v4371, 0.0
      %v4442 = vmax.f32 %v4373, 0.0
      %v4443 = vmax.f32 %v4377, 0.0
      %v4444 = vmax.f32 %v4379, 0.0
      %v4445 = vmax.f32 %v4381, 0.0
      %v4446 = vmax.f32 %v4383, 0.0
      %v4447 = vmax.f32 %v4387, 0.0
      %v4448 = vmax.f32 %v4389, 0.0
      %v4449 = vmax.f32 %v4391, 0.0
      %v4450 = vmax.f32 %v4393, 0.0
      %v4451 = vpack.c.bf16 %v4397, %v4395
      %v4452 = vpack.c.bf16 %v4398, %v4396
      %v4453 = vpack.c.bf16 %v4401, %v4399
      %v4454 = vpack.c.bf16 %v4402, %v4400
      %v4455 = vpack.c.bf16 %v4405, %v4403
      %v4456 = vpack.c.bf16 %v4406, %v4404
      %v4457 = vpack.c.bf16 %v4409, %v4407
      %v4458 = vpack.c.bf16 %v4410, %v4408
      %v4459 = vpack.c.bf16 %v4413, %v4411
      %v4460 = vpack.c.bf16 %v4414, %v4412
      %v4461 = vpack.c.bf16 %v4417, %v4415
      %v4462 = vpack.c.bf16 %v4418, %v4416
      %v4463 = vpack.c.bf16 %v4421, %v4419
      %v4464 = vpack.c.bf16 %v4422, %v4420
      %v4465 = vpack.c.bf16 %v4425, %v4423
      %v4466 = vpack.c.bf16 %v4426, %v4424
      %v4467 = vpack.c.bf16 %v4429, %v4427
      %v4468 = vpack.c.bf16 %v4430, %v4428
      %v4469 = vpack.c.bf16 %v4433, %v4431
      %v4470 = vpack.c.bf16 %v4434, %v4432
      %v4471 = vpack.c.bf16 %v4437, %v4435
      %v4472 = vpack.c.bf16 %v4438, %v4436
      %v4473 = vpack.c.bf16 %v4441, %v4439
      %v4474 = vpack.c.bf16 %v4442, %v4440
      %v4475 = vpack.c.bf16 %v4445, %v4443
      %v4476 = vpack.c.bf16 %v4446, %v4444
      %v4477 = vpack.c.bf16 %v4449, %v4447
      %v4478 = vpack.c.bf16 %v4450, %v4448
      %v4507 = vunpack.c.l.b16 %v4451
      %v4508 = vunpack.c.l.b16 %v4452
      %v4509 = vunpack.c.h.b16 %v4451
      %v4510 = vunpack.c.h.b16 %v4452
      %v4511 = vunpack.c.l.b16 %v4453
      %v4512 = vunpack.c.l.b16 %v4454
      %v4513 = vunpack.c.h.b16 %v4453
      %v4514 = vunpack.c.h.b16 %v4454
      %v4515 = vunpack.c.l.b16 %v4455
      %v4516 = vunpack.c.l.b16 %v4456
      %v4517 = vunpack.c.h.b16 %v4455
      %v4518 = vunpack.c.h.b16 %v4456
      %v4519 = vunpack.c.l.b16 %v4457
      %v4520 = vunpack.c.l.b16 %v4458
      %v4521 = vunpack.c.h.b16 %v4457
      %v4522 = vunpack.c.h.b16 %v4458
      %v4523 = vunpack.c.l.b16 %v4459
      %v4524 = vunpack.c.l.b16 %v4460
      %v4525 = vunpack.c.h.b16 %v4459
      %v4526 = vunpack.c.h.b16 %v4460
      %v4527 = vunpack.c.l.b16 %v4461
      %v4528 = vunpack.c.l.b16 %v4462
      %v4529 = vunpack.c.h.b16 %v4461
      %v4530 = vunpack.c.h.b16 %v4462
      %v4531 = vunpack.c.l.b16 %v4463
      %v4532 = vunpack.c.l.b16 %v4464
      %v4533 = vunpack.c.h.b16 %v4463
      %v4534 = vunpack.c.h.b16 %v4464
      %v4535 = vunpack.c.l.b16 %v4465
      %v4536 = vunpack.c.l.b16 %v4466
      %v4537 = vunpack.c.h.b16 %v4465
      %v4538 = vunpack.c.h.b16 %v4466
      %v4539 = vunpack.c.l.b16 %v4467
      %v4540 = vunpack.c.l.b16 %v4468
      %v4541 = vunpack.c.h.b16 %v4467
      %v4542 = vunpack.c.h.b16 %v4468
      %v4543 = vunpack.c.l.b16 %v4469
      %v4544 = vunpack.c.l.b16 %v4470
      %v4545 = vunpack.c.h.b16 %v4469
      %v4546 = vunpack.c.h.b16 %v4470
      %v4547 = vunpack.c.l.b16 %v4471
      %v4548 = vunpack.c.l.b16 %v4472
      %v4549 = vunpack.c.h.b16 %v4471
      %v4550 = vunpack.c.h.b16 %v4472
      %v4551 = vunpack.c.l.b16 %v4473
      %v4552 = vunpack.c.l.b16 %v4474
      %v4553 = vunpack.c.h.b16 %v4473
      %v4554 = vunpack.c.h.b16 %v4474
      %v4555 = vunpack.c.l.b16 %v4475
      %v4556 = vunpack.c.l.b16 %v4476
      %v4557 = vunpack.c.h.b16 %v4475
      %v4558 = vunpack.c.h.b16 %v4476
      %v4559 = vunpack.c.l.b16 %v4477
      %v4560 = vunpack.c.l.b16 %v4478
      %v4561 = vunpack.c.h.b16 %v4477
      %v4562 = vunpack.c.h.b16 %v4478
      %v4563 = vpack.c.b16 %v4508, %v4507
      %v4564 = vpack.c.b16 %v4510, %v4509
      %v4565 = vpack.c.b16 %v4512, %v4511
      %v4566 = vpack.c.b16 %v4514, %v4513
      %v4567 = vpack.c.b16 %v4516, %v4515
      %v4568 = vpack.c.b16 %v4518, %v4517
      %v4569 = vpack.c.b16 %v4520, %v4519
      %v4570 = vpack.c.b16 %v4522, %v4521
      %v4571 = vpack.c.b16 %v4524, %v4523
      %v4572 = vpack.c.b16 %v4526, %v4525
      %v4573 = vpack.c.b16 %v4528, %v4527
      %v4574 = vpack.c.b16 %v4530, %v4529
      %v4575 = vpack.c.b16 %v4532, %v4531
      %v4576 = vpack.c.b16 %v4534, %v4533
      %v4577 = vpack.c.b16 %v4536, %v4535
      %v4578 = vpack.c.b16 %v4538, %v4537
      %v4579 = vpack.c.b16 %v4540, %v4539
      %v4580 = vpack.c.b16 %v4542, %v4541
      %v4581 = vpack.c.b16 %v4544, %v4543
      %v4582 = vpack.c.b16 %v4546, %v4545
      %v4583 = vpack.c.b16 %v4548, %v4547
      %v4584 = vpack.c.b16 %v4550, %v4549
      %v4585 = vpack.c.b16 %v4552, %v4551
      %v4586 = vpack.c.b16 %v4554, %v4553
      %v4587 = vpack.c.b16 %v4556, %v4555
      %v4588 = vpack.c.b16 %v4558, %v4557
      %v4589 = vpack.c.b16 %v4560, %v4559
      %v4590 = vpack.c.b16 %v4562, %v4561
      %s4619 = scalar_lea.vmem %s683, 224
      %4620 = vst.msk [vmem:[%s4619] sm:$0xff] %vm1338, %v4563
      %4621 = vst.msk [vmem:[%s4619 + $0x8] sm:$0xff] %vm1338, %v4564
      %4622 = vst.msk [vmem:[%s4619 + $0x10] sm:$0xff] %vm1338, %v4565
      %4623 = vst.msk [vmem:[%s4619 + $0x18] sm:$0xff] %vm1338, %v4566
      %4624 = vst.msk [vmem:[%s4619 + $0x20] sm:$0xff] %vm1338, %v4567
      %4625 = vst.msk [vmem:[%s4619 + $0x28] sm:$0xff] %vm1338, %v4568
      %4626 = vst.msk [vmem:[%s4619 + $0x30] sm:$0xff] %vm1338, %v4569
      %4627 = vst.msk [vmem:[%s4619 + $0x38] sm:$0xff] %vm1338, %v4570
      %4628 = vst.msk [vmem:[%s4619 + $0x40] sm:$0xff] %vm1338, %v4571
      %4629 = vst.msk [vmem:[%s4619 + $0x48] sm:$0xff] %vm1338, %v4572
      %4630 = vst.msk [vmem:[%s4619 + $0x50] sm:$0xff] %vm1338, %v4573
      %4631 = vst.msk [vmem:[%s4619 + $0x58] sm:$0xff] %vm1338, %v4574
      %4632 = vst.msk [vmem:[%s4619 + $0x60] sm:$0xff] %vm1338, %v4575
      %4633 = vst.msk [vmem:[%s4619 + $0x68] sm:$0xff] %vm1338, %v4576
      %4634 = vst.msk [vmem:[%s4619 + $0x70] sm:$0xff] %vm1338, %v4577
      %4635 = vst.msk [vmem:[%s4619 + $0x78] sm:$0xff] %vm1338, %v4578
      %4636 = vst.msk [vmem:[%s4619 + $0x80] sm:$0xff] %vm1338, %v4579
      %4637 = vst.msk [vmem:[%s4619 + $0x88] sm:$0xff] %vm1338, %v4580
      %4638 = vst.msk [vmem:[%s4619 + $0x90] sm:$0xff] %vm1338, %v4581
      %4639 = vst.msk [vmem:[%s4619 + $0x98] sm:$0xff] %vm1338, %v4582
      %4640 = vst.msk [vmem:[%s4619 + $0xa0] sm:$0xff] %vm1338, %v4583
      %4641 = vst.msk [vmem:[%s4619 + $0xa8] sm:$0xff] %vm1338, %v4584
      %4642 = vst.msk [vmem:[%s4619 + $0xb0] sm:$0xff] %vm1338, %v4585
      %4643 = vst.msk [vmem:[%s4619 + $0xb8] sm:$0xff] %vm1338, %v4586
      %4644 = vst.msk [vmem:[%s4619 + $0xc0] sm:$0xff] %vm1338, %v4587
      %4645 = vst.msk [vmem:[%s4619 + $0xc8] sm:$0xff] %vm1338, %v4588
      %4646 = vst.msk [vmem:[%s4619 + $0xd0] sm:$0xff] %vm1338, %v4589
      %4647 = vst.msk [vmem:[%s4619 + $0xd8] sm:$0xff] %vm1338, %v4590
      %v4648 = vld [vmem:[%s678 + $0xc] sm:$0xf]
      %v4649 = vld [vmem:[%s678 + $0x10] sm:$0xf]
      %v4650 = vld [vmem:[%s678 + $0x14] sm:$0xf]
      %v4651 = vld [vmem:[%s678 + $0x18] sm:$0xf]
      %v4652 = vld [vmem:[%s678 + $0x1c] sm:$0xf]
      %v4653 = vld [vmem:[%s678 + $0x20] sm:$0xf]
      %v4654 = vld [vmem:[%s678 + $0x24] sm:$0xf]
      %v4655 = vld [vmem:[%s678 + $0x28] sm:$0xf]
      %v4656 = vld [vmem:[%s678 + $0x2c] sm:$0xf]
      %v4657 = vld [vmem:[%s678 + $0x30] sm:$0xf]
      %v4658 = vld [vmem:[%s678 + $0x34] sm:$0xf]
      %v4659 = vld [vmem:[%s678 + $0x38] sm:$0xf]
      %v4660 = vld [vmem:[%s678 + $0x3c] sm:$0xf]
      %v4661 = vld [vmem:[%s678 + $0x40] sm:$0xf]
      %v4662 = vld [vmem:[%s678 + $0x44] sm:$0xf]
      %v4663 = vld [vmem:[%s678 + $0x48] sm:$0xf]
      %v4664 = vld [vmem:[%s678 + $0x4c] sm:$0xf]
      %v4665 = vld [vmem:[%s678 + $0x50] sm:$0xf]
      %v4666 = vld [vmem:[%s678 + $0x54] sm:$0xf]
      %v4667 = vld [vmem:[%s678 + $0x58] sm:$0xf]
      %v4668 = vld [vmem:[%s678 + $0x5c] sm:$0xf]
      %v4669 = vld [vmem:[%s678 + $0x60] sm:$0xf]
      %v4670 = vld [vmem:[%s678 + $0x64] sm:$0xf]
      %v4671 = vld [vmem:[%s678 + $0x68] sm:$0xf]
      %v4672 = vld [vmem:[%s678 + $0x6c] sm:$0xf]
      %v4673 = vld [vmem:[%s678 + $0x70] sm:$0xf]
      %v4674 = vld [vmem:[%s678 + $0x74] sm:$0xf]
      %v4675 = vld [vmem:[%s678 + $0x78] sm:$0xf]
      %v4676 = vld [vmem:[%s10] sm:$0xf]
      %v4677 = vld [vmem:[%s10 + $0x4] sm:$0xf]
      %v4678 = vld [vmem:[%s10 + $0x8] sm:$0xf]
      %v4679 = vld [vmem:[%s10 + $0xc] sm:$0xf]
      %v4680 = vld [vmem:[%s10 + $0x10] sm:$0xf]
      %v4681 = vld [vmem:[%s10 + $0x14] sm:$0xf]
      %v4682 = vld [vmem:[%s10 + $0x18] sm:$0xf]
      %v4683 = vld [vmem:[%s10 + $0x1c] sm:$0xf]
      %v4684 = vld [vmem:[%s11] sm:$0x1]
      %v4686 = vlaneseq
      %v4687 = vshrl.u32 %v4686, 7
      %v4688 = vsub.s32 0, %v4687
      %v4689 = vrot.slane %v4684, %v4688
      %v4719 = vunpack.c.l.b16 %v4648
      %v4720 = vunpack.c.l.b16 %v4649
      %v4721 = vunpack.c.l.b16 %v4650
      %v4722 = vunpack.c.l.b16 %v4651
      %v4723 = vunpack.c.l.b16 %v4652
      %v4724 = vunpack.c.l.b16 %v4653
      %v4725 = vunpack.c.l.b16 %v4654
      %v4726 = vunpack.c.l.b16 %v4655
      %v4727 = vunpack.c.l.b16 %v4656
      %v4728 = vunpack.c.l.b16 %v4657
      %v4729 = vunpack.c.l.b16 %v4658
      %v4730 = vunpack.c.l.b16 %v4659
      %v4731 = vunpack.c.l.b16 %v4660
      %v4732 = vunpack.c.l.b16 %v4661
      %v4733 = vunpack.c.l.b16 %v4662
      %v4734 = vunpack.c.l.b16 %v4663
      %v4735 = vunpack.c.l.b16 %v4664
      %v4736 = vunpack.c.l.b16 %v4665
      %v4737 = vunpack.c.l.b16 %v4666
      %v4738 = vunpack.c.l.b16 %v4667
      %v4739 = vunpack.c.l.b16 %v4668
      %v4740 = vunpack.c.l.b16 %v4669
      %v4741 = vunpack.c.l.b16 %v4670
      %v4742 = vunpack.c.l.b16 %v4671
      %v4743 = vunpack.c.l.b16 %v4672
      %v4744 = vunpack.c.l.b16 %v4673
      %v4745 = vunpack.c.l.b16 %v4674
      %v4746 = vunpack.c.l.b16 %v4675
      %v4747 = vpack.c.b16 %v4720, %v4719
      %v4748 = vpack.c.b16 %v4722, %v4721
      %v4749 = vpack.c.b16 %v4724, %v4723
      %v4750 = vpack.c.b16 %v4726, %v4725
      %v4751 = vpack.c.b16 %v4728, %v4727
      %v4752 = vpack.c.b16 %v4730, %v4729
      %v4753 = vpack.c.b16 %v4732, %v4731
      %v4754 = vpack.c.b16 %v4734, %v4733
      %v4755 = vpack.c.b16 %v4736, %v4735
      %v4756 = vpack.c.b16 %v4738, %v4737
      %v4757 = vpack.c.b16 %v4740, %v4739
      %v4758 = vpack.c.b16 %v4742, %v4741
      %v4759 = vpack.c.b16 %v4744, %v4743
      %v4760 = vpack.c.b16 %v4746, %v4745
      %v4769 = vunpack.c.l.b16 %v4676
      %v4770 = vunpack.c.l.b16 %v4677
      %v4771 = vunpack.c.l.b16 %v4678
      %v4772 = vunpack.c.l.b16 %v4679
      %v4773 = vunpack.c.l.b16 %v4680
      %v4774 = vunpack.c.l.b16 %v4681
      %v4775 = vunpack.c.l.b16 %v4682
      %v4776 = vunpack.c.l.b16 %v4683
      %v4777 = vpack.c.b16 %v4770, %v4769
      %v4778 = vpack.c.b16 %v4772, %v4771
      %v4779 = vpack.c.b16 %v4774, %v4773
      %v4780 = vpack.c.b16 %v4776, %v4775
      %v4786 = vsel %vm896, %v4747, 0
      %v4789 = vsel %vm896, %v4748, 0
      %v4792 = vsel %vm896, %v4749, 0
      %v4795 = vsel %vm896, %v4750, 0
      %v4798 = vsel %vm896, %v4751, 0
      %v4801 = vsel %vm896, %v4752, 0
      %v4804 = vsel %vm896, %v4753, 0
      %v4807 = vsel %vm896, %v4754, 0
      %v4810 = vsel %vm896, %v4755, 0
      %v4813 = vsel %vm896, %v4756, 0
      %v4816 = vsel %vm896, %v4757, 0
      %v4819 = vsel %vm896, %v4758, 0
      %v4822 = vsel %vm896, %v4759, 0
      %v4825 = vsel %vm896, %v4760, 0
      %4827 = vmatprep.subr.bf16.mxu0 0
      %4828 = vmatpush1.bf16.msra.mxu0 0
      %4829 = vmatprep.subr.bf16.mxu0 0
      %4830 = vmatpush1.bf16.msra.mxu0 0
      %4831 = vmatprep.subr.bf16.mxu0 0
      %4832 = vmatpush1.bf16.msra.mxu0 0
      %4833 = vmatprep.subr.bf16.mxu0 0
      %4834 = vmatpush1.bf16.msra.mxu0 0
      %4835 = vmatprep.subr.bf16.mxu0 0
      %4836 = vmatpush1.bf16.msra.mxu0 %v4780
      %4837 = vmatprep.subr.bf16.mxu0 0
      %4838 = vmatpush1.bf16.msra.mxu0 %v4779
      %4839 = vmatprep.subr.bf16.mxu0 0
      %4840 = vmatpush1.bf16.msra.mxu0 %v4778
      %4841 = vmatprep.subr.bf16.mxu0 0
      %4842 = vmatpush1.bf16.msra.mxu0 %v4777
      %4843 = vmatprep.subr.bf16.mxu0 0
      %4844 = vmatpush2.bf16.msra.mxu0 0
      %4845 = vmatprep.subr.bf16.mxu0 0
      %4846 = vmatpush2.bf16.msra.mxu0 0
      %4847 = vmatprep.subr.bf16.mxu0 0
      %4848 = vmatpush2.bf16.msra.mxu0 0
      %4849 = vmatprep.subr.bf16.mxu0 0
      %4850 = vmatpush2.bf16.msra.mxu0 0
      %4851 = vmatprep.subr.bf16.mxu0 0
      %4852 = vmatpush2.bf16.msra.mxu0 0
      %4853 = vmatprep.subr.bf16.mxu0 0
      %4854 = vmatpush2.bf16.msra.mxu0 0
      %4855 = vmatprep.subr.bf16.mxu0 0
      %4856 = vmatpush2.bf16.msra.mxu0 0
      %4857 = vmatprep.subr.bf16.mxu0 0
      %4858 = vmatpush2.bf16.msra.mxu0 0
      %4859 = vmatprep.mubr.bf16.mxu0 0
      %4860 = vmatmul.mubr.bf16.gmra.mxu0 %v4786
      %v4861 = vpop.f32.mrf.mxu0
      %v4862 = vadd.f32 %v4689, %v4861
      %v4863 = vpop.f32.mrf.mxu0
      %v4864 = vpop.f32.mrf.mxu0
      %v4865 = vadd.f32 %v4689, %v4864
      %v4866 = vpop.f32.mrf.mxu0
      %4867 = vmatprep.mubr.bf16.mxu0 0
      %4868 = vmatmul.mubr.bf16.gmra.mxu0 %v4789
      %v4869 = vpop.f32.mrf.mxu0
      %v4870 = vadd.f32 %v4689, %v4869
      %v4871 = vpop.f32.mrf.mxu0
      %v4872 = vpop.f32.mrf.mxu0
      %v4873 = vadd.f32 %v4689, %v4872
      %v4874 = vpop.f32.mrf.mxu0
      %4875 = vmatprep.mubr.bf16.mxu0 0
      %4876 = vmatmul.mubr.bf16.gmra.mxu0 %v4792
      %v4877 = vpop.f32.mrf.mxu0
      %v4878 = vadd.f32 %v4689, %v4877
      %v4879 = vpop.f32.mrf.mxu0
      %v4880 = vpop.f32.mrf.mxu0
      %v4881 = vadd.f32 %v4689, %v4880
      %v4882 = vpop.f32.mrf.mxu0
      %4883 = vmatprep.mubr.bf16.mxu0 0
      %4884 = vmatmul.mubr.bf16.gmra.mxu0 %v4795
      %v4885 = vpop.f32.mrf.mxu0
      %v4886 = vadd.f32 %v4689, %v4885
      %v4887 = vpop.f32.mrf.mxu0
      %v4888 = vpop.f32.mrf.mxu0
      %v4889 = vadd.f32 %v4689, %v4888
      %v4890 = vpop.f32.mrf.mxu0
      %4891 = vmatprep.mubr.bf16.mxu0 0
      %4892 = vmatmul.mubr.bf16.gmra.mxu0 %v4798
      %v4893 = vpop.f32.mrf.mxu0
      %v4894 = vadd.f32 %v4689, %v4893
      %v4895 = vpop.f32.mrf.mxu0
      %v4896 = vpop.f32.mrf.mxu0
      %v4897 = vadd.f32 %v4689, %v4896
      %v4898 = vpop.f32.mrf.mxu0
      %4899 = vmatprep.mubr.bf16.mxu0 0
      %4900 = vmatmul.mubr.bf16.gmra.mxu0 %v4801
      %v4901 = vpop.f32.mrf.mxu0
      %v4902 = vadd.f32 %v4689, %v4901
      %v4903 = vpop.f32.mrf.mxu0
      %v4904 = vpop.f32.mrf.mxu0
      %v4905 = vadd.f32 %v4689, %v4904
      %v4906 = vpop.f32.mrf.mxu0
      %4907 = vmatprep.mubr.bf16.mxu0 0
      %4908 = vmatmul.mubr.bf16.gmra.mxu0 %v4804
      %v4909 = vpop.f32.mrf.mxu0
      %v4910 = vadd.f32 %v4689, %v4909
      %v4911 = vpop.f32.mrf.mxu0
      %v4912 = vpop.f32.mrf.mxu0
      %v4913 = vadd.f32 %v4689, %v4912
      %v4914 = vpop.f32.mrf.mxu0
      %4915 = vmatprep.mubr.bf16.mxu0 0
      %4916 = vmatmul.mubr.bf16.gmra.mxu0 %v4807
      %v4917 = vpop.f32.mrf.mxu0
      %v4918 = vadd.f32 %v4689, %v4917
      %v4919 = vpop.f32.mrf.mxu0
      %v4920 = vpop.f32.mrf.mxu0
      %v4921 = vadd.f32 %v4689, %v4920
      %v4922 = vpop.f32.mrf.mxu0
      %4923 = vmatprep.mubr.bf16.mxu0 0
      %4924 = vmatmul.mubr.bf16.gmra.mxu0 %v4810
      %v4925 = vpop.f32.mrf.mxu0
      %v4926 = vadd.f32 %v4689, %v4925
      %v4927 = vpop.f32.mrf.mxu0
      %v4928 = vpop.f32.mrf.mxu0
      %v4929 = vadd.f32 %v4689, %v4928
      %v4930 = vpop.f32.mrf.mxu0
      %4931 = vmatprep.mubr.bf16.mxu0 0
      %4932 = vmatmul.mubr.bf16.gmra.mxu0 %v4813
      %v4933 = vpop.f32.mrf.mxu0
      %v4934 = vadd.f32 %v4689, %v4933
      %v4935 = vpop.f32.mrf.mxu0
      %v4936 = vpop.f32.mrf.mxu0
      %v4937 = vadd.f32 %v4689, %v4936
      %v4938 = vpop.f32.mrf.mxu0
      %4939 = vmatprep.mubr.bf16.mxu0 0
      %4940 = vmatmul.mubr.bf16.gmra.mxu0 %v4816
      %v4941 = vpop.f32.mrf.mxu0
      %v4942 = vadd.f32 %v4689, %v4941
      %v4943 = vpop.f32.mrf.mxu0
      %v4944 = vpop.f32.mrf.mxu0
      %v4945 = vadd.f32 %v4689, %v4944
      %v4946 = vpop.f32.mrf.mxu0
      %4947 = vmatprep.mubr.bf16.mxu0 0
      %4948 = vmatmul.mubr.bf16.gmra.mxu0 %v4819
      %v4949 = vpop.f32.mrf.mxu0
      %v4950 = vadd.f32 %v4689, %v4949
      %v4951 = vpop.f32.mrf.mxu0
      %v4952 = vpop.f32.mrf.mxu0
      %v4953 = vadd.f32 %v4689, %v4952
      %v4954 = vpop.f32.mrf.mxu0
      %4955 = vmatprep.mubr.bf16.mxu0 0
      %4956 = vmatmul.mubr.bf16.gmra.mxu0 %v4822
      %v4957 = vpop.f32.mrf.mxu0
      %v4958 = vadd.f32 %v4689, %v4957
      %v4959 = vpop.f32.mrf.mxu0
      %v4960 = vpop.f32.mrf.mxu0
      %v4961 = vadd.f32 %v4689, %v4960
      %v4962 = vpop.f32.mrf.mxu0
      %4963 = vmatprep.mubr.bf16.mxu0 0
      %4964 = vmatmul.mubr.bf16.gmra.mxu0 %v4825
      %v4965 = vpop.f32.mrf.mxu0
      %v4966 = vadd.f32 %v4689, %v4965
      %v4967 = vpop.f32.mrf.mxu0
      %v4968 = vpop.f32.mrf.mxu0
      %v4969 = vadd.f32 %v4689, %v4968
      %v4970 = vpop.f32.mrf.mxu0
      %4971 = vdwg.mxu0
      %v4972 = vmax.f32 %v4862, 0.0
      %v4973 = vmax.f32 %v4865, 0.0
      %v4974 = vmax.f32 %v4870, 0.0
      %v4975 = vmax.f32 %v4873, 0.0
      %v4976 = vmax.f32 %v4878, 0.0
      %v4977 = vmax.f32 %v4881, 0.0
      %v4978 = vmax.f32 %v4886, 0.0
      %v4979 = vmax.f32 %v4889, 0.0
      %v4980 = vmax.f32 %v4894, 0.0
      %v4981 = vmax.f32 %v4897, 0.0
      %v4982 = vmax.f32 %v4902, 0.0
      %v4983 = vmax.f32 %v4905, 0.0
      %v4984 = vmax.f32 %v4910, 0.0
      %v4985 = vmax.f32 %v4913, 0.0
      %v4986 = vmax.f32 %v4918, 0.0
      %v4987 = vmax.f32 %v4921, 0.0
      %v4988 = vmax.f32 %v4926, 0.0
      %v4989 = vmax.f32 %v4929, 0.0
      %v4990 = vmax.f32 %v4934, 0.0
      %v4991 = vmax.f32 %v4937, 0.0
      %v4992 = vmax.f32 %v4942, 0.0
      %v4993 = vmax.f32 %v4945, 0.0
      %v4994 = vmax.f32 %v4950, 0.0
      %v4995 = vmax.f32 %v4953, 0.0
      %v4996 = vmax.f32 %v4958, 0.0
      %v4997 = vmax.f32 %v4961, 0.0
      %v4998 = vmax.f32 %v4966, 0.0
      %v4999 = vmax.f32 %v4969, 0.0
      %v5000 = vmul.f32 %v4972, %v1722
      %v5001 = vmul.f32 %v4973, %v1727
      %v5002 = vmul.f32 %v4974, %v1732
      %v5003 = vmul.f32 %v4975, %v1737
      %v5004 = vmul.f32 %v4976, %v1742
      %v5005 = vmul.f32 %v4977, %v1747
      %v5006 = vmul.f32 %v4978, %v1752
      %v5007 = vmul.f32 %v4979, %v1757
      %v5008 = vmul.f32 %v4980, %v1762
      %v5009 = vmul.f32 %v4981, %v1767
      %v5010 = vmul.f32 %v4982, %v1772
      %v5011 = vmul.f32 %v4983, %v1777
      %v5012 = vmul.f32 %v4984, %v1782
      %v5013 = vmul.f32 %v4985, %v1787
      %v5014 = vmul.f32 %v4986, %v1792
      %v5015 = vmul.f32 %v4987, %v1797
      %v5016 = vmul.f32 %v4988, %v1802
      %v5017 = vmul.f32 %v4989, %v1807
      %v5018 = vmul.f32 %v4990, %v1812
      %v5019 = vmul.f32 %v4991, %v1817
      %v5020 = vmul.f32 %v4992, %v1822
      %v5021 = vmul.f32 %v4993, %v1827
      %v5022 = vmul.f32 %v4994, %v1832
      %v5023 = vmul.f32 %v4995, %v1837
      %v5024 = vmul.f32 %v4996, %v1842
      %v5025 = vmul.f32 %v4997, %v1847
      %v5026 = vmul.f32 %v4998, %v1852
      %v5027 = vmul.f32 %v4999, %v1857
      %v5028 = vpack.c.bf16 %v5001, %v5000
      %v5029 = vpack.c.bf16 %v5003, %v5002
      %v5030 = vpack.c.bf16 %v5005, %v5004
      %v5031 = vpack.c.bf16 %v5007, %v5006
      %v5032 = vpack.c.bf16 %v5009, %v5008
      %v5033 = vpack.c.bf16 %v5011, %v5010
      %v5034 = vpack.c.bf16 %v5013, %v5012
      %v5035 = vpack.c.bf16 %v5015, %v5014
      %v5036 = vpack.c.bf16 %v5017, %v5016
      %v5037 = vpack.c.bf16 %v5019, %v5018
      %v5038 = vpack.c.bf16 %v5021, %v5020
      %v5039 = vpack.c.bf16 %v5023, %v5022
      %v5040 = vpack.c.bf16 %v5025, %v5024
      %v5041 = vpack.c.bf16 %v5027, %v5026
      %v5056 = vunpack.c.l.b16 %v5028
      %v5057 = vunpack.c.h.b16 %v5028
      %v5058 = vunpack.c.l.b16 %v5029
      %v5059 = vunpack.c.h.b16 %v5029
      %v5060 = vunpack.c.l.b16 %v5030
      %v5061 = vunpack.c.h.b16 %v5030
      %v5062 = vunpack.c.l.b16 %v5031
      %v5063 = vunpack.c.h.b16 %v5031
      %v5064 = vunpack.c.l.b16 %v5032
      %v5065 = vunpack.c.h.b16 %v5032
      %v5066 = vunpack.c.l.b16 %v5033
      %v5067 = vunpack.c.h.b16 %v5033
      %v5068 = vunpack.c.l.b16 %v5034
      %v5069 = vunpack.c.h.b16 %v5034
      %v5070 = vunpack.c.l.b16 %v5035
      %v5071 = vunpack.c.h.b16 %v5035
      %v5072 = vunpack.c.l.b16 %v5036
      %v5073 = vunpack.c.h.b16 %v5036
      %v5074 = vunpack.c.l.b16 %v5037
      %v5075 = vunpack.c.h.b16 %v5037
      %v5076 = vunpack.c.l.b16 %v5038
      %v5077 = vunpack.c.h.b16 %v5038
      %v5078 = vunpack.c.l.b16 %v5039
      %v5079 = vunpack.c.h.b16 %v5039
      %v5080 = vunpack.c.l.b16 %v5040
      %v5081 = vunpack.c.h.b16 %v5040
      %v5082 = vunpack.c.l.b16 %v5041
      %v5083 = vunpack.c.h.b16 %v5041
      %v5084 = vpack.c.b16 %v5056, %v5056
      %v5085 = vpack.c.b16 %v5057, %v5057
      %v5086 = vpack.c.b16 %v5058, %v5058
      %v5087 = vpack.c.b16 %v5059, %v5059
      %v5088 = vpack.c.b16 %v5060, %v5060
      %v5089 = vpack.c.b16 %v5061, %v5061
      %v5090 = vpack.c.b16 %v5062, %v5062
      %v5091 = vpack.c.b16 %v5063, %v5063
      %v5092 = vpack.c.b16 %v5064, %v5064
      %v5093 = vpack.c.b16 %v5065, %v5065
      %v5094 = vpack.c.b16 %v5066, %v5066
      %v5095 = vpack.c.b16 %v5067, %v5067
      %v5096 = vpack.c.b16 %v5068, %v5068
      %v5097 = vpack.c.b16 %v5069, %v5069
      %v5098 = vpack.c.b16 %v5070, %v5070
      %v5099 = vpack.c.b16 %v5071, %v5071
      %v5100 = vpack.c.b16 %v5072, %v5072
      %v5101 = vpack.c.b16 %v5073, %v5073
      %v5102 = vpack.c.b16 %v5074, %v5074
      %v5103 = vpack.c.b16 %v5075, %v5075
      %v5104 = vpack.c.b16 %v5076, %v5076
      %v5105 = vpack.c.b16 %v5077, %v5077
      %v5106 = vpack.c.b16 %v5078, %v5078
      %v5107 = vpack.c.b16 %v5079, %v5079
      %v5108 = vpack.c.b16 %v5080, %v5080
      %v5109 = vpack.c.b16 %v5081, %v5081
      %v5110 = vpack.c.b16 %v5082, %v5082
      %v5111 = vpack.c.b16 %v5083, %v5083
      %5140 = vst.msk [vmem:[#allocation2 + $0x18] sm:$0xf] %vm713, %v5084
      %5141 = vst.msk [vmem:[#allocation2 + $0x1c] sm:$0xf] %vm713, %v5085
      %5142 = vst.msk [vmem:[#allocation2 + $0x20] sm:$0xf] %vm713, %v5086
      %5143 = vst.msk [vmem:[#allocation2 + $0x24] sm:$0xf] %vm713, %v5087
      %5144 = vst.msk [vmem:[#allocation2 + $0x28] sm:$0xf] %vm713, %v5088
      %5145 = vst.msk [vmem:[#allocation2 + $0x2c] sm:$0xf] %vm713, %v5089
      %5146 = vst.msk [vmem:[#allocation2 + $0x30] sm:$0xf] %vm713, %v5090
      %5147 = vst.msk [vmem:[#allocation2 + $0x34] sm:$0xf] %vm713, %v5091
      %5148 = vst.msk [vmem:[#allocation2 + $0x38] sm:$0xf] %vm713, %v5092
      %5149 = vst.msk [vmem:[#allocation2 + $0x3c] sm:$0xf] %vm713, %v5093
      %5150 = vst.msk [vmem:[#allocation2 + $0x40] sm:$0xf] %vm713, %v5094
      %5151 = vst.msk [vmem:[#allocation2 + $0x44] sm:$0xf] %vm713, %v5095
      %5152 = vst.msk [vmem:[#allocation2 + $0x48] sm:$0xf] %vm713, %v5096
      %5153 = vst.msk [vmem:[#allocation2 + $0x4c] sm:$0xf] %vm713, %v5097
      %5154 = vst.msk [vmem:[#allocation2 + $0x50] sm:$0xf] %vm713, %v5098
      %5155 = vst.msk [vmem:[#allocation2 + $0x54] sm:$0xf] %vm713, %v5099
      %5156 = vst.msk [vmem:[#allocation2 + $0x58] sm:$0xf] %vm713, %v5100
      %5157 = vst.msk [vmem:[#allocation2 + $0x5c] sm:$0xf] %vm713, %v5101
      %5158 = vst.msk [vmem:[#allocation2 + $0x60] sm:$0xf] %vm713, %v5102
      %5159 = vst.msk [vmem:[#allocation2 + $0x64] sm:$0xf] %vm713, %v5103
      %5160 = vst.msk [vmem:[#allocation2 + $0x68] sm:$0xf] %vm713, %v5104
      %5161 = vst.msk [vmem:[#allocation2 + $0x6c] sm:$0xf] %vm713, %v5105
      %5162 = vst.msk [vmem:[#allocation2 + $0x70] sm:$0xf] %vm713, %v5106
      %5163 = vst.msk [vmem:[#allocation2 + $0x74] sm:$0xf] %vm713, %v5107
      %5164 = vst.msk [vmem:[#allocation2 + $0x78] sm:$0xf] %vm713, %v5108
      %5165 = vst.msk [vmem:[#allocation2 + $0x7c] sm:$0xf] %vm713, %v5109
      %5166 = vst.msk [vmem:[#allocation2 + $0x80] sm:$0xf] %vm713, %v5110
      %5167 = vst.msk [vmem:[#allocation2 + $0x84] sm:$0xf] %vm713, %v5111
      %v5168 = vld [vmem:[#allocation2] sm:$0xf]
      %v5169 = vld [vmem:[#allocation2 + $0x4] sm:$0xf]
      %v5170 = vld [vmem:[#allocation2 + $0x8] sm:$0xf]
      %v5171 = vld [vmem:[#allocation2 + $0xc] sm:$0xf]
      %v5172 = vld [vmem:[#allocation2 + $0x10] sm:$0xf]
      %v5173 = vld [vmem:[#allocation2 + $0x14] sm:$0xf]
      %v5174 = vld [vmem:[#allocation2 + $0x18] sm:$0xf]
      %v5175 = vld [vmem:[#allocation2 + $0x1c] sm:$0xf]
      %v5176 = vld [vmem:[#allocation2 + $0x20] sm:$0xf]
      %v5177 = vld [vmem:[#allocation2 + $0x24] sm:$0xf]
      %v5178 = vld [vmem:[#allocation2 + $0x28] sm:$0xf]
      %v5179 = vld [vmem:[#allocation2 + $0x2c] sm:$0xf]
      %v5180 = vld [vmem:[#allocation2 + $0x30] sm:$0xf]
      %v5181 = vld [vmem:[#allocation2 + $0x34] sm:$0xf]
      %v5182 = vld [vmem:[#allocation2 + $0x38] sm:$0xf]
      %v5183 = vld [vmem:[#allocation2 + $0x3c] sm:$0xf]
      %v5184 = vld [vmem:[#allocation2 + $0x40] sm:$0xf]
      %v5185 = vld [vmem:[#allocation2 + $0x44] sm:$0xf]
      %v5186 = vld [vmem:[#allocation2 + $0x48] sm:$0xf]
      %v5187 = vld [vmem:[#allocation2 + $0x4c] sm:$0xf]
      %v5188 = vld [vmem:[#allocation2 + $0x50] sm:$0xf]
      %v5189 = vld [vmem:[#allocation2 + $0x54] sm:$0xf]
      %v5190 = vld [vmem:[#allocation2 + $0x58] sm:$0xf]
      %v5191 = vld [vmem:[#allocation2 + $0x5c] sm:$0xf]
      %v5192 = vld [vmem:[#allocation2 + $0x60] sm:$0xf]
      %v5193 = vld [vmem:[#allocation2 + $0x64] sm:$0xf]
      %v5194 = vld [vmem:[#allocation2 + $0x68] sm:$0xf]
      %v5195 = vld [vmem:[#allocation2 + $0x6c] sm:$0xf]
      %v5196 = vld [vmem:[#allocation2 + $0x70] sm:$0xf]
      %v5197 = vld [vmem:[#allocation2 + $0x74] sm:$0xf]
      %v5198 = vld [vmem:[#allocation2 + $0x78] sm:$0xf]
      %v5199 = vld [vmem:[#allocation2 + $0x7c] sm:$0xf]
      %v5200 = vld [vmem:[#allocation2 + $0x80] sm:$0xf]
      %v5201 = vld [vmem:[#allocation2 + $0x84] sm:$0xf]
      %v5202 = vld [vmem:[#allocation2 + $0x88] sm:$0xf]
      %v5203 = vld [vmem:[#allocation2 + $0x8c] sm:$0xf]
      %v5204 = vld [vmem:[#allocation2 + $0x90] sm:$0xf]
      %v5205 = vld [vmem:[#allocation2 + $0x94] sm:$0xf]
      %v5206 = vld [vmem:[#allocation2 + $0x98] sm:$0xf]
      %v5207 = vld [vmem:[#allocation2 + $0x9c] sm:$0xf]
      %v5236 = vunpack.c.l.b16 %v5168
      %v5237 = vunpack.c.l.b16 %v5169
      %v5238 = vunpack.c.l.b16 %v5170
      %v5239 = vunpack.c.l.b16 %v5171
      %v5240 = vunpack.c.l.b16 %v5172
      %v5241 = vunpack.c.l.b16 %v5173
      %v5242 = vunpack.c.l.b16 %v5174
      %v5243 = vunpack.c.l.b16 %v5175
      %v5244 = vunpack.c.l.b16 %v5176
      %v5245 = vunpack.c.l.b16 %v5177
      %v5246 = vunpack.c.l.b16 %v5178
      %v5247 = vunpack.c.l.b16 %v5179
      %v5248 = vunpack.c.l.b16 %v5180
      %v5249 = vunpack.c.l.b16 %v5181
      %v5250 = vunpack.c.l.b16 %v5182
      %v5251 = vunpack.c.l.b16 %v5183
      %v5252 = vunpack.c.l.b16 %v5184
      %v5253 = vunpack.c.l.b16 %v5185
      %v5254 = vunpack.c.l.b16 %v5186
      %v5255 = vunpack.c.l.b16 %v5187
      %v5256 = vunpack.c.l.b16 %v5188
      %v5257 = vunpack.c.l.b16 %v5189
      %v5258 = vunpack.c.l.b16 %v5190
      %v5259 = vunpack.c.l.b16 %v5191
      %v5260 = vunpack.c.l.b16 %v5192
      %v5261 = vunpack.c.l.b16 %v5193
      %v5262 = vunpack.c.l.b16 %v5194
      %v5263 = vunpack.c.l.b16 %v5195
      %v5264 = vpack.c.b16 %v5237, %v5236
      %v5265 = vpack.c.b16 %v5239, %v5238
      %v5266 = vpack.c.b16 %v5241, %v5240
      %v5267 = vpack.c.b16 %v5243, %v5242
      %v5268 = vpack.c.b16 %v5245, %v5244
      %v5269 = vpack.c.b16 %v5247, %v5246
      %v5270 = vpack.c.b16 %v5249, %v5248
      %v5271 = vpack.c.b16 %v5251, %v5250
      %v5272 = vpack.c.b16 %v5253, %v5252
      %v5273 = vpack.c.b16 %v5255, %v5254
      %v5274 = vpack.c.b16 %v5257, %v5256
      %v5275 = vpack.c.b16 %v5259, %v5258
      %v5276 = vpack.c.b16 %v5261, %v5260
      %v5277 = vpack.c.b16 %v5263, %v5262
      %v5280 = vunpack.c.l.b16 %v5196
      %v5281 = vunpack.c.l.b16 %v5197
      %v5282 = vpack.c.b16 %v5281, %v5280
      %5283 = vrot.lane.b32.xlu0 %v5265, 32
      %v5284 = vpop.permute.xlu0 %5283
      %5285 = vrot.lane.b32.xlu0 %v5266, 32
      %v5286 = vpop.permute.xlu0 %5285
      %5287 = vrot.lane.b32.xlu0 %v5267, 32
      %v5288 = vpop.permute.xlu0 %5287
      %5289 = vrot.lane.b32.xlu0 %v5268, 32
      %v5290 = vpop.permute.xlu0 %5289
      %5291 = vrot.lane.b32.xlu0 %v5269, 32
      %v5292 = vpop.permute.xlu0 %5291
      %5293 = vrot.lane.b32.xlu0 %v5270, 32
      %v5294 = vpop.permute.xlu0 %5293
      %5295 = vrot.lane.b32.xlu0 %v5271, 32
      %v5296 = vpop.permute.xlu0 %5295
      %5297 = vrot.lane.b32.xlu0 %v5272, 32
      %v5298 = vpop.permute.xlu0 %5297
      %5299 = vrot.lane.b32.xlu0 %v5273, 32
      %v5300 = vpop.permute.xlu0 %5299
      %5301 = vrot.lane.b32.xlu0 %v5274, 32
      %v5302 = vpop.permute.xlu0 %5301
      %5303 = vrot.lane.b32.xlu0 %v5275, 32
      %v5304 = vpop.permute.xlu0 %5303
      %5305 = vrot.lane.b32.xlu0 %v5276, 32
      %v5306 = vpop.permute.xlu0 %5305
      %5307 = vrot.lane.b32.xlu0 %v5277, 32
      %v5308 = vpop.permute.xlu0 %5307
      %5309 = vrot.lane.b32.xlu0 %v5282, 32
      %v5310 = vpop.permute.xlu0 %5309
      %v5313 = vunpack.c.l.b16 %v5198
      %v5314 = vunpack.c.l.b16 %v5199
      %v5315 = vpack.c.b16 %v5314, %v5313
      %5316 = vrot.lane.b32.xlu0 %v5266, 64
      %v5317 = vpop.permute.xlu0 %5316
      %5318 = vrot.lane.b32.xlu0 %v5267, 64
      %v5319 = vpop.permute.xlu0 %5318
      %5320 = vrot.lane.b32.xlu0 %v5268, 64
      %v5321 = vpop.permute.xlu0 %5320
      %5322 = vrot.lane.b32.xlu0 %v5269, 64
      %v5323 = vpop.permute.xlu0 %5322
      %5324 = vrot.lane.b32.xlu0 %v5270, 64
      %v5325 = vpop.permute.xlu0 %5324
      %5326 = vrot.lane.b32.xlu0 %v5271, 64
      %v5327 = vpop.permute.xlu0 %5326
      %5328 = vrot.lane.b32.xlu0 %v5272, 64
      %v5329 = vpop.permute.xlu0 %5328
      %5330 = vrot.lane.b32.xlu0 %v5273, 64
      %v5331 = vpop.permute.xlu0 %5330
      %5332 = vrot.lane.b32.xlu0 %v5274, 64
      %v5333 = vpop.permute.xlu0 %5332
      %5334 = vrot.lane.b32.xlu0 %v5275, 64
      %v5335 = vpop.permute.xlu0 %5334
      %5336 = vrot.lane.b32.xlu0 %v5276, 64
      %v5337 = vpop.permute.xlu0 %5336
      %5338 = vrot.lane.b32.xlu0 %v5277, 64
      %v5339 = vpop.permute.xlu0 %5338
      %5340 = vrot.lane.b32.xlu0 %v5282, 64
      %v5341 = vpop.permute.xlu0 %5340
      %5342 = vrot.lane.b32.xlu0 %v5315, 64
      %v5343 = vpop.permute.xlu0 %5342
      %v5346 = vunpack.c.l.b16 %v5200
      %v5347 = vunpack.c.l.b16 %v5201
      %v5348 = vpack.c.b16 %v5347, %v5346
      %5349 = vrot.lane.b32.xlu0 %v5267, 96
      %v5350 = vpop.permute.xlu0 %5349
      %5351 = vrot.lane.b32.xlu0 %v5268, 96
      %v5352 = vpop.permute.xlu0 %5351
      %5353 = vrot.lane.b32.xlu0 %v5269, 96
      %v5354 = vpop.permute.xlu0 %5353
      %5355 = vrot.lane.b32.xlu0 %v5270, 96
      %v5356 = vpop.permute.xlu0 %5355
      %5357 = vrot.lane.b32.xlu0 %v5271, 96
      %v5358 = vpop.permute.xlu0 %5357
      %5359 = vrot.lane.b32.xlu0 %v5272, 96
      %v5360 = vpop.permute.xlu0 %5359
      %5361 = vrot.lane.b32.xlu0 %v5273, 96
      %v5362 = vpop.permute.xlu0 %5361
      %5363 = vrot.lane.b32.xlu0 %v5274, 96
      %v5364 = vpop.permute.xlu0 %5363
      %5365 = vrot.lane.b32.xlu0 %v5275, 96
      %v5366 = vpop.permute.xlu0 %5365
      %5367 = vrot.lane.b32.xlu0 %v5276, 96
      %v5368 = vpop.permute.xlu0 %5367
      %5369 = vrot.lane.b32.xlu0 %v5277, 96
      %v5370 = vpop.permute.xlu0 %5369
      %5371 = vrot.lane.b32.xlu0 %v5282, 96
      %v5372 = vpop.permute.xlu0 %5371
      %5373 = vrot.lane.b32.xlu0 %v5315, 96
      %v5374 = vpop.permute.xlu0 %5373
      %5375 = vrot.lane.b32.xlu0 %v5348, 96
      %v5376 = vpop.permute.xlu0 %5375
      %v5379 = vunpack.c.l.b16 %v5202
      %v5380 = vunpack.c.l.b16 %v5203
      %v5381 = vpack.c.b16 %v5380, %v5379
      %v5384 = vunpack.c.l.b16 %v5204
      %v5385 = vunpack.c.l.b16 %v5205
      %v5386 = vpack.c.b16 %v5385, %v5384
      %5387 = vrot.lane.b32.xlu0 %v5315, 32
      %v5388 = vpop.permute.xlu0 %5387
      %5389 = vrot.lane.b32.xlu0 %v5348, 32
      %v5390 = vpop.permute.xlu0 %5389
      %5391 = vrot.lane.b32.xlu0 %v5381, 32
      %v5392 = vpop.permute.xlu0 %5391
      %5393 = vrot.lane.b32.xlu0 %v5386, 32
      %v5394 = vpop.permute.xlu0 %5393
      %v5397 = vunpack.c.l.b16 %v5206
      %v5398 = vunpack.c.l.b16 %v5207
      %v5399 = vpack.c.b16 %v5398, %v5397
      %5400 = vrot.lane.b32.xlu0 %v5348, 64
      %v5401 = vpop.permute.xlu0 %5400
      %5402 = vrot.lane.b32.xlu0 %v5381, 64
      %v5403 = vpop.permute.xlu0 %5402
      %5404 = vrot.lane.b32.xlu0 %v5386, 64
      %v5405 = vpop.permute.xlu0 %5404
      %5406 = vrot.lane.b32.xlu0 %v5399, 64
      %v5407 = vpop.permute.xlu0 %5406
      %v5410 = vsel %vm2719, %v5264, %v5284
      %v5413 = vsel %vm2719, %v5265, %v5286
      %v5416 = vsel %vm2719, %v5266, %v5288
      %v5419 = vsel %vm2719, %v5267, %v5290
      %v5422 = vsel %vm2719, %v5268, %v5292
      %v5425 = vsel %vm2719, %v5269, %v5294
      %v5428 = vsel %vm2719, %v5270, %v5296
      %v5431 = vsel %vm2719, %v5271, %v5298
      %v5434 = vsel %vm2719, %v5272, %v5300
      %v5437 = vsel %vm2719, %v5273, %v5302
      %v5440 = vsel %vm2719, %v5274, %v5304
      %v5443 = vsel %vm2719, %v5275, %v5306
      %v5446 = vsel %vm2719, %v5276, %v5308
      %v5449 = vsel %vm2719, %v5277, %v5310
      %v5451 = vsel %vm896, %v5410, %v5317
      %v5453 = vsel %vm896, %v5413, %v5319
      %v5455 = vsel %vm896, %v5416, %v5321
      %v5457 = vsel %vm896, %v5419, %v5323
      %v5459 = vsel %vm896, %v5422, %v5325
      %v5461 = vsel %vm896, %v5425, %v5327
      %v5463 = vsel %vm896, %v5428, %v5329
      %v5465 = vsel %vm896, %v5431, %v5331
      %v5467 = vsel %vm896, %v5434, %v5333
      %v5469 = vsel %vm896, %v5437, %v5335
      %v5471 = vsel %vm896, %v5440, %v5337
      %v5473 = vsel %vm896, %v5443, %v5339
      %v5475 = vsel %vm896, %v5446, %v5341
      %v5477 = vsel %vm896, %v5449, %v5343
      %v5479 = vsel %vm2781, %v5451, %v5350
      %v5482 = vsel %vm2781, %v5453, %v5352
      %v5485 = vsel %vm2781, %v5455, %v5354
      %v5488 = vsel %vm2781, %v5457, %v5356
      %v5491 = vsel %vm2781, %v5459, %v5358
      %v5494 = vsel %vm2781, %v5461, %v5360
      %v5497 = vsel %vm2781, %v5463, %v5362
      %v5500 = vsel %vm2781, %v5465, %v5364
      %v5503 = vsel %vm2781, %v5467, %v5366
      %v5506 = vsel %vm2781, %v5469, %v5368
      %v5509 = vsel %vm2781, %v5471, %v5370
      %v5512 = vsel %vm2781, %v5473, %v5372
      %v5515 = vsel %vm2781, %v5475, %v5374
      %v5518 = vsel %vm2781, %v5477, %v5376
      %v5522 = vsel %vm2719, %v5282, %v5388
      %v5525 = vsel %vm2719, %v5315, %v5390
      %v5528 = vsel %vm2719, %v5348, %v5392
      %v5531 = vsel %vm2719, %v5381, %v5394
      %v5533 = vsel %vm896, %v5522, %v5401
      %v5535 = vsel %vm896, %v5525, %v5403
      %v5537 = vsel %vm896, %v5528, %v5405
      %v5539 = vsel %vm896, %v5531, %v5407
      %v5540 = vld [vmem:[%s12] sm:$0xf]
      %v5541 = vld [vmem:[%s12 + $0x4] sm:$0xf]
      %v5542 = vld [vmem:[%s12 + $0x8] sm:$0xf]
      %v5543 = vld [vmem:[%s12 + $0xc] sm:$0xf]
      %v5544 = vld [vmem:[%s12 + $0x10] sm:$0xf]
      %v5545 = vld [vmem:[%s12 + $0x14] sm:$0xf]
      %v5546 = vld [vmem:[%s12 + $0x18] sm:$0xf]
      %v5547 = vld [vmem:[%s12 + $0x1c] sm:$0xf]
      %v5548 = vld [vmem:[%s12 + $0x20] sm:$0xf]
      %v5549 = vld [vmem:[%s12 + $0x24] sm:$0xf]
      %v5550 = vld [vmem:[%s12 + $0x28] sm:$0xf]
      %v5551 = vld [vmem:[%s12 + $0x2c] sm:$0xf]
      %v5552 = vld [vmem:[%s12 + $0x30] sm:$0xf]
      %v5553 = vld [vmem:[%s12 + $0x34] sm:$0xf]
      %v5554 = vld [vmem:[%s12 + $0x38] sm:$0xf]
      %v5555 = vld [vmem:[%s12 + $0x3c] sm:$0xf]
      %v5556 = vld [vmem:[%s12 + $0x40] sm:$0xf]
      %v5557 = vld [vmem:[%s12 + $0x44] sm:$0xf]
      %v5558 = vld [vmem:[%s12 + $0x48] sm:$0xf]
      %v5559 = vld [vmem:[%s12 + $0x4c] sm:$0xf]
      %v5560 = vld [vmem:[%s12 + $0x50] sm:$0xf]
      %v5561 = vld [vmem:[%s12 + $0x54] sm:$0xf]
      %v5562 = vld [vmem:[%s12 + $0x58] sm:$0xf]
      %v5563 = vld [vmem:[%s12 + $0x5c] sm:$0xf]
      %v5564 = vld [vmem:[%s12 + $0x60] sm:$0xf]
      %v5565 = vld [vmem:[%s12 + $0x64] sm:$0xf]
      %v5566 = vld [vmem:[%s12 + $0x68] sm:$0xf]
      %v5567 = vld [vmem:[%s12 + $0x6c] sm:$0xf]
      %v5568 = vld [vmem:[%s13] sm:$0x1]
      %v5570 = vlaneseq
      %v5571 = vshrl.u32 %v5570, 7
      %v5572 = vsub.s32 0, %v5571
      %v5573 = vrot.slane %v5568, %v5572
      %v5603 = vunpack.c.l.b16 %v5540
      %v5604 = vunpack.c.l.b16 %v5541
      %v5605 = vunpack.c.l.b16 %v5542
      %v5606 = vunpack.c.l.b16 %v5543
      %v5607 = vunpack.c.l.b16 %v5544
      %v5608 = vunpack.c.l.b16 %v5545
      %v5609 = vunpack.c.l.b16 %v5546
      %v5610 = vunpack.c.l.b16 %v5547
      %v5611 = vunpack.c.l.b16 %v5548
      %v5612 = vunpack.c.l.b16 %v5549
      %v5613 = vunpack.c.l.b16 %v5550
      %v5614 = vunpack.c.l.b16 %v5551
      %v5615 = vunpack.c.l.b16 %v5552
      %v5616 = vunpack.c.l.b16 %v5553
      %v5617 = vunpack.c.l.b16 %v5554
      %v5618 = vunpack.c.l.b16 %v5555
      %v5619 = vunpack.c.l.b16 %v5556
      %v5620 = vunpack.c.l.b16 %v5557
      %v5621 = vunpack.c.l.b16 %v5558
      %v5622 = vunpack.c.l.b16 %v5559
      %v5623 = vunpack.c.l.b16 %v5560
      %v5624 = vunpack.c.l.b16 %v5561
      %v5625 = vunpack.c.l.b16 %v5562
      %v5626 = vunpack.c.l.b16 %v5563
      %v5627 = vunpack.c.l.b16 %v5564
      %v5628 = vunpack.c.l.b16 %v5565
      %v5629 = vunpack.c.l.b16 %v5566
      %v5630 = vunpack.c.l.b16 %v5567
      %v5631 = vpack.c.b16 %v5604, %v5603
      %v5632 = vpack.c.b16 %v5606, %v5605
      %v5633 = vpack.c.b16 %v5608, %v5607
      %v5634 = vpack.c.b16 %v5610, %v5609
      %v5635 = vpack.c.b16 %v5612, %v5611
      %v5636 = vpack.c.b16 %v5614, %v5613
      %v5637 = vpack.c.b16 %v5616, %v5615
      %v5638 = vpack.c.b16 %v5618, %v5617
      %v5639 = vpack.c.b16 %v5620, %v5619
      %v5640 = vpack.c.b16 %v5622, %v5621
      %v5641 = vpack.c.b16 %v5624, %v5623
      %v5642 = vpack.c.b16 %v5626, %v5625
      %v5643 = vpack.c.b16 %v5628, %v5627
      %v5644 = vpack.c.b16 %v5630, %v5629
      %v5659 = vsel %vm2781, %v5459, 0
      %v5661 = vsel %vm2781, %v5461, 0
      %v5663 = vsel %vm2781, %v5463, 0
      %v5665 = vsel %vm2781, %v5465, 0
      %v5667 = vsel %vm2781, %v5467, 0
      %v5669 = vsel %vm2781, %v5469, 0
      %v5671 = vsel %vm2781, %v5471, 0
      %v5673 = vsel %vm2781, %v5473, 0
      %v5675 = vsel %vm2781, %v5475, 0
      %v5677 = vsel %vm2781, %v5477, 0
      %v5679 = vsel %vm2781, %v5533, 0
      %v5681 = vsel %vm2781, %v5535, 0
      %v5683 = vsel %vm2781, %v5537, 0
      %v5685 = vsel %vm2781, %v5539, 0
      %5687 = vmatprep.subr.bf16.mxu0 0
      %5688 = vmatpush1.bf16.msra.mxu0 %v5638
      %5689 = vmatprep.subr.bf16.mxu0 0
      %5690 = vmatpush1.bf16.msra.mxu0 %v5637
      %5691 = vmatprep.subr.bf16.mxu0 0
      %5692 = vmatpush1.bf16.msra.mxu0 %v5636
      %5693 = vmatprep.subr.bf16.mxu0 0
      %5694 = vmatpush1.bf16.msra.mxu0 %v5635
      %5695 = vmatprep.subr.bf16.mxu0 0
      %5696 = vmatpush1.bf16.msra.mxu0 %v5634
      %5697 = vmatprep.subr.bf16.mxu0 0
      %5698 = vmatpush1.bf16.msra.mxu0 %v5633
      %5699 = vmatprep.subr.bf16.mxu0 0
      %5700 = vmatpush1.bf16.msra.mxu0 %v5632
      %5701 = vmatprep.subr.bf16.mxu0 0
      %5702 = vmatpush1.bf16.msra.mxu0 %v5631
      %5703 = vmatprep.subr.bf16.mxu0 0
      %5704 = vmatpush2.bf16.msra.mxu0 0
      %5705 = vmatprep.subr.bf16.mxu0 0
      %5706 = vmatpush2.bf16.msra.mxu0 0
      %5707 = vmatprep.subr.bf16.mxu0 0
      %5708 = vmatpush2.bf16.msra.mxu0 %v5644
      %5709 = vmatprep.subr.bf16.mxu0 0
      %5710 = vmatpush2.bf16.msra.mxu0 %v5643
      %5711 = vmatprep.subr.bf16.mxu0 0
      %5712 = vmatpush2.bf16.msra.mxu0 %v5642
      %5713 = vmatprep.subr.bf16.mxu0 0
      %5714 = vmatpush2.bf16.msra.mxu0 %v5641
      %5715 = vmatprep.subr.bf16.mxu0 0
      %5716 = vmatpush2.bf16.msra.mxu0 %v5640
      %5717 = vmatprep.subr.bf16.mxu0 0
      %5718 = vmatpush2.bf16.msra.mxu0 %v5639
      %5719 = vmatprep.mubr.bf16.mxu0 %v5659
      %5720 = vmatmul.mubr.bf16.gmra.mxu0 %v5479
      %v5721 = vpop.f32.mrf.mxu0
      %v5722 = vadd.f32 %v5573, %v5721
      %v5723 = vpop.f32.mrf.mxu0
      %v5724 = vpop.f32.mrf.mxu0
      %v5725 = vadd.f32 %v5573, %v5724
      %v5726 = vpop.f32.mrf.mxu0
      %5727 = vmatprep.mubr.bf16.mxu0 %v5661
      %5728 = vmatmul.mubr.bf16.gmra.mxu0 %v5482
      %v5729 = vpop.f32.mrf.mxu0
      %v5730 = vadd.f32 %v5573, %v5729
      %v5731 = vpop.f32.mrf.mxu0
      %v5732 = vpop.f32.mrf.mxu0
      %v5733 = vadd.f32 %v5573, %v5732
      %v5734 = vpop.f32.mrf.mxu0
      %5735 = vmatprep.mubr.bf16.mxu0 %v5663
      %5736 = vmatmul.mubr.bf16.gmra.mxu0 %v5485
      %v5737 = vpop.f32.mrf.mxu0
      %v5738 = vadd.f32 %v5573, %v5737
      %v5739 = vpop.f32.mrf.mxu0
      %v5740 = vpop.f32.mrf.mxu0
      %v5741 = vadd.f32 %v5573, %v5740
      %v5742 = vpop.f32.mrf.mxu0
      %5743 = vmatprep.mubr.bf16.mxu0 %v5665
      %5744 = vmatmul.mubr.bf16.gmra.mxu0 %v5488
      %v5745 = vpop.f32.mrf.mxu0
      %v5746 = vadd.f32 %v5573, %v5745
      %v5747 = vpop.f32.mrf.mxu0
      %v5748 = vpop.f32.mrf.mxu0
      %v5749 = vadd.f32 %v5573, %v5748
      %v5750 = vpop.f32.mrf.mxu0
      %5751 = vmatprep.mubr.bf16.mxu0 %v5667
      %5752 = vmatmul.mubr.bf16.gmra.mxu0 %v5491
      %v5753 = vpop.f32.mrf.mxu0
      %v5754 = vadd.f32 %v5573, %v5753
      %v5755 = vpop.f32.mrf.mxu0
      %v5756 = vpop.f32.mrf.mxu0
      %v5757 = vadd.f32 %v5573, %v5756
      %v5758 = vpop.f32.mrf.mxu0
      %5759 = vmatprep.mubr.bf16.mxu0 %v5669
      %5760 = vmatmul.mubr.bf16.gmra.mxu0 %v5494
      %v5761 = vpop.f32.mrf.mxu0
      %v5762 = vadd.f32 %v5573, %v5761
      %v5763 = vpop.f32.mrf.mxu0
      %v5764 = vpop.f32.mrf.mxu0
      %v5765 = vadd.f32 %v5573, %v5764
      %v5766 = vpop.f32.mrf.mxu0
      %5767 = vmatprep.mubr.bf16.mxu0 %v5671
      %5768 = vmatmul.mubr.bf16.gmra.mxu0 %v5497
      %v5769 = vpop.f32.mrf.mxu0
      %v5770 = vadd.f32 %v5573, %v5769
      %v5771 = vpop.f32.mrf.mxu0
      %v5772 = vpop.f32.mrf.mxu0
      %v5773 = vadd.f32 %v5573, %v5772
      %v5774 = vpop.f32.mrf.mxu0
      %5775 = vmatprep.mubr.bf16.mxu0 %v5673
      %5776 = vmatmul.mubr.bf16.gmra.mxu0 %v5500
      %v5777 = vpop.f32.mrf.mxu0
      %v5778 = vadd.f32 %v5573, %v5777
      %v5779 = vpop.f32.mrf.mxu0
      %v5780 = vpop.f32.mrf.mxu0
      %v5781 = vadd.f32 %v5573, %v5780
      %v5782 = vpop.f32.mrf.mxu0
      %5783 = vmatprep.mubr.bf16.mxu0 %v5675
      %5784 = vmatmul.mubr.bf16.gmra.mxu0 %v5503
      %v5785 = vpop.f32.mrf.mxu0
      %v5786 = vadd.f32 %v5573, %v5785
      %v5787 = vpop.f32.mrf.mxu0
      %v5788 = vpop.f32.mrf.mxu0
      %v5789 = vadd.f32 %v5573, %v5788
      %v5790 = vpop.f32.mrf.mxu0
      %5791 = vmatprep.mubr.bf16.mxu0 %v5677
      %5792 = vmatmul.mubr.bf16.gmra.mxu0 %v5506
      %v5793 = vpop.f32.mrf.mxu0
      %v5794 = vadd.f32 %v5573, %v5793
      %v5795 = vpop.f32.mrf.mxu0
      %v5796 = vpop.f32.mrf.mxu0
      %v5797 = vadd.f32 %v5573, %v5796
      %v5798 = vpop.f32.mrf.mxu0
      %5799 = vmatprep.mubr.bf16.mxu0 %v5679
      %5800 = vmatmul.mubr.bf16.gmra.mxu0 %v5509
      %v5801 = vpop.f32.mrf.mxu0
      %v5802 = vadd.f32 %v5573, %v5801
      %v5803 = vpop.f32.mrf.mxu0
      %v5804 = vpop.f32.mrf.mxu0
      %v5805 = vadd.f32 %v5573, %v5804
      %v5806 = vpop.f32.mrf.mxu0
      %5807 = vmatprep.mubr.bf16.mxu0 %v5681
      %5808 = vmatmul.mubr.bf16.gmra.mxu0 %v5512
      %v5809 = vpop.f32.mrf.mxu0
      %v5810 = vadd.f32 %v5573, %v5809
      %v5811 = vpop.f32.mrf.mxu0
      %v5812 = vpop.f32.mrf.mxu0
      %v5813 = vadd.f32 %v5573, %v5812
      %v5814 = vpop.f32.mrf.mxu0
      %5815 = vmatprep.mubr.bf16.mxu0 %v5683
      %5816 = vmatmul.mubr.bf16.gmra.mxu0 %v5515
      %v5817 = vpop.f32.mrf.mxu0
      %v5818 = vadd.f32 %v5573, %v5817
      %v5819 = vpop.f32.mrf.mxu0
      %v5820 = vpop.f32.mrf.mxu0
      %v5821 = vadd.f32 %v5573, %v5820
      %v5822 = vpop.f32.mrf.mxu0
      %5823 = vmatprep.mubr.bf16.mxu0 %v5685
      %5824 = vmatmul.mubr.bf16.gmra.mxu0 %v5518
      %v5825 = vpop.f32.mrf.mxu0
      %v5826 = vadd.f32 %v5573, %v5825
      %v5827 = vpop.f32.mrf.mxu0
      %v5828 = vpop.f32.mrf.mxu0
      %v5829 = vadd.f32 %v5573, %v5828
      %v5830 = vpop.f32.mrf.mxu0
      %5831 = vdwg.mxu0
      %v5832 = vmax.f32 %v5722, 0.0
      %v5833 = vmax.f32 %v5725, 0.0
      %v5834 = vmax.f32 %v5730, 0.0
      %v5835 = vmax.f32 %v5733, 0.0
      %v5836 = vmax.f32 %v5738, 0.0
      %v5837 = vmax.f32 %v5741, 0.0
      %v5838 = vmax.f32 %v5746, 0.0
      %v5839 = vmax.f32 %v5749, 0.0
      %v5840 = vmax.f32 %v5754, 0.0
      %v5841 = vmax.f32 %v5757, 0.0
      %v5842 = vmax.f32 %v5762, 0.0
      %v5843 = vmax.f32 %v5765, 0.0
      %v5844 = vmax.f32 %v5770, 0.0
      %v5845 = vmax.f32 %v5773, 0.0
      %v5846 = vmax.f32 %v5778, 0.0
      %v5847 = vmax.f32 %v5781, 0.0
      %v5848 = vmax.f32 %v5786, 0.0
      %v5849 = vmax.f32 %v5789, 0.0
      %v5850 = vmax.f32 %v5794, 0.0
      %v5851 = vmax.f32 %v5797, 0.0
      %v5852 = vmax.f32 %v5802, 0.0
      %v5853 = vmax.f32 %v5805, 0.0
      %v5854 = vmax.f32 %v5810, 0.0
      %v5855 = vmax.f32 %v5813, 0.0
      %v5856 = vmax.f32 %v5818, 0.0
      %v5857 = vmax.f32 %v5821, 0.0
      %v5858 = vmax.f32 %v5826, 0.0
      %v5859 = vmax.f32 %v5829, 0.0
      %v5860 = vmul.f32 %v5832, %v1722
      %v5861 = vmul.f32 %v5833, %v1727
      %v5862 = vmul.f32 %v5834, %v1732
      %v5863 = vmul.f32 %v5835, %v1737
      %v5864 = vmul.f32 %v5836, %v1742
      %v5865 = vmul.f32 %v5837, %v1747
      %v5866 = vmul.f32 %v5838, %v1752
      %v5867 = vmul.f32 %v5839, %v1757
      %v5868 = vmul.f32 %v5840, %v1762
      %v5869 = vmul.f32 %v5841, %v1767
      %v5870 = vmul.f32 %v5842, %v1772
      %v5871 = vmul.f32 %v5843, %v1777
      %v5872 = vmul.f32 %v5844, %v1782
      %v5873 = vmul.f32 %v5845, %v1787
      %v5874 = vmul.f32 %v5846, %v1792
      %v5875 = vmul.f32 %v5847, %v1797
      %v5876 = vmul.f32 %v5848, %v1802
      %v5877 = vmul.f32 %v5849, %v1807
      %v5878 = vmul.f32 %v5850, %v1812
      %v5879 = vmul.f32 %v5851, %v1817
      %v5880 = vmul.f32 %v5852, %v1822
      %v5881 = vmul.f32 %v5853, %v1827
      %v5882 = vmul.f32 %v5854, %v1832
      %v5883 = vmul.f32 %v5855, %v1837
      %v5884 = vmul.f32 %v5856, %v1842
      %v5885 = vmul.f32 %v5857, %v1847
      %v5886 = vmul.f32 %v5858, %v1852
      %v5887 = vmul.f32 %v5859, %v1857
      %v5888 = vpack.c.bf16 %v5861, %v5860
      %v5889 = vpack.c.bf16 %v5863, %v5862
      %v5890 = vpack.c.bf16 %v5865, %v5864
      %v5891 = vpack.c.bf16 %v5867, %v5866
      %v5892 = vpack.c.bf16 %v5869, %v5868
      %v5893 = vpack.c.bf16 %v5871, %v5870
      %v5894 = vpack.c.bf16 %v5873, %v5872
      %v5895 = vpack.c.bf16 %v5875, %v5874
      %v5896 = vpack.c.bf16 %v5877, %v5876
      %v5897 = vpack.c.bf16 %v5879, %v5878
      %v5898 = vpack.c.bf16 %v5881, %v5880
      %v5899 = vpack.c.bf16 %v5883, %v5882
      %v5900 = vpack.c.bf16 %v5885, %v5884
      %v5901 = vpack.c.bf16 %v5887, %v5886
      %v5916 = vunpack.c.l.b16 %v5888
      %v5917 = vunpack.c.h.b16 %v5888
      %v5918 = vunpack.c.l.b16 %v5889
      %v5919 = vunpack.c.h.b16 %v5889
      %v5920 = vunpack.c.l.b16 %v5890
      %v5921 = vunpack.c.h.b16 %v5890
      %v5922 = vunpack.c.l.b16 %v5891
      %v5923 = vunpack.c.h.b16 %v5891
      %v5924 = vunpack.c.l.b16 %v5892
      %v5925 = vunpack.c.h.b16 %v5892
      %v5926 = vunpack.c.l.b16 %v5893
      %v5927 = vunpack.c.h.b16 %v5893
      %v5928 = vunpack.c.l.b16 %v5894
      %v5929 = vunpack.c.h.b16 %v5894
      %v5930 = vunpack.c.l.b16 %v5895
      %v5931 = vunpack.c.h.b16 %v5895
      %v5932 = vunpack.c.l.b16 %v5896
      %v5933 = vunpack.c.h.b16 %v5896
      %v5934 = vunpack.c.l.b16 %v5897
      %v5935 = vunpack.c.h.b16 %v5897
      %v5936 = vunpack.c.l.b16 %v5898
      %v5937 = vunpack.c.h.b16 %v5898
      %v5938 = vunpack.c.l.b16 %v5899
      %v5939 = vunpack.c.h.b16 %v5899
      %v5940 = vunpack.c.l.b16 %v5900
      %v5941 = vunpack.c.h.b16 %v5900
      %v5942 = vunpack.c.l.b16 %v5901
      %v5943 = vunpack.c.h.b16 %v5901
      %v5944 = vpack.c.b16 %v5916, %v5916
      %v5945 = vpack.c.b16 %v5917, %v5917
      %v5946 = vpack.c.b16 %v5918, %v5918
      %v5947 = vpack.c.b16 %v5919, %v5919
      %v5948 = vpack.c.b16 %v5920, %v5920
      %v5949 = vpack.c.b16 %v5921, %v5921
      %v5950 = vpack.c.b16 %v5922, %v5922
      %v5951 = vpack.c.b16 %v5923, %v5923
      %v5952 = vpack.c.b16 %v5924, %v5924
      %v5953 = vpack.c.b16 %v5925, %v5925
      %v5954 = vpack.c.b16 %v5926, %v5926
      %v5955 = vpack.c.b16 %v5927, %v5927
      %v5956 = vpack.c.b16 %v5928, %v5928
      %v5957 = vpack.c.b16 %v5929, %v5929
      %v5958 = vpack.c.b16 %v5930, %v5930
      %v5959 = vpack.c.b16 %v5931, %v5931
      %v5960 = vpack.c.b16 %v5932, %v5932
      %v5961 = vpack.c.b16 %v5933, %v5933
      %v5962 = vpack.c.b16 %v5934, %v5934
      %v5963 = vpack.c.b16 %v5935, %v5935
      %v5964 = vpack.c.b16 %v5936, %v5936
      %v5965 = vpack.c.b16 %v5937, %v5937
      %v5966 = vpack.c.b16 %v5938, %v5938
      %v5967 = vpack.c.b16 %v5939, %v5939
      %v5968 = vpack.c.b16 %v5940, %v5940
      %v5969 = vpack.c.b16 %v5941, %v5941
      %v5970 = vpack.c.b16 %v5942, %v5942
      %v5971 = vpack.c.b16 %v5943, %v5943
      %6000 = vst.msk [vmem:[#allocation3 + $0x18] sm:$0xf] %vm713, %v5944
      %6001 = vst.msk [vmem:[#allocation3 + $0x1c] sm:$0xf] %vm713, %v5945
      %6002 = vst.msk [vmem:[#allocation3 + $0x20] sm:$0xf] %vm713, %v5946
      %6003 = vst.msk [vmem:[#allocation3 + $0x24] sm:$0xf] %vm713, %v5947
      %6004 = vst.msk [vmem:[#allocation3 + $0x28] sm:$0xf] %vm713, %v5948
      %6005 = vst.msk [vmem:[#allocation3 + $0x2c] sm:$0xf] %vm713, %v5949
      %6006 = vst.msk [vmem:[#allocation3 + $0x30] sm:$0xf] %vm713, %v5950
      %6007 = vst.msk [vmem:[#allocation3 + $0x34] sm:$0xf] %vm713, %v5951
      %6008 = vst.msk [vmem:[#allocation3 + $0x38] sm:$0xf] %vm713, %v5952
      %6009 = vst.msk [vmem:[#allocation3 + $0x3c] sm:$0xf] %vm713, %v5953
      %6010 = vst.msk [vmem:[#allocation3 + $0x40] sm:$0xf] %vm713, %v5954
      %6011 = vst.msk [vmem:[#allocation3 + $0x44] sm:$0xf] %vm713, %v5955
      %6012 = vst.msk [vmem:[#allocation3 + $0x48] sm:$0xf] %vm713, %v5956
      %6013 = vst.msk [vmem:[#allocation3 + $0x4c] sm:$0xf] %vm713, %v5957
      %6014 = vst.msk [vmem:[#allocation3 + $0x50] sm:$0xf] %vm713, %v5958
      %6015 = vst.msk [vmem:[#allocation3 + $0x54] sm:$0xf] %vm713, %v5959
      %6016 = vst.msk [vmem:[#allocation3 + $0x58] sm:$0xf] %vm713, %v5960
      %6017 = vst.msk [vmem:[#allocation3 + $0x5c] sm:$0xf] %vm713, %v5961
      %6018 = vst.msk [vmem:[#allocation3 + $0x60] sm:$0xf] %vm713, %v5962
      %6019 = vst.msk [vmem:[#allocation3 + $0x64] sm:$0xf] %vm713, %v5963
      %6020 = vst.msk [vmem:[#allocation3 + $0x68] sm:$0xf] %vm713, %v5964
      %6021 = vst.msk [vmem:[#allocation3 + $0x6c] sm:$0xf] %vm713, %v5965
      %6022 = vst.msk [vmem:[#allocation3 + $0x70] sm:$0xf] %vm713, %v5966
      %6023 = vst.msk [vmem:[#allocation3 + $0x74] sm:$0xf] %vm713, %v5967
      %6024 = vst.msk [vmem:[#allocation3 + $0x78] sm:$0xf] %vm713, %v5968
      %6025 = vst.msk [vmem:[#allocation3 + $0x7c] sm:$0xf] %vm713, %v5969
      %6026 = vst.msk [vmem:[#allocation3 + $0x80] sm:$0xf] %vm713, %v5970
      %6027 = vst.msk [vmem:[#allocation3 + $0x84] sm:$0xf] %vm713, %v5971
      %v6028 = vld [vmem:[#allocation3 + $0x14] sm:$0xc]
      %v6029 = vld [vmem:[#allocation3 + $0x18] sm:$0xf]
      %v6030 = vld [vmem:[#allocation3 + $0x1c] sm:$0xf]
      %v6031 = vld [vmem:[#allocation3 + $0x20] sm:$0xf]
      %v6032 = vld [vmem:[#allocation3 + $0x24] sm:$0xf]
      %v6033 = vld [vmem:[#allocation3 + $0x28] sm:$0xf]
      %v6034 = vld [vmem:[#allocation3 + $0x2c] sm:$0xf]
      %v6035 = vld [vmem:[#allocation3 + $0x30] sm:$0xf]
      %v6036 = vld [vmem:[#allocation3 + $0x34] sm:$0xf]
      %v6037 = vld [vmem:[#allocation3 + $0x38] sm:$0xf]
      %v6038 = vld [vmem:[#allocation3 + $0x3c] sm:$0xf]
      %v6039 = vld [vmem:[#allocation3 + $0x40] sm:$0xf]
      %v6040 = vld [vmem:[#allocation3 + $0x44] sm:$0xf]
      %v6041 = vld [vmem:[#allocation3 + $0x48] sm:$0xf]
      %v6042 = vld [vmem:[#allocation3 + $0x4c] sm:$0xf]
      %v6043 = vld [vmem:[#allocation3 + $0x50] sm:$0xf]
      %v6044 = vld [vmem:[#allocation3 + $0x54] sm:$0xf]
      %v6045 = vld [vmem:[#allocation3 + $0x58] sm:$0xf]
      %v6046 = vld [vmem:[#allocation3 + $0x5c] sm:$0xf]
      %v6047 = vld [vmem:[#allocation3 + $0x60] sm:$0xf]
      %v6048 = vld [vmem:[#allocation3 + $0x64] sm:$0xf]
      %v6049 = vld [vmem:[#allocation3 + $0x68] sm:$0xf]
      %v6050 = vld [vmem:[#allocation3 + $0x6c] sm:$0xf]
      %v6051 = vld [vmem:[#allocation3 + $0x70] sm:$0xf]
      %v6052 = vld [vmem:[#allocation3 + $0x74] sm:$0xf]
      %v6053 = vld [vmem:[#allocation3 + $0x78] sm:$0xf]
      %v6054 = vld [vmem:[#allocation3 + $0x7c] sm:$0xf]
      %v6055 = vld [vmem:[#allocation3 + $0x80] sm:$0xf]
      %v6056 = vld [vmem:[#allocation3 + $0x84] sm:$0x7]
      %v6057 = vld [vmem:[#allocation3 + $0x14] sm:$0x8]
      %v6058 = vld [vmem:[#allocation3 + $0x84] sm:$0xf]
      %v6059 = vld [vmem:[#allocation3 + $0x88] sm:$0x1]
      %v6060 = vld [vmem:[#allocation3 + $0x18] sm:$0xe]
      %v6061 = vld [vmem:[#allocation3 + $0x88] sm:$0x3]
      %v6091 = vunpack.c.l.b16 %v6028
      %v6092 = vunpack.c.l.b16 %v6029
      %v6093 = vunpack.c.l.b16 %v6030
      %v6094 = vunpack.c.l.b16 %v6031
      %v6095 = vunpack.c.l.b16 %v6032
      %v6096 = vunpack.c.l.b16 %v6033
      %v6097 = vunpack.c.l.b16 %v6034
      %v6098 = vunpack.c.l.b16 %v6035
      %v6099 = vunpack.c.l.b16 %v6036
      %v6100 = vunpack.c.l.b16 %v6037
      %v6101 = vunpack.c.l.b16 %v6038
      %v6102 = vunpack.c.l.b16 %v6039
      %v6103 = vunpack.c.l.b16 %v6040
      %v6104 = vunpack.c.l.b16 %v6041
      %v6105 = vunpack.c.l.b16 %v6042
      %v6106 = vunpack.c.l.b16 %v6043
      %v6107 = vunpack.c.l.b16 %v6044
      %v6108 = vunpack.c.l.b16 %v6045
      %v6109 = vunpack.c.l.b16 %v6046
      %v6110 = vunpack.c.l.b16 %v6047
      %v6111 = vunpack.c.l.b16 %v6048
      %v6112 = vunpack.c.l.b16 %v6049
      %v6113 = vunpack.c.l.b16 %v6050
      %v6114 = vunpack.c.l.b16 %v6051
      %v6115 = vunpack.c.l.b16 %v6052
      %v6116 = vunpack.c.l.b16 %v6053
      %v6117 = vunpack.c.l.b16 %v6054
      %v6118 = vunpack.c.l.b16 %v6055
      %v6119 = vunpack.c.l.b16 %v6056
      %v6120 = vpack.c.b16 %v6092, %v6091
      %v6121 = vpack.c.b16 %v6094, %v6093
      %v6122 = vpack.c.b16 %v6096, %v6095
      %v6123 = vpack.c.b16 %v6098, %v6097
      %v6124 = vpack.c.b16 %v6100, %v6099
      %v6125 = vpack.c.b16 %v6102, %v6101
      %v6126 = vpack.c.b16 %v6104, %v6103
      %v6127 = vpack.c.b16 %v6106, %v6105
      %v6128 = vpack.c.b16 %v6108, %v6107
      %v6129 = vpack.c.b16 %v6110, %v6109
      %v6130 = vpack.c.b16 %v6112, %v6111
      %v6131 = vpack.c.b16 %v6114, %v6113
      %v6132 = vpack.c.b16 %v6116, %v6115
      %v6133 = vpack.c.b16 %v6118, %v6117
      %v6134 = vpack.c.b16 %v6119, %v6119
      %v6136 = vunpack.c.l.b16 %v6057
      %v6137 = vpack.c.b16 %v6092, %v6136
      %v6139 = vshrl.u32 %v6137, 16
      %v6141 = vshll.u32 %v6137, 16
      %v6143 = vrot.slane %v6141, 1
      %v6144 = vor.u32 %v6139, %v6143
      %v6146 = vshll.u32 %v6121, 16
      %v6148 = vrot.slane %v6146, 1
      %v6149 = vsel %vm2137, %v6144, %v6148
      %v6150 = vshrl.u32 %v6121, 16
      %v6152 = vor.u32 %v6150, %v6148
      %v6154 = vshll.u32 %v6122, 16
      %v6156 = vrot.slane %v6154, 1
      %v6157 = vsel %vm2137, %v6152, %v6156
      %v6158 = vshrl.u32 %v6122, 16
      %v6160 = vor.u32 %v6158, %v6156
      %v6162 = vshll.u32 %v6123, 16
      %v6164 = vrot.slane %v6162, 1
      %v6165 = vsel %vm2137, %v6160, %v6164
      %v6166 = vshrl.u32 %v6123, 16
      %v6168 = vor.u32 %v6166, %v6164
      %v6170 = vshll.u32 %v6124, 16
      %v6172 = vrot.slane %v6170, 1
      %v6173 = vsel %vm2137, %v6168, %v6172
      %v6174 = vshrl.u32 %v6124, 16
      %v6176 = vor.u32 %v6174, %v6172
      %v6178 = vshll.u32 %v6125, 16
      %v6180 = vrot.slane %v6178, 1
      %v6181 = vsel %vm2137, %v6176, %v6180
      %v6182 = vshrl.u32 %v6125, 16
      %v6184 = vor.u32 %v6182, %v6180
      %v6186 = vshll.u32 %v6126, 16
      %v6188 = vrot.slane %v6186, 1
      %v6189 = vsel %vm2137, %v6184, %v6188
      %v6190 = vshrl.u32 %v6126, 16
      %v6192 = vor.u32 %v6190, %v6188
      %v6194 = vshll.u32 %v6127, 16
      %v6196 = vrot.slane %v6194, 1
      %v6197 = vsel %vm2137, %v6192, %v6196
      %v6198 = vshrl.u32 %v6127, 16
      %v6200 = vor.u32 %v6198, %v6196
      %v6202 = vshll.u32 %v6128, 16
      %v6204 = vrot.slane %v6202, 1
      %v6205 = vsel %vm2137, %v6200, %v6204
      %v6206 = vshrl.u32 %v6128, 16
      %v6208 = vor.u32 %v6206, %v6204
      %v6210 = vshll.u32 %v6129, 16
      %v6212 = vrot.slane %v6210, 1
      %v6213 = vsel %vm2137, %v6208, %v6212
      %v6214 = vshrl.u32 %v6129, 16
      %v6216 = vor.u32 %v6214, %v6212
      %v6218 = vshll.u32 %v6130, 16
      %v6220 = vrot.slane %v6218, 1
      %v6221 = vsel %vm2137, %v6216, %v6220
      %v6222 = vshrl.u32 %v6130, 16
      %v6224 = vor.u32 %v6222, %v6220
      %v6226 = vshll.u32 %v6131, 16
      %v6228 = vrot.slane %v6226, 1
      %v6229 = vsel %vm2137, %v6224, %v6228
      %v6230 = vshrl.u32 %v6131, 16
      %v6232 = vor.u32 %v6230, %v6228
      %v6234 = vshll.u32 %v6132, 16
      %v6236 = vrot.slane %v6234, 1
      %v6237 = vsel %vm2137, %v6232, %v6236
      %v6238 = vshrl.u32 %v6132, 16
      %v6240 = vor.u32 %v6238, %v6236
      %v6242 = vshll.u32 %v6133, 16
      %v6244 = vrot.slane %v6242, 1
      %v6245 = vsel %vm2137, %v6240, %v6244
      %v6246 = vshrl.u32 %v6133, 16
      %v6248 = vor.u32 %v6246, %v6244
      %v6250 = vshll.u32 %v6134, 16
      %v6252 = vrot.slane %v6250, 1
      %v6253 = vsel %vm2137, %v6248, %v6252
      %v6254 = vshrl.u32 %v6134, 16
      %v6256 = vor.u32 %v6254, %v6252
      %6257 = vrot.lane.b32.xlu0 %v6149, 32
      %v6258 = vpop.permute.xlu0 %6257
      %6259 = vrot.lane.b32.xlu0 %v6157, 32
      %v6260 = vpop.permute.xlu0 %6259
      %6261 = vrot.lane.b32.xlu0 %v6165, 32
      %v6262 = vpop.permute.xlu0 %6261
      %6263 = vrot.lane.b32.xlu0 %v6173, 32
      %v6264 = vpop.permute.xlu0 %6263
      %6265 = vrot.lane.b32.xlu0 %v6181, 32
      %v6266 = vpop.permute.xlu0 %6265
      %6267 = vrot.lane.b32.xlu0 %v6189, 32
      %v6268 = vpop.permute.xlu0 %6267
      %6269 = vrot.lane.b32.xlu0 %v6197, 32
      %v6270 = vpop.permute.xlu0 %6269
      %6271 = vrot.lane.b32.xlu0 %v6205, 32
      %v6272 = vpop.permute.xlu0 %6271
      %6273 = vrot.lane.b32.xlu0 %v6213, 32
      %v6274 = vpop.permute.xlu0 %6273
      %6275 = vrot.lane.b32.xlu0 %v6221, 32
      %v6276 = vpop.permute.xlu0 %6275
      %6277 = vrot.lane.b32.xlu0 %v6229, 32
      %v6278 = vpop.permute.xlu0 %6277
      %6279 = vrot.lane.b32.xlu0 %v6237, 32
      %v6280 = vpop.permute.xlu0 %6279
      %6281 = vrot.lane.b32.xlu0 %v6245, 32
      %v6282 = vpop.permute.xlu0 %6281
      %6283 = vrot.lane.b32.xlu0 %v6253, 32
      %v6284 = vpop.permute.xlu0 %6283
      %6285 = vrot.lane.b32.xlu0 %v6256, 32
      %v6286 = vpop.permute.xlu0 %6285
      %v6288 = vunpack.c.l.b16 %v6058
      %v6289 = vpack.c.b16 %v6288, %v6288
      %v6290 = vrot.slane %v6137, 1
      %v6291 = vrot.slane %v6121, 1
      %v6292 = vsel %vm2290, %v6290, %v6291
      %v6293 = vrot.slane %v6122, 1
      %v6294 = vsel %vm2290, %v6291, %v6293
      %v6295 = vrot.slane %v6123, 1
      %v6296 = vsel %vm2290, %v6293, %v6295
      %v6297 = vrot.slane %v6124, 1
      %v6298 = vsel %vm2290, %v6295, %v6297
      %v6299 = vrot.slane %v6125, 1
      %v6300 = vsel %vm2290, %v6297, %v6299
      %v6301 = vrot.slane %v6126, 1
      %v6302 = vsel %vm2290, %v6299, %v6301
      %v6303 = vrot.slane %v6127, 1
      %v6304 = vsel %vm2290, %v6301, %v6303
      %v6305 = vrot.slane %v6128, 1
      %v6306 = vsel %vm2290, %v6303, %v6305
      %v6307 = vrot.slane %v6129, 1
      %v6308 = vsel %vm2290, %v6305, %v6307
      %v6309 = vrot.slane %v6130, 1
      %v6310 = vsel %vm2290, %v6307, %v6309
      %v6311 = vrot.slane %v6131, 1
      %v6312 = vsel %vm2290, %v6309, %v6311
      %v6313 = vrot.slane %v6132, 1
      %v6314 = vsel %vm2290, %v6311, %v6313
      %v6315 = vrot.slane %v6133, 1
      %v6316 = vsel %vm2290, %v6313, %v6315
      %v6317 = vrot.slane %v6289, 1
      %v6318 = vsel %vm2290, %v6315, %v6317
      %6319 = vrot.lane.b32.xlu0 %v6292, 64
      %v6320 = vpop.permute.xlu0 %6319
      %6321 = vrot.lane.b32.xlu0 %v6294, 64
      %v6322 = vpop.permute.xlu0 %6321
      %6323 = vrot.lane.b32.xlu0 %v6296, 64
      %v6324 = vpop.permute.xlu0 %6323
      %6325 = vrot.lane.b32.xlu0 %v6298, 64
      %v6326 = vpop.permute.xlu0 %6325
      %6327 = vrot.lane.b32.xlu0 %v6300, 64
      %v6328 = vpop.permute.xlu0 %6327
      %6329 = vrot.lane.b32.xlu0 %v6302, 64
      %v6330 = vpop.permute.xlu0 %6329
      %6331 = vrot.lane.b32.xlu0 %v6304, 64
      %v6332 = vpop.permute.xlu0 %6331
      %6333 = vrot.lane.b32.xlu0 %v6306, 64
      %v6334 = vpop.permute.xlu0 %6333
      %6335 = vrot.lane.b32.xlu0 %v6308, 64
      %v6336 = vpop.permute.xlu0 %6335
      %6337 = vrot.lane.b32.xlu0 %v6310, 64
      %v6338 = vpop.permute.xlu0 %6337
      %6339 = vrot.lane.b32.xlu0 %v6312, 64
      %v6340 = vpop.permute.xlu0 %6339
      %6341 = vrot.lane.b32.xlu0 %v6314, 64
      %v6342 = vpop.permute.xlu0 %6341
      %6343 = vrot.lane.b32.xlu0 %v6316, 64
      %v6344 = vpop.permute.xlu0 %6343
      %6345 = vrot.lane.b32.xlu0 %v6318, 64
      %v6346 = vpop.permute.xlu0 %6345
      %6347 = vrot.lane.b32.xlu0 %v6317, 64
      %v6348 = vpop.permute.xlu0 %6347
      %v6349 = vpack.c.b16 %v6093, %v6092
      %v6350 = vpack.c.b16 %v6095, %v6094
      %v6351 = vpack.c.b16 %v6097, %v6096
      %v6352 = vpack.c.b16 %v6099, %v6098
      %v6353 = vpack.c.b16 %v6101, %v6100
      %v6354 = vpack.c.b16 %v6103, %v6102
      %v6355 = vpack.c.b16 %v6105, %v6104
      %v6356 = vpack.c.b16 %v6107, %v6106
      %v6357 = vpack.c.b16 %v6109, %v6108
      %v6358 = vpack.c.b16 %v6111, %v6110
      %v6359 = vpack.c.b16 %v6113, %v6112
      %v6360 = vpack.c.b16 %v6115, %v6114
      %v6361 = vpack.c.b16 %v6117, %v6116
      %v6362 = vpack.c.b16 %v6288, %v6118
      %v6364 = vshrl.u32 %v6349, 16
      %v6366 = vrot.slane %v6364, 5
      %v6367 = vshll.u32 %v6349, 16
      %v6369 = vrot.slane %v6367, 6
      %v6370 = vor.u32 %v6366, %v6369
      %v6372 = vshrl.u32 %v6350, 16
      %v6374 = vrot.slane %v6372, 5
      %v6375 = vshll.u32 %v6350, 16
      %v6377 = vrot.slane %v6375, 6
      %v6378 = vor.u32 %v6374, %v6377
      %v6379 = vsel %vm2364, %v6370, %v6378
      %v6381 = vshrl.u32 %v6351, 16
      %v6383 = vrot.slane %v6381, 5
      %v6384 = vshll.u32 %v6351, 16
      %v6386 = vrot.slane %v6384, 6
      %v6387 = vor.u32 %v6383, %v6386
      %v6388 = vsel %vm2364, %v6378, %v6387
      %v6390 = vshrl.u32 %v6352, 16
      %v6392 = vrot.slane %v6390, 5
      %v6393 = vshll.u32 %v6352, 16
      %v6395 = vrot.slane %v6393, 6
      %v6396 = vor.u32 %v6392, %v6395
      %v6397 = vsel %vm2364, %v6387, %v6396
      %v6399 = vshrl.u32 %v6353, 16
      %v6401 = vrot.slane %v6399, 5
      %v6402 = vshll.u32 %v6353, 16
      %v6404 = vrot.slane %v6402, 6
      %v6405 = vor.u32 %v6401, %v6404
      %v6406 = vsel %vm2364, %v6396, %v6405
      %v6408 = vshrl.u32 %v6354, 16
      %v6410 = vrot.slane %v6408, 5
      %v6411 = vshll.u32 %v6354, 16
      %v6413 = vrot.slane %v6411, 6
      %v6414 = vor.u32 %v6410, %v6413
      %v6415 = vsel %vm2364, %v6405, %v6414
      %v6417 = vshrl.u32 %v6355, 16
      %v6419 = vrot.slane %v6417, 5
      %v6420 = vshll.u32 %v6355, 16
      %v6422 = vrot.slane %v6420, 6
      %v6423 = vor.u32 %v6419, %v6422
      %v6424 = vsel %vm2364, %v6414, %v6423
      %v6426 = vshrl.u32 %v6356, 16
      %v6428 = vrot.slane %v6426, 5
      %v6429 = vshll.u32 %v6356, 16
      %v6431 = vrot.slane %v6429, 6
      %v6432 = vor.u32 %v6428, %v6431
      %v6433 = vsel %vm2364, %v6423, %v6432
      %v6435 = vshrl.u32 %v6357, 16
      %v6437 = vrot.slane %v6435, 5
      %v6438 = vshll.u32 %v6357, 16
      %v6440 = vrot.slane %v6438, 6
      %v6441 = vor.u32 %v6437, %v6440
      %v6442 = vsel %vm2364, %v6432, %v6441
      %v6444 = vshrl.u32 %v6358, 16
      %v6446 = vrot.slane %v6444, 5
      %v6447 = vshll.u32 %v6358, 16
      %v6449 = vrot.slane %v6447, 6
      %v6450 = vor.u32 %v6446, %v6449
      %v6451 = vsel %vm2364, %v6441, %v6450
      %v6453 = vshrl.u32 %v6359, 16
      %v6455 = vrot.slane %v6453, 5
      %v6456 = vshll.u32 %v6359, 16
      %v6458 = vrot.slane %v6456, 6
      %v6459 = vor.u32 %v6455, %v6458
      %v6460 = vsel %vm2364, %v6450, %v6459
      %v6462 = vshrl.u32 %v6360, 16
      %v6464 = vrot.slane %v6462, 5
      %v6465 = vshll.u32 %v6360, 16
      %v6467 = vrot.slane %v6465, 6
      %v6468 = vor.u32 %v6464, %v6467
      %v6469 = vsel %vm2364, %v6459, %v6468
      %v6471 = vshrl.u32 %v6361, 16
      %v6473 = vrot.slane %v6471, 5
      %v6474 = vshll.u32 %v6361, 16
      %v6476 = vrot.slane %v6474, 6
      %v6477 = vor.u32 %v6473, %v6476
      %v6478 = vsel %vm2364, %v6468, %v6477
      %v6480 = vshrl.u32 %v6362, 16
      %v6482 = vrot.slane %v6480, 5
      %v6483 = vshll.u32 %v6362, 16
      %v6485 = vrot.slane %v6483, 6
      %v6486 = vor.u32 %v6482, %v6485
      %v6487 = vsel %vm2364, %v6477, %v6486
      %6488 = vrot.lane.b32.xlu0 %v6370, 96
      %v6489 = vpop.permute.xlu0 %6488
      %6490 = vrot.lane.b32.xlu0 %v6379, 96
      %v6491 = vpop.permute.xlu0 %6490
      %6492 = vrot.lane.b32.xlu0 %v6388, 96
      %v6493 = vpop.permute.xlu0 %6492
      %6494 = vrot.lane.b32.xlu0 %v6397, 96
      %v6495 = vpop.permute.xlu0 %6494
      %6496 = vrot.lane.b32.xlu0 %v6406, 96
      %v6497 = vpop.permute.xlu0 %6496
      %6498 = vrot.lane.b32.xlu0 %v6415, 96
      %v6499 = vpop.permute.xlu0 %6498
      %6500 = vrot.lane.b32.xlu0 %v6424, 96
      %v6501 = vpop.permute.xlu0 %6500
      %6502 = vrot.lane.b32.xlu0 %v6433, 96
      %v6503 = vpop.permute.xlu0 %6502
      %6504 = vrot.lane.b32.xlu0 %v6442, 96
      %v6505 = vpop.permute.xlu0 %6504
      %6506 = vrot.lane.b32.xlu0 %v6451, 96
      %v6507 = vpop.permute.xlu0 %6506
      %6508 = vrot.lane.b32.xlu0 %v6460, 96
      %v6509 = vpop.permute.xlu0 %6508
      %6510 = vrot.lane.b32.xlu0 %v6469, 96
      %v6511 = vpop.permute.xlu0 %6510
      %6512 = vrot.lane.b32.xlu0 %v6478, 96
      %v6513 = vpop.permute.xlu0 %6512
      %6514 = vrot.lane.b32.xlu0 %v6487, 96
      %v6515 = vpop.permute.xlu0 %6514
      %6516 = vrot.lane.b32.xlu0 %v6486, 96
      %v6517 = vpop.permute.xlu0 %6516
      %v6519 = vunpack.c.l.b16 %v6059
      %v6520 = vpack.c.b16 %v6519, %v6519
      %v6521 = vrot.slane %v6349, 6
      %v6522 = vrot.slane %v6350, 6
      %v6523 = vsel %vm2523, %v6521, %v6522
      %v6524 = vrot.slane %v6351, 6
      %v6525 = vsel %vm2523, %v6522, %v6524
      %v6526 = vrot.slane %v6352, 6
      %v6527 = vsel %vm2523, %v6524, %v6526
      %v6528 = vrot.slane %v6353, 6
      %v6529 = vsel %vm2523, %v6526, %v6528
      %v6530 = vrot.slane %v6354, 6
      %v6531 = vsel %vm2523, %v6528, %v6530
      %v6532 = vrot.slane %v6355, 6
      %v6533 = vsel %vm2523, %v6530, %v6532
      %v6534 = vrot.slane %v6356, 6
      %v6535 = vsel %vm2523, %v6532, %v6534
      %v6536 = vrot.slane %v6357, 6
      %v6537 = vsel %vm2523, %v6534, %v6536
      %v6538 = vrot.slane %v6358, 6
      %v6539 = vsel %vm2523, %v6536, %v6538
      %v6540 = vrot.slane %v6359, 6
      %v6541 = vsel %vm2523, %v6538, %v6540
      %v6542 = vrot.slane %v6360, 6
      %v6543 = vsel %vm2523, %v6540, %v6542
      %v6544 = vrot.slane %v6361, 6
      %v6545 = vsel %vm2523, %v6542, %v6544
      %v6546 = vrot.slane %v6362, 6
      %v6547 = vsel %vm2523, %v6544, %v6546
      %v6548 = vrot.slane %v6520, 6
      %v6549 = vsel %vm2523, %v6546, %v6548
      %v6551 = vunpack.c.l.b16 %v6060
      %v6552 = vpack.c.b16 %v6093, %v6551
      %v6554 = vshrl.u32 %v6552, 16
      %v6556 = vrot.slane %v6554, 6
      %v6557 = vshll.u32 %v6552, 16
      %v6559 = vrot.slane %v6557, 7
      %v6560 = vor.u32 %v6556, %v6559
      %v6561 = vrot.slane %v6372, 6
      %v6562 = vrot.slane %v6375, 7
      %v6563 = vor.u32 %v6561, %v6562
      %v6564 = vsel %vm2556, %v6560, %v6563
      %v6565 = vrot.slane %v6381, 6
      %v6566 = vrot.slane %v6384, 7
      %v6567 = vor.u32 %v6565, %v6566
      %v6568 = vsel %vm2556, %v6563, %v6567
      %v6569 = vrot.slane %v6390, 6
      %v6570 = vrot.slane %v6393, 7
      %v6571 = vor.u32 %v6569, %v6570
      %v6572 = vsel %vm2556, %v6567, %v6571
      %v6573 = vrot.slane %v6399, 6
      %v6574 = vrot.slane %v6402, 7
      %v6575 = vor.u32 %v6573, %v6574
      %v6576 = vsel %vm2556, %v6571, %v6575
      %v6577 = vrot.slane %v6408, 6
      %v6578 = vrot.slane %v6411, 7
      %v6579 = vor.u32 %v6577, %v6578
      %v6580 = vsel %vm2556, %v6575, %v6579
      %v6581 = vrot.slane %v6417, 6
      %v6582 = vrot.slane %v6420, 7
      %v6583 = vor.u32 %v6581, %v6582
      %v6584 = vsel %vm2556, %v6579, %v6583
      %v6585 = vrot.slane %v6426, 6
      %v6586 = vrot.slane %v6429, 7
      %v6587 = vor.u32 %v6585, %v6586
      %v6588 = vsel %vm2556, %v6583, %v6587
      %v6589 = vrot.slane %v6435, 6
      %v6590 = vrot.slane %v6438, 7
      %v6591 = vor.u32 %v6589, %v6590
      %v6592 = vsel %vm2556, %v6587, %v6591
      %v6593 = vrot.slane %v6444, 6
      %v6594 = vrot.slane %v6447, 7
      %v6595 = vor.u32 %v6593, %v6594
      %v6596 = vsel %vm2556, %v6591, %v6595
      %v6597 = vrot.slane %v6453, 6
      %v6598 = vrot.slane %v6456, 7
      %v6599 = vor.u32 %v6597, %v6598
      %v6600 = vsel %vm2556, %v6595, %v6599
      %v6601 = vrot.slane %v6462, 6
      %v6602 = vrot.slane %v6465, 7
      %v6603 = vor.u32 %v6601, %v6602
      %v6604 = vsel %vm2556, %v6599, %v6603
      %v6605 = vrot.slane %v6471, 6
      %v6606 = vrot.slane %v6474, 7
      %v6607 = vor.u32 %v6605, %v6606
      %v6608 = vsel %vm2556, %v6603, %v6607
      %v6609 = vrot.slane %v6480, 6
      %v6610 = vrot.slane %v6483, 7
      %v6611 = vor.u32 %v6609, %v6610
      %v6612 = vsel %vm2556, %v6607, %v6611
      %v6614 = vshrl.u32 %v6520, 16
      %v6616 = vrot.slane %v6614, 6
      %v6617 = vshll.u32 %v6520, 16
      %v6619 = vrot.slane %v6617, 7
      %v6620 = vor.u32 %v6616, %v6619
      %v6621 = vsel %vm2556, %v6611, %v6620
      %6622 = vrot.lane.b32.xlu0 %v6560, 32
      %v6623 = vpop.permute.xlu0 %6622
      %6624 = vrot.lane.b32.xlu0 %v6564, 32
      %v6625 = vpop.permute.xlu0 %6624
      %6626 = vrot.lane.b32.xlu0 %v6568, 32
      %v6627 = vpop.permute.xlu0 %6626
      %6628 = vrot.lane.b32.xlu0 %v6572, 32
      %v6629 = vpop.permute.xlu0 %6628
      %6630 = vrot.lane.b32.xlu0 %v6576, 32
      %v6631 = vpop.permute.xlu0 %6630
      %6632 = vrot.lane.b32.xlu0 %v6580, 32
      %v6633 = vpop.permute.xlu0 %6632
      %6634 = vrot.lane.b32.xlu0 %v6584, 32
      %v6635 = vpop.permute.xlu0 %6634
      %6636 = vrot.lane.b32.xlu0 %v6588, 32
      %v6637 = vpop.permute.xlu0 %6636
      %6638 = vrot.lane.b32.xlu0 %v6592, 32
      %v6639 = vpop.permute.xlu0 %6638
      %6640 = vrot.lane.b32.xlu0 %v6596, 32
      %v6641 = vpop.permute.xlu0 %6640
      %6642 = vrot.lane.b32.xlu0 %v6600, 32
      %v6643 = vpop.permute.xlu0 %6642
      %6644 = vrot.lane.b32.xlu0 %v6604, 32
      %v6645 = vpop.permute.xlu0 %6644
      %6646 = vrot.lane.b32.xlu0 %v6608, 32
      %v6647 = vpop.permute.xlu0 %6646
      %6648 = vrot.lane.b32.xlu0 %v6612, 32
      %v6649 = vpop.permute.xlu0 %6648
      %6650 = vrot.lane.b32.xlu0 %v6621, 32
      %v6651 = vpop.permute.xlu0 %6650
      %v6653 = vunpack.c.l.b16 %v6061
      %v6654 = vpack.c.b16 %v6653, %v6653
      %v6655 = vrot.slane %v6552, 7
      %v6656 = vrot.slane %v6350, 7
      %v6657 = vsel %vm2659, %v6655, %v6656
      %v6658 = vrot.slane %v6351, 7
      %v6659 = vsel %vm2659, %v6656, %v6658
      %v6660 = vrot.slane %v6352, 7
      %v6661 = vsel %vm2659, %v6658, %v6660
      %v6662 = vrot.slane %v6353, 7
      %v6663 = vsel %vm2659, %v6660, %v6662
      %v6664 = vrot.slane %v6354, 7
      %v6665 = vsel %vm2659, %v6662, %v6664
      %v6666 = vrot.slane %v6355, 7
      %v6667 = vsel %vm2659, %v6664, %v6666
      %v6668 = vrot.slane %v6356, 7
      %v6669 = vsel %vm2659, %v6666, %v6668
      %v6670 = vrot.slane %v6357, 7
      %v6671 = vsel %vm2659, %v6668, %v6670
      %v6672 = vrot.slane %v6358, 7
      %v6673 = vsel %vm2659, %v6670, %v6672
      %v6674 = vrot.slane %v6359, 7
      %v6675 = vsel %vm2659, %v6672, %v6674
      %v6676 = vrot.slane %v6360, 7
      %v6677 = vsel %vm2659, %v6674, %v6676
      %v6678 = vrot.slane %v6361, 7
      %v6679 = vsel %vm2659, %v6676, %v6678
      %v6680 = vrot.slane %v6362, 7
      %v6681 = vsel %vm2659, %v6678, %v6680
      %v6682 = vrot.slane %v6654, 7
      %v6683 = vsel %vm2659, %v6680, %v6682
      %6684 = vrot.lane.b32.xlu0 %v6655, 64
      %v6685 = vpop.permute.xlu0 %6684
      %6686 = vrot.lane.b32.xlu0 %v6657, 64
      %v6687 = vpop.permute.xlu0 %6686
      %6688 = vrot.lane.b32.xlu0 %v6659, 64
      %v6689 = vpop.permute.xlu0 %6688
      %6690 = vrot.lane.b32.xlu0 %v6661, 64
      %v6691 = vpop.permute.xlu0 %6690
      %6692 = vrot.lane.b32.xlu0 %v6663, 64
      %v6693 = vpop.permute.xlu0 %6692
      %6694 = vrot.lane.b32.xlu0 %v6665, 64
      %v6695 = vpop.permute.xlu0 %6694
      %6696 = vrot.lane.b32.xlu0 %v6667, 64
      %v6697 = vpop.permute.xlu0 %6696
      %6698 = vrot.lane.b32.xlu0 %v6669, 64
      %v6699 = vpop.permute.xlu0 %6698
      %6700 = vrot.lane.b32.xlu0 %v6671, 64
      %v6701 = vpop.permute.xlu0 %6700
      %6702 = vrot.lane.b32.xlu0 %v6673, 64
      %v6703 = vpop.permute.xlu0 %6702
      %6704 = vrot.lane.b32.xlu0 %v6675, 64
      %v6705 = vpop.permute.xlu0 %6704
      %6706 = vrot.lane.b32.xlu0 %v6677, 64
      %v6707 = vpop.permute.xlu0 %6706
      %6708 = vrot.lane.b32.xlu0 %v6679, 64
      %v6709 = vpop.permute.xlu0 %6708
      %6710 = vrot.lane.b32.xlu0 %v6681, 64
      %v6711 = vpop.permute.xlu0 %6710
      %6712 = vrot.lane.b32.xlu0 %v6683, 64
      %v6713 = vpop.permute.xlu0 %6712
      %v6716 = vsel %vm2719, %v6120, %v6258
      %v6718 = vsel %vm2719, %v6121, %v6260
      %v6720 = vsel %vm2719, %v6122, %v6262
      %v6722 = vsel %vm2719, %v6123, %v6264
      %v6724 = vsel %vm2719, %v6124, %v6266
      %v6726 = vsel %vm2719, %v6125, %v6268
      %v6728 = vsel %vm2719, %v6126, %v6270
      %v6730 = vsel %vm2719, %v6127, %v6272
      %v6732 = vsel %vm2719, %v6128, %v6274
      %v6734 = vsel %vm2719, %v6129, %v6276
      %v6736 = vsel %vm2719, %v6130, %v6278
      %v6738 = vsel %vm2719, %v6131, %v6280
      %v6740 = vsel %vm2719, %v6132, %v6282
      %v6742 = vsel %vm2719, %v6133, %v6284
      %v6744 = vsel %vm2719, %v6134, %v6286
      %v6746 = vsel %vm896, %v6716, %v6320
      %v6748 = vsel %vm896, %v6718, %v6322
      %v6750 = vsel %vm896, %v6720, %v6324
      %v6752 = vsel %vm896, %v6722, %v6326
      %v6754 = vsel %vm896, %v6724, %v6328
      %v6756 = vsel %vm896, %v6726, %v6330
      %v6758 = vsel %vm896, %v6728, %v6332
      %v6760 = vsel %vm896, %v6730, %v6334
      %v6762 = vsel %vm896, %v6732, %v6336
      %v6764 = vsel %vm896, %v6734, %v6338
      %v6766 = vsel %vm896, %v6736, %v6340
      %v6768 = vsel %vm896, %v6738, %v6342
      %v6770 = vsel %vm896, %v6740, %v6344
      %v6772 = vsel %vm896, %v6742, %v6346
      %v6774 = vsel %vm896, %v6744, %v6348
      %v6776 = vsel %vm2781, %v6746, %v6489
      %v6778 = vsel %vm2781, %v6748, %v6491
      %v6780 = vsel %vm2781, %v6750, %v6493
      %v6782 = vsel %vm2781, %v6752, %v6495
      %v6784 = vsel %vm2781, %v6754, %v6497
      %v6786 = vsel %vm2781, %v6756, %v6499
      %v6788 = vsel %vm2781, %v6758, %v6501
      %v6790 = vsel %vm2781, %v6760, %v6503
      %v6792 = vsel %vm2781, %v6762, %v6505
      %v6794 = vsel %vm2781, %v6764, %v6507
      %v6796 = vsel %vm2781, %v6766, %v6509
      %v6798 = vsel %vm2781, %v6768, %v6511
      %v6800 = vsel %vm2781, %v6770, %v6513
      %v6802 = vsel %vm2781, %v6772, %v6515
      %v6804 = vsel %vm2781, %v6774, %v6517
      %v6807 = vsel %vm2719, %v6521, %v6623
      %v6810 = vsel %vm2719, %v6523, %v6625
      %v6813 = vsel %vm2719, %v6525, %v6627
      %v6816 = vsel %vm2719, %v6527, %v6629
      %v6819 = vsel %vm2719, %v6529, %v6631
      %v6822 = vsel %vm2719, %v6531, %v6633
      %v6825 = vsel %vm2719, %v6533, %v6635
      %v6828 = vsel %vm2719, %v6535, %v6637
      %v6831 = vsel %vm2719, %v6537, %v6639
      %v6834 = vsel %vm2719, %v6539, %v6641
      %v6837 = vsel %vm2719, %v6541, %v6643
      %v6840 = vsel %vm2719, %v6543, %v6645
      %v6843 = vsel %vm2719, %v6545, %v6647
      %v6846 = vsel %vm2719, %v6547, %v6649
      %v6849 = vsel %vm2719, %v6549, %v6651
      %v6851 = vsel %vm896, %v6807, %v6685
      %v6853 = vsel %vm896, %v6810, %v6687
      %v6855 = vsel %vm896, %v6813, %v6689
      %v6857 = vsel %vm896, %v6816, %v6691
      %v6859 = vsel %vm896, %v6819, %v6693
      %v6861 = vsel %vm896, %v6822, %v6695
      %v6863 = vsel %vm896, %v6825, %v6697
      %v6865 = vsel %vm896, %v6828, %v6699
      %v6867 = vsel %vm896, %v6831, %v6701
      %v6869 = vsel %vm896, %v6834, %v6703
      %v6871 = vsel %vm896, %v6837, %v6705
      %v6873 = vsel %vm896, %v6840, %v6707
      %v6875 = vsel %vm896, %v6843, %v6709
      %v6877 = vsel %vm896, %v6846, %v6711
      %v6879 = vsel %vm896, %v6849, %v6713
      %v6880 = vld [vmem:[%s14] sm:$0xf]
      %v6881 = vld [vmem:[%s14 + $0x4] sm:$0xf]
      %v6882 = vld [vmem:[%s14 + $0x8] sm:$0xf]
      %v6883 = vld [vmem:[%s14 + $0xc] sm:$0xf]
      %v6884 = vld [vmem:[%s14 + $0x10] sm:$0xf]
      %v6885 = vld [vmem:[%s14 + $0x14] sm:$0xf]
      %v6886 = vld [vmem:[%s14 + $0x18] sm:$0xf]
      %v6887 = vld [vmem:[%s14 + $0x1c] sm:$0xf]
      %v6888 = vld [vmem:[%s14 + $0x20] sm:$0xf]
      %v6889 = vld [vmem:[%s14 + $0x24] sm:$0xf]
      %v6890 = vld [vmem:[%s14 + $0x28] sm:$0xf]
      %v6891 = vld [vmem:[%s14 + $0x2c] sm:$0xf]
      %v6892 = vld [vmem:[%s14 + $0x30] sm:$0xf]
      %v6893 = vld [vmem:[%s14 + $0x34] sm:$0xf]
      %v6894 = vld [vmem:[%s14 + $0x38] sm:$0xf]
      %v6895 = vld [vmem:[%s14 + $0x3c] sm:$0xf]
      %v6896 = vld [vmem:[%s14 + $0x40] sm:$0xf]
      %v6897 = vld [vmem:[%s14 + $0x44] sm:$0xf]
      %v6898 = vld [vmem:[%s14 + $0x48] sm:$0xf]
      %v6899 = vld [vmem:[%s14 + $0x4c] sm:$0xf]
      %v6900 = vld [vmem:[%s14 + $0x50] sm:$0xf]
      %v6901 = vld [vmem:[%s14 + $0x54] sm:$0xf]
      %v6902 = vld [vmem:[%s14 + $0x58] sm:$0xf]
      %v6903 = vld [vmem:[%s14 + $0x5c] sm:$0xf]
      %v6904 = vld [vmem:[%s14 + $0x60] sm:$0xf]
      %v6905 = vld [vmem:[%s14 + $0x64] sm:$0xf]
      %v6906 = vld [vmem:[%s14 + $0x68] sm:$0xf]
      %v6907 = vld [vmem:[%s14 + $0x6c] sm:$0xf]
      %v6908 = vld [vmem:[%s15] sm:$0x1]
      %v6910 = vlaneseq
      %v6911 = vshrl.u32 %v6910, 7
      %v6912 = vsub.s32 0, %v6911
      %v6913 = vrot.slane %v6908, %v6912
      %v6915 = vshrl.u32 %v6776, 16
      %v6917 = vrot.slane %v6915, 2
      %v6918 = vshll.u32 %v6776, 16
      %v6920 = vrot.slane %v6918, 3
      %v6921 = vor.u32 %v6917, %v6920
      %v6922 = vshrl.u32 %v6778, 16
      %v6924 = vrot.slane %v6922, 2
      %v6925 = vshll.u32 %v6778, 16
      %v6927 = vrot.slane %v6925, 3
      %v6928 = vor.u32 %v6924, %v6927
      %v6929 = vsel %vm2922, %v6921, %v6928
      %v6930 = vshrl.u32 %v6851, 16
      %v6932 = vrot.slane %v6930, 2
      %v6933 = vshll.u32 %v6851, 16
      %v6935 = vrot.slane %v6933, 3
      %v6936 = vor.u32 %v6932, %v6935
      %v6937 = vshrl.u32 %v6853, 16
      %v6939 = vrot.slane %v6937, 2
      %v6940 = vshll.u32 %v6853, 16
      %v6942 = vrot.slane %v6940, 3
      %v6943 = vor.u32 %v6939, %v6942
      %v6944 = vsel %vm2922, %v6936, %v6943
      %v6945 = vshrl.u32 %v6780, 16
      %v6947 = vrot.slane %v6945, 2
      %v6948 = vshll.u32 %v6780, 16
      %v6950 = vrot.slane %v6948, 3
      %v6951 = vor.u32 %v6947, %v6950
      %v6952 = vsel %vm2922, %v6928, %v6951
      %v6953 = vshrl.u32 %v6855, 16
      %v6955 = vrot.slane %v6953, 2
      %v6956 = vshll.u32 %v6855, 16
      %v6958 = vrot.slane %v6956, 3
      %v6959 = vor.u32 %v6955, %v6958
      %v6960 = vsel %vm2922, %v6943, %v6959
      %v6961 = vshrl.u32 %v6782, 16
      %v6963 = vrot.slane %v6961, 2
      %v6964 = vshll.u32 %v6782, 16
      %v6966 = vrot.slane %v6964, 3
      %v6967 = vor.u32 %v6963, %v6966
      %v6968 = vsel %vm2922, %v6951, %v6967
      %v6969 = vshrl.u32 %v6857, 16
      %v6971 = vrot.slane %v6969, 2
      %v6972 = vshll.u32 %v6857, 16
      %v6974 = vrot.slane %v6972, 3
      %v6975 = vor.u32 %v6971, %v6974
      %v6976 = vsel %vm2922, %v6959, %v6975
      %v6977 = vshrl.u32 %v6784, 16
      %v6979 = vrot.slane %v6977, 2
      %v6980 = vshll.u32 %v6784, 16
      %v6982 = vrot.slane %v6980, 3
      %v6983 = vor.u32 %v6979, %v6982
      %v6984 = vsel %vm2922, %v6967, %v6983
      %v6985 = vshrl.u32 %v6859, 16
      %v6987 = vrot.slane %v6985, 2
      %v6988 = vshll.u32 %v6859, 16
      %v6990 = vrot.slane %v6988, 3
      %v6991 = vor.u32 %v6987, %v6990
      %v6992 = vsel %vm2922, %v6975, %v6991
      %v6993 = vshrl.u32 %v6786, 16
      %v6995 = vrot.slane %v6993, 2
      %v6996 = vshll.u32 %v6786, 16
      %v6998 = vrot.slane %v6996, 3
      %v6999 = vor.u32 %v6995, %v6998
      %v7000 = vsel %vm2922, %v6983, %v6999
      %v7001 = vshrl.u32 %v6861, 16
      %v7003 = vrot.slane %v7001, 2
      %v7004 = vshll.u32 %v6861, 16
      %v7006 = vrot.slane %v7004, 3
      %v7007 = vor.u32 %v7003, %v7006
      %v7008 = vsel %vm2922, %v6991, %v7007
      %v7009 = vshrl.u32 %v6788, 16
      %v7011 = vrot.slane %v7009, 2
      %v7012 = vshll.u32 %v6788, 16
      %v7014 = vrot.slane %v7012, 3
      %v7015 = vor.u32 %v7011, %v7014
      %v7016 = vsel %vm2922, %v6999, %v7015
      %v7017 = vshrl.u32 %v6863, 16
      %v7019 = vrot.slane %v7017, 2
      %v7020 = vshll.u32 %v6863, 16
      %v7022 = vrot.slane %v7020, 3
      %v7023 = vor.u32 %v7019, %v7022
      %v7024 = vsel %vm2922, %v7007, %v7023
      %v7025 = vshrl.u32 %v6790, 16
      %v7027 = vrot.slane %v7025, 2
      %v7028 = vshll.u32 %v6790, 16
      %v7030 = vrot.slane %v7028, 3
      %v7031 = vor.u32 %v7027, %v7030
      %v7032 = vsel %vm2922, %v7015, %v7031
      %v7033 = vshrl.u32 %v6865, 16
      %v7035 = vrot.slane %v7033, 2
      %v7036 = vshll.u32 %v6865, 16
      %v7038 = vrot.slane %v7036, 3
      %v7039 = vor.u32 %v7035, %v7038
      %v7040 = vsel %vm2922, %v7023, %v7039
      %v7041 = vshrl.u32 %v6792, 16
      %v7043 = vrot.slane %v7041, 2
      %v7044 = vshll.u32 %v6792, 16
      %v7046 = vrot.slane %v7044, 3
      %v7047 = vor.u32 %v7043, %v7046
      %v7048 = vsel %vm2922, %v7031, %v7047
      %v7049 = vshrl.u32 %v6867, 16
      %v7051 = vrot.slane %v7049, 2
      %v7052 = vshll.u32 %v6867, 16
      %v7054 = vrot.slane %v7052, 3
      %v7055 = vor.u32 %v7051, %v7054
      %v7056 = vsel %vm2922, %v7039, %v7055
      %v7057 = vshrl.u32 %v6794, 16
      %v7059 = vrot.slane %v7057, 2
      %v7060 = vshll.u32 %v6794, 16
      %v7062 = vrot.slane %v7060, 3
      %v7063 = vor.u32 %v7059, %v7062
      %v7064 = vsel %vm2922, %v7047, %v7063
      %v7065 = vshrl.u32 %v6869, 16
      %v7067 = vrot.slane %v7065, 2
      %v7068 = vshll.u32 %v6869, 16
      %v7070 = vrot.slane %v7068, 3
      %v7071 = vor.u32 %v7067, %v7070
      %v7072 = vsel %vm2922, %v7055, %v7071
      %v7073 = vshrl.u32 %v6796, 16
      %v7075 = vrot.slane %v7073, 2
      %v7076 = vshll.u32 %v6796, 16
      %v7078 = vrot.slane %v7076, 3
      %v7079 = vor.u32 %v7075, %v7078
      %v7080 = vsel %vm2922, %v7063, %v7079
      %v7081 = vshrl.u32 %v6871, 16
      %v7083 = vrot.slane %v7081, 2
      %v7084 = vshll.u32 %v6871, 16
      %v7086 = vrot.slane %v7084, 3
      %v7087 = vor.u32 %v7083, %v7086
      %v7088 = vsel %vm2922, %v7071, %v7087
      %v7089 = vshrl.u32 %v6798, 16
      %v7091 = vrot.slane %v7089, 2
      %v7092 = vshll.u32 %v6798, 16
      %v7094 = vrot.slane %v7092, 3
      %v7095 = vor.u32 %v7091, %v7094
      %v7096 = vsel %vm2922, %v7079, %v7095
      %v7097 = vshrl.u32 %v6873, 16
      %v7099 = vrot.slane %v7097, 2
      %v7100 = vshll.u32 %v6873, 16
      %v7102 = vrot.slane %v7100, 3
      %v7103 = vor.u32 %v7099, %v7102
      %v7104 = vsel %vm2922, %v7087, %v7103
      %v7105 = vshrl.u32 %v6800, 16
      %v7107 = vrot.slane %v7105, 2
      %v7108 = vshll.u32 %v6800, 16
      %v7110 = vrot.slane %v7108, 3
      %v7111 = vor.u32 %v7107, %v7110
      %v7112 = vsel %vm2922, %v7095, %v7111
      %v7113 = vshrl.u32 %v6875, 16
      %v7115 = vrot.slane %v7113, 2
      %v7116 = vshll.u32 %v6875, 16
      %v7118 = vrot.slane %v7116, 3
      %v7119 = vor.u32 %v7115, %v7118
      %v7120 = vsel %vm2922, %v7103, %v7119
      %v7121 = vshrl.u32 %v6802, 16
      %v7123 = vrot.slane %v7121, 2
      %v7124 = vshll.u32 %v6802, 16
      %v7126 = vrot.slane %v7124, 3
      %v7127 = vor.u32 %v7123, %v7126
      %v7128 = vsel %vm2922, %v7111, %v7127
      %v7129 = vshrl.u32 %v6877, 16
      %v7131 = vrot.slane %v7129, 2
      %v7132 = vshll.u32 %v6877, 16
      %v7134 = vrot.slane %v7132, 3
      %v7135 = vor.u32 %v7131, %v7134
      %v7136 = vsel %vm2922, %v7119, %v7135
      %v7137 = vshrl.u32 %v6804, 16
      %v7139 = vrot.slane %v7137, 2
      %v7140 = vshll.u32 %v6804, 16
      %v7142 = vrot.slane %v7140, 3
      %v7143 = vor.u32 %v7139, %v7142
      %v7144 = vsel %vm2922, %v7127, %v7143
      %v7145 = vshrl.u32 %v6879, 16
      %v7147 = vrot.slane %v7145, 2
      %v7148 = vshll.u32 %v6879, 16
      %v7150 = vrot.slane %v7148, 3
      %v7151 = vor.u32 %v7147, %v7150
      %v7152 = vsel %vm2922, %v7135, %v7151
      %v7195 = vunpack.c.l.b16 %v6880
      %v7196 = vunpack.c.l.b16 %v6881
      %v7197 = vunpack.c.l.b16 %v6882
      %v7198 = vunpack.c.l.b16 %v6883
      %v7199 = vunpack.c.l.b16 %v6884
      %v7200 = vunpack.c.l.b16 %v6885
      %v7201 = vunpack.c.l.b16 %v6886
      %v7202 = vunpack.c.l.b16 %v6887
      %v7203 = vunpack.c.l.b16 %v6888
      %v7204 = vunpack.c.l.b16 %v6889
      %v7205 = vunpack.c.l.b16 %v6890
      %v7206 = vunpack.c.l.b16 %v6891
      %v7207 = vunpack.c.l.b16 %v6892
      %v7208 = vunpack.c.l.b16 %v6893
      %v7209 = vunpack.c.l.b16 %v6894
      %v7210 = vunpack.c.l.b16 %v6895
      %v7211 = vunpack.c.l.b16 %v6896
      %v7212 = vunpack.c.l.b16 %v6897
      %v7213 = vunpack.c.l.b16 %v6898
      %v7214 = vunpack.c.l.b16 %v6899
      %v7215 = vunpack.c.l.b16 %v6900
      %v7216 = vunpack.c.l.b16 %v6901
      %v7217 = vunpack.c.l.b16 %v6902
      %v7218 = vunpack.c.l.b16 %v6903
      %v7219 = vunpack.c.l.b16 %v6904
      %v7220 = vunpack.c.l.b16 %v6905
      %v7221 = vunpack.c.l.b16 %v6906
      %v7222 = vunpack.c.l.b16 %v6907
      %v7223 = vpack.c.b16 %v7196, %v7195
      %v7224 = vpack.c.b16 %v7198, %v7197
      %v7225 = vpack.c.b16 %v7200, %v7199
      %v7226 = vpack.c.b16 %v7202, %v7201
      %v7227 = vpack.c.b16 %v7204, %v7203
      %v7228 = vpack.c.b16 %v7206, %v7205
      %v7229 = vpack.c.b16 %v7208, %v7207
      %v7230 = vpack.c.b16 %v7210, %v7209
      %v7231 = vpack.c.b16 %v7212, %v7211
      %v7232 = vpack.c.b16 %v7214, %v7213
      %v7233 = vpack.c.b16 %v7216, %v7215
      %v7234 = vpack.c.b16 %v7218, %v7217
      %v7235 = vpack.c.b16 %v7220, %v7219
      %v7236 = vpack.c.b16 %v7222, %v7221
      %v7252 = vsel %vm2781, %v6944, 0
      %v7255 = vsel %vm2781, %v6960, 0
      %v7258 = vsel %vm2781, %v6976, 0
      %v7261 = vsel %vm2781, %v6992, 0
      %v7264 = vsel %vm2781, %v7008, 0
      %v7267 = vsel %vm2781, %v7024, 0
      %v7270 = vsel %vm2781, %v7040, 0
      %v7273 = vsel %vm2781, %v7056, 0
      %v7276 = vsel %vm2781, %v7072, 0
      %v7279 = vsel %vm2781, %v7088, 0
      %v7282 = vsel %vm2781, %v7104, 0
      %v7285 = vsel %vm2781, %v7120, 0
      %v7288 = vsel %vm2781, %v7136, 0
      %v7291 = vsel %vm2781, %v7152, 0
      %7293 = vmatprep.subr.bf16.mxu0 0
      %7294 = vmatpush1.bf16.msra.mxu0 %v7230
      %7295 = vmatprep.subr.bf16.mxu0 0
      %7296 = vmatpush1.bf16.msra.mxu0 %v7229
      %7297 = vmatprep.subr.bf16.mxu0 0
      %7298 = vmatpush1.bf16.msra.mxu0 %v7228
      %7299 = vmatprep.subr.bf16.mxu0 0
      %7300 = vmatpush1.bf16.msra.mxu0 %v7227
      %7301 = vmatprep.subr.bf16.mxu0 0
      %7302 = vmatpush1.bf16.msra.mxu0 %v7226
      %7303 = vmatprep.subr.bf16.mxu0 0
      %7304 = vmatpush1.bf16.msra.mxu0 %v7225
      %7305 = vmatprep.subr.bf16.mxu0 0
      %7306 = vmatpush1.bf16.msra.mxu0 %v7224
      %7307 = vmatprep.subr.bf16.mxu0 0
      %7308 = vmatpush1.bf16.msra.mxu0 %v7223
      %7309 = vmatprep.subr.bf16.mxu0 0
      %7310 = vmatpush2.bf16.msra.mxu0 0
      %7311 = vmatprep.subr.bf16.mxu0 0
      %7312 = vmatpush2.bf16.msra.mxu0 0
      %7313 = vmatprep.subr.bf16.mxu0 0
      %7314 = vmatpush2.bf16.msra.mxu0 %v7236
      %7315 = vmatprep.subr.bf16.mxu0 0
      %7316 = vmatpush2.bf16.msra.mxu0 %v7235
      %7317 = vmatprep.subr.bf16.mxu0 0
      %7318 = vmatpush2.bf16.msra.mxu0 %v7234
      %7319 = vmatprep.subr.bf16.mxu0 0
      %7320 = vmatpush2.bf16.msra.mxu0 %v7233
      %7321 = vmatprep.subr.bf16.mxu0 0
      %7322 = vmatpush2.bf16.msra.mxu0 %v7232
      %7323 = vmatprep.subr.bf16.mxu0 0
      %7324 = vmatpush2.bf16.msra.mxu0 %v7231
      %7325 = vmatprep.mubr.bf16.mxu0 %v7252
      %7326 = vmatmul.mubr.bf16.gmra.mxu0 %v6929
      %v7327 = vpop.f32.mrf.mxu0
      %v7328 = vadd.f32 %v6913, %v7327
      %v7329 = vpop.f32.mrf.mxu0
      %v7330 = vpop.f32.mrf.mxu0
      %v7331 = vadd.f32 %v6913, %v7330
      %v7332 = vpop.f32.mrf.mxu0
      %7333 = vmatprep.mubr.bf16.mxu0 %v7255
      %7334 = vmatmul.mubr.bf16.gmra.mxu0 %v6952
      %v7335 = vpop.f32.mrf.mxu0
      %v7336 = vadd.f32 %v6913, %v7335
      %v7337 = vpop.f32.mrf.mxu0
      %v7338 = vpop.f32.mrf.mxu0
      %v7339 = vadd.f32 %v6913, %v7338
      %v7340 = vpop.f32.mrf.mxu0
      %7341 = vmatprep.mubr.bf16.mxu0 %v7258
      %7342 = vmatmul.mubr.bf16.gmra.mxu0 %v6968
      %v7343 = vpop.f32.mrf.mxu0
      %v7344 = vadd.f32 %v6913, %v7343
      %v7345 = vpop.f32.mrf.mxu0
      %v7346 = vpop.f32.mrf.mxu0
      %v7347 = vadd.f32 %v6913, %v7346
      %v7348 = vpop.f32.mrf.mxu0
      %7349 = vmatprep.mubr.bf16.mxu0 %v7261
      %7350 = vmatmul.mubr.bf16.gmra.mxu0 %v6984
      %v7351 = vpop.f32.mrf.mxu0
      %v7352 = vadd.f32 %v6913, %v7351
      %v7353 = vpop.f32.mrf.mxu0
      %v7354 = vpop.f32.mrf.mxu0
      %v7355 = vadd.f32 %v6913, %v7354
      %v7356 = vpop.f32.mrf.mxu0
      %7357 = vmatprep.mubr.bf16.mxu0 %v7264
      %7358 = vmatmul.mubr.bf16.gmra.mxu0 %v7000
      %v7359 = vpop.f32.mrf.mxu0
      %v7360 = vadd.f32 %v6913, %v7359
      %v7361 = vpop.f32.mrf.mxu0
      %v7362 = vpop.f32.mrf.mxu0
      %v7363 = vadd.f32 %v6913, %v7362
      %v7364 = vpop.f32.mrf.mxu0
      %7365 = vmatprep.mubr.bf16.mxu0 %v7267
      %7366 = vmatmul.mubr.bf16.gmra.mxu0 %v7016
      %v7367 = vpop.f32.mrf.mxu0
      %v7368 = vadd.f32 %v6913, %v7367
      %v7369 = vpop.f32.mrf.mxu0
      %v7370 = vpop.f32.mrf.mxu0
      %v7371 = vadd.f32 %v6913, %v7370
      %v7372 = vpop.f32.mrf.mxu0
      %7373 = vmatprep.mubr.bf16.mxu0 %v7270
      %7374 = vmatmul.mubr.bf16.gmra.mxu0 %v7032
      %v7375 = vpop.f32.mrf.mxu0
      %v7376 = vadd.f32 %v6913, %v7375
      %v7377 = vpop.f32.mrf.mxu0
      %v7378 = vpop.f32.mrf.mxu0
      %v7379 = vadd.f32 %v6913, %v7378
      %v7380 = vpop.f32.mrf.mxu0
      %7381 = vmatprep.mubr.bf16.mxu0 %v7273
      %7382 = vmatmul.mubr.bf16.gmra.mxu0 %v7048
      %v7383 = vpop.f32.mrf.mxu0
      %v7384 = vadd.f32 %v6913, %v7383
      %v7385 = vpop.f32.mrf.mxu0
      %v7386 = vpop.f32.mrf.mxu0
      %v7387 = vadd.f32 %v6913, %v7386
      %v7388 = vpop.f32.mrf.mxu0
      %7389 = vmatprep.mubr.bf16.mxu0 %v7276
      %7390 = vmatmul.mubr.bf16.gmra.mxu0 %v7064
      %v7391 = vpop.f32.mrf.mxu0
      %v7392 = vadd.f32 %v6913, %v7391
      %v7393 = vpop.f32.mrf.mxu0
      %v7394 = vpop.f32.mrf.mxu0
      %v7395 = vadd.f32 %v6913, %v7394
      %v7396 = vpop.f32.mrf.mxu0
      %7397 = vmatprep.mubr.bf16.mxu0 %v7279
      %7398 = vmatmul.mubr.bf16.gmra.mxu0 %v7080
      %v7399 = vpop.f32.mrf.mxu0
      %v7400 = vadd.f32 %v6913, %v7399
      %v7401 = vpop.f32.mrf.mxu0
      %v7402 = vpop.f32.mrf.mxu0
      %v7403 = vadd.f32 %v6913, %v7402
      %v7404 = vpop.f32.mrf.mxu0
      %7405 = vmatprep.mubr.bf16.mxu0 %v7282
      %7406 = vmatmul.mubr.bf16.gmra.mxu0 %v7096
      %v7407 = vpop.f32.mrf.mxu0
      %v7408 = vadd.f32 %v6913, %v7407
      %v7409 = vpop.f32.mrf.mxu0
      %v7410 = vpop.f32.mrf.mxu0
      %v7411 = vadd.f32 %v6913, %v7410
      %v7412 = vpop.f32.mrf.mxu0
      %7413 = vmatprep.mubr.bf16.mxu0 %v7285
      %7414 = vmatmul.mubr.bf16.gmra.mxu0 %v7112
      %v7415 = vpop.f32.mrf.mxu0
      %v7416 = vadd.f32 %v6913, %v7415
      %v7417 = vpop.f32.mrf.mxu0
      %v7418 = vpop.f32.mrf.mxu0
      %v7419 = vadd.f32 %v6913, %v7418
      %v7420 = vpop.f32.mrf.mxu0
      %7421 = vmatprep.mubr.bf16.mxu0 %v7288
      %7422 = vmatmul.mubr.bf16.gmra.mxu0 %v7128
      %v7423 = vpop.f32.mrf.mxu0
      %v7424 = vadd.f32 %v6913, %v7423
      %v7425 = vpop.f32.mrf.mxu0
      %v7426 = vpop.f32.mrf.mxu0
      %v7427 = vadd.f32 %v6913, %v7426
      %v7428 = vpop.f32.mrf.mxu0
      %7429 = vmatprep.mubr.bf16.mxu0 %v7291
      %7430 = vmatmul.mubr.bf16.gmra.mxu0 %v7144
      %v7431 = vpop.f32.mrf.mxu0
      %v7432 = vadd.f32 %v6913, %v7431
      %v7433 = vpop.f32.mrf.mxu0
      %v7434 = vpop.f32.mrf.mxu0
      %v7435 = vadd.f32 %v6913, %v7434
      %v7436 = vpop.f32.mrf.mxu0
      %7437 = vdwg.mxu0
      %v7438 = vmax.f32 %v7328, 0.0
      %v7439 = vmax.f32 %v7331, 0.0
      %v7440 = vmax.f32 %v7336, 0.0
      %v7441 = vmax.f32 %v7339, 0.0
      %v7442 = vmax.f32 %v7344, 0.0
      %v7443 = vmax.f32 %v7347, 0.0
      %v7444 = vmax.f32 %v7352, 0.0
      %v7445 = vmax.f32 %v7355, 0.0
      %v7446 = vmax.f32 %v7360, 0.0
      %v7447 = vmax.f32 %v7363, 0.0
      %v7448 = vmax.f32 %v7368, 0.0
      %v7449 = vmax.f32 %v7371, 0.0
      %v7450 = vmax.f32 %v7376, 0.0
      %v7451 = vmax.f32 %v7379, 0.0
      %v7452 = vmax.f32 %v7384, 0.0
      %v7453 = vmax.f32 %v7387, 0.0
      %v7454 = vmax.f32 %v7392, 0.0
      %v7455 = vmax.f32 %v7395, 0.0
      %v7456 = vmax.f32 %v7400, 0.0
      %v7457 = vmax.f32 %v7403, 0.0
      %v7458 = vmax.f32 %v7408, 0.0
      %v7459 = vmax.f32 %v7411, 0.0
      %v7460 = vmax.f32 %v7416, 0.0
      %v7461 = vmax.f32 %v7419, 0.0
      %v7462 = vmax.f32 %v7424, 0.0
      %v7463 = vmax.f32 %v7427, 0.0
      %v7464 = vmax.f32 %v7432, 0.0
      %v7465 = vmax.f32 %v7435, 0.0
      %v7466 = vmul.f32 %v7438, %v1722
      %v7467 = vmul.f32 %v7439, %v1727
      %v7468 = vmul.f32 %v7440, %v1732
      %v7469 = vmul.f32 %v7441, %v1737
      %v7470 = vmul.f32 %v7442, %v1742
      %v7471 = vmul.f32 %v7443, %v1747
      %v7472 = vmul.f32 %v7444, %v1752
      %v7473 = vmul.f32 %v7445, %v1757
      %v7474 = vmul.f32 %v7446, %v1762
      %v7475 = vmul.f32 %v7447, %v1767
      %v7476 = vmul.f32 %v7448, %v1772
      %v7477 = vmul.f32 %v7449, %v1777
      %v7478 = vmul.f32 %v7450, %v1782
      %v7479 = vmul.f32 %v7451, %v1787
      %v7480 = vmul.f32 %v7452, %v1792
      %v7481 = vmul.f32 %v7453, %v1797
      %v7482 = vmul.f32 %v7454, %v1802
      %v7483 = vmul.f32 %v7455, %v1807
      %v7484 = vmul.f32 %v7456, %v1812
      %v7485 = vmul.f32 %v7457, %v1817
      %v7486 = vmul.f32 %v7458, %v1822
      %v7487 = vmul.f32 %v7459, %v1827
      %v7488 = vmul.f32 %v7460, %v1832
      %v7489 = vmul.f32 %v7461, %v1837
      %v7490 = vmul.f32 %v7462, %v1842
      %v7491 = vmul.f32 %v7463, %v1847
      %v7492 = vmul.f32 %v7464, %v1852
      %v7493 = vmul.f32 %v7465, %v1857
      %v7494 = vpack.c.bf16 %v7467, %v7466
      %v7495 = vpack.c.bf16 %v7469, %v7468
      %v7496 = vpack.c.bf16 %v7471, %v7470
      %v7497 = vpack.c.bf16 %v7473, %v7472
      %v7498 = vpack.c.bf16 %v7475, %v7474
      %v7499 = vpack.c.bf16 %v7477, %v7476
      %v7500 = vpack.c.bf16 %v7479, %v7478
      %v7501 = vpack.c.bf16 %v7481, %v7480
      %v7502 = vpack.c.bf16 %v7483, %v7482
      %v7503 = vpack.c.bf16 %v7485, %v7484
      %v7504 = vpack.c.bf16 %v7487, %v7486
      %v7505 = vpack.c.bf16 %v7489, %v7488
      %v7506 = vpack.c.bf16 %v7491, %v7490
      %v7507 = vpack.c.bf16 %v7493, %v7492
      %v7522 = vunpack.c.l.b16 %v7494
      %v7523 = vunpack.c.h.b16 %v7494
      %v7524 = vunpack.c.l.b16 %v7495
      %v7525 = vunpack.c.h.b16 %v7495
      %v7526 = vunpack.c.l.b16 %v7496
      %v7527 = vunpack.c.h.b16 %v7496
      %v7528 = vunpack.c.l.b16 %v7497
      %v7529 = vunpack.c.h.b16 %v7497
      %v7530 = vunpack.c.l.b16 %v7498
      %v7531 = vunpack.c.h.b16 %v7498
      %v7532 = vunpack.c.l.b16 %v7499
      %v7533 = vunpack.c.h.b16 %v7499
      %v7534 = vunpack.c.l.b16 %v7500
      %v7535 = vunpack.c.h.b16 %v7500
      %v7536 = vunpack.c.l.b16 %v7501
      %v7537 = vunpack.c.h.b16 %v7501
      %v7538 = vunpack.c.l.b16 %v7502
      %v7539 = vunpack.c.h.b16 %v7502
      %v7540 = vunpack.c.l.b16 %v7503
      %v7541 = vunpack.c.h.b16 %v7503
      %v7542 = vunpack.c.l.b16 %v7504
      %v7543 = vunpack.c.h.b16 %v7504
      %v7544 = vunpack.c.l.b16 %v7505
      %v7545 = vunpack.c.h.b16 %v7505
      %v7546 = vunpack.c.l.b16 %v7506
      %v7547 = vunpack.c.h.b16 %v7506
      %v7548 = vunpack.c.l.b16 %v7507
      %v7549 = vunpack.c.h.b16 %v7507
      %v7550 = vpack.c.b16 %v7522, %v7522
      %v7551 = vpack.c.b16 %v7523, %v7523
      %v7552 = vpack.c.b16 %v7524, %v7524
      %v7553 = vpack.c.b16 %v7525, %v7525
      %v7554 = vpack.c.b16 %v7526, %v7526
      %v7555 = vpack.c.b16 %v7527, %v7527
      %v7556 = vpack.c.b16 %v7528, %v7528
      %v7557 = vpack.c.b16 %v7529, %v7529
      %v7558 = vpack.c.b16 %v7530, %v7530
      %v7559 = vpack.c.b16 %v7531, %v7531
      %v7560 = vpack.c.b16 %v7532, %v7532
      %v7561 = vpack.c.b16 %v7533, %v7533
      %v7562 = vpack.c.b16 %v7534, %v7534
      %v7563 = vpack.c.b16 %v7535, %v7535
      %v7564 = vpack.c.b16 %v7536, %v7536
      %v7565 = vpack.c.b16 %v7537, %v7537
      %v7566 = vpack.c.b16 %v7538, %v7538
      %v7567 = vpack.c.b16 %v7539, %v7539
      %v7568 = vpack.c.b16 %v7540, %v7540
      %v7569 = vpack.c.b16 %v7541, %v7541
      %v7570 = vpack.c.b16 %v7542, %v7542
      %v7571 = vpack.c.b16 %v7543, %v7543
      %v7572 = vpack.c.b16 %v7544, %v7544
      %v7573 = vpack.c.b16 %v7545, %v7545
      %v7574 = vpack.c.b16 %v7546, %v7546
      %v7575 = vpack.c.b16 %v7547, %v7547
      %v7576 = vpack.c.b16 %v7548, %v7548
      %v7577 = vpack.c.b16 %v7549, %v7549
      %7606 = vst.msk [vmem:[#allocation2 + $0x18] sm:$0xf] %vm713, %v7550
      %7607 = vst.msk [vmem:[#allocation2 + $0x1c] sm:$0xf] %vm713, %v7551
      %7608 = vst.msk [vmem:[#allocation2 + $0x20] sm:$0xf] %vm713, %v7552
      %7609 = vst.msk [vmem:[#allocation2 + $0x24] sm:$0xf] %vm713, %v7553
      %7610 = vst.msk [vmem:[#allocation2 + $0x28] sm:$0xf] %vm713, %v7554
      %7611 = vst.msk [vmem:[#allocation2 + $0x2c] sm:$0xf] %vm713, %v7555
      %7612 = vst.msk [vmem:[#allocation2 + $0x30] sm:$0xf] %vm713, %v7556
      %7613 = vst.msk [vmem:[#allocation2 + $0x34] sm:$0xf] %vm713, %v7557
      %7614 = vst.msk [vmem:[#allocation2 + $0x38] sm:$0xf] %vm713, %v7558
      %7615 = vst.msk [vmem:[#allocation2 + $0x3c] sm:$0xf] %vm713, %v7559
      %7616 = vst.msk [vmem:[#allocation2 + $0x40] sm:$0xf] %vm713, %v7560
      %7617 = vst.msk [vmem:[#allocation2 + $0x44] sm:$0xf] %vm713, %v7561
      %7618 = vst.msk [vmem:[#allocation2 + $0x48] sm:$0xf] %vm713, %v7562
      %7619 = vst.msk [vmem:[#allocation2 + $0x4c] sm:$0xf] %vm713, %v7563
      %7620 = vst.msk [vmem:[#allocation2 + $0x50] sm:$0xf] %vm713, %v7564
      %7621 = vst.msk [vmem:[#allocation2 + $0x54] sm:$0xf] %vm713, %v7565
      %7622 = vst.msk [vmem:[#allocation2 + $0x58] sm:$0xf] %vm713, %v7566
      %7623 = vst.msk [vmem:[#allocation2 + $0x5c] sm:$0xf] %vm713, %v7567
      %7624 = vst.msk [vmem:[#allocation2 + $0x60] sm:$0xf] %vm713, %v7568
      %7625 = vst.msk [vmem:[#allocation2 + $0x64] sm:$0xf] %vm713, %v7569
      %7626 = vst.msk [vmem:[#allocation2 + $0x68] sm:$0xf] %vm713, %v7570
      %7627 = vst.msk [vmem:[#allocation2 + $0x6c] sm:$0xf] %vm713, %v7571
      %7628 = vst.msk [vmem:[#allocation2 + $0x70] sm:$0xf] %vm713, %v7572
      %7629 = vst.msk [vmem:[#allocation2 + $0x74] sm:$0xf] %vm713, %v7573
      %7630 = vst.msk [vmem:[#allocation2 + $0x78] sm:$0xf] %vm713, %v7574
      %7631 = vst.msk [vmem:[#allocation2 + $0x7c] sm:$0xf] %vm713, %v7575
      %7632 = vst.msk [vmem:[#allocation2 + $0x80] sm:$0xf] %vm713, %v7576
      %7633 = vst.msk [vmem:[#allocation2 + $0x84] sm:$0xf] %vm713, %v7577
      %v7634 = vld [vmem:[#allocation2] sm:$0xf]
      %v7635 = vld [vmem:[#allocation2 + $0x4] sm:$0xf]
      %v7636 = vld [vmem:[#allocation2 + $0x8] sm:$0xf]
      %v7637 = vld [vmem:[#allocation2 + $0xc] sm:$0xf]
      %v7638 = vld [vmem:[#allocation2 + $0x10] sm:$0xf]
      %v7639 = vld [vmem:[#allocation2 + $0x14] sm:$0xf]
      %v7640 = vld [vmem:[#allocation2 + $0x18] sm:$0xf]
      %v7641 = vld [vmem:[#allocation2 + $0x1c] sm:$0xf]
      %v7642 = vld [vmem:[#allocation2 + $0x20] sm:$0xf]
      %v7643 = vld [vmem:[#allocation2 + $0x24] sm:$0xf]
      %v7644 = vld [vmem:[#allocation2 + $0x28] sm:$0xf]
      %v7645 = vld [vmem:[#allocation2 + $0x2c] sm:$0xf]
      %v7646 = vld [vmem:[#allocation2 + $0x30] sm:$0xf]
      %v7647 = vld [vmem:[#allocation2 + $0x34] sm:$0xf]
      %v7648 = vld [vmem:[#allocation2 + $0x38] sm:$0xf]
      %v7649 = vld [vmem:[#allocation2 + $0x3c] sm:$0xf]
      %v7650 = vld [vmem:[#allocation2 + $0x40] sm:$0xf]
      %v7651 = vld [vmem:[#allocation2 + $0x44] sm:$0xf]
      %v7652 = vld [vmem:[#allocation2 + $0x48] sm:$0xf]
      %v7653 = vld [vmem:[#allocation2 + $0x4c] sm:$0xf]
      %v7654 = vld [vmem:[#allocation2 + $0x50] sm:$0xf]
      %v7655 = vld [vmem:[#allocation2 + $0x54] sm:$0xf]
      %v7656 = vld [vmem:[#allocation2 + $0x58] sm:$0xf]
      %v7657 = vld [vmem:[#allocation2 + $0x5c] sm:$0xf]
      %v7658 = vld [vmem:[#allocation2 + $0x60] sm:$0xf]
      %v7659 = vld [vmem:[#allocation2 + $0x64] sm:$0xf]
      %v7660 = vld [vmem:[#allocation2 + $0x68] sm:$0xf]
      %v7661 = vld [vmem:[#allocation2 + $0x6c] sm:$0xf]
      %v7662 = vld [vmem:[#allocation2 + $0x70] sm:$0xf]
      %v7663 = vld [vmem:[#allocation2 + $0x74] sm:$0xf]
      %v7664 = vld [vmem:[#allocation2 + $0x78] sm:$0xf]
      %v7665 = vld [vmem:[#allocation2 + $0x7c] sm:$0xf]
      %v7666 = vld [vmem:[#allocation2 + $0x80] sm:$0xf]
      %v7667 = vld [vmem:[#allocation2 + $0x84] sm:$0xf]
      %v7668 = vld [vmem:[#allocation2 + $0x88] sm:$0xf]
      %v7669 = vld [vmem:[#allocation2 + $0x8c] sm:$0xf]
      %v7670 = vld [vmem:[#allocation2 + $0x90] sm:$0xf]
      %v7671 = vld [vmem:[#allocation2 + $0x94] sm:$0xf]
      %v7672 = vld [vmem:[#allocation2 + $0x98] sm:$0xf]
      %v7673 = vld [vmem:[#allocation2 + $0x9c] sm:$0xf]
      %v7702 = vunpack.c.l.b16 %v7634
      %v7703 = vunpack.c.l.b16 %v7635
      %v7704 = vunpack.c.l.b16 %v7636
      %v7705 = vunpack.c.l.b16 %v7637
      %v7706 = vunpack.c.l.b16 %v7638
      %v7707 = vunpack.c.l.b16 %v7639
      %v7708 = vunpack.c.l.b16 %v7640
      %v7709 = vunpack.c.l.b16 %v7641
      %v7710 = vunpack.c.l.b16 %v7642
      %v7711 = vunpack.c.l.b16 %v7643
      %v7712 = vunpack.c.l.b16 %v7644
      %v7713 = vunpack.c.l.b16 %v7645
      %v7714 = vunpack.c.l.b16 %v7646
      %v7715 = vunpack.c.l.b16 %v7647
      %v7716 = vunpack.c.l.b16 %v7648
      %v7717 = vunpack.c.l.b16 %v7649
      %v7718 = vunpack.c.l.b16 %v7650
      %v7719 = vunpack.c.l.b16 %v7651
      %v7720 = vunpack.c.l.b16 %v7652
      %v7721 = vunpack.c.l.b16 %v7653
      %v7722 = vunpack.c.l.b16 %v7654
      %v7723 = vunpack.c.l.b16 %v7655
      %v7724 = vunpack.c.l.b16 %v7656
      %v7725 = vunpack.c.l.b16 %v7657
      %v7726 = vunpack.c.l.b16 %v7658
      %v7727 = vunpack.c.l.b16 %v7659
      %v7728 = vunpack.c.l.b16 %v7660
      %v7729 = vunpack.c.l.b16 %v7661
      %v7730 = vpack.c.b16 %v7703, %v7702
      %v7731 = vpack.c.b16 %v7705, %v7704
      %v7732 = vpack.c.b16 %v7707, %v7706
      %v7733 = vpack.c.b16 %v7709, %v7708
      %v7734 = vpack.c.b16 %v7711, %v7710
      %v7735 = vpack.c.b16 %v7713, %v7712
      %v7736 = vpack.c.b16 %v7715, %v7714
      %v7737 = vpack.c.b16 %v7717, %v7716
      %v7738 = vpack.c.b16 %v7719, %v7718
      %v7739 = vpack.c.b16 %v7721, %v7720
      %v7740 = vpack.c.b16 %v7723, %v7722
      %v7741 = vpack.c.b16 %v7725, %v7724
      %v7742 = vpack.c.b16 %v7727, %v7726
      %v7743 = vpack.c.b16 %v7729, %v7728
      %v7746 = vunpack.c.l.b16 %v7662
      %v7747 = vunpack.c.l.b16 %v7663
      %v7748 = vpack.c.b16 %v7747, %v7746
      %7749 = vrot.lane.b32.xlu0 %v7731, 32
      %v7750 = vpop.permute.xlu0 %7749
      %7751 = vrot.lane.b32.xlu0 %v7732, 32
      %v7752 = vpop.permute.xlu0 %7751
      %7753 = vrot.lane.b32.xlu0 %v7733, 32
      %v7754 = vpop.permute.xlu0 %7753
      %7755 = vrot.lane.b32.xlu0 %v7734, 32
      %v7756 = vpop.permute.xlu0 %7755
      %7757 = vrot.lane.b32.xlu0 %v7735, 32
      %v7758 = vpop.permute.xlu0 %7757
      %7759 = vrot.lane.b32.xlu0 %v7736, 32
      %v7760 = vpop.permute.xlu0 %7759
      %7761 = vrot.lane.b32.xlu0 %v7737, 32
      %v7762 = vpop.permute.xlu0 %7761
      %7763 = vrot.lane.b32.xlu0 %v7738, 32
      %v7764 = vpop.permute.xlu0 %7763
      %7765 = vrot.lane.b32.xlu0 %v7739, 32
      %v7766 = vpop.permute.xlu0 %7765
      %7767 = vrot.lane.b32.xlu0 %v7740, 32
      %v7768 = vpop.permute.xlu0 %7767
      %7769 = vrot.lane.b32.xlu0 %v7741, 32
      %v7770 = vpop.permute.xlu0 %7769
      %7771 = vrot.lane.b32.xlu0 %v7742, 32
      %v7772 = vpop.permute.xlu0 %7771
      %7773 = vrot.lane.b32.xlu0 %v7743, 32
      %v7774 = vpop.permute.xlu0 %7773
      %7775 = vrot.lane.b32.xlu0 %v7748, 32
      %v7776 = vpop.permute.xlu0 %7775
      %v7779 = vunpack.c.l.b16 %v7664
      %v7780 = vunpack.c.l.b16 %v7665
      %v7781 = vpack.c.b16 %v7780, %v7779
      %7782 = vrot.lane.b32.xlu0 %v7732, 64
      %v7783 = vpop.permute.xlu0 %7782
      %7784 = vrot.lane.b32.xlu0 %v7733, 64
      %v7785 = vpop.permute.xlu0 %7784
      %7786 = vrot.lane.b32.xlu0 %v7734, 64
      %v7787 = vpop.permute.xlu0 %7786
      %7788 = vrot.lane.b32.xlu0 %v7735, 64
      %v7789 = vpop.permute.xlu0 %7788
      %7790 = vrot.lane.b32.xlu0 %v7736, 64
      %v7791 = vpop.permute.xlu0 %7790
      %7792 = vrot.lane.b32.xlu0 %v7737, 64
      %v7793 = vpop.permute.xlu0 %7792
      %7794 = vrot.lane.b32.xlu0 %v7738, 64
      %v7795 = vpop.permute.xlu0 %7794
      %7796 = vrot.lane.b32.xlu0 %v7739, 64
      %v7797 = vpop.permute.xlu0 %7796
      %7798 = vrot.lane.b32.xlu0 %v7740, 64
      %v7799 = vpop.permute.xlu0 %7798
      %7800 = vrot.lane.b32.xlu0 %v7741, 64
      %v7801 = vpop.permute.xlu0 %7800
      %7802 = vrot.lane.b32.xlu0 %v7742, 64
      %v7803 = vpop.permute.xlu0 %7802
      %7804 = vrot.lane.b32.xlu0 %v7743, 64
      %v7805 = vpop.permute.xlu0 %7804
      %7806 = vrot.lane.b32.xlu0 %v7748, 64
      %v7807 = vpop.permute.xlu0 %7806
      %7808 = vrot.lane.b32.xlu0 %v7781, 64
      %v7809 = vpop.permute.xlu0 %7808
      %v7812 = vunpack.c.l.b16 %v7666
      %v7813 = vunpack.c.l.b16 %v7667
      %v7814 = vpack.c.b16 %v7813, %v7812
      %7815 = vrot.lane.b32.xlu0 %v7733, 96
      %v7816 = vpop.permute.xlu0 %7815
      %7817 = vrot.lane.b32.xlu0 %v7734, 96
      %v7818 = vpop.permute.xlu0 %7817
      %7819 = vrot.lane.b32.xlu0 %v7735, 96
      %v7820 = vpop.permute.xlu0 %7819
      %7821 = vrot.lane.b32.xlu0 %v7736, 96
      %v7822 = vpop.permute.xlu0 %7821
      %7823 = vrot.lane.b32.xlu0 %v7737, 96
      %v7824 = vpop.permute.xlu0 %7823
      %7825 = vrot.lane.b32.xlu0 %v7738, 96
      %v7826 = vpop.permute.xlu0 %7825
      %7827 = vrot.lane.b32.xlu0 %v7739, 96
      %v7828 = vpop.permute.xlu0 %7827
      %7829 = vrot.lane.b32.xlu0 %v7740, 96
      %v7830 = vpop.permute.xlu0 %7829
      %7831 = vrot.lane.b32.xlu0 %v7741, 96
      %v7832 = vpop.permute.xlu0 %7831
      %7833 = vrot.lane.b32.xlu0 %v7742, 96
      %v7834 = vpop.permute.xlu0 %7833
      %7835 = vrot.lane.b32.xlu0 %v7743, 96
      %v7836 = vpop.permute.xlu0 %7835
      %7837 = vrot.lane.b32.xlu0 %v7748, 96
      %v7838 = vpop.permute.xlu0 %7837
      %7839 = vrot.lane.b32.xlu0 %v7781, 96
      %v7840 = vpop.permute.xlu0 %7839
      %7841 = vrot.lane.b32.xlu0 %v7814, 96
      %v7842 = vpop.permute.xlu0 %7841
      %v7845 = vunpack.c.l.b16 %v7668
      %v7846 = vunpack.c.l.b16 %v7669
      %v7847 = vpack.c.b16 %v7846, %v7845
      %v7850 = vunpack.c.l.b16 %v7670
      %v7851 = vunpack.c.l.b16 %v7671
      %v7852 = vpack.c.b16 %v7851, %v7850
      %7853 = vrot.lane.b32.xlu0 %v7781, 32
      %v7854 = vpop.permute.xlu0 %7853
      %7855 = vrot.lane.b32.xlu0 %v7814, 32
      %v7856 = vpop.permute.xlu0 %7855
      %7857 = vrot.lane.b32.xlu0 %v7847, 32
      %v7858 = vpop.permute.xlu0 %7857
      %7859 = vrot.lane.b32.xlu0 %v7852, 32
      %v7860 = vpop.permute.xlu0 %7859
      %v7863 = vunpack.c.l.b16 %v7672
      %v7864 = vunpack.c.l.b16 %v7673
      %v7865 = vpack.c.b16 %v7864, %v7863
      %7866 = vrot.lane.b32.xlu0 %v7814, 64
      %v7867 = vpop.permute.xlu0 %7866
      %7868 = vrot.lane.b32.xlu0 %v7847, 64
      %v7869 = vpop.permute.xlu0 %7868
      %7870 = vrot.lane.b32.xlu0 %v7852, 64
      %v7871 = vpop.permute.xlu0 %7870
      %7872 = vrot.lane.b32.xlu0 %v7865, 64
      %v7873 = vpop.permute.xlu0 %7872
      %v7876 = vsel %vm2719, %v7730, %v7750
      %v7879 = vsel %vm2719, %v7731, %v7752
      %v7882 = vsel %vm2719, %v7732, %v7754
      %v7885 = vsel %vm2719, %v7733, %v7756
      %v7888 = vsel %vm2719, %v7734, %v7758
      %v7891 = vsel %vm2719, %v7735, %v7760
      %v7894 = vsel %vm2719, %v7736, %v7762
      %v7897 = vsel %vm2719, %v7737, %v7764
      %v7900 = vsel %vm2719, %v7738, %v7766
      %v7903 = vsel %vm2719, %v7739, %v7768
      %v7906 = vsel %vm2719, %v7740, %v7770
      %v7909 = vsel %vm2719, %v7741, %v7772
      %v7912 = vsel %vm2719, %v7742, %v7774
      %v7915 = vsel %vm2719, %v7743, %v7776
      %v7917 = vsel %vm896, %v7876, %v7783
      %v7919 = vsel %vm896, %v7879, %v7785
      %v7921 = vsel %vm896, %v7882, %v7787
      %v7923 = vsel %vm896, %v7885, %v7789
      %v7925 = vsel %vm896, %v7888, %v7791
      %v7927 = vsel %vm896, %v7891, %v7793
      %v7929 = vsel %vm896, %v7894, %v7795
      %v7931 = vsel %vm896, %v7897, %v7797
      %v7933 = vsel %vm896, %v7900, %v7799
      %v7935 = vsel %vm896, %v7903, %v7801
      %v7937 = vsel %vm896, %v7906, %v7803
      %v7939 = vsel %vm896, %v7909, %v7805
      %v7941 = vsel %vm896, %v7912, %v7807
      %v7943 = vsel %vm896, %v7915, %v7809
      %v7945 = vsel %vm2781, %v7917, %v7816
      %v7948 = vsel %vm2781, %v7919, %v7818
      %v7951 = vsel %vm2781, %v7921, %v7820
      %v7954 = vsel %vm2781, %v7923, %v7822
      %v7957 = vsel %vm2781, %v7925, %v7824
      %v7960 = vsel %vm2781, %v7927, %v7826
      %v7963 = vsel %vm2781, %v7929, %v7828
      %v7966 = vsel %vm2781, %v7931, %v7830
      %v7969 = vsel %vm2781, %v7933, %v7832
      %v7972 = vsel %vm2781, %v7935, %v7834
      %v7975 = vsel %vm2781, %v7937, %v7836
      %v7978 = vsel %vm2781, %v7939, %v7838
      %v7981 = vsel %vm2781, %v7941, %v7840
      %v7984 = vsel %vm2781, %v7943, %v7842
      %v7988 = vsel %vm2719, %v7748, %v7854
      %v7991 = vsel %vm2719, %v7781, %v7856
      %v7994 = vsel %vm2719, %v7814, %v7858
      %v7997 = vsel %vm2719, %v7847, %v7860
      %v7999 = vsel %vm896, %v7988, %v7867
      %v8001 = vsel %vm896, %v7991, %v7869
      %v8003 = vsel %vm896, %v7994, %v7871
      %v8005 = vsel %vm896, %v7997, %v7873
      %v8006 = vld [vmem:[%s16] sm:$0xf]
      %v8007 = vld [vmem:[%s16 + $0x4] sm:$0xf]
      %v8008 = vld [vmem:[%s16 + $0x8] sm:$0xf]
      %v8009 = vld [vmem:[%s16 + $0xc] sm:$0xf]
      %v8010 = vld [vmem:[%s16 + $0x10] sm:$0xf]
      %v8011 = vld [vmem:[%s16 + $0x14] sm:$0xf]
      %v8012 = vld [vmem:[%s16 + $0x18] sm:$0xf]
      %v8013 = vld [vmem:[%s16 + $0x1c] sm:$0xf]
      %v8014 = vld [vmem:[%s16 + $0x20] sm:$0xf]
      %v8015 = vld [vmem:[%s16 + $0x24] sm:$0xf]
      %v8016 = vld [vmem:[%s16 + $0x28] sm:$0xf]
      %v8017 = vld [vmem:[%s16 + $0x2c] sm:$0xf]
      %v8018 = vld [vmem:[%s16 + $0x30] sm:$0xf]
      %v8019 = vld [vmem:[%s16 + $0x34] sm:$0xf]
      %v8020 = vld [vmem:[%s16 + $0x38] sm:$0xf]
      %v8021 = vld [vmem:[%s16 + $0x3c] sm:$0xf]
      %v8022 = vld [vmem:[%s16 + $0x40] sm:$0xf]
      %v8023 = vld [vmem:[%s16 + $0x44] sm:$0xf]
      %v8024 = vld [vmem:[%s16 + $0x48] sm:$0xf]
      %v8025 = vld [vmem:[%s16 + $0x4c] sm:$0xf]
      %v8026 = vld [vmem:[%s16 + $0x50] sm:$0xf]
      %v8027 = vld [vmem:[%s16 + $0x54] sm:$0xf]
      %v8028 = vld [vmem:[%s16 + $0x58] sm:$0xf]
      %v8029 = vld [vmem:[%s16 + $0x5c] sm:$0xf]
      %v8030 = vld [vmem:[%s16 + $0x60] sm:$0xf]
      %v8031 = vld [vmem:[%s16 + $0x64] sm:$0xf]
      %v8032 = vld [vmem:[%s16 + $0x68] sm:$0xf]
      %v8033 = vld [vmem:[%s16 + $0x6c] sm:$0xf]
      %v8034 = vld [vmem:[%s17] sm:$0x1]
      %v8036 = vlaneseq
      %v8037 = vshrl.u32 %v8036, 7
      %v8038 = vsub.s32 0, %v8037
      %v8039 = vrot.slane %v8034, %v8038
      %v8069 = vunpack.c.l.b16 %v8006
      %v8070 = vunpack.c.l.b16 %v8007
      %v8071 = vunpack.c.l.b16 %v8008
      %v8072 = vunpack.c.l.b16 %v8009
      %v8073 = vunpack.c.l.b16 %v8010
      %v8074 = vunpack.c.l.b16 %v8011
      %v8075 = vunpack.c.l.b16 %v8012
      %v8076 = vunpack.c.l.b16 %v8013
      %v8077 = vunpack.c.l.b16 %v8014
      %v8078 = vunpack.c.l.b16 %v8015
      %v8079 = vunpack.c.l.b16 %v8016
      %v8080 = vunpack.c.l.b16 %v8017
      %v8081 = vunpack.c.l.b16 %v8018
      %v8082 = vunpack.c.l.b16 %v8019
      %v8083 = vunpack.c.l.b16 %v8020
      %v8084 = vunpack.c.l.b16 %v8021
      %v8085 = vunpack.c.l.b16 %v8022
      %v8086 = vunpack.c.l.b16 %v8023
      %v8087 = vunpack.c.l.b16 %v8024
      %v8088 = vunpack.c.l.b16 %v8025
      %v8089 = vunpack.c.l.b16 %v8026
      %v8090 = vunpack.c.l.b16 %v8027
      %v8091 = vunpack.c.l.b16 %v8028
      %v8092 = vunpack.c.l.b16 %v8029
      %v8093 = vunpack.c.l.b16 %v8030
      %v8094 = vunpack.c.l.b16 %v8031
      %v8095 = vunpack.c.l.b16 %v8032
      %v8096 = vunpack.c.l.b16 %v8033
      %v8097 = vpack.c.b16 %v8070, %v8069
      %v8098 = vpack.c.b16 %v8072, %v8071
      %v8099 = vpack.c.b16 %v8074, %v8073
      %v8100 = vpack.c.b16 %v8076, %v8075
      %v8101 = vpack.c.b16 %v8078, %v8077
      %v8102 = vpack.c.b16 %v8080, %v8079
      %v8103 = vpack.c.b16 %v8082, %v8081
      %v8104 = vpack.c.b16 %v8084, %v8083
      %v8105 = vpack.c.b16 %v8086, %v8085
      %v8106 = vpack.c.b16 %v8088, %v8087
      %v8107 = vpack.c.b16 %v8090, %v8089
      %v8108 = vpack.c.b16 %v8092, %v8091
      %v8109 = vpack.c.b16 %v8094, %v8093
      %v8110 = vpack.c.b16 %v8096, %v8095
      %v8125 = vsel %vm2781, %v7925, 0
      %v8127 = vsel %vm2781, %v7927, 0
      %v8129 = vsel %vm2781, %v7929, 0
      %v8131 = vsel %vm2781, %v7931, 0
      %v8133 = vsel %vm2781, %v7933, 0
      %v8135 = vsel %vm2781, %v7935, 0
      %v8137 = vsel %vm2781, %v7937, 0
      %v8139 = vsel %vm2781, %v7939, 0
      %v8141 = vsel %vm2781, %v7941, 0
      %v8143 = vsel %vm2781, %v7943, 0
      %v8145 = vsel %vm2781, %v7999, 0
      %v8147 = vsel %vm2781, %v8001, 0
      %v8149 = vsel %vm2781, %v8003, 0
      %v8151 = vsel %vm2781, %v8005, 0
      %8153 = vmatprep.subr.bf16.mxu0 0
      %8154 = vmatpush1.bf16.msra.mxu0 %v8104
      %8155 = vmatprep.subr.bf16.mxu0 0
      %8156 = vmatpush1.bf16.msra.mxu0 %v8103
      %8157 = vmatprep.subr.bf16.mxu0 0
      %8158 = vmatpush1.bf16.msra.mxu0 %v8102
      %8159 = vmatprep.subr.bf16.mxu0 0
      %8160 = vmatpush1.bf16.msra.mxu0 %v8101
      %8161 = vmatprep.subr.bf16.mxu0 0
      %8162 = vmatpush1.bf16.msra.mxu0 %v8100
      %8163 = vmatprep.subr.bf16.mxu0 0
      %8164 = vmatpush1.bf16.msra.mxu0 %v8099
      %8165 = vmatprep.subr.bf16.mxu0 0
      %8166 = vmatpush1.bf16.msra.mxu0 %v8098
      %8167 = vmatprep.subr.bf16.mxu0 0
      %8168 = vmatpush1.bf16.msra.mxu0 %v8097
      %8169 = vmatprep.subr.bf16.mxu0 0
      %8170 = vmatpush2.bf16.msra.mxu0 0
      %8171 = vmatprep.subr.bf16.mxu0 0
      %8172 = vmatpush2.bf16.msra.mxu0 0
      %8173 = vmatprep.subr.bf16.mxu0 0
      %8174 = vmatpush2.bf16.msra.mxu0 %v8110
      %8175 = vmatprep.subr.bf16.mxu0 0
      %8176 = vmatpush2.bf16.msra.mxu0 %v8109
      %8177 = vmatprep.subr.bf16.mxu0 0
      %8178 = vmatpush2.bf16.msra.mxu0 %v8108
      %8179 = vmatprep.subr.bf16.mxu0 0
      %8180 = vmatpush2.bf16.msra.mxu0 %v8107
      %8181 = vmatprep.subr.bf16.mxu0 0
      %8182 = vmatpush2.bf16.msra.mxu0 %v8106
      %8183 = vmatprep.subr.bf16.mxu0 0
      %8184 = vmatpush2.bf16.msra.mxu0 %v8105
      %8185 = vmatprep.mubr.bf16.mxu0 %v8125
      %8186 = vmatmul.mubr.bf16.gmra.mxu0 %v7945
      %v8187 = vpop.f32.mrf.mxu0
      %v8188 = vadd.f32 %v8039, %v8187
      %v8189 = vpop.f32.mrf.mxu0
      %v8190 = vpop.f32.mrf.mxu0
      %v8191 = vadd.f32 %v8039, %v8190
      %v8192 = vpop.f32.mrf.mxu0
      %8193 = vmatprep.mubr.bf16.mxu0 %v8127
      %8194 = vmatmul.mubr.bf16.gmra.mxu0 %v7948
      %v8195 = vpop.f32.mrf.mxu0
      %v8196 = vadd.f32 %v8039, %v8195
      %v8197 = vpop.f32.mrf.mxu0
      %v8198 = vpop.f32.mrf.mxu0
      %v8199 = vadd.f32 %v8039, %v8198
      %v8200 = vpop.f32.mrf.mxu0
      %8201 = vmatprep.mubr.bf16.mxu0 %v8129
      %8202 = vmatmul.mubr.bf16.gmra.mxu0 %v7951
      %v8203 = vpop.f32.mrf.mxu0
      %v8204 = vadd.f32 %v8039, %v8203
      %v8205 = vpop.f32.mrf.mxu0
      %v8206 = vpop.f32.mrf.mxu0
      %v8207 = vadd.f32 %v8039, %v8206
      %v8208 = vpop.f32.mrf.mxu0
      %8209 = vmatprep.mubr.bf16.mxu0 %v8131
      %8210 = vmatmul.mubr.bf16.gmra.mxu0 %v7954
      %v8211 = vpop.f32.mrf.mxu0
      %v8212 = vadd.f32 %v8039, %v8211
      %v8213 = vpop.f32.mrf.mxu0
      %v8214 = vpop.f32.mrf.mxu0
      %v8215 = vadd.f32 %v8039, %v8214
      %v8216 = vpop.f32.mrf.mxu0
      %8217 = vmatprep.mubr.bf16.mxu0 %v8133
      %8218 = vmatmul.mubr.bf16.gmra.mxu0 %v7957
      %v8219 = vpop.f32.mrf.mxu0
      %v8220 = vadd.f32 %v8039, %v8219
      %v8221 = vpop.f32.mrf.mxu0
      %v8222 = vpop.f32.mrf.mxu0
      %v8223 = vadd.f32 %v8039, %v8222
      %v8224 = vpop.f32.mrf.mxu0
      %8225 = vmatprep.mubr.bf16.mxu0 %v8135
      %8226 = vmatmul.mubr.bf16.gmra.mxu0 %v7960
      %v8227 = vpop.f32.mrf.mxu0
      %v8228 = vadd.f32 %v8039, %v8227
      %v8229 = vpop.f32.mrf.mxu0
      %v8230 = vpop.f32.mrf.mxu0
      %v8231 = vadd.f32 %v8039, %v8230
      %v8232 = vpop.f32.mrf.mxu0
      %8233 = vmatprep.mubr.bf16.mxu0 %v8137
      %8234 = vmatmul.mubr.bf16.gmra.mxu0 %v7963
      %v8235 = vpop.f32.mrf.mxu0
      %v8236 = vadd.f32 %v8039, %v8235
      %v8237 = vpop.f32.mrf.mxu0
      %v8238 = vpop.f32.mrf.mxu0
      %v8239 = vadd.f32 %v8039, %v8238
      %v8240 = vpop.f32.mrf.mxu0
      %8241 = vmatprep.mubr.bf16.mxu0 %v8139
      %8242 = vmatmul.mubr.bf16.gmra.mxu0 %v7966
      %v8243 = vpop.f32.mrf.mxu0
      %v8244 = vadd.f32 %v8039, %v8243
      %v8245 = vpop.f32.mrf.mxu0
      %v8246 = vpop.f32.mrf.mxu0
      %v8247 = vadd.f32 %v8039, %v8246
      %v8248 = vpop.f32.mrf.mxu0
      %8249 = vmatprep.mubr.bf16.mxu0 %v8141
      %8250 = vmatmul.mubr.bf16.gmra.mxu0 %v7969
      %v8251 = vpop.f32.mrf.mxu0
      %v8252 = vadd.f32 %v8039, %v8251
      %v8253 = vpop.f32.mrf.mxu0
      %v8254 = vpop.f32.mrf.mxu0
      %v8255 = vadd.f32 %v8039, %v8254
      %v8256 = vpop.f32.mrf.mxu0
      %8257 = vmatprep.mubr.bf16.mxu0 %v8143
      %8258 = vmatmul.mubr.bf16.gmra.mxu0 %v7972
      %v8259 = vpop.f32.mrf.mxu0
      %v8260 = vadd.f32 %v8039, %v8259
      %v8261 = vpop.f32.mrf.mxu0
      %v8262 = vpop.f32.mrf.mxu0
      %v8263 = vadd.f32 %v8039, %v8262
      %v8264 = vpop.f32.mrf.mxu0
      %8265 = vmatprep.mubr.bf16.mxu0 %v8145
      %8266 = vmatmul.mubr.bf16.gmra.mxu0 %v7975
      %v8267 = vpop.f32.mrf.mxu0
      %v8268 = vadd.f32 %v8039, %v8267
      %v8269 = vpop.f32.mrf.mxu0
      %v8270 = vpop.f32.mrf.mxu0
      %v8271 = vadd.f32 %v8039, %v8270
      %v8272 = vpop.f32.mrf.mxu0
      %8273 = vmatprep.mubr.bf16.mxu0 %v8147
      %8274 = vmatmul.mubr.bf16.gmra.mxu0 %v7978
      %v8275 = vpop.f32.mrf.mxu0
      %v8276 = vadd.f32 %v8039, %v8275
      %v8277 = vpop.f32.mrf.mxu0
      %v8278 = vpop.f32.mrf.mxu0
      %v8279 = vadd.f32 %v8039, %v8278
      %v8280 = vpop.f32.mrf.mxu0
      %8281 = vmatprep.mubr.bf16.mxu0 %v8149
      %8282 = vmatmul.mubr.bf16.gmra.mxu0 %v7981
      %v8283 = vpop.f32.mrf.mxu0
      %v8284 = vadd.f32 %v8039, %v8283
      %v8285 = vpop.f32.mrf.mxu0
      %v8286 = vpop.f32.mrf.mxu0
      %v8287 = vadd.f32 %v8039, %v8286
      %v8288 = vpop.f32.mrf.mxu0
      %8289 = vmatprep.mubr.bf16.mxu0 %v8151
      %8290 = vmatmul.mubr.bf16.gmra.mxu0 %v7984
      %v8291 = vpop.f32.mrf.mxu0
      %v8292 = vadd.f32 %v8039, %v8291
      %v8293 = vpop.f32.mrf.mxu0
      %v8294 = vpop.f32.mrf.mxu0
      %v8295 = vadd.f32 %v8039, %v8294
      %v8296 = vpop.f32.mrf.mxu0
      %8297 = vdwg.mxu0
      %v8298 = vmax.f32 %v8188, 0.0
      %v8299 = vmax.f32 %v8191, 0.0
      %v8300 = vmax.f32 %v8196, 0.0
      %v8301 = vmax.f32 %v8199, 0.0
      %v8302 = vmax.f32 %v8204, 0.0
      %v8303 = vmax.f32 %v8207, 0.0
      %v8304 = vmax.f32 %v8212, 0.0
      %v8305 = vmax.f32 %v8215, 0.0
      %v8306 = vmax.f32 %v8220, 0.0
      %v8307 = vmax.f32 %v8223, 0.0
      %v8308 = vmax.f32 %v8228, 0.0
      %v8309 = vmax.f32 %v8231, 0.0
      %v8310 = vmax.f32 %v8236, 0.0
      %v8311 = vmax.f32 %v8239, 0.0
      %v8312 = vmax.f32 %v8244, 0.0
      %v8313 = vmax.f32 %v8247, 0.0
      %v8314 = vmax.f32 %v8252, 0.0
      %v8315 = vmax.f32 %v8255, 0.0
      %v8316 = vmax.f32 %v8260, 0.0
      %v8317 = vmax.f32 %v8263, 0.0
      %v8318 = vmax.f32 %v8268, 0.0
      %v8319 = vmax.f32 %v8271, 0.0
      %v8320 = vmax.f32 %v8276, 0.0
      %v8321 = vmax.f32 %v8279, 0.0
      %v8322 = vmax.f32 %v8284, 0.0
      %v8323 = vmax.f32 %v8287, 0.0
      %v8324 = vmax.f32 %v8292, 0.0
      %v8325 = vmax.f32 %v8295, 0.0
      %v8326 = vmul.f32 %v8298, %v1722
      %v8327 = vmul.f32 %v8299, %v1727
      %v8328 = vmul.f32 %v8300, %v1732
      %v8329 = vmul.f32 %v8301, %v1737
      %v8330 = vmul.f32 %v8302, %v1742
      %v8331 = vmul.f32 %v8303, %v1747
      %v8332 = vmul.f32 %v8304, %v1752
      %v8333 = vmul.f32 %v8305, %v1757
      %v8334 = vmul.f32 %v8306, %v1762
      %v8335 = vmul.f32 %v8307, %v1767
      %v8336 = vmul.f32 %v8308, %v1772
      %v8337 = vmul.f32 %v8309, %v1777
      %v8338 = vmul.f32 %v8310, %v1782
      %v8339 = vmul.f32 %v8311, %v1787
      %v8340 = vmul.f32 %v8312, %v1792
      %v8341 = vmul.f32 %v8313, %v1797
      %v8342 = vmul.f32 %v8314, %v1802
      %v8343 = vmul.f32 %v8315, %v1807
      %v8344 = vmul.f32 %v8316, %v1812
      %v8345 = vmul.f32 %v8317, %v1817
      %v8346 = vmul.f32 %v8318, %v1822
      %v8347 = vmul.f32 %v8319, %v1827
      %v8348 = vmul.f32 %v8320, %v1832
      %v8349 = vmul.f32 %v8321, %v1837
      %v8350 = vmul.f32 %v8322, %v1842
      %v8351 = vmul.f32 %v8323, %v1847
      %v8352 = vmul.f32 %v8324, %v1852
      %v8353 = vmul.f32 %v8325, %v1857
      %v8354 = vpack.c.bf16 %v8327, %v8326
      %v8355 = vpack.c.bf16 %v8329, %v8328
      %v8356 = vpack.c.bf16 %v8331, %v8330
      %v8357 = vpack.c.bf16 %v8333, %v8332
      %v8358 = vpack.c.bf16 %v8335, %v8334
      %v8359 = vpack.c.bf16 %v8337, %v8336
      %v8360 = vpack.c.bf16 %v8339, %v8338
      %v8361 = vpack.c.bf16 %v8341, %v8340
      %v8362 = vpack.c.bf16 %v8343, %v8342
      %v8363 = vpack.c.bf16 %v8345, %v8344
      %v8364 = vpack.c.bf16 %v8347, %v8346
      %v8365 = vpack.c.bf16 %v8349, %v8348
      %v8366 = vpack.c.bf16 %v8351, %v8350
      %v8367 = vpack.c.bf16 %v8353, %v8352
      %v8382 = vunpack.c.l.b16 %v8354
      %v8383 = vunpack.c.h.b16 %v8354
      %v8384 = vunpack.c.l.b16 %v8355
      %v8385 = vunpack.c.h.b16 %v8355
      %v8386 = vunpack.c.l.b16 %v8356
      %v8387 = vunpack.c.h.b16 %v8356
      %v8388 = vunpack.c.l.b16 %v8357
      %v8389 = vunpack.c.h.b16 %v8357
      %v8390 = vunpack.c.l.b16 %v8358
      %v8391 = vunpack.c.h.b16 %v8358
      %v8392 = vunpack.c.l.b16 %v8359
      %v8393 = vunpack.c.h.b16 %v8359
      %v8394 = vunpack.c.l.b16 %v8360
      %v8395 = vunpack.c.h.b16 %v8360
      %v8396 = vunpack.c.l.b16 %v8361
      %v8397 = vunpack.c.h.b16 %v8361
      %v8398 = vunpack.c.l.b16 %v8362
      %v8399 = vunpack.c.h.b16 %v8362
      %v8400 = vunpack.c.l.b16 %v8363
      %v8401 = vunpack.c.h.b16 %v8363
      %v8402 = vunpack.c.l.b16 %v8364
      %v8403 = vunpack.c.h.b16 %v8364
      %v8404 = vunpack.c.l.b16 %v8365
      %v8405 = vunpack.c.h.b16 %v8365
      %v8406 = vunpack.c.l.b16 %v8366
      %v8407 = vunpack.c.h.b16 %v8366
      %v8408 = vunpack.c.l.b16 %v8367
      %v8409 = vunpack.c.h.b16 %v8367
      %v8410 = vpack.c.b16 %v8382, %v8382
      %v8411 = vpack.c.b16 %v8383, %v8383
      %v8412 = vpack.c.b16 %v8384, %v8384
      %v8413 = vpack.c.b16 %v8385, %v8385
      %v8414 = vpack.c.b16 %v8386, %v8386
      %v8415 = vpack.c.b16 %v8387, %v8387
      %v8416 = vpack.c.b16 %v8388, %v8388
      %v8417 = vpack.c.b16 %v8389, %v8389
      %v8418 = vpack.c.b16 %v8390, %v8390
      %v8419 = vpack.c.b16 %v8391, %v8391
      %v8420 = vpack.c.b16 %v8392, %v8392
      %v8421 = vpack.c.b16 %v8393, %v8393
      %v8422 = vpack.c.b16 %v8394, %v8394
      %v8423 = vpack.c.b16 %v8395, %v8395
      %v8424 = vpack.c.b16 %v8396, %v8396
      %v8425 = vpack.c.b16 %v8397, %v8397
      %v8426 = vpack.c.b16 %v8398, %v8398
      %v8427 = vpack.c.b16 %v8399, %v8399
      %v8428 = vpack.c.b16 %v8400, %v8400
      %v8429 = vpack.c.b16 %v8401, %v8401
      %v8430 = vpack.c.b16 %v8402, %v8402
      %v8431 = vpack.c.b16 %v8403, %v8403
      %v8432 = vpack.c.b16 %v8404, %v8404
      %v8433 = vpack.c.b16 %v8405, %v8405
      %v8434 = vpack.c.b16 %v8406, %v8406
      %v8435 = vpack.c.b16 %v8407, %v8407
      %v8436 = vpack.c.b16 %v8408, %v8408
      %v8437 = vpack.c.b16 %v8409, %v8409
      %8466 = vst.msk [vmem:[#allocation3 + $0x18] sm:$0xf] %vm713, %v8410
      %8467 = vst.msk [vmem:[#allocation3 + $0x1c] sm:$0xf] %vm713, %v8411
      %8468 = vst.msk [vmem:[#allocation3 + $0x20] sm:$0xf] %vm713, %v8412
      %8469 = vst.msk [vmem:[#allocation3 + $0x24] sm:$0xf] %vm713, %v8413
      %8470 = vst.msk [vmem:[#allocation3 + $0x28] sm:$0xf] %vm713, %v8414
      %8471 = vst.msk [vmem:[#allocation3 + $0x2c] sm:$0xf] %vm713, %v8415
      %8472 = vst.msk [vmem:[#allocation3 + $0x30] sm:$0xf] %vm713, %v8416
      %8473 = vst.msk [vmem:[#allocation3 + $0x34] sm:$0xf] %vm713, %v8417
      %8474 = vst.msk [vmem:[#allocation3 + $0x38] sm:$0xf] %vm713, %v8418
      %8475 = vst.msk [vmem:[#allocation3 + $0x3c] sm:$0xf] %vm713, %v8419
      %8476 = vst.msk [vmem:[#allocation3 + $0x40] sm:$0xf] %vm713, %v8420
      %8477 = vst.msk [vmem:[#allocation3 + $0x44] sm:$0xf] %vm713, %v8421
      %8478 = vst.msk [vmem:[#allocation3 + $0x48] sm:$0xf] %vm713, %v8422
      %8479 = vst.msk [vmem:[#allocation3 + $0x4c] sm:$0xf] %vm713, %v8423
      %8480 = vst.msk [vmem:[#allocation3 + $0x50] sm:$0xf] %vm713, %v8424
      %8481 = vst.msk [vmem:[#allocation3 + $0x54] sm:$0xf] %vm713, %v8425
      %8482 = vst.msk [vmem:[#allocation3 + $0x58] sm:$0xf] %vm713, %v8426
      %8483 = vst.msk [vmem:[#allocation3 + $0x5c] sm:$0xf] %vm713, %v8427
      %8484 = vst.msk [vmem:[#allocation3 + $0x60] sm:$0xf] %vm713, %v8428
      %8485 = vst.msk [vmem:[#allocation3 + $0x64] sm:$0xf] %vm713, %v8429
      %8486 = vst.msk [vmem:[#allocation3 + $0x68] sm:$0xf] %vm713, %v8430
      %8487 = vst.msk [vmem:[#allocation3 + $0x6c] sm:$0xf] %vm713, %v8431
      %8488 = vst.msk [vmem:[#allocation3 + $0x70] sm:$0xf] %vm713, %v8432
      %8489 = vst.msk [vmem:[#allocation3 + $0x74] sm:$0xf] %vm713, %v8433
      %8490 = vst.msk [vmem:[#allocation3 + $0x78] sm:$0xf] %vm713, %v8434
      %8491 = vst.msk [vmem:[#allocation3 + $0x7c] sm:$0xf] %vm713, %v8435
      %8492 = vst.msk [vmem:[#allocation3 + $0x80] sm:$0xf] %vm713, %v8436
      %8493 = vst.msk [vmem:[#allocation3 + $0x84] sm:$0xf] %vm713, %v8437
      %v8494 = vld [vmem:[#allocation3 + $0x14] sm:$0xc]
      %v8495 = vld [vmem:[#allocation3 + $0x18] sm:$0xf]
      %v8496 = vld [vmem:[#allocation3 + $0x1c] sm:$0xf]
      %v8497 = vld [vmem:[#allocation3 + $0x20] sm:$0xf]
      %v8498 = vld [vmem:[#allocation3 + $0x24] sm:$0xf]
      %v8499 = vld [vmem:[#allocation3 + $0x28] sm:$0xf]
      %v8500 = vld [vmem:[#allocation3 + $0x2c] sm:$0xf]
      %v8501 = vld [vmem:[#allocation3 + $0x30] sm:$0xf]
      %v8502 = vld [vmem:[#allocation3 + $0x34] sm:$0xf]
      %v8503 = vld [vmem:[#allocation3 + $0x38] sm:$0xf]
      %v8504 = vld [vmem:[#allocation3 + $0x3c] sm:$0xf]
      %v8505 = vld [vmem:[#allocation3 + $0x40] sm:$0xf]
      %v8506 = vld [vmem:[#allocation3 + $0x44] sm:$0xf]
      %v8507 = vld [vmem:[#allocation3 + $0x48] sm:$0xf]
      %v8508 = vld [vmem:[#allocation3 + $0x4c] sm:$0xf]
      %v8509 = vld [vmem:[#allocation3 + $0x50] sm:$0xf]
      %v8510 = vld [vmem:[#allocation3 + $0x54] sm:$0xf]
      %v8511 = vld [vmem:[#allocation3 + $0x58] sm:$0xf]
      %v8512 = vld [vmem:[#allocation3 + $0x5c] sm:$0xf]
      %v8513 = vld [vmem:[#allocation3 + $0x60] sm:$0xf]
      %v8514 = vld [vmem:[#allocation3 + $0x64] sm:$0xf]
      %v8515 = vld [vmem:[#allocation3 + $0x68] sm:$0xf]
      %v8516 = vld [vmem:[#allocation3 + $0x6c] sm:$0xf]
      %v8517 = vld [vmem:[#allocation3 + $0x70] sm:$0xf]
      %v8518 = vld [vmem:[#allocation3 + $0x74] sm:$0xf]
      %v8519 = vld [vmem:[#allocation3 + $0x78] sm:$0xf]
      %v8520 = vld [vmem:[#allocation3 + $0x7c] sm:$0xf]
      %v8521 = vld [vmem:[#allocation3 + $0x80] sm:$0xf]
      %v8522 = vld [vmem:[#allocation3 + $0x84] sm:$0x7]
      %v8523 = vld [vmem:[#allocation3 + $0x14] sm:$0x8]
      %v8524 = vld [vmem:[#allocation3 + $0x84] sm:$0xf]
      %v8525 = vld [vmem:[#allocation3 + $0x88] sm:$0x1]
      %v8526 = vld [vmem:[#allocation3 + $0x18] sm:$0xe]
      %v8527 = vld [vmem:[#allocation3 + $0x88] sm:$0x3]
      %v8557 = vunpack.c.l.b16 %v8494
      %v8558 = vunpack.c.l.b16 %v8495
      %v8559 = vunpack.c.l.b16 %v8496
      %v8560 = vunpack.c.l.b16 %v8497
      %v8561 = vunpack.c.l.b16 %v8498
      %v8562 = vunpack.c.l.b16 %v8499
      %v8563 = vunpack.c.l.b16 %v8500
      %v8564 = vunpack.c.l.b16 %v8501
      %v8565 = vunpack.c.l.b16 %v8502
      %v8566 = vunpack.c.l.b16 %v8503
      %v8567 = vunpack.c.l.b16 %v8504
      %v8568 = vunpack.c.l.b16 %v8505
      %v8569 = vunpack.c.l.b16 %v8506
      %v8570 = vunpack.c.l.b16 %v8507
      %v8571 = vunpack.c.l.b16 %v8508
      %v8572 = vunpack.c.l.b16 %v8509
      %v8573 = vunpack.c.l.b16 %v8510
      %v8574 = vunpack.c.l.b16 %v8511
      %v8575 = vunpack.c.l.b16 %v8512
      %v8576 = vunpack.c.l.b16 %v8513
      %v8577 = vunpack.c.l.b16 %v8514
      %v8578 = vunpack.c.l.b16 %v8515
      %v8579 = vunpack.c.l.b16 %v8516
      %v8580 = vunpack.c.l.b16 %v8517
      %v8581 = vunpack.c.l.b16 %v8518
      %v8582 = vunpack.c.l.b16 %v8519
      %v8583 = vunpack.c.l.b16 %v8520
      %v8584 = vunpack.c.l.b16 %v8521
      %v8585 = vunpack.c.l.b16 %v8522
      %v8586 = vpack.c.b16 %v8558, %v8557
      %v8587 = vpack.c.b16 %v8560, %v8559
      %v8588 = vpack.c.b16 %v8562, %v8561
      %v8589 = vpack.c.b16 %v8564, %v8563
      %v8590 = vpack.c.b16 %v8566, %v8565
      %v8591 = vpack.c.b16 %v8568, %v8567
      %v8592 = vpack.c.b16 %v8570, %v8569
      %v8593 = vpack.c.b16 %v8572, %v8571
      %v8594 = vpack.c.b16 %v8574, %v8573
      %v8595 = vpack.c.b16 %v8576, %v8575
      %v8596 = vpack.c.b16 %v8578, %v8577
      %v8597 = vpack.c.b16 %v8580, %v8579
      %v8598 = vpack.c.b16 %v8582, %v8581
      %v8599 = vpack.c.b16 %v8584, %v8583
      %v8600 = vpack.c.b16 %v8585, %v8585
      %v8602 = vunpack.c.l.b16 %v8523
      %v8603 = vpack.c.b16 %v8558, %v8602
      %v8605 = vshrl.u32 %v8603, 16
      %v8607 = vshll.u32 %v8603, 16
      %v8609 = vrot.slane %v8607, 1
      %v8610 = vor.u32 %v8605, %v8609
      %v8612 = vshll.u32 %v8587, 16
      %v8614 = vrot.slane %v8612, 1
      %v8615 = vsel %vm2137, %v8610, %v8614
      %v8616 = vshrl.u32 %v8587, 16
      %v8618 = vor.u32 %v8616, %v8614
      %v8620 = vshll.u32 %v8588, 16
      %v8622 = vrot.slane %v8620, 1
      %v8623 = vsel %vm2137, %v8618, %v8622
      %v8624 = vshrl.u32 %v8588, 16
      %v8626 = vor.u32 %v8624, %v8622
      %v8628 = vshll.u32 %v8589, 16
      %v8630 = vrot.slane %v8628, 1
      %v8631 = vsel %vm2137, %v8626, %v8630
      %v8632 = vshrl.u32 %v8589, 16
      %v8634 = vor.u32 %v8632, %v8630
      %v8636 = vshll.u32 %v8590, 16
      %v8638 = vrot.slane %v8636, 1
      %v8639 = vsel %vm2137, %v8634, %v8638
      %v8640 = vshrl.u32 %v8590, 16
      %v8642 = vor.u32 %v8640, %v8638
      %v8644 = vshll.u32 %v8591, 16
      %v8646 = vrot.slane %v8644, 1
      %v8647 = vsel %vm2137, %v8642, %v8646
      %v8648 = vshrl.u32 %v8591, 16
      %v8650 = vor.u32 %v8648, %v8646
      %v8652 = vshll.u32 %v8592, 16
      %v8654 = vrot.slane %v8652, 1
      %v8655 = vsel %vm2137, %v8650, %v8654
      %v8656 = vshrl.u32 %v8592, 16
      %v8658 = vor.u32 %v8656, %v8654
      %v8660 = vshll.u32 %v8593, 16
      %v8662 = vrot.slane %v8660, 1
      %v8663 = vsel %vm2137, %v8658, %v8662
      %v8664 = vshrl.u32 %v8593, 16
      %v8666 = vor.u32 %v8664, %v8662
      %v8668 = vshll.u32 %v8594, 16
      %v8670 = vrot.slane %v8668, 1
      %v8671 = vsel %vm2137, %v8666, %v8670
      %v8672 = vshrl.u32 %v8594, 16
      %v8674 = vor.u32 %v8672, %v8670
      %v8676 = vshll.u32 %v8595, 16
      %v8678 = vrot.slane %v8676, 1
      %v8679 = vsel %vm2137, %v8674, %v8678
      %v8680 = vshrl.u32 %v8595, 16
      %v8682 = vor.u32 %v8680, %v8678
      %v8684 = vshll.u32 %v8596, 16
      %v8686 = vrot.slane %v8684, 1
      %v8687 = vsel %vm2137, %v8682, %v8686
      %v8688 = vshrl.u32 %v8596, 16
      %v8690 = vor.u32 %v8688, %v8686
      %v8692 = vshll.u32 %v8597, 16
      %v8694 = vrot.slane %v8692, 1
      %v8695 = vsel %vm2137, %v8690, %v8694
      %v8696 = vshrl.u32 %v8597, 16
      %v8698 = vor.u32 %v8696, %v8694
      %v8700 = vshll.u32 %v8598, 16
      %v8702 = vrot.slane %v8700, 1
      %v8703 = vsel %vm2137, %v8698, %v8702
      %v8704 = vshrl.u32 %v8598, 16
      %v8706 = vor.u32 %v8704, %v8702
      %v8708 = vshll.u32 %v8599, 16
      %v8710 = vrot.slane %v8708, 1
      %v8711 = vsel %vm2137, %v8706, %v8710
      %v8712 = vshrl.u32 %v8599, 16
      %v8714 = vor.u32 %v8712, %v8710
      %v8716 = vshll.u32 %v8600, 16
      %v8718 = vrot.slane %v8716, 1
      %v8719 = vsel %vm2137, %v8714, %v8718
      %v8720 = vshrl.u32 %v8600, 16
      %v8722 = vor.u32 %v8720, %v8718
      %8723 = vrot.lane.b32.xlu0 %v8615, 32
      %v8724 = vpop.permute.xlu0 %8723
      %8725 = vrot.lane.b32.xlu0 %v8623, 32
      %v8726 = vpop.permute.xlu0 %8725
      %8727 = vrot.lane.b32.xlu0 %v8631, 32
      %v8728 = vpop.permute.xlu0 %8727
      %8729 = vrot.lane.b32.xlu0 %v8639, 32
      %v8730 = vpop.permute.xlu0 %8729
      %8731 = vrot.lane.b32.xlu0 %v8647, 32
      %v8732 = vpop.permute.xlu0 %8731
      %8733 = vrot.lane.b32.xlu0 %v8655, 32
      %v8734 = vpop.permute.xlu0 %8733
      %8735 = vrot.lane.b32.xlu0 %v8663, 32
      %v8736 = vpop.permute.xlu0 %8735
      %8737 = vrot.lane.b32.xlu0 %v8671, 32
      %v8738 = vpop.permute.xlu0 %8737
      %8739 = vrot.lane.b32.xlu0 %v8679, 32
      %v8740 = vpop.permute.xlu0 %8739
      %8741 = vrot.lane.b32.xlu0 %v8687, 32
      %v8742 = vpop.permute.xlu0 %8741
      %8743 = vrot.lane.b32.xlu0 %v8695, 32
      %v8744 = vpop.permute.xlu0 %8743
      %8745 = vrot.lane.b32.xlu0 %v8703, 32
      %v8746 = vpop.permute.xlu0 %8745
      %8747 = vrot.lane.b32.xlu0 %v8711, 32
      %v8748 = vpop.permute.xlu0 %8747
      %8749 = vrot.lane.b32.xlu0 %v8719, 32
      %v8750 = vpop.permute.xlu0 %8749
      %8751 = vrot.lane.b32.xlu0 %v8722, 32
      %v8752 = vpop.permute.xlu0 %8751
      %v8754 = vunpack.c.l.b16 %v8524
      %v8755 = vpack.c.b16 %v8754, %v8754
      %v8756 = vrot.slane %v8603, 1
      %v8757 = vrot.slane %v8587, 1
      %v8758 = vsel %vm2290, %v8756, %v8757
      %v8759 = vrot.slane %v8588, 1
      %v8760 = vsel %vm2290, %v8757, %v8759
      %v8761 = vrot.slane %v8589, 1
      %v8762 = vsel %vm2290, %v8759, %v8761
      %v8763 = vrot.slane %v8590, 1
      %v8764 = vsel %vm2290, %v8761, %v8763
      %v8765 = vrot.slane %v8591, 1
      %v8766 = vsel %vm2290, %v8763, %v8765
      %v8767 = vrot.slane %v8592, 1
      %v8768 = vsel %vm2290, %v8765, %v8767
      %v8769 = vrot.slane %v8593, 1
      %v8770 = vsel %vm2290, %v8767, %v8769
      %v8771 = vrot.slane %v8594, 1
      %v8772 = vsel %vm2290, %v8769, %v8771
      %v8773 = vrot.slane %v8595, 1
      %v8774 = vsel %vm2290, %v8771, %v8773
      %v8775 = vrot.slane %v8596, 1
      %v8776 = vsel %vm2290, %v8773, %v8775
      %v8777 = vrot.slane %v8597, 1
      %v8778 = vsel %vm2290, %v8775, %v8777
      %v8779 = vrot.slane %v8598, 1
      %v8780 = vsel %vm2290, %v8777, %v8779
      %v8781 = vrot.slane %v8599, 1
      %v8782 = vsel %vm2290, %v8779, %v8781
      %v8783 = vrot.slane %v8755, 1
      %v8784 = vsel %vm2290, %v8781, %v8783
      %8785 = vrot.lane.b32.xlu0 %v8758, 64
      %v8786 = vpop.permute.xlu0 %8785
      %8787 = vrot.lane.b32.xlu0 %v8760, 64
      %v8788 = vpop.permute.xlu0 %8787
      %8789 = vrot.lane.b32.xlu0 %v8762, 64
      %v8790 = vpop.permute.xlu0 %8789
      %8791 = vrot.lane.b32.xlu0 %v8764, 64
      %v8792 = vpop.permute.xlu0 %8791
      %8793 = vrot.lane.b32.xlu0 %v8766, 64
      %v8794 = vpop.permute.xlu0 %8793
      %8795 = vrot.lane.b32.xlu0 %v8768, 64
      %v8796 = vpop.permute.xlu0 %8795
      %8797 = vrot.lane.b32.xlu0 %v8770, 64
      %v8798 = vpop.permute.xlu0 %8797
      %8799 = vrot.lane.b32.xlu0 %v8772, 64
      %v8800 = vpop.permute.xlu0 %8799
      %8801 = vrot.lane.b32.xlu0 %v8774, 64
      %v8802 = vpop.permute.xlu0 %8801
      %8803 = vrot.lane.b32.xlu0 %v8776, 64
      %v8804 = vpop.permute.xlu0 %8803
      %8805 = vrot.lane.b32.xlu0 %v8778, 64
      %v8806 = vpop.permute.xlu0 %8805
      %8807 = vrot.lane.b32.xlu0 %v8780, 64
      %v8808 = vpop.permute.xlu0 %8807
      %8809 = vrot.lane.b32.xlu0 %v8782, 64
      %v8810 = vpop.permute.xlu0 %8809
      %8811 = vrot.lane.b32.xlu0 %v8784, 64
      %v8812 = vpop.permute.xlu0 %8811
      %8813 = vrot.lane.b32.xlu0 %v8783, 64
      %v8814 = vpop.permute.xlu0 %8813
      %v8815 = vpack.c.b16 %v8559, %v8558
      %v8816 = vpack.c.b16 %v8561, %v8560
      %v8817 = vpack.c.b16 %v8563, %v8562
      %v8818 = vpack.c.b16 %v8565, %v8564
      %v8819 = vpack.c.b16 %v8567, %v8566
      %v8820 = vpack.c.b16 %v8569, %v8568
      %v8821 = vpack.c.b16 %v8571, %v8570
      %v8822 = vpack.c.b16 %v8573, %v8572
      %v8823 = vpack.c.b16 %v8575, %v8574
      %v8824 = vpack.c.b16 %v8577, %v8576
      %v8825 = vpack.c.b16 %v8579, %v8578
      %v8826 = vpack.c.b16 %v8581, %v8580
      %v8827 = vpack.c.b16 %v8583, %v8582
      %v8828 = vpack.c.b16 %v8754, %v8584
      %v8830 = vshrl.u32 %v8815, 16
      %v8832 = vrot.slane %v8830, 5
      %v8833 = vshll.u32 %v8815, 16
      %v8835 = vrot.slane %v8833, 6
      %v8836 = vor.u32 %v8832, %v8835
      %v8838 = vshrl.u32 %v8816, 16
      %v8840 = vrot.slane %v8838, 5
      %v8841 = vshll.u32 %v8816, 16
      %v8843 = vrot.slane %v8841, 6
      %v8844 = vor.u32 %v8840, %v8843
      %v8845 = vsel %vm2364, %v8836, %v8844
      %v8847 = vshrl.u32 %v8817, 16
      %v8849 = vrot.slane %v8847, 5
      %v8850 = vshll.u32 %v8817, 16
      %v8852 = vrot.slane %v8850, 6
      %v8853 = vor.u32 %v8849, %v8852
      %v8854 = vsel %vm2364, %v8844, %v8853
      %v8856 = vshrl.u32 %v8818, 16
      %v8858 = vrot.slane %v8856, 5
      %v8859 = vshll.u32 %v8818, 16
      %v8861 = vrot.slane %v8859, 6
      %v8862 = vor.u32 %v8858, %v8861
      %v8863 = vsel %vm2364, %v8853, %v8862
      %v8865 = vshrl.u32 %v8819, 16
      %v8867 = vrot.slane %v8865, 5
      %v8868 = vshll.u32 %v8819, 16
      %v8870 = vrot.slane %v8868, 6
      %v8871 = vor.u32 %v8867, %v8870
      %v8872 = vsel %vm2364, %v8862, %v8871
      %v8874 = vshrl.u32 %v8820, 16
      %v8876 = vrot.slane %v8874, 5
      %v8877 = vshll.u32 %v8820, 16
      %v8879 = vrot.slane %v8877, 6
      %v8880 = vor.u32 %v8876, %v8879
      %v8881 = vsel %vm2364, %v8871, %v8880
      %v8883 = vshrl.u32 %v8821, 16
      %v8885 = vrot.slane %v8883, 5
      %v8886 = vshll.u32 %v8821, 16
      %v8888 = vrot.slane %v8886, 6
      %v8889 = vor.u32 %v8885, %v8888
      %v8890 = vsel %vm2364, %v8880, %v8889
      %v8892 = vshrl.u32 %v8822, 16
      %v8894 = vrot.slane %v8892, 5
      %v8895 = vshll.u32 %v8822, 16
      %v8897 = vrot.slane %v8895, 6
      %v8898 = vor.u32 %v8894, %v8897
      %v8899 = vsel %vm2364, %v8889, %v8898
      %v8901 = vshrl.u32 %v8823, 16
      %v8903 = vrot.slane %v8901, 5
      %v8904 = vshll.u32 %v8823, 16
      %v8906 = vrot.slane %v8904, 6
      %v8907 = vor.u32 %v8903, %v8906
      %v8908 = vsel %vm2364, %v8898, %v8907
      %v8910 = vshrl.u32 %v8824, 16
      %v8912 = vrot.slane %v8910, 5
      %v8913 = vshll.u32 %v8824, 16
      %v8915 = vrot.slane %v8913, 6
      %v8916 = vor.u32 %v8912, %v8915
      %v8917 = vsel %vm2364, %v8907, %v8916
      %v8919 = vshrl.u32 %v8825, 16
      %v8921 = vrot.slane %v8919, 5
      %v8922 = vshll.u32 %v8825, 16
      %v8924 = vrot.slane %v8922, 6
      %v8925 = vor.u32 %v8921, %v8924
      %v8926 = vsel %vm2364, %v8916, %v8925
      %v8928 = vshrl.u32 %v8826, 16
      %v8930 = vrot.slane %v8928, 5
      %v8931 = vshll.u32 %v8826, 16
      %v8933 = vrot.slane %v8931, 6
      %v8934 = vor.u32 %v8930, %v8933
      %v8935 = vsel %vm2364, %v8925, %v8934
      %v8937 = vshrl.u32 %v8827, 16
      %v8939 = vrot.slane %v8937, 5
      %v8940 = vshll.u32 %v8827, 16
      %v8942 = vrot.slane %v8940, 6
      %v8943 = vor.u32 %v8939, %v8942
      %v8944 = vsel %vm2364, %v8934, %v8943
      %v8946 = vshrl.u32 %v8828, 16
      %v8948 = vrot.slane %v8946, 5
      %v8949 = vshll.u32 %v8828, 16
      %v8951 = vrot.slane %v8949, 6
      %v8952 = vor.u32 %v8948, %v8951
      %v8953 = vsel %vm2364, %v8943, %v8952
      %8954 = vrot.lane.b32.xlu0 %v8836, 96
      %v8955 = vpop.permute.xlu0 %8954
      %8956 = vrot.lane.b32.xlu0 %v8845, 96
      %v8957 = vpop.permute.xlu0 %8956
      %8958 = vrot.lane.b32.xlu0 %v8854, 96
      %v8959 = vpop.permute.xlu0 %8958
      %8960 = vrot.lane.b32.xlu0 %v8863, 96
      %v8961 = vpop.permute.xlu0 %8960
      %8962 = vrot.lane.b32.xlu0 %v8872, 96
      %v8963 = vpop.permute.xlu0 %8962
      %8964 = vrot.lane.b32.xlu0 %v8881, 96
      %v8965 = vpop.permute.xlu0 %8964
      %8966 = vrot.lane.b32.xlu0 %v8890, 96
      %v8967 = vpop.permute.xlu0 %8966
      %8968 = vrot.lane.b32.xlu0 %v8899, 96
      %v8969 = vpop.permute.xlu0 %8968
      %8970 = vrot.lane.b32.xlu0 %v8908, 96
      %v8971 = vpop.permute.xlu0 %8970
      %8972 = vrot.lane.b32.xlu0 %v8917, 96
      %v8973 = vpop.permute.xlu0 %8972
      %8974 = vrot.lane.b32.xlu0 %v8926, 96
      %v8975 = vpop.permute.xlu0 %8974
      %8976 = vrot.lane.b32.xlu0 %v8935, 96
      %v8977 = vpop.permute.xlu0 %8976
      %8978 = vrot.lane.b32.xlu0 %v8944, 96
      %v8979 = vpop.permute.xlu0 %8978
      %8980 = vrot.lane.b32.xlu0 %v8953, 96
      %v8981 = vpop.permute.xlu0 %8980
      %8982 = vrot.lane.b32.xlu0 %v8952, 96
      %v8983 = vpop.permute.xlu0 %8982
      %v8985 = vunpack.c.l.b16 %v8525
      %v8986 = vpack.c.b16 %v8985, %v8985
      %v8987 = vrot.slane %v8815, 6
      %v8988 = vrot.slane %v8816, 6
      %v8989 = vsel %vm2523, %v8987, %v8988
      %v8990 = vrot.slane %v8817, 6
      %v8991 = vsel %vm2523, %v8988, %v8990
      %v8992 = vrot.slane %v8818, 6
      %v8993 = vsel %vm2523, %v8990, %v8992
      %v8994 = vrot.slane %v8819, 6
      %v8995 = vsel %vm2523, %v8992, %v8994
      %v8996 = vrot.slane %v8820, 6
      %v8997 = vsel %vm2523, %v8994, %v8996
      %v8998 = vrot.slane %v8821, 6
      %v8999 = vsel %vm2523, %v8996, %v8998
      %v9000 = vrot.slane %v8822, 6
      %v9001 = vsel %vm2523, %v8998, %v9000
      %v9002 = vrot.slane %v8823, 6
      %v9003 = vsel %vm2523, %v9000, %v9002
      %v9004 = vrot.slane %v8824, 6
      %v9005 = vsel %vm2523, %v9002, %v9004
      %v9006 = vrot.slane %v8825, 6
      %v9007 = vsel %vm2523, %v9004, %v9006
      %v9008 = vrot.slane %v8826, 6
      %v9009 = vsel %vm2523, %v9006, %v9008
      %v9010 = vrot.slane %v8827, 6
      %v9011 = vsel %vm2523, %v9008, %v9010
      %v9012 = vrot.slane %v8828, 6
      %v9013 = vsel %vm2523, %v9010, %v9012
      %v9014 = vrot.slane %v8986, 6
      %v9015 = vsel %vm2523, %v9012, %v9014
      %v9017 = vunpack.c.l.b16 %v8526
      %v9018 = vpack.c.b16 %v8559, %v9017
      %v9020 = vshrl.u32 %v9018, 16
      %v9022 = vrot.slane %v9020, 6
      %v9023 = vshll.u32 %v9018, 16
      %v9025 = vrot.slane %v9023, 7
      %v9026 = vor.u32 %v9022, %v9025
      %v9027 = vrot.slane %v8838, 6
      %v9028 = vrot.slane %v8841, 7
      %v9029 = vor.u32 %v9027, %v9028
      %v9030 = vsel %vm2556, %v9026, %v9029
      %v9031 = vrot.slane %v8847, 6
      %v9032 = vrot.slane %v8850, 7
      %v9033 = vor.u32 %v9031, %v9032
      %v9034 = vsel %vm2556, %v9029, %v9033
      %v9035 = vrot.slane %v8856, 6
      %v9036 = vrot.slane %v8859, 7
      %v9037 = vor.u32 %v9035, %v9036
      %v9038 = vsel %vm2556, %v9033, %v9037
      %v9039 = vrot.slane %v8865, 6
      %v9040 = vrot.slane %v8868, 7
      %v9041 = vor.u32 %v9039, %v9040
      %v9042 = vsel %vm2556, %v9037, %v9041
      %v9043 = vrot.slane %v8874, 6
      %v9044 = vrot.slane %v8877, 7
      %v9045 = vor.u32 %v9043, %v9044
      %v9046 = vsel %vm2556, %v9041, %v9045
      %v9047 = vrot.slane %v8883, 6
      %v9048 = vrot.slane %v8886, 7
      %v9049 = vor.u32 %v9047, %v9048
      %v9050 = vsel %vm2556, %v9045, %v9049
      %v9051 = vrot.slane %v8892, 6
      %v9052 = vrot.slane %v8895, 7
      %v9053 = vor.u32 %v9051, %v9052
      %v9054 = vsel %vm2556, %v9049, %v9053
      %v9055 = vrot.slane %v8901, 6
      %v9056 = vrot.slane %v8904, 7
      %v9057 = vor.u32 %v9055, %v9056
      %v9058 = vsel %vm2556, %v9053, %v9057
      %v9059 = vrot.slane %v8910, 6
      %v9060 = vrot.slane %v8913, 7
      %v9061 = vor.u32 %v9059, %v9060
      %v9062 = vsel %vm2556, %v9057, %v9061
      %v9063 = vrot.slane %v8919, 6
      %v9064 = vrot.slane %v8922, 7
      %v9065 = vor.u32 %v9063, %v9064
      %v9066 = vsel %vm2556, %v9061, %v9065
      %v9067 = vrot.slane %v8928, 6
      %v9068 = vrot.slane %v8931, 7
      %v9069 = vor.u32 %v9067, %v9068
      %v9070 = vsel %vm2556, %v9065, %v9069
      %v9071 = vrot.slane %v8937, 6
      %v9072 = vrot.slane %v8940, 7
      %v9073 = vor.u32 %v9071, %v9072
      %v9074 = vsel %vm2556, %v9069, %v9073
      %v9075 = vrot.slane %v8946, 6
      %v9076 = vrot.slane %v8949, 7
      %v9077 = vor.u32 %v9075, %v9076
      %v9078 = vsel %vm2556, %v9073, %v9077
      %v9080 = vshrl.u32 %v8986, 16
      %v9082 = vrot.slane %v9080, 6
      %v9083 = vshll.u32 %v8986, 16
      %v9085 = vrot.slane %v9083, 7
      %v9086 = vor.u32 %v9082, %v9085
      %v9087 = vsel %vm2556, %v9077, %v9086
      %9088 = vrot.lane.b32.xlu0 %v9026, 32
      %v9089 = vpop.permute.xlu0 %9088
      %9090 = vrot.lane.b32.xlu0 %v9030, 32
      %v9091 = vpop.permute.xlu0 %9090
      %9092 = vrot.lane.b32.xlu0 %v9034, 32
      %v9093 = vpop.permute.xlu0 %9092
      %9094 = vrot.lane.b32.xlu0 %v9038, 32
      %v9095 = vpop.permute.xlu0 %9094
      %9096 = vrot.lane.b32.xlu0 %v9042, 32
      %v9097 = vpop.permute.xlu0 %9096
      %9098 = vrot.lane.b32.xlu0 %v9046, 32
      %v9099 = vpop.permute.xlu0 %9098
      %9100 = vrot.lane.b32.xlu0 %v9050, 32
      %v9101 = vpop.permute.xlu0 %9100
      %9102 = vrot.lane.b32.xlu0 %v9054, 32
      %v9103 = vpop.permute.xlu0 %9102
      %9104 = vrot.lane.b32.xlu0 %v9058, 32
      %v9105 = vpop.permute.xlu0 %9104
      %9106 = vrot.lane.b32.xlu0 %v9062, 32
      %v9107 = vpop.permute.xlu0 %9106
      %9108 = vrot.lane.b32.xlu0 %v9066, 32
      %v9109 = vpop.permute.xlu0 %9108
      %9110 = vrot.lane.b32.xlu0 %v9070, 32
      %v9111 = vpop.permute.xlu0 %9110
      %9112 = vrot.lane.b32.xlu0 %v9074, 32
      %v9113 = vpop.permute.xlu0 %9112
      %9114 = vrot.lane.b32.xlu0 %v9078, 32
      %v9115 = vpop.permute.xlu0 %9114
      %9116 = vrot.lane.b32.xlu0 %v9087, 32
      %v9117 = vpop.permute.xlu0 %9116
      %v9119 = vunpack.c.l.b16 %v8527
      %v9120 = vpack.c.b16 %v9119, %v9119
      %v9121 = vrot.slane %v9018, 7
      %v9122 = vrot.slane %v8816, 7
      %v9123 = vsel %vm2659, %v9121, %v9122
      %v9124 = vrot.slane %v8817, 7
      %v9125 = vsel %vm2659, %v9122, %v9124
      %v9126 = vrot.slane %v8818, 7
      %v9127 = vsel %vm2659, %v9124, %v9126
      %v9128 = vrot.slane %v8819, 7
      %v9129 = vsel %vm2659, %v9126, %v9128
      %v9130 = vrot.slane %v8820, 7
      %v9131 = vsel %vm2659, %v9128, %v9130
      %v9132 = vrot.slane %v8821, 7
      %v9133 = vsel %vm2659, %v9130, %v9132
      %v9134 = vrot.slane %v8822, 7
      %v9135 = vsel %vm2659, %v9132, %v9134
      %v9136 = vrot.slane %v8823, 7
      %v9137 = vsel %vm2659, %v9134, %v9136
      %v9138 = vrot.slane %v8824, 7
      %v9139 = vsel %vm2659, %v9136, %v9138
      %v9140 = vrot.slane %v8825, 7
      %v9141 = vsel %vm2659, %v9138, %v9140
      %v9142 = vrot.slane %v8826, 7
      %v9143 = vsel %vm2659, %v9140, %v9142
      %v9144 = vrot.slane %v8827, 7
      %v9145 = vsel %vm2659, %v9142, %v9144
      %v9146 = vrot.slane %v8828, 7
      %v9147 = vsel %vm2659, %v9144, %v9146
      %v9148 = vrot.slane %v9120, 7
      %v9149 = vsel %vm2659, %v9146, %v9148
      %9150 = vrot.lane.b32.xlu0 %v9121, 64
      %v9151 = vpop.permute.xlu0 %9150
      %9152 = vrot.lane.b32.xlu0 %v9123, 64
      %v9153 = vpop.permute.xlu0 %9152
      %9154 = vrot.lane.b32.xlu0 %v9125, 64
      %v9155 = vpop.permute.xlu0 %9154
      %9156 = vrot.lane.b32.xlu0 %v9127, 64
      %v9157 = vpop.permute.xlu0 %9156
      %9158 = vrot.lane.b32.xlu0 %v9129, 64
      %v9159 = vpop.permute.xlu0 %9158
      %9160 = vrot.lane.b32.xlu0 %v9131, 64
      %v9161 = vpop.permute.xlu0 %9160
      %9162 = vrot.lane.b32.xlu0 %v9133, 64
      %v9163 = vpop.permute.xlu0 %9162
      %9164 = vrot.lane.b32.xlu0 %v9135, 64
      %v9165 = vpop.permute.xlu0 %9164
      %9166 = vrot.lane.b32.xlu0 %v9137, 64
      %v9167 = vpop.permute.xlu0 %9166
      %9168 = vrot.lane.b32.xlu0 %v9139, 64
      %v9169 = vpop.permute.xlu0 %9168
      %9170 = vrot.lane.b32.xlu0 %v9141, 64
      %v9171 = vpop.permute.xlu0 %9170
      %9172 = vrot.lane.b32.xlu0 %v9143, 64
      %v9173 = vpop.permute.xlu0 %9172
      %9174 = vrot.lane.b32.xlu0 %v9145, 64
      %v9175 = vpop.permute.xlu0 %9174
      %9176 = vrot.lane.b32.xlu0 %v9147, 64
      %v9177 = vpop.permute.xlu0 %9176
      %9178 = vrot.lane.b32.xlu0 %v9149, 64
      %v9179 = vpop.permute.xlu0 %9178
      %v9182 = vsel %vm2719, %v8586, %v8724
      %v9184 = vsel %vm2719, %v8587, %v8726
      %v9186 = vsel %vm2719, %v8588, %v8728
      %v9188 = vsel %vm2719, %v8589, %v8730
      %v9190 = vsel %vm2719, %v8590, %v8732
      %v9192 = vsel %vm2719, %v8591, %v8734
      %v9194 = vsel %vm2719, %v8592, %v8736
      %v9196 = vsel %vm2719, %v8593, %v8738
      %v9198 = vsel %vm2719, %v8594, %v8740
      %v9200 = vsel %vm2719, %v8595, %v8742
      %v9202 = vsel %vm2719, %v8596, %v8744
      %v9204 = vsel %vm2719, %v8597, %v8746
      %v9206 = vsel %vm2719, %v8598, %v8748
      %v9208 = vsel %vm2719, %v8599, %v8750
      %v9210 = vsel %vm2719, %v8600, %v8752
      %v9212 = vsel %vm896, %v9182, %v8786
      %v9214 = vsel %vm896, %v9184, %v8788
      %v9216 = vsel %vm896, %v9186, %v8790
      %v9218 = vsel %vm896, %v9188, %v8792
      %v9220 = vsel %vm896, %v9190, %v8794
      %v9222 = vsel %vm896, %v9192, %v8796
      %v9224 = vsel %vm896, %v9194, %v8798
      %v9226 = vsel %vm896, %v9196, %v8800
      %v9228 = vsel %vm896, %v9198, %v8802
      %v9230 = vsel %vm896, %v9200, %v8804
      %v9232 = vsel %vm896, %v9202, %v8806
      %v9234 = vsel %vm896, %v9204, %v8808
      %v9236 = vsel %vm896, %v9206, %v8810
      %v9238 = vsel %vm896, %v9208, %v8812
      %v9240 = vsel %vm896, %v9210, %v8814
      %v9242 = vsel %vm2781, %v9212, %v8955
      %v9244 = vsel %vm2781, %v9214, %v8957
      %v9246 = vsel %vm2781, %v9216, %v8959
      %v9248 = vsel %vm2781, %v9218, %v8961
      %v9250 = vsel %vm2781, %v9220, %v8963
      %v9252 = vsel %vm2781, %v9222, %v8965
      %v9254 = vsel %vm2781, %v9224, %v8967
      %v9256 = vsel %vm2781, %v9226, %v8969
      %v9258 = vsel %vm2781, %v9228, %v8971
      %v9260 = vsel %vm2781, %v9230, %v8973
      %v9262 = vsel %vm2781, %v9232, %v8975
      %v9264 = vsel %vm2781, %v9234, %v8977
      %v9266 = vsel %vm2781, %v9236, %v8979
      %v9268 = vsel %vm2781, %v9238, %v8981
      %v9270 = vsel %vm2781, %v9240, %v8983
      %v9273 = vsel %vm2719, %v8987, %v9089
      %v9276 = vsel %vm2719, %v8989, %v9091
      %v9279 = vsel %vm2719, %v8991, %v9093
      %v9282 = vsel %vm2719, %v8993, %v9095
      %v9285 = vsel %vm2719, %v8995, %v9097
      %v9288 = vsel %vm2719, %v8997, %v9099
      %v9291 = vsel %vm2719, %v8999, %v9101
      %v9294 = vsel %vm2719, %v9001, %v9103
      %v9297 = vsel %vm2719, %v9003, %v9105
      %v9300 = vsel %vm2719, %v9005, %v9107
      %v9303 = vsel %vm2719, %v9007, %v9109
      %v9306 = vsel %vm2719, %v9009, %v9111
      %v9309 = vsel %vm2719, %v9011, %v9113
      %v9312 = vsel %vm2719, %v9013, %v9115
      %v9315 = vsel %vm2719, %v9015, %v9117
      %v9317 = vsel %vm896, %v9273, %v9151
      %v9319 = vsel %vm896, %v9276, %v9153
      %v9321 = vsel %vm896, %v9279, %v9155
      %v9323 = vsel %vm896, %v9282, %v9157
      %v9325 = vsel %vm896, %v9285, %v9159
      %v9327 = vsel %vm896, %v9288, %v9161
      %v9329 = vsel %vm896, %v9291, %v9163
      %v9331 = vsel %vm896, %v9294, %v9165
      %v9333 = vsel %vm896, %v9297, %v9167
      %v9335 = vsel %vm896, %v9300, %v9169
      %v9337 = vsel %vm896, %v9303, %v9171
      %v9339 = vsel %vm896, %v9306, %v9173
      %v9341 = vsel %vm896, %v9309, %v9175
      %v9343 = vsel %vm896, %v9312, %v9177
      %v9345 = vsel %vm896, %v9315, %v9179
      %v9346 = vld [vmem:[%s18] sm:$0xff]
      %v9347 = vld [vmem:[%s18 + $0x8] sm:$0xff]
      %v9348 = vld [vmem:[%s18 + $0x10] sm:$0xff]
      %v9349 = vld [vmem:[%s18 + $0x18] sm:$0xff]
      %v9350 = vld [vmem:[%s18 + $0x20] sm:$0xff]
      %v9351 = vld [vmem:[%s18 + $0x28] sm:$0xff]
      %v9352 = vld [vmem:[%s18 + $0x30] sm:$0xff]
      %v9353 = vld [vmem:[%s18 + $0x38] sm:$0xff]
      %v9354 = vld [vmem:[%s18 + $0x40] sm:$0xff]
      %v9355 = vld [vmem:[%s18 + $0x48] sm:$0xff]
      %v9356 = vld [vmem:[%s18 + $0x50] sm:$0xff]
      %v9357 = vld [vmem:[%s18 + $0x58] sm:$0xff]
      %v9358 = vld [vmem:[%s18 + $0x60] sm:$0xff]
      %v9359 = vld [vmem:[%s18 + $0x68] sm:$0xff]
      %v9360 = vld [vmem:[%s18 + $0x70] sm:$0xff]
      %v9361 = vld [vmem:[%s18 + $0x78] sm:$0xff]
      %v9362 = vld [vmem:[%s18 + $0x80] sm:$0xff]
      %v9363 = vld [vmem:[%s18 + $0x88] sm:$0xff]
      %v9364 = vld [vmem:[%s18 + $0x90] sm:$0xff]
      %v9365 = vld [vmem:[%s18 + $0x98] sm:$0xff]
      %v9366 = vld [vmem:[%s18 + $0xa0] sm:$0xff]
      %v9367 = vld [vmem:[%s18 + $0xa8] sm:$0xff]
      %v9368 = vld [vmem:[%s18 + $0xb0] sm:$0xff]
      %v9369 = vld [vmem:[%s18 + $0xb8] sm:$0xff]
      %v9370 = vld [vmem:[%s18 + $0xc0] sm:$0xff]
      %v9371 = vld [vmem:[%s18 + $0xc8] sm:$0xff]
      %v9372 = vld [vmem:[%s18 + $0xd0] sm:$0xff]
      %v9373 = vld [vmem:[%s18 + $0xd8] sm:$0xff]
      %v9374 = vld [vmem:[%s19] sm:$0x3]
      %v9376 = vlaneseq
      %v9377 = vshrl.u32 %v9376, 7
      %v9378 = vsub.s32 0, %v9377
      %v9379 = vrot.slane %v9374, %v9378
      %v9380 = vlaneseq
      %v9381 = vshrl.u32 %v9380, 7
      %v9382 = vsub.s32 1, %v9381
      %v9383 = vrot.slane %v9374, %v9382
      %v9386 = vshrl.u32 %v9242, 16
      %v9388 = vrot.slane %v9386, 2
      %v9389 = vshll.u32 %v9242, 16
      %v9391 = vrot.slane %v9389, 3
      %v9392 = vor.u32 %v9388, %v9391
      %v9393 = vshrl.u32 %v9244, 16
      %v9395 = vrot.slane %v9393, 2
      %v9396 = vshll.u32 %v9244, 16
      %v9398 = vrot.slane %v9396, 3
      %v9399 = vor.u32 %v9395, %v9398
      %v9400 = vsel %vm2922, %v9392, %v9399
      %v9401 = vshrl.u32 %v9317, 16
      %v9403 = vrot.slane %v9401, 2
      %v9404 = vshll.u32 %v9317, 16
      %v9406 = vrot.slane %v9404, 3
      %v9407 = vor.u32 %v9403, %v9406
      %v9408 = vshrl.u32 %v9319, 16
      %v9410 = vrot.slane %v9408, 2
      %v9411 = vshll.u32 %v9319, 16
      %v9413 = vrot.slane %v9411, 3
      %v9414 = vor.u32 %v9410, %v9413
      %v9415 = vsel %vm2922, %v9407, %v9414
      %v9416 = vshrl.u32 %v9246, 16
      %v9418 = vrot.slane %v9416, 2
      %v9419 = vshll.u32 %v9246, 16
      %v9421 = vrot.slane %v9419, 3
      %v9422 = vor.u32 %v9418, %v9421
      %v9423 = vsel %vm2922, %v9399, %v9422
      %v9424 = vshrl.u32 %v9321, 16
      %v9426 = vrot.slane %v9424, 2
      %v9427 = vshll.u32 %v9321, 16
      %v9429 = vrot.slane %v9427, 3
      %v9430 = vor.u32 %v9426, %v9429
      %v9431 = vsel %vm2922, %v9414, %v9430
      %v9432 = vshrl.u32 %v9248, 16
      %v9434 = vrot.slane %v9432, 2
      %v9435 = vshll.u32 %v9248, 16
      %v9437 = vrot.slane %v9435, 3
      %v9438 = vor.u32 %v9434, %v9437
      %v9439 = vsel %vm2922, %v9422, %v9438
      %v9440 = vshrl.u32 %v9323, 16
      %v9442 = vrot.slane %v9440, 2
      %v9443 = vshll.u32 %v9323, 16
      %v9445 = vrot.slane %v9443, 3
      %v9446 = vor.u32 %v9442, %v9445
      %v9447 = vsel %vm2922, %v9430, %v9446
      %v9448 = vshrl.u32 %v9250, 16
      %v9450 = vrot.slane %v9448, 2
      %v9451 = vshll.u32 %v9250, 16
      %v9453 = vrot.slane %v9451, 3
      %v9454 = vor.u32 %v9450, %v9453
      %v9455 = vsel %vm2922, %v9438, %v9454
      %v9456 = vshrl.u32 %v9325, 16
      %v9458 = vrot.slane %v9456, 2
      %v9459 = vshll.u32 %v9325, 16
      %v9461 = vrot.slane %v9459, 3
      %v9462 = vor.u32 %v9458, %v9461
      %v9463 = vsel %vm2922, %v9446, %v9462
      %v9464 = vshrl.u32 %v9252, 16
      %v9466 = vrot.slane %v9464, 2
      %v9467 = vshll.u32 %v9252, 16
      %v9469 = vrot.slane %v9467, 3
      %v9470 = vor.u32 %v9466, %v9469
      %v9471 = vsel %vm2922, %v9454, %v9470
      %v9472 = vshrl.u32 %v9327, 16
      %v9474 = vrot.slane %v9472, 2
      %v9475 = vshll.u32 %v9327, 16
      %v9477 = vrot.slane %v9475, 3
      %v9478 = vor.u32 %v9474, %v9477
      %v9479 = vsel %vm2922, %v9462, %v9478
      %v9480 = vshrl.u32 %v9254, 16
      %v9482 = vrot.slane %v9480, 2
      %v9483 = vshll.u32 %v9254, 16
      %v9485 = vrot.slane %v9483, 3
      %v9486 = vor.u32 %v9482, %v9485
      %v9487 = vsel %vm2922, %v9470, %v9486
      %v9488 = vshrl.u32 %v9329, 16
      %v9490 = vrot.slane %v9488, 2
      %v9491 = vshll.u32 %v9329, 16
      %v9493 = vrot.slane %v9491, 3
      %v9494 = vor.u32 %v9490, %v9493
      %v9495 = vsel %vm2922, %v9478, %v9494
      %v9496 = vshrl.u32 %v9256, 16
      %v9498 = vrot.slane %v9496, 2
      %v9499 = vshll.u32 %v9256, 16
      %v9501 = vrot.slane %v9499, 3
      %v9502 = vor.u32 %v9498, %v9501
      %v9503 = vsel %vm2922, %v9486, %v9502
      %v9504 = vshrl.u32 %v9331, 16
      %v9506 = vrot.slane %v9504, 2
      %v9507 = vshll.u32 %v9331, 16
      %v9509 = vrot.slane %v9507, 3
      %v9510 = vor.u32 %v9506, %v9509
      %v9511 = vsel %vm2922, %v9494, %v9510
      %v9512 = vshrl.u32 %v9258, 16
      %v9514 = vrot.slane %v9512, 2
      %v9515 = vshll.u32 %v9258, 16
      %v9517 = vrot.slane %v9515, 3
      %v9518 = vor.u32 %v9514, %v9517
      %v9519 = vsel %vm2922, %v9502, %v9518
      %v9520 = vshrl.u32 %v9333, 16
      %v9522 = vrot.slane %v9520, 2
      %v9523 = vshll.u32 %v9333, 16
      %v9525 = vrot.slane %v9523, 3
      %v9526 = vor.u32 %v9522, %v9525
      %v9527 = vsel %vm2922, %v9510, %v9526
      %v9528 = vshrl.u32 %v9260, 16
      %v9530 = vrot.slane %v9528, 2
      %v9531 = vshll.u32 %v9260, 16
      %v9533 = vrot.slane %v9531, 3
      %v9534 = vor.u32 %v9530, %v9533
      %v9535 = vsel %vm2922, %v9518, %v9534
      %v9536 = vshrl.u32 %v9335, 16
      %v9538 = vrot.slane %v9536, 2
      %v9539 = vshll.u32 %v9335, 16
      %v9541 = vrot.slane %v9539, 3
      %v9542 = vor.u32 %v9538, %v9541
      %v9543 = vsel %vm2922, %v9526, %v9542
      %v9544 = vshrl.u32 %v9262, 16
      %v9546 = vrot.slane %v9544, 2
      %v9547 = vshll.u32 %v9262, 16
      %v9549 = vrot.slane %v9547, 3
      %v9550 = vor.u32 %v9546, %v9549
      %v9551 = vsel %vm2922, %v9534, %v9550
      %v9552 = vshrl.u32 %v9337, 16
      %v9554 = vrot.slane %v9552, 2
      %v9555 = vshll.u32 %v9337, 16
      %v9557 = vrot.slane %v9555, 3
      %v9558 = vor.u32 %v9554, %v9557
      %v9559 = vsel %vm2922, %v9542, %v9558
      %v9560 = vshrl.u32 %v9264, 16
      %v9562 = vrot.slane %v9560, 2
      %v9563 = vshll.u32 %v9264, 16
      %v9565 = vrot.slane %v9563, 3
      %v9566 = vor.u32 %v9562, %v9565
      %v9567 = vsel %vm2922, %v9550, %v9566
      %v9568 = vshrl.u32 %v9339, 16
      %v9570 = vrot.slane %v9568, 2
      %v9571 = vshll.u32 %v9339, 16
      %v9573 = vrot.slane %v9571, 3
      %v9574 = vor.u32 %v9570, %v9573
      %v9575 = vsel %vm2922, %v9558, %v9574
      %v9576 = vshrl.u32 %v9266, 16
      %v9578 = vrot.slane %v9576, 2
      %v9579 = vshll.u32 %v9266, 16
      %v9581 = vrot.slane %v9579, 3
      %v9582 = vor.u32 %v9578, %v9581
      %v9583 = vsel %vm2922, %v9566, %v9582
      %v9584 = vshrl.u32 %v9341, 16
      %v9586 = vrot.slane %v9584, 2
      %v9587 = vshll.u32 %v9341, 16
      %v9589 = vrot.slane %v9587, 3
      %v9590 = vor.u32 %v9586, %v9589
      %v9591 = vsel %vm2922, %v9574, %v9590
      %v9592 = vshrl.u32 %v9268, 16
      %v9594 = vrot.slane %v9592, 2
      %v9595 = vshll.u32 %v9268, 16
      %v9597 = vrot.slane %v9595, 3
      %v9598 = vor.u32 %v9594, %v9597
      %v9599 = vsel %vm2922, %v9582, %v9598
      %v9600 = vshrl.u32 %v9343, 16
      %v9602 = vrot.slane %v9600, 2
      %v9603 = vshll.u32 %v9343, 16
      %v9605 = vrot.slane %v9603, 3
      %v9606 = vor.u32 %v9602, %v9605
      %v9607 = vsel %vm2922, %v9590, %v9606
      %v9608 = vshrl.u32 %v9270, 16
      %v9610 = vrot.slane %v9608, 2
      %v9611 = vshll.u32 %v9270, 16
      %v9613 = vrot.slane %v9611, 3
      %v9614 = vor.u32 %v9610, %v9613
      %v9615 = vsel %vm2922, %v9598, %v9614
      %v9616 = vshrl.u32 %v9345, 16
      %v9618 = vrot.slane %v9616, 2
      %v9619 = vshll.u32 %v9345, 16
      %v9621 = vrot.slane %v9619, 3
      %v9622 = vor.u32 %v9618, %v9621
      %v9623 = vsel %vm2922, %v9606, %v9622
      %v9666 = vunpack.c.l.b16 %v9346
      %v9667 = vunpack.c.h.b16 %v9346
      %v9668 = vunpack.c.l.b16 %v9347
      %v9669 = vunpack.c.h.b16 %v9347
      %v9670 = vunpack.c.l.b16 %v9348
      %v9671 = vunpack.c.h.b16 %v9348
      %v9672 = vunpack.c.l.b16 %v9349
      %v9673 = vunpack.c.h.b16 %v9349
      %v9674 = vunpack.c.l.b16 %v9350
      %v9675 = vunpack.c.h.b16 %v9350
      %v9676 = vunpack.c.l.b16 %v9351
      %v9677 = vunpack.c.h.b16 %v9351
      %v9678 = vunpack.c.l.b16 %v9352
      %v9679 = vunpack.c.h.b16 %v9352
      %v9680 = vunpack.c.l.b16 %v9353
      %v9681 = vunpack.c.h.b16 %v9353
      %v9682 = vunpack.c.l.b16 %v9354
      %v9683 = vunpack.c.h.b16 %v9354
      %v9684 = vunpack.c.l.b16 %v9355
      %v9685 = vunpack.c.h.b16 %v9355
      %v9686 = vunpack.c.l.b16 %v9356
      %v9687 = vunpack.c.h.b16 %v9356
      %v9688 = vunpack.c.l.b16 %v9357
      %v9689 = vunpack.c.h.b16 %v9357
      %v9690 = vunpack.c.l.b16 %v9358
      %v9691 = vunpack.c.h.b16 %v9358
      %v9692 = vunpack.c.l.b16 %v9359
      %v9693 = vunpack.c.h.b16 %v9359
      %v9694 = vunpack.c.l.b16 %v9360
      %v9695 = vunpack.c.h.b16 %v9360
      %v9696 = vunpack.c.l.b16 %v9361
      %v9697 = vunpack.c.h.b16 %v9361
      %v9698 = vunpack.c.l.b16 %v9362
      %v9699 = vunpack.c.h.b16 %v9362
      %v9700 = vunpack.c.l.b16 %v9363
      %v9701 = vunpack.c.h.b16 %v9363
      %v9702 = vunpack.c.l.b16 %v9364
      %v9703 = vunpack.c.h.b16 %v9364
      %v9704 = vunpack.c.l.b16 %v9365
      %v9705 = vunpack.c.h.b16 %v9365
      %v9706 = vunpack.c.l.b16 %v9366
      %v9707 = vunpack.c.h.b16 %v9366
      %v9708 = vunpack.c.l.b16 %v9367
      %v9709 = vunpack.c.h.b16 %v9367
      %v9710 = vunpack.c.l.b16 %v9368
      %v9711 = vunpack.c.h.b16 %v9368
      %v9712 = vunpack.c.l.b16 %v9369
      %v9713 = vunpack.c.h.b16 %v9369
      %v9714 = vunpack.c.l.b16 %v9370
      %v9715 = vunpack.c.h.b16 %v9370
      %v9716 = vunpack.c.l.b16 %v9371
      %v9717 = vunpack.c.h.b16 %v9371
      %v9718 = vunpack.c.l.b16 %v9372
      %v9719 = vunpack.c.h.b16 %v9372
      %v9720 = vunpack.c.l.b16 %v9373
      %v9721 = vunpack.c.h.b16 %v9373
      %v9722 = vpack.c.b16 %v9668, %v9666
      %v9723 = vpack.c.b16 %v9669, %v9667
      %v9724 = vpack.c.b16 %v9672, %v9670
      %v9725 = vpack.c.b16 %v9673, %v9671
      %v9726 = vpack.c.b16 %v9676, %v9674
      %v9727 = vpack.c.b16 %v9677, %v9675
      %v9728 = vpack.c.b16 %v9680, %v9678
      %v9729 = vpack.c.b16 %v9681, %v9679
      %v9730 = vpack.c.b16 %v9684, %v9682
      %v9731 = vpack.c.b16 %v9685, %v9683
      %v9732 = vpack.c.b16 %v9688, %v9686
      %v9733 = vpack.c.b16 %v9689, %v9687
      %v9734 = vpack.c.b16 %v9692, %v9690
      %v9735 = vpack.c.b16 %v9693, %v9691
      %v9736 = vpack.c.b16 %v9696, %v9694
      %v9737 = vpack.c.b16 %v9697, %v9695
      %v9738 = vpack.c.b16 %v9700, %v9698
      %v9739 = vpack.c.b16 %v9701, %v9699
      %v9740 = vpack.c.b16 %v9704, %v9702
      %v9741 = vpack.c.b16 %v9705, %v9703
      %v9742 = vpack.c.b16 %v9708, %v9706
      %v9743 = vpack.c.b16 %v9709, %v9707
      %v9744 = vpack.c.b16 %v9712, %v9710
      %v9745 = vpack.c.b16 %v9713, %v9711
      %v9746 = vpack.c.b16 %v9716, %v9714
      %v9747 = vpack.c.b16 %v9717, %v9715
      %v9748 = vpack.c.b16 %v9720, %v9718
      %v9749 = vpack.c.b16 %v9721, %v9719
      %v9779 = vsel %vm2781, %v9415, 0
      %v9782 = vsel %vm2781, %v9431, 0
      %v9785 = vsel %vm2781, %v9447, 0
      %v9788 = vsel %vm2781, %v9463, 0
      %v9791 = vsel %vm2781, %v9479, 0
      %v9794 = vsel %vm2781, %v9495, 0
      %v9797 = vsel %vm2781, %v9511, 0
      %v9800 = vsel %vm2781, %v9527, 0
      %v9803 = vsel %vm2781, %v9543, 0
      %v9806 = vsel %vm2781, %v9559, 0
      %v9809 = vsel %vm2781, %v9575, 0
      %v9812 = vsel %vm2781, %v9591, 0
      %v9815 = vsel %vm2781, %v9607, 0
      %v9818 = vsel %vm2781, %v9623, 0
      %9820 = vmatprep.subr.bf16.mxu0 %v9737
      %9821 = vmatpush1.bf16.msra.mxu0 %v9736
      %9822 = vmatprep.subr.bf16.mxu0 %v9735
      %9823 = vmatpush1.bf16.msra.mxu0 %v9734
      %9824 = vmatprep.subr.bf16.mxu0 %v9733
      %9825 = vmatpush1.bf16.msra.mxu0 %v9732
      %9826 = vmatprep.subr.bf16.mxu0 %v9731
      %9827 = vmatpush1.bf16.msra.mxu0 %v9730
      %9828 = vmatprep.subr.bf16.mxu0 %v9729
      %9829 = vmatpush1.bf16.msra.mxu0 %v9728
      %9830 = vmatprep.subr.bf16.mxu0 %v9727
      %9831 = vmatpush1.bf16.msra.mxu0 %v9726
      %9832 = vmatprep.subr.bf16.mxu0 %v9725
      %9833 = vmatpush1.bf16.msra.mxu0 %v9724
      %9834 = vmatprep.subr.bf16.mxu0 %v9723
      %9835 = vmatpush1.bf16.msra.mxu0 %v9722
      %9836 = vmatprep.subr.bf16.mxu0 0
      %9837 = vmatpush2.bf16.msra.mxu0 0
      %9838 = vmatprep.subr.bf16.mxu0 0
      %9839 = vmatpush2.bf16.msra.mxu0 0
      %9840 = vmatprep.subr.bf16.mxu0 %v9749
      %9841 = vmatpush2.bf16.msra.mxu0 %v9748
      %9842 = vmatprep.subr.bf16.mxu0 %v9747
      %9843 = vmatpush2.bf16.msra.mxu0 %v9746
      %9844 = vmatprep.subr.bf16.mxu0 %v9745
      %9845 = vmatpush2.bf16.msra.mxu0 %v9744
      %9846 = vmatprep.subr.bf16.mxu0 %v9743
      %9847 = vmatpush2.bf16.msra.mxu0 %v9742
      %9848 = vmatprep.subr.bf16.mxu0 %v9741
      %9849 = vmatpush2.bf16.msra.mxu0 %v9740
      %9850 = vmatprep.subr.bf16.mxu0 %v9739
      %9851 = vmatpush2.bf16.msra.mxu0 %v9738
      %9852 = vmatprep.mubr.bf16.mxu0 %v9779
      %9853 = vmatmul.mubr.bf16.gmra.mxu0 %v9400
      %v9854 = vpop.f32.mrf.mxu0
      %v9855 = vadd.f32 %v9379, %v9854
      %v9856 = vpop.f32.mrf.mxu0
      %v9857 = vadd.f32 %v9383, %v9856
      %v9858 = vpop.f32.mrf.mxu0
      %v9859 = vadd.f32 %v9379, %v9858
      %v9860 = vpop.f32.mrf.mxu0
      %v9861 = vadd.f32 %v9383, %v9860
      %9862 = vmatprep.mubr.bf16.mxu0 %v9782
      %9863 = vmatmul.mubr.bf16.gmra.mxu0 %v9423
      %v9864 = vpop.f32.mrf.mxu0
      %v9865 = vadd.f32 %v9379, %v9864
      %v9866 = vpop.f32.mrf.mxu0
      %v9867 = vadd.f32 %v9383, %v9866
      %v9868 = vpop.f32.mrf.mxu0
      %v9869 = vadd.f32 %v9379, %v9868
      %v9870 = vpop.f32.mrf.mxu0
      %v9871 = vadd.f32 %v9383, %v9870
      %9872 = vmatprep.mubr.bf16.mxu0 %v9785
      %9873 = vmatmul.mubr.bf16.gmra.mxu0 %v9439
      %v9874 = vpop.f32.mrf.mxu0
      %v9875 = vadd.f32 %v9379, %v9874
      %v9876 = vpop.f32.mrf.mxu0
      %v9877 = vadd.f32 %v9383, %v9876
      %v9878 = vpop.f32.mrf.mxu0
      %v9879 = vadd.f32 %v9379, %v9878
      %v9880 = vpop.f32.mrf.mxu0
      %v9881 = vadd.f32 %v9383, %v9880
      %9882 = vmatprep.mubr.bf16.mxu0 %v9788
      %9883 = vmatmul.mubr.bf16.gmra.mxu0 %v9455
      %v9884 = vpop.f32.mrf.mxu0
      %v9885 = vadd.f32 %v9379, %v9884
      %v9886 = vpop.f32.mrf.mxu0
      %v9887 = vadd.f32 %v9383, %v9886
      %v9888 = vpop.f32.mrf.mxu0
      %v9889 = vadd.f32 %v9379, %v9888
      %v9890 = vpop.f32.mrf.mxu0
      %v9891 = vadd.f32 %v9383, %v9890
      %9892 = vmatprep.mubr.bf16.mxu0 %v9791
      %9893 = vmatmul.mubr.bf16.gmra.mxu0 %v9471
      %v9894 = vpop.f32.mrf.mxu0
      %v9895 = vadd.f32 %v9379, %v9894
      %v9896 = vpop.f32.mrf.mxu0
      %v9897 = vadd.f32 %v9383, %v9896
      %v9898 = vpop.f32.mrf.mxu0
      %v9899 = vadd.f32 %v9379, %v9898
      %v9900 = vpop.f32.mrf.mxu0
      %v9901 = vadd.f32 %v9383, %v9900
      %9902 = vmatprep.mubr.bf16.mxu0 %v9794
      %9903 = vmatmul.mubr.bf16.gmra.mxu0 %v9487
      %v9904 = vpop.f32.mrf.mxu0
      %v9905 = vadd.f32 %v9379, %v9904
      %v9906 = vpop.f32.mrf.mxu0
      %v9907 = vadd.f32 %v9383, %v9906
      %v9908 = vpop.f32.mrf.mxu0
      %v9909 = vadd.f32 %v9379, %v9908
      %v9910 = vpop.f32.mrf.mxu0
      %v9911 = vadd.f32 %v9383, %v9910
      %9912 = vmatprep.mubr.bf16.mxu0 %v9797
      %9913 = vmatmul.mubr.bf16.gmra.mxu0 %v9503
      %v9914 = vpop.f32.mrf.mxu0
      %v9915 = vadd.f32 %v9379, %v9914
      %v9916 = vpop.f32.mrf.mxu0
      %v9917 = vadd.f32 %v9383, %v9916
      %v9918 = vpop.f32.mrf.mxu0
      %v9919 = vadd.f32 %v9379, %v9918
      %v9920 = vpop.f32.mrf.mxu0
      %v9921 = vadd.f32 %v9383, %v9920
      %9922 = vmatprep.mubr.bf16.mxu0 %v9800
      %9923 = vmatmul.mubr.bf16.gmra.mxu0 %v9519
      %v9924 = vpop.f32.mrf.mxu0
      %v9925 = vadd.f32 %v9379, %v9924
      %v9926 = vpop.f32.mrf.mxu0
      %v9927 = vadd.f32 %v9383, %v9926
      %v9928 = vpop.f32.mrf.mxu0
      %v9929 = vadd.f32 %v9379, %v9928
      %v9930 = vpop.f32.mrf.mxu0
      %v9931 = vadd.f32 %v9383, %v9930
      %9932 = vmatprep.mubr.bf16.mxu0 %v9803
      %9933 = vmatmul.mubr.bf16.gmra.mxu0 %v9535
      %v9934 = vpop.f32.mrf.mxu0
      %v9935 = vadd.f32 %v9379, %v9934
      %v9936 = vpop.f32.mrf.mxu0
      %v9937 = vadd.f32 %v9383, %v9936
      %v9938 = vpop.f32.mrf.mxu0
      %v9939 = vadd.f32 %v9379, %v9938
      %v9940 = vpop.f32.mrf.mxu0
      %v9941 = vadd.f32 %v9383, %v9940
      %9942 = vmatprep.mubr.bf16.mxu0 %v9806
      %9943 = vmatmul.mubr.bf16.gmra.mxu0 %v9551
      %v9944 = vpop.f32.mrf.mxu0
      %v9945 = vadd.f32 %v9379, %v9944
      %v9946 = vpop.f32.mrf.mxu0
      %v9947 = vadd.f32 %v9383, %v9946
      %v9948 = vpop.f32.mrf.mxu0
      %v9949 = vadd.f32 %v9379, %v9948
      %v9950 = vpop.f32.mrf.mxu0
      %v9951 = vadd.f32 %v9383, %v9950
      %9952 = vmatprep.mubr.bf16.mxu0 %v9809
      %9953 = vmatmul.mubr.bf16.gmra.mxu0 %v9567
      %v9954 = vpop.f32.mrf.mxu0
      %v9955 = vadd.f32 %v9379, %v9954
      %v9956 = vpop.f32.mrf.mxu0
      %v9957 = vadd.f32 %v9383, %v9956
      %v9958 = vpop.f32.mrf.mxu0
      %v9959 = vadd.f32 %v9379, %v9958
      %v9960 = vpop.f32.mrf.mxu0
      %v9961 = vadd.f32 %v9383, %v9960
      %9962 = vmatprep.mubr.bf16.mxu0 %v9812
      %9963 = vmatmul.mubr.bf16.gmra.mxu0 %v9583
      %v9964 = vpop.f32.mrf.mxu0
      %v9965 = vadd.f32 %v9379, %v9964
      %v9966 = vpop.f32.mrf.mxu0
      %v9967 = vadd.f32 %v9383, %v9966
      %v9968 = vpop.f32.mrf.mxu0
      %v9969 = vadd.f32 %v9379, %v9968
      %v9970 = vpop.f32.mrf.mxu0
      %v9971 = vadd.f32 %v9383, %v9970
      %9972 = vmatprep.mubr.bf16.mxu0 %v9815
      %9973 = vmatmul.mubr.bf16.gmra.mxu0 %v9599
      %v9974 = vpop.f32.mrf.mxu0
      %v9975 = vadd.f32 %v9379, %v9974
      %v9976 = vpop.f32.mrf.mxu0
      %v9977 = vadd.f32 %v9383, %v9976
      %v9978 = vpop.f32.mrf.mxu0
      %v9979 = vadd.f32 %v9379, %v9978
      %v9980 = vpop.f32.mrf.mxu0
      %v9981 = vadd.f32 %v9383, %v9980
      %9982 = vmatprep.mubr.bf16.mxu0 %v9818
      %9983 = vmatmul.mubr.bf16.gmra.mxu0 %v9615
      %v9984 = vpop.f32.mrf.mxu0
      %v9985 = vadd.f32 %v9379, %v9984
      %v9986 = vpop.f32.mrf.mxu0
      %v9987 = vadd.f32 %v9383, %v9986
      %v9988 = vpop.f32.mrf.mxu0
      %v9989 = vadd.f32 %v9379, %v9988
      %v9990 = vpop.f32.mrf.mxu0
      %v9991 = vadd.f32 %v9383, %v9990
      %9992 = vdwg.mxu0
      %v9993 = vmax.f32 %v9855, 0.0
      %v9994 = vmax.f32 %v9857, 0.0
      %v9995 = vmax.f32 %v9859, 0.0
      %v9996 = vmax.f32 %v9861, 0.0
      %v9997 = vmax.f32 %v9865, 0.0
      %v9998 = vmax.f32 %v9867, 0.0
      %v9999 = vmax.f32 %v9869, 0.0
      %v10000 = vmax.f32 %v9871, 0.0
      %v10001 = vmax.f32 %v9875, 0.0
      %v10002 = vmax.f32 %v9877, 0.0
      %v10003 = vmax.f32 %v9879, 0.0
      %v10004 = vmax.f32 %v9881, 0.0
      %v10005 = vmax.f32 %v9885, 0.0
      %v10006 = vmax.f32 %v9887, 0.0
      %v10007 = vmax.f32 %v9889, 0.0
      %v10008 = vmax.f32 %v9891, 0.0
      %v10009 = vmax.f32 %v9895, 0.0
      %v10010 = vmax.f32 %v9897, 0.0
      %v10011 = vmax.f32 %v9899, 0.0
      %v10012 = vmax.f32 %v9901, 0.0
      %v10013 = vmax.f32 %v9905, 0.0
      %v10014 = vmax.f32 %v9907, 0.0
      %v10015 = vmax.f32 %v9909, 0.0
      %v10016 = vmax.f32 %v9911, 0.0
      %v10017 = vmax.f32 %v9915, 0.0
      %v10018 = vmax.f32 %v9917, 0.0
      %v10019 = vmax.f32 %v9919, 0.0
      %v10020 = vmax.f32 %v9921, 0.0
      %v10021 = vmax.f32 %v9925, 0.0
      %v10022 = vmax.f32 %v9927, 0.0
      %v10023 = vmax.f32 %v9929, 0.0
      %v10024 = vmax.f32 %v9931, 0.0
      %v10025 = vmax.f32 %v9935, 0.0
      %v10026 = vmax.f32 %v9937, 0.0
      %v10027 = vmax.f32 %v9939, 0.0
      %v10028 = vmax.f32 %v9941, 0.0
      %v10029 = vmax.f32 %v9945, 0.0
      %v10030 = vmax.f32 %v9947, 0.0
      %v10031 = vmax.f32 %v9949, 0.0
      %v10032 = vmax.f32 %v9951, 0.0
      %v10033 = vmax.f32 %v9955, 0.0
      %v10034 = vmax.f32 %v9957, 0.0
      %v10035 = vmax.f32 %v9959, 0.0
      %v10036 = vmax.f32 %v9961, 0.0
      %v10037 = vmax.f32 %v9965, 0.0
      %v10038 = vmax.f32 %v9967, 0.0
      %v10039 = vmax.f32 %v9969, 0.0
      %v10040 = vmax.f32 %v9971, 0.0
      %v10041 = vmax.f32 %v9975, 0.0
      %v10042 = vmax.f32 %v9977, 0.0
      %v10043 = vmax.f32 %v9979, 0.0
      %v10044 = vmax.f32 %v9981, 0.0
      %v10045 = vmax.f32 %v9985, 0.0
      %v10046 = vmax.f32 %v9987, 0.0
      %v10047 = vmax.f32 %v9989, 0.0
      %v10048 = vmax.f32 %v9991, 0.0
      %v10049 = vpack.c.bf16 %v9995, %v9993
      %v10050 = vpack.c.bf16 %v9996, %v9994
      %v10051 = vpack.c.bf16 %v9999, %v9997
      %v10052 = vpack.c.bf16 %v10000, %v9998
      %v10053 = vpack.c.bf16 %v10003, %v10001
      %v10054 = vpack.c.bf16 %v10004, %v10002
      %v10055 = vpack.c.bf16 %v10007, %v10005
      %v10056 = vpack.c.bf16 %v10008, %v10006
      %v10057 = vpack.c.bf16 %v10011, %v10009
      %v10058 = vpack.c.bf16 %v10012, %v10010
      %v10059 = vpack.c.bf16 %v10015, %v10013
      %v10060 = vpack.c.bf16 %v10016, %v10014
      %v10061 = vpack.c.bf16 %v10019, %v10017
      %v10062 = vpack.c.bf16 %v10020, %v10018
      %v10063 = vpack.c.bf16 %v10023, %v10021
      %v10064 = vpack.c.bf16 %v10024, %v10022
      %v10065 = vpack.c.bf16 %v10027, %v10025
      %v10066 = vpack.c.bf16 %v10028, %v10026
      %v10067 = vpack.c.bf16 %v10031, %v10029
      %v10068 = vpack.c.bf16 %v10032, %v10030
      %v10069 = vpack.c.bf16 %v10035, %v10033
      %v10070 = vpack.c.bf16 %v10036, %v10034
      %v10071 = vpack.c.bf16 %v10039, %v10037
      %v10072 = vpack.c.bf16 %v10040, %v10038
      %v10073 = vpack.c.bf16 %v10043, %v10041
      %v10074 = vpack.c.bf16 %v10044, %v10042
      %v10075 = vpack.c.bf16 %v10047, %v10045
      %v10076 = vpack.c.bf16 %v10048, %v10046
      %v10105 = vunpack.c.l.b16 %v10049
      %v10106 = vunpack.c.l.b16 %v10050
      %v10107 = vunpack.c.h.b16 %v10049
      %v10108 = vunpack.c.h.b16 %v10050
      %v10109 = vunpack.c.l.b16 %v10051
      %v10110 = vunpack.c.l.b16 %v10052
      %v10111 = vunpack.c.h.b16 %v10051
      %v10112 = vunpack.c.h.b16 %v10052
      %v10113 = vunpack.c.l.b16 %v10053
      %v10114 = vunpack.c.l.b16 %v10054
      %v10115 = vunpack.c.h.b16 %v10053
      %v10116 = vunpack.c.h.b16 %v10054
      %v10117 = vunpack.c.l.b16 %v10055
      %v10118 = vunpack.c.l.b16 %v10056
      %v10119 = vunpack.c.h.b16 %v10055
      %v10120 = vunpack.c.h.b16 %v10056
      %v10121 = vunpack.c.l.b16 %v10057
      %v10122 = vunpack.c.l.b16 %v10058
      %v10123 = vunpack.c.h.b16 %v10057
      %v10124 = vunpack.c.h.b16 %v10058
      %v10125 = vunpack.c.l.b16 %v10059
      %v10126 = vunpack.c.l.b16 %v10060
      %v10127 = vunpack.c.h.b16 %v10059
      %v10128 = vunpack.c.h.b16 %v10060
      %v10129 = vunpack.c.l.b16 %v10061
      %v10130 = vunpack.c.l.b16 %v10062
      %v10131 = vunpack.c.h.b16 %v10061
      %v10132 = vunpack.c.h.b16 %v10062
      %v10133 = vunpack.c.l.b16 %v10063
      %v10134 = vunpack.c.l.b16 %v10064
      %v10135 = vunpack.c.h.b16 %v10063
      %v10136 = vunpack.c.h.b16 %v10064
      %v10137 = vunpack.c.l.b16 %v10065
      %v10138 = vunpack.c.l.b16 %v10066
      %v10139 = vunpack.c.h.b16 %v10065
      %v10140 = vunpack.c.h.b16 %v10066
      %v10141 = vunpack.c.l.b16 %v10067
      %v10142 = vunpack.c.l.b16 %v10068
      %v10143 = vunpack.c.h.b16 %v10067
      %v10144 = vunpack.c.h.b16 %v10068
      %v10145 = vunpack.c.l.b16 %v10069
      %v10146 = vunpack.c.l.b16 %v10070
      %v10147 = vunpack.c.h.b16 %v10069
      %v10148 = vunpack.c.h.b16 %v10070
      %v10149 = vunpack.c.l.b16 %v10071
      %v10150 = vunpack.c.l.b16 %v10072
      %v10151 = vunpack.c.h.b16 %v10071
      %v10152 = vunpack.c.h.b16 %v10072
      %v10153 = vunpack.c.l.b16 %v10073
      %v10154 = vunpack.c.l.b16 %v10074
      %v10155 = vunpack.c.h.b16 %v10073
      %v10156 = vunpack.c.h.b16 %v10074
      %v10157 = vunpack.c.l.b16 %v10075
      %v10158 = vunpack.c.l.b16 %v10076
      %v10159 = vunpack.c.h.b16 %v10075
      %v10160 = vunpack.c.h.b16 %v10076
      %v10161 = vpack.c.b16 %v10106, %v10105
      %v10162 = vpack.c.b16 %v10108, %v10107
      %v10163 = vpack.c.b16 %v10110, %v10109
      %v10164 = vpack.c.b16 %v10112, %v10111
      %v10165 = vpack.c.b16 %v10114, %v10113
      %v10166 = vpack.c.b16 %v10116, %v10115
      %v10167 = vpack.c.b16 %v10118, %v10117
      %v10168 = vpack.c.b16 %v10120, %v10119
      %v10169 = vpack.c.b16 %v10122, %v10121
      %v10170 = vpack.c.b16 %v10124, %v10123
      %v10171 = vpack.c.b16 %v10126, %v10125
      %v10172 = vpack.c.b16 %v10128, %v10127
      %v10173 = vpack.c.b16 %v10130, %v10129
      %v10174 = vpack.c.b16 %v10132, %v10131
      %v10175 = vpack.c.b16 %v10134, %v10133
      %v10176 = vpack.c.b16 %v10136, %v10135
      %v10177 = vpack.c.b16 %v10138, %v10137
      %v10178 = vpack.c.b16 %v10140, %v10139
      %v10179 = vpack.c.b16 %v10142, %v10141
      %v10180 = vpack.c.b16 %v10144, %v10143
      %v10181 = vpack.c.b16 %v10146, %v10145
      %v10182 = vpack.c.b16 %v10148, %v10147
      %v10183 = vpack.c.b16 %v10150, %v10149
      %v10184 = vpack.c.b16 %v10152, %v10151
      %v10185 = vpack.c.b16 %v10154, %v10153
      %v10186 = vpack.c.b16 %v10156, %v10155
      %v10187 = vpack.c.b16 %v10158, %v10157
      %v10188 = vpack.c.b16 %v10160, %v10159
      %s10217 = scalar_lea.vmem %s683, 448
      %10218 = vst.msk [vmem:[%s10217] sm:$0xff] %vm1338, %v10161
      %10219 = vst.msk [vmem:[%s10217 + $0x8] sm:$0xff] %vm1338, %v10162
      %10220 = vst.msk [vmem:[%s10217 + $0x10] sm:$0xff] %vm1338, %v10163
      %10221 = vst.msk [vmem:[%s10217 + $0x18] sm:$0xff] %vm1338, %v10164
      %10222 = vst.msk [vmem:[%s10217 + $0x20] sm:$0xff] %vm1338, %v10165
      %10223 = vst.msk [vmem:[%s10217 + $0x28] sm:$0xff] %vm1338, %v10166
      %10224 = vst.msk [vmem:[%s10217 + $0x30] sm:$0xff] %vm1338, %v10167
      %10225 = vst.msk [vmem:[%s10217 + $0x38] sm:$0xff] %vm1338, %v10168
      %10226 = vst.msk [vmem:[%s10217 + $0x40] sm:$0xff] %vm1338, %v10169
      %10227 = vst.msk [vmem:[%s10217 + $0x48] sm:$0xff] %vm1338, %v10170
      %10228 = vst.msk [vmem:[%s10217 + $0x50] sm:$0xff] %vm1338, %v10171
      %10229 = vst.msk [vmem:[%s10217 + $0x58] sm:$0xff] %vm1338, %v10172
      %10230 = vst.msk [vmem:[%s10217 + $0x60] sm:$0xff] %vm1338, %v10173
      %10231 = vst.msk [vmem:[%s10217 + $0x68] sm:$0xff] %vm1338, %v10174
      %10232 = vst.msk [vmem:[%s10217 + $0x70] sm:$0xff] %vm1338, %v10175
      %10233 = vst.msk [vmem:[%s10217 + $0x78] sm:$0xff] %vm1338, %v10176
      %10234 = vst.msk [vmem:[%s10217 + $0x80] sm:$0xff] %vm1338, %v10177
      %10235 = vst.msk [vmem:[%s10217 + $0x88] sm:$0xff] %vm1338, %v10178
      %10236 = vst.msk [vmem:[%s10217 + $0x90] sm:$0xff] %vm1338, %v10179
      %10237 = vst.msk [vmem:[%s10217 + $0x98] sm:$0xff] %vm1338, %v10180
      %10238 = vst.msk [vmem:[%s10217 + $0xa0] sm:$0xff] %vm1338, %v10181
      %10239 = vst.msk [vmem:[%s10217 + $0xa8] sm:$0xff] %vm1338, %v10182
      %10240 = vst.msk [vmem:[%s10217 + $0xb0] sm:$0xff] %vm1338, %v10183
      %10241 = vst.msk [vmem:[%s10217 + $0xb8] sm:$0xff] %vm1338, %v10184
      %10242 = vst.msk [vmem:[%s10217 + $0xc0] sm:$0xff] %vm1338, %v10185
      %10243 = vst.msk [vmem:[%s10217 + $0xc8] sm:$0xff] %vm1338, %v10186
      %10244 = vst.msk [vmem:[%s10217 + $0xd0] sm:$0xff] %vm1338, %v10187
      %10245 = vst.msk [vmem:[%s10217 + $0xd8] sm:$0xff] %vm1338, %v10188
      %v10246 = vld [vmem:[%s678] sm:$0x8]
      %v10247 = vld [vmem:[%s678 + $0x4] sm:$0xf]
      %v10248 = vld [vmem:[%s678 + $0x8] sm:$0xf]
      %v10249 = vld [vmem:[%s678 + $0xc] sm:$0xf]
      %v10250 = vld [vmem:[%s678 + $0x10] sm:$0xf]
      %v10251 = vld [vmem:[%s678 + $0x14] sm:$0xf]
      %v10252 = vld [vmem:[%s678 + $0x18] sm:$0xf]
      %v10253 = vld [vmem:[%s678 + $0x1c] sm:$0xf]
      %v10254 = vld [vmem:[%s678 + $0x20] sm:$0xf]
      %v10255 = vld [vmem:[%s678 + $0x24] sm:$0xf]
      %v10256 = vld [vmem:[%s678 + $0x28] sm:$0xf]
      %v10257 = vld [vmem:[%s678 + $0x2c] sm:$0xf]
      %v10258 = vld [vmem:[%s678 + $0x30] sm:$0xf]
      %v10259 = vld [vmem:[%s678 + $0x34] sm:$0xf]
      %v10260 = vld [vmem:[%s678 + $0x38] sm:$0xf]
      %v10261 = vld [vmem:[%s678 + $0x3c] sm:$0xf]
      %v10262 = vld [vmem:[%s678 + $0x40] sm:$0xf]
      %v10263 = vld [vmem:[%s678 + $0x44] sm:$0xf]
      %v10264 = vld [vmem:[%s678 + $0x48] sm:$0xf]
      %v10265 = vld [vmem:[%s678 + $0x4c] sm:$0xf]
      %v10266 = vld [vmem:[%s678 + $0x50] sm:$0xf]
      %v10267 = vld [vmem:[%s678 + $0x54] sm:$0xf]
      %v10268 = vld [vmem:[%s678 + $0x58] sm:$0xf]
      %v10269 = vld [vmem:[%s678 + $0x5c] sm:$0xf]
      %v10270 = vld [vmem:[%s678 + $0x60] sm:$0xf]
      %v10271 = vld [vmem:[%s678 + $0x64] sm:$0xf]
      %v10272 = vld [vmem:[%s678 + $0x68] sm:$0xf]
      %v10273 = vld [vmem:[%s678 + $0x6c] sm:$0xf]
      %v10274 = vld [vmem:[%s678 + $0x70] sm:$0xf]
      %v10275 = vunpack.c.l.bf16 %v10246
      %v10276 = vunpack.c.l.bf16 %v10247
      %v10277 = vunpack.c.l.bf16 %v10248
      %v10278 = vunpack.c.l.bf16 %v10249
      %v10279 = vunpack.c.l.bf16 %v10250
      %v10280 = vunpack.c.l.bf16 %v10251
      %v10281 = vunpack.c.l.bf16 %v10252
      %v10282 = vunpack.c.l.bf16 %v10253
      %v10283 = vunpack.c.l.bf16 %v10254
      %v10284 = vunpack.c.l.bf16 %v10255
      %v10285 = vunpack.c.l.bf16 %v10256
      %v10286 = vunpack.c.l.bf16 %v10257
      %v10287 = vunpack.c.l.bf16 %v10258
      %v10288 = vunpack.c.l.bf16 %v10259
      %v10289 = vunpack.c.l.bf16 %v10260
      %v10290 = vunpack.c.l.bf16 %v10261
      %v10291 = vunpack.c.l.bf16 %v10262
      %v10292 = vunpack.c.l.bf16 %v10263
      %v10293 = vunpack.c.l.bf16 %v10264
      %v10294 = vunpack.c.l.bf16 %v10265
      %v10295 = vunpack.c.l.bf16 %v10266
      %v10296 = vunpack.c.l.bf16 %v10267
      %v10297 = vunpack.c.l.bf16 %v10268
      %v10298 = vunpack.c.l.bf16 %v10269
      %v10299 = vunpack.c.l.bf16 %v10270
      %v10300 = vunpack.c.l.bf16 %v10271
      %v10301 = vunpack.c.l.bf16 %v10272
      %v10302 = vunpack.c.l.bf16 %v10273
      %v10303 = vunpack.c.l.bf16 %v10274
      %vm10332 = vcmask 1046528
      %v10333 = vrot.slane %v10276, 1
      %v10334 = vrot.slane %v10277, 1
      %v10335 = vsel %vm10332, %v10333, %v10334
      %v10336 = vrot.slane %v10278, 1
      %v10337 = vsel %vm10332, %v10334, %v10336
      %v10338 = vrot.slane %v10279, 1
      %v10339 = vsel %vm10332, %v10336, %v10338
      %v10340 = vrot.slane %v10280, 1
      %v10341 = vsel %vm10332, %v10338, %v10340
      %v10342 = vrot.slane %v10281, 1
      %v10343 = vsel %vm10332, %v10340, %v10342
      %v10344 = vrot.slane %v10282, 1
      %v10345 = vsel %vm10332, %v10342, %v10344
      %v10346 = vrot.slane %v10283, 1
      %v10347 = vsel %vm10332, %v10344, %v10346
      %v10348 = vrot.slane %v10284, 1
      %v10349 = vsel %vm10332, %v10346, %v10348
      %v10350 = vrot.slane %v10285, 1
      %v10351 = vsel %vm10332, %v10348, %v10350
      %v10352 = vrot.slane %v10286, 1
      %v10353 = vsel %vm10332, %v10350, %v10352
      %v10354 = vrot.slane %v10287, 1
      %v10355 = vsel %vm10332, %v10352, %v10354
      %v10356 = vrot.slane %v10288, 1
      %v10357 = vsel %vm10332, %v10354, %v10356
      %v10358 = vrot.slane %v10289, 1
      %v10359 = vsel %vm10332, %v10356, %v10358
      %v10360 = vrot.slane %v10290, 1
      %v10361 = vsel %vm10332, %v10358, %v10360
      %v10362 = vrot.slane %v10291, 1
      %v10363 = vsel %vm10332, %v10360, %v10362
      %v10364 = vrot.slane %v10292, 1
      %v10365 = vsel %vm10332, %v10362, %v10364
      %v10366 = vrot.slane %v10293, 1
      %v10367 = vsel %vm10332, %v10364, %v10366
      %v10368 = vrot.slane %v10294, 1
      %v10369 = vsel %vm10332, %v10366, %v10368
      %v10370 = vrot.slane %v10295, 1
      %v10371 = vsel %vm10332, %v10368, %v10370
      %v10372 = vrot.slane %v10296, 1
      %v10373 = vsel %vm10332, %v10370, %v10372
      %v10374 = vrot.slane %v10297, 1
      %v10375 = vsel %vm10332, %v10372, %v10374
      %v10376 = vrot.slane %v10298, 1
      %v10377 = vsel %vm10332, %v10374, %v10376
      %v10378 = vrot.slane %v10299, 1
      %v10379 = vsel %vm10332, %v10376, %v10378
      %v10380 = vrot.slane %v10300, 1
      %v10381 = vsel %vm10332, %v10378, %v10380
      %v10382 = vrot.slane %v10301, 1
      %v10383 = vsel %vm10332, %v10380, %v10382
      %v10384 = vrot.slane %v10302, 1
      %v10385 = vsel %vm10332, %v10382, %v10384
      %v10386 = vrot.slane %v10303, 1
      %v10387 = vsel %vm10332, %v10384, %v10386
      %v10417 = vadd.f32 %v10275, %v10333
      %v10418 = vadd.f32 %v10276, %v10335
      %v10419 = vadd.f32 %v10277, %v10337
      %v10420 = vadd.f32 %v10278, %v10339
      %v10421 = vadd.f32 %v10279, %v10341
      %v10422 = vadd.f32 %v10280, %v10343
      %v10423 = vadd.f32 %v10281, %v10345
      %v10424 = vadd.f32 %v10282, %v10347
      %v10425 = vadd.f32 %v10283, %v10349
      %v10426 = vadd.f32 %v10284, %v10351
      %v10427 = vadd.f32 %v10285, %v10353
      %v10428 = vadd.f32 %v10286, %v10355
      %v10429 = vadd.f32 %v10287, %v10357
      %v10430 = vadd.f32 %v10288, %v10359
      %v10431 = vadd.f32 %v10289, %v10361
      %v10432 = vadd.f32 %v10290, %v10363
      %v10433 = vadd.f32 %v10291, %v10365
      %v10434 = vadd.f32 %v10292, %v10367
      %v10435 = vadd.f32 %v10293, %v10369
      %v10436 = vadd.f32 %v10294, %v10371
      %v10437 = vadd.f32 %v10295, %v10373
      %v10438 = vadd.f32 %v10296, %v10375
      %v10439 = vadd.f32 %v10297, %v10377
      %v10440 = vadd.f32 %v10298, %v10379
      %v10441 = vadd.f32 %v10299, %v10381
      %v10442 = vadd.f32 %v10300, %v10383
      %v10443 = vadd.f32 %v10301, %v10385
      %v10444 = vadd.f32 %v10302, %v10387
      %v10445 = vadd.f32 %v10303, %v10386
      %v10446 = vld [vmem:[%s678 + $0x74] sm:$0x1]
      %v10447 = vunpack.c.l.bf16 %v10446
      %vm10449 = vcmask 1045504
      %v10450 = vrot.slane %v10276, 2
      %v10451 = vrot.slane %v10277, 2
      %v10452 = vsel %vm10449, %v10450, %v10451
      %v10453 = vrot.slane %v10278, 2
      %v10454 = vsel %vm10449, %v10451, %v10453
      %v10455 = vrot.slane %v10279, 2
      %v10456 = vsel %vm10449, %v10453, %v10455
      %v10457 = vrot.slane %v10280, 2
      %v10458 = vsel %vm10449, %v10455, %v10457
      %v10459 = vrot.slane %v10281, 2
      %v10460 = vsel %vm10449, %v10457, %v10459
      %v10461 = vrot.slane %v10282, 2
      %v10462 = vsel %vm10449, %v10459, %v10461
      %v10463 = vrot.slane %v10283, 2
      %v10464 = vsel %vm10449, %v10461, %v10463
      %v10465 = vrot.slane %v10284, 2
      %v10466 = vsel %vm10449, %v10463, %v10465
      %v10467 = vrot.slane %v10285, 2
      %v10468 = vsel %vm10449, %v10465, %v10467
      %v10469 = vrot.slane %v10286, 2
      %v10470 = vsel %vm10449, %v10467, %v10469
      %v10471 = vrot.slane %v10287, 2
      %v10472 = vsel %vm10449, %v10469, %v10471
      %v10473 = vrot.slane %v10288, 2
      %v10474 = vsel %vm10449, %v10471, %v10473
      %v10475 = vrot.slane %v10289, 2
      %v10476 = vsel %vm10449, %v10473, %v10475
      %v10477 = vrot.slane %v10290, 2
      %v10478 = vsel %vm10449, %v10475, %v10477
      %v10479 = vrot.slane %v10291, 2
      %v10480 = vsel %vm10449, %v10477, %v10479
      %v10481 = vrot.slane %v10292, 2
      %v10482 = vsel %vm10449, %v10479, %v10481
      %v10483 = vrot.slane %v10293, 2
      %v10484 = vsel %vm10449, %v10481, %v10483
      %v10485 = vrot.slane %v10294, 2
      %v10486 = vsel %vm10449, %v10483, %v10485
      %v10487 = vrot.slane %v10295, 2
      %v10488 = vsel %vm10449, %v10485, %v10487
      %v10489 = vrot.slane %v10296, 2
      %v10490 = vsel %vm10449, %v10487, %v10489
      %v10491 = vrot.slane %v10297, 2
      %v10492 = vsel %vm10449, %v10489, %v10491
      %v10493 = vrot.slane %v10298, 2
      %v10494 = vsel %vm10449, %v10491, %v10493
      %v10495 = vrot.slane %v10299, 2
      %v10496 = vsel %vm10449, %v10493, %v10495
      %v10497 = vrot.slane %v10300, 2
      %v10498 = vsel %vm10449, %v10495, %v10497
      %v10499 = vrot.slane %v10301, 2
      %v10500 = vsel %vm10449, %v10497, %v10499
      %v10501 = vrot.slane %v10302, 2
      %v10502 = vsel %vm10449, %v10499, %v10501
      %v10503 = vrot.slane %v10303, 2
      %v10504 = vsel %vm10449, %v10501, %v10503
      %v10505 = vrot.slane %v10447, 2
      %v10506 = vsel %vm10449, %v10503, %v10505
      %v10536 = vadd.f32 %v10417, %v10450
      %v10537 = vadd.f32 %v10418, %v10452
      %v10538 = vadd.f32 %v10419, %v10454
      %v10539 = vadd.f32 %v10420, %v10456
      %v10540 = vadd.f32 %v10421, %v10458
      %v10541 = vadd.f32 %v10422, %v10460
      %v10542 = vadd.f32 %v10423, %v10462
      %v10543 = vadd.f32 %v10424, %v10464
      %v10544 = vadd.f32 %v10425, %v10466
      %v10545 = vadd.f32 %v10426, %v10468
      %v10546 = vadd.f32 %v10427, %v10470
      %v10547 = vadd.f32 %v10428, %v10472
      %v10548 = vadd.f32 %v10429, %v10474
      %v10549 = vadd.f32 %v10430, %v10476
      %v10550 = vadd.f32 %v10431, %v10478
      %v10551 = vadd.f32 %v10432, %v10480
      %v10552 = vadd.f32 %v10433, %v10482
      %v10553 = vadd.f32 %v10434, %v10484
      %v10554 = vadd.f32 %v10435, %v10486
      %v10555 = vadd.f32 %v10436, %v10488
      %v10556 = vadd.f32 %v10437, %v10490
      %v10557 = vadd.f32 %v10438, %v10492
      %v10558 = vadd.f32 %v10439, %v10494
      %v10559 = vadd.f32 %v10440, %v10496
      %v10560 = vadd.f32 %v10441, %v10498
      %v10561 = vadd.f32 %v10442, %v10500
      %v10562 = vadd.f32 %v10443, %v10502
      %v10563 = vadd.f32 %v10444, %v10504
      %v10564 = vadd.f32 %v10445, %v10506
      %v10565 = vld [vmem:[%s678 + $0x8] sm:$0x8]
      %v10566 = vld [vmem:[%s678 + $0x74] sm:$0xf]
      %v10567 = vld [vmem:[%s678 + $0x78] sm:$0xf]
      %v10568 = vunpack.c.l.bf16 %v10565
      %v10569 = vunpack.c.l.bf16 %v10566
      %v10570 = vunpack.c.l.bf16 %v10567
      %v10571 = vadd.f32 %v10536, %v10568
      %v10572 = vadd.f32 %v10537, %v10278
      %v10573 = vadd.f32 %v10538, %v10279
      %v10574 = vadd.f32 %v10539, %v10280
      %v10575 = vadd.f32 %v10540, %v10281
      %v10576 = vadd.f32 %v10541, %v10282
      %v10577 = vadd.f32 %v10542, %v10283
      %v10578 = vadd.f32 %v10543, %v10284
      %v10579 = vadd.f32 %v10544, %v10285
      %v10580 = vadd.f32 %v10545, %v10286
      %v10581 = vadd.f32 %v10546, %v10287
      %v10582 = vadd.f32 %v10547, %v10288
      %v10583 = vadd.f32 %v10548, %v10289
      %v10584 = vadd.f32 %v10549, %v10290
      %v10585 = vadd.f32 %v10550, %v10291
      %v10586 = vadd.f32 %v10551, %v10292
      %v10587 = vadd.f32 %v10552, %v10293
      %v10588 = vadd.f32 %v10553, %v10294
      %v10589 = vadd.f32 %v10554, %v10295
      %v10590 = vadd.f32 %v10555, %v10296
      %v10591 = vadd.f32 %v10556, %v10297
      %v10592 = vadd.f32 %v10557, %v10298
      %v10593 = vadd.f32 %v10558, %v10299
      %v10594 = vadd.f32 %v10559, %v10300
      %v10595 = vadd.f32 %v10560, %v10301
      %v10596 = vadd.f32 %v10561, %v10302
      %v10597 = vadd.f32 %v10562, %v10303
      %v10598 = vadd.f32 %v10563, %v10569
      %v10599 = vadd.f32 %v10564, %v10570
      %v10602 = vrot.slane %v10569, 1
      %v10603 = vsel %vm10332, %v10386, %v10602
      %v10604 = vrot.slane %v10570, 1
      %v10605 = vsel %vm10332, %v10602, %v10604
      %v10610 = vadd.f32 %v10571, %v10336
      %v10611 = vadd.f32 %v10572, %v10339
      %v10612 = vadd.f32 %v10573, %v10341
      %v10613 = vadd.f32 %v10574, %v10343
      %v10614 = vadd.f32 %v10575, %v10345
      %v10615 = vadd.f32 %v10576, %v10347
      %v10616 = vadd.f32 %v10577, %v10349
      %v10617 = vadd.f32 %v10578, %v10351
      %v10618 = vadd.f32 %v10579, %v10353
      %v10619 = vadd.f32 %v10580, %v10355
      %v10620 = vadd.f32 %v10581, %v10357
      %v10621 = vadd.f32 %v10582, %v10359
      %v10622 = vadd.f32 %v10583, %v10361
      %v10623 = vadd.f32 %v10584, %v10363
      %v10624 = vadd.f32 %v10585, %v10365
      %v10625 = vadd.f32 %v10586, %v10367
      %v10626 = vadd.f32 %v10587, %v10369
      %v10627 = vadd.f32 %v10588, %v10371
      %v10628 = vadd.f32 %v10589, %v10373
      %v10629 = vadd.f32 %v10590, %v10375
      %v10630 = vadd.f32 %v10591, %v10377
      %v10631 = vadd.f32 %v10592, %v10379
      %v10632 = vadd.f32 %v10593, %v10381
      %v10633 = vadd.f32 %v10594, %v10383
      %v10634 = vadd.f32 %v10595, %v10385
      %v10635 = vadd.f32 %v10596, %v10387
      %v10636 = vadd.f32 %v10597, %v10603
      %v10637 = vadd.f32 %v10598, %v10605
      %v10638 = vadd.f32 %v10599, %v10604
      %v10639 = vld [vmem:[%s678 + $0x7c] sm:$0x1]
      %v10640 = vunpack.c.l.bf16 %v10639
      %v10642 = vrot.slane %v10569, 2
      %v10643 = vsel %vm10449, %v10503, %v10642
      %v10644 = vrot.slane %v10570, 2
      %v10645 = vsel %vm10449, %v10642, %v10644
      %v10646 = vrot.slane %v10640, 2
      %v10647 = vsel %vm10449, %v10644, %v10646
      %v10652 = vadd.f32 %v10610, %v10453
      %v10653 = vadd.f32 %v10611, %v10456
      %v10654 = vadd.f32 %v10612, %v10458
      %v10655 = vadd.f32 %v10613, %v10460
      %v10656 = vadd.f32 %v10614, %v10462
      %v10657 = vadd.f32 %v10615, %v10464
      %v10658 = vadd.f32 %v10616, %v10466
      %v10659 = vadd.f32 %v10617, %v10468
      %v10660 = vadd.f32 %v10618, %v10470
      %v10661 = vadd.f32 %v10619, %v10472
      %v10662 = vadd.f32 %v10620, %v10474
      %v10663 = vadd.f32 %v10621, %v10476
      %v10664 = vadd.f32 %v10622, %v10478
      %v10665 = vadd.f32 %v10623, %v10480
      %v10666 = vadd.f32 %v10624, %v10482
      %v10667 = vadd.f32 %v10625, %v10484
      %v10668 = vadd.f32 %v10626, %v10486
      %v10669 = vadd.f32 %v10627, %v10488
      %v10670 = vadd.f32 %v10628, %v10490
      %v10671 = vadd.f32 %v10629, %v10492
      %v10672 = vadd.f32 %v10630, %v10494
      %v10673 = vadd.f32 %v10631, %v10496
      %v10674 = vadd.f32 %v10632, %v10498
      %v10675 = vadd.f32 %v10633, %v10500
      %v10676 = vadd.f32 %v10634, %v10502
      %v10677 = vadd.f32 %v10635, %v10504
      %v10678 = vadd.f32 %v10636, %v10643
      %v10679 = vadd.f32 %v10637, %v10645
      %v10680 = vadd.f32 %v10638, %v10647
      %v10681 = vld [vmem:[%s678 + $0x10] sm:$0x8]
      %v10682 = vld [vmem:[%s678 + $0x7c] sm:$0xf]
      %v10683 = vld [vmem:[%s678 + $0x80] sm:$0xf]
      %v10684 = vunpack.c.l.bf16 %v10681
      %v10685 = vunpack.c.l.bf16 %v10682
      %v10686 = vunpack.c.l.bf16 %v10683
      %v10687 = vadd.f32 %v10652, %v10684
      %v10688 = vadd.f32 %v10653, %v10280
      %v10689 = vadd.f32 %v10654, %v10281
      %v10690 = vadd.f32 %v10655, %v10282
      %v10691 = vadd.f32 %v10656, %v10283
      %v10692 = vadd.f32 %v10657, %v10284
      %v10693 = vadd.f32 %v10658, %v10285
      %v10694 = vadd.f32 %v10659, %v10286
      %v10695 = vadd.f32 %v10660, %v10287
      %v10696 = vadd.f32 %v10661, %v10288
      %v10697 = vadd.f32 %v10662, %v10289
      %v10698 = vadd.f32 %v10663, %v10290
      %v10699 = vadd.f32 %v10664, %v10291
      %v10700 = vadd.f32 %v10665, %v10292
      %v10701 = vadd.f32 %v10666, %v10293
      %v10702 = vadd.f32 %v10667, %v10294
      %v10703 = vadd.f32 %v10668, %v10295
      %v10704 = vadd.f32 %v10669, %v10296
      %v10705 = vadd.f32 %v10670, %v10297
      %v10706 = vadd.f32 %v10671, %v10298
      %v10707 = vadd.f32 %v10672, %v10299
      %v10708 = vadd.f32 %v10673, %v10300
      %v10709 = vadd.f32 %v10674, %v10301
      %v10710 = vadd.f32 %v10675, %v10302
      %v10711 = vadd.f32 %v10676, %v10303
      %v10712 = vadd.f32 %v10677, %v10569
      %v10713 = vadd.f32 %v10678, %v10570
      %v10714 = vadd.f32 %v10679, %v10685
      %v10715 = vadd.f32 %v10680, %v10686
      %v10718 = vrot.slane %v10685, 1
      %v10719 = vsel %vm10332, %v10604, %v10718
      %v10720 = vrot.slane %v10686, 1
      %v10721 = vsel %vm10332, %v10718, %v10720
      %v10726 = vadd.f32 %v10687, %v10340
      %v10727 = vadd.f32 %v10688, %v10343
      %v10728 = vadd.f32 %v10689, %v10345
      %v10729 = vadd.f32 %v10690, %v10347
      %v10730 = vadd.f32 %v10691, %v10349
      %v10731 = vadd.f32 %v10692, %v10351
      %v10732 = vadd.f32 %v10693, %v10353
      %v10733 = vadd.f32 %v10694, %v10355
      %v10734 = vadd.f32 %v10695, %v10357
      %v10735 = vadd.f32 %v10696, %v10359
      %v10736 = vadd.f32 %v10697, %v10361
      %v10737 = vadd.f32 %v10698, %v10363
      %v10738 = vadd.f32 %v10699, %v10365
      %v10739 = vadd.f32 %v10700, %v10367
      %v10740 = vadd.f32 %v10701, %v10369
      %v10741 = vadd.f32 %v10702, %v10371
      %v10742 = vadd.f32 %v10703, %v10373
      %v10743 = vadd.f32 %v10704, %v10375
      %v10744 = vadd.f32 %v10705, %v10377
      %v10745 = vadd.f32 %v10706, %v10379
      %v10746 = vadd.f32 %v10707, %v10381
      %v10747 = vadd.f32 %v10708, %v10383
      %v10748 = vadd.f32 %v10709, %v10385
      %v10749 = vadd.f32 %v10710, %v10387
      %v10750 = vadd.f32 %v10711, %v10603
      %v10751 = vadd.f32 %v10712, %v10605
      %v10752 = vadd.f32 %v10713, %v10719
      %v10753 = vadd.f32 %v10714, %v10721
      %v10754 = vadd.f32 %v10715, %v10720
      %v10755 = vld [vmem:[%s678 + $0x84] sm:$0x1]
      %v10756 = vunpack.c.l.bf16 %v10755
      %v10758 = vrot.slane %v10685, 2
      %v10759 = vsel %vm10449, %v10644, %v10758
      %v10760 = vrot.slane %v10686, 2
      %v10761 = vsel %vm10449, %v10758, %v10760
      %v10762 = vrot.slane %v10756, 2
      %v10763 = vsel %vm10449, %v10760, %v10762
      %v10768 = vadd.f32 %v10726, %v10457
      %v10769 = vadd.f32 %v10727, %v10460
      %v10770 = vadd.f32 %v10728, %v10462
      %v10771 = vadd.f32 %v10729, %v10464
      %v10772 = vadd.f32 %v10730, %v10466
      %v10773 = vadd.f32 %v10731, %v10468
      %v10774 = vadd.f32 %v10732, %v10470
      %v10775 = vadd.f32 %v10733, %v10472
      %v10776 = vadd.f32 %v10734, %v10474
      %v10777 = vadd.f32 %v10735, %v10476
      %v10778 = vadd.f32 %v10736, %v10478
      %v10779 = vadd.f32 %v10737, %v10480
      %v10780 = vadd.f32 %v10738, %v10482
      %v10781 = vadd.f32 %v10739, %v10484
      %v10782 = vadd.f32 %v10740, %v10486
      %v10783 = vadd.f32 %v10741, %v10488
      %v10784 = vadd.f32 %v10742, %v10490
      %v10785 = vadd.f32 %v10743, %v10492
      %v10786 = vadd.f32 %v10744, %v10494
      %v10787 = vadd.f32 %v10745, %v10496
      %v10788 = vadd.f32 %v10746, %v10498
      %v10789 = vadd.f32 %v10747, %v10500
      %v10790 = vadd.f32 %v10748, %v10502
      %v10791 = vadd.f32 %v10749, %v10504
      %v10792 = vadd.f32 %v10750, %v10643
      %v10793 = vadd.f32 %v10751, %v10645
      %v10794 = vadd.f32 %v10752, %v10759
      %v10795 = vadd.f32 %v10753, %v10761
      %v10796 = vadd.f32 %v10754, %v10763
      %v10797 = vmul.f32 %v10768, 0.11111111
      %v10798 = vmul.f32 %v10769, 0.11111111
      %v10799 = vmul.f32 %v10770, 0.11111111
      %v10800 = vmul.f32 %v10771, 0.11111111
      %v10801 = vmul.f32 %v10772, 0.11111111
      %v10802 = vmul.f32 %v10773, 0.11111111
      %v10803 = vmul.f32 %v10774, 0.11111111
      %v10804 = vmul.f32 %v10775, 0.11111111
      %v10805 = vmul.f32 %v10776, 0.11111111
      %v10806 = vmul.f32 %v10777, 0.11111111
      %v10807 = vmul.f32 %v10778, 0.11111111
      %v10808 = vmul.f32 %v10779, 0.11111111
      %v10809 = vmul.f32 %v10780, 0.11111111
      %v10810 = vmul.f32 %v10781, 0.11111111
      %v10811 = vmul.f32 %v10782, 0.11111111
      %v10812 = vmul.f32 %v10783, 0.11111111
      %v10813 = vmul.f32 %v10784, 0.11111111
      %v10814 = vmul.f32 %v10785, 0.11111111
      %v10815 = vmul.f32 %v10786, 0.11111111
      %v10816 = vmul.f32 %v10787, 0.11111111
      %v10817 = vmul.f32 %v10788, 0.11111111
      %v10818 = vmul.f32 %v10789, 0.11111111
      %v10819 = vmul.f32 %v10790, 0.11111111
      %v10820 = vmul.f32 %v10791, 0.11111111
      %v10821 = vmul.f32 %v10792, 0.11111111
      %v10822 = vmul.f32 %v10793, 0.11111111
      %v10823 = vmul.f32 %v10794, 0.11111111
      %v10824 = vmul.f32 %v10795, 0.11111111
      %v10825 = vmul.f32 %v10796, 0.11111111
      %v10826 = vpack.c.bf16 %v10798, %v10797
      %v10827 = vpack.c.bf16 %v10800, %v10799
      %v10828 = vpack.c.bf16 %v10802, %v10801
      %v10829 = vpack.c.bf16 %v10804, %v10803
      %v10830 = vpack.c.bf16 %v10806, %v10805
      %v10831 = vpack.c.bf16 %v10808, %v10807
      %v10832 = vpack.c.bf16 %v10810, %v10809
      %v10833 = vpack.c.bf16 %v10812, %v10811
      %v10834 = vpack.c.bf16 %v10814, %v10813
      %v10835 = vpack.c.bf16 %v10816, %v10815
      %v10836 = vpack.c.bf16 %v10818, %v10817
      %v10837 = vpack.c.bf16 %v10820, %v10819
      %v10838 = vpack.c.bf16 %v10822, %v10821
      %v10839 = vpack.c.bf16 %v10824, %v10823
      %v10840 = vpack.c.bf16 %v10825, %v10825
      %v10841 = vld [vmem:[%s20] sm:$0xff]
      %v10842 = vld [vmem:[%s20 + $0x8] sm:$0xff]
      %v10843 = vld [vmem:[%s20 + $0x10] sm:$0xff]
      %v10844 = vld [vmem:[%s20 + $0x18] sm:$0xff]
      %v10845 = vld [vmem:[%s20 + $0x20] sm:$0xff]
      %v10846 = vld [vmem:[%s20 + $0x28] sm:$0xff]
      %v10847 = vld [vmem:[%s20 + $0x30] sm:$0xff]
      %v10848 = vld [vmem:[%s20 + $0x38] sm:$0xff]
      %v10849 = vld [vmem:[%s21] sm:$0x3]
      %v10851 = vlaneseq
      %v10852 = vshrl.u32 %v10851, 7
      %v10853 = vsub.s32 0, %v10852
      %v10854 = vrot.slane %v10849, %v10853
      %v10855 = vlaneseq
      %v10856 = vshrl.u32 %v10855, 7
      %v10857 = vsub.s32 1, %v10856
      %v10858 = vrot.slane %v10849, %v10857
      %vm10861 = vsmask.f32 4352
      %v10863 = vshrl.u32 %v10826, 16
      %v10865 = vrot.slane %v10863, 3
      %v10866 = vshll.u32 %v10826, 16
      %v10868 = vrot.slane %v10866, 4
      %v10869 = vor.u32 %v10865, %v10868
      %v10871 = vshrl.u32 %v10827, 16
      %v10873 = vrot.slane %v10871, 3
      %v10874 = vshll.u32 %v10827, 16
      %v10876 = vrot.slane %v10874, 4
      %v10877 = vor.u32 %v10873, %v10876
      %v10878 = vsel %vm10861, %v10869, %v10877
      %v10880 = vshrl.u32 %v10828, 16
      %v10882 = vrot.slane %v10880, 3
      %v10883 = vshll.u32 %v10828, 16
      %v10885 = vrot.slane %v10883, 4
      %v10886 = vor.u32 %v10882, %v10885
      %v10887 = vsel %vm10861, %v10877, %v10886
      %v10889 = vshrl.u32 %v10829, 16
      %v10891 = vrot.slane %v10889, 3
      %v10892 = vshll.u32 %v10829, 16
      %v10894 = vrot.slane %v10892, 4
      %v10895 = vor.u32 %v10891, %v10894
      %v10896 = vsel %vm10861, %v10886, %v10895
      %v10898 = vshrl.u32 %v10830, 16
      %v10900 = vrot.slane %v10898, 3
      %v10901 = vshll.u32 %v10830, 16
      %v10903 = vrot.slane %v10901, 4
      %v10904 = vor.u32 %v10900, %v10903
      %v10905 = vsel %vm10861, %v10895, %v10904
      %v10907 = vshrl.u32 %v10831, 16
      %v10909 = vrot.slane %v10907, 3
      %v10910 = vshll.u32 %v10831, 16
      %v10912 = vrot.slane %v10910, 4
      %v10913 = vor.u32 %v10909, %v10912
      %v10914 = vsel %vm10861, %v10904, %v10913
      %v10916 = vshrl.u32 %v10832, 16
      %v10918 = vrot.slane %v10916, 3
      %v10919 = vshll.u32 %v10832, 16
      %v10921 = vrot.slane %v10919, 4
      %v10922 = vor.u32 %v10918, %v10921
      %v10923 = vsel %vm10861, %v10913, %v10922
      %v10925 = vshrl.u32 %v10833, 16
      %v10927 = vrot.slane %v10925, 3
      %v10928 = vshll.u32 %v10833, 16
      %v10930 = vrot.slane %v10928, 4
      %v10931 = vor.u32 %v10927, %v10930
      %v10932 = vsel %vm10861, %v10922, %v10931
      %v10934 = vshrl.u32 %v10834, 16
      %v10936 = vrot.slane %v10934, 3
      %v10937 = vshll.u32 %v10834, 16
      %v10939 = vrot.slane %v10937, 4
      %v10940 = vor.u32 %v10936, %v10939
      %v10941 = vsel %vm10861, %v10931, %v10940
      %v10943 = vshrl.u32 %v10835, 16
      %v10945 = vrot.slane %v10943, 3
      %v10946 = vshll.u32 %v10835, 16
      %v10948 = vrot.slane %v10946, 4
      %v10949 = vor.u32 %v10945, %v10948
      %v10950 = vsel %vm10861, %v10940, %v10949
      %v10952 = vshrl.u32 %v10836, 16
      %v10954 = vrot.slane %v10952, 3
      %v10955 = vshll.u32 %v10836, 16
      %v10957 = vrot.slane %v10955, 4
      %v10958 = vor.u32 %v10954, %v10957
      %v10959 = vsel %vm10861, %v10949, %v10958
      %v10961 = vshrl.u32 %v10837, 16
      %v10963 = vrot.slane %v10961, 3
      %v10964 = vshll.u32 %v10837, 16
      %v10966 = vrot.slane %v10964, 4
      %v10967 = vor.u32 %v10963, %v10966
      %v10968 = vsel %vm10861, %v10958, %v10967
      %v10970 = vshrl.u32 %v10838, 16
      %v10972 = vrot.slane %v10970, 3
      %v10973 = vshll.u32 %v10838, 16
      %v10975 = vrot.slane %v10973, 4
      %v10976 = vor.u32 %v10972, %v10975
      %v10977 = vsel %vm10861, %v10967, %v10976
      %v10979 = vshrl.u32 %v10839, 16
      %v10981 = vrot.slane %v10979, 3
      %v10982 = vshll.u32 %v10839, 16
      %v10984 = vrot.slane %v10982, 4
      %v10985 = vor.u32 %v10981, %v10984
      %v10986 = vsel %vm10861, %v10976, %v10985
      %v10988 = vshrl.u32 %v10840, 16
      %v10990 = vrot.slane %v10988, 3
      %v10991 = vshll.u32 %v10840, 16
      %v10993 = vrot.slane %v10991, 4
      %v10994 = vor.u32 %v10990, %v10993
      %v10995 = vsel %vm10861, %v10985, %v10994
      %v11004 = vunpack.c.l.b16 %v10841
      %v11005 = vunpack.c.h.b16 %v10841
      %v11006 = vunpack.c.l.b16 %v10842
      %v11007 = vunpack.c.h.b16 %v10842
      %v11008 = vunpack.c.l.b16 %v10843
      %v11009 = vunpack.c.h.b16 %v10843
      %v11010 = vunpack.c.l.b16 %v10844
      %v11011 = vunpack.c.h.b16 %v10844
      %v11012 = vunpack.c.l.b16 %v10845
      %v11013 = vunpack.c.h.b16 %v10845
      %v11014 = vunpack.c.l.b16 %v10846
      %v11015 = vunpack.c.h.b16 %v10846
      %v11016 = vunpack.c.l.b16 %v10847
      %v11017 = vunpack.c.h.b16 %v10847
      %v11018 = vunpack.c.l.b16 %v10848
      %v11019 = vunpack.c.h.b16 %v10848
      %v11020 = vpack.c.b16 %v11006, %v11004
      %v11021 = vpack.c.b16 %v11007, %v11005
      %v11022 = vpack.c.b16 %v11010, %v11008
      %v11023 = vpack.c.b16 %v11011, %v11009
      %v11024 = vpack.c.b16 %v11014, %v11012
      %v11025 = vpack.c.b16 %v11015, %v11013
      %v11026 = vpack.c.b16 %v11018, %v11016
      %v11027 = vpack.c.b16 %v11019, %v11017
      %v11037 = vsel %vm896, %v10878, 0
      %v11040 = vsel %vm896, %v10887, 0
      %v11043 = vsel %vm896, %v10896, 0
      %v11046 = vsel %vm896, %v10905, 0
      %v11049 = vsel %vm896, %v10914, 0
      %v11052 = vsel %vm896, %v10923, 0
      %v11055 = vsel %vm896, %v10932, 0
      %v11058 = vsel %vm896, %v10941, 0
      %v11061 = vsel %vm896, %v10950, 0
      %v11064 = vsel %vm896, %v10959, 0
      %v11067 = vsel %vm896, %v10968, 0
      %v11070 = vsel %vm896, %v10977, 0
      %v11073 = vsel %vm896, %v10986, 0
      %v11076 = vsel %vm896, %v10995, 0
      %11078 = vmatprep.subr.bf16.mxu0 0
      %11079 = vmatpush1.bf16.msra.mxu0 0
      %11080 = vmatprep.subr.bf16.mxu0 0
      %11081 = vmatpush1.bf16.msra.mxu0 0
      %11082 = vmatprep.subr.bf16.mxu0 0
      %11083 = vmatpush1.bf16.msra.mxu0 0
      %11084 = vmatprep.subr.bf16.mxu0 0
      %11085 = vmatpush1.bf16.msra.mxu0 0
      %11086 = vmatprep.subr.bf16.mxu0 %v11027
      %11087 = vmatpush1.bf16.msra.mxu0 %v11026
      %11088 = vmatprep.subr.bf16.mxu0 %v11025
      %11089 = vmatpush1.bf16.msra.mxu0 %v11024
      %11090 = vmatprep.subr.bf16.mxu0 %v11023
      %11091 = vmatpush1.bf16.msra.mxu0 %v11022
      %11092 = vmatprep.subr.bf16.mxu0 %v11021
      %11093 = vmatpush1.bf16.msra.mxu0 %v11020
      %11094 = vmatprep.subr.bf16.mxu0 0
      %11095 = vmatpush2.bf16.msra.mxu0 0
      %11096 = vmatprep.subr.bf16.mxu0 0
      %11097 = vmatpush2.bf16.msra.mxu0 0
      %11098 = vmatprep.subr.bf16.mxu0 0
      %11099 = vmatpush2.bf16.msra.mxu0 0
      %11100 = vmatprep.subr.bf16.mxu0 0
      %11101 = vmatpush2.bf16.msra.mxu0 0
      %11102 = vmatprep.subr.bf16.mxu0 0
      %11103 = vmatpush2.bf16.msra.mxu0 0
      %11104 = vmatprep.subr.bf16.mxu0 0
      %11105 = vmatpush2.bf16.msra.mxu0 0
      %11106 = vmatprep.subr.bf16.mxu0 0
      %11107 = vmatpush2.bf16.msra.mxu0 0
      %11108 = vmatprep.subr.bf16.mxu0 0
      %11109 = vmatpush2.bf16.msra.mxu0 0
      %11110 = vmatprep.mubr.bf16.mxu0 0
      %11111 = vmatmul.mubr.bf16.gmra.mxu0 %v11037
      %v11112 = vpop.f32.mrf.mxu0
      %v11113 = vadd.f32 %v10854, %v11112
      %v11114 = vpop.f32.mrf.mxu0
      %v11115 = vadd.f32 %v10858, %v11114
      %v11116 = vpop.f32.mrf.mxu0
      %v11117 = vadd.f32 %v10854, %v11116
      %v11118 = vpop.f32.mrf.mxu0
      %v11119 = vadd.f32 %v10858, %v11118
      %11120 = vmatprep.mubr.bf16.mxu0 0
      %11121 = vmatmul.mubr.bf16.gmra.mxu0 %v11040
      %v11122 = vpop.f32.mrf.mxu0
      %v11123 = vadd.f32 %v10854, %v11122
      %v11124 = vpop.f32.mrf.mxu0
      %v11125 = vadd.f32 %v10858, %v11124
      %v11126 = vpop.f32.mrf.mxu0
      %v11127 = vadd.f32 %v10854, %v11126
      %v11128 = vpop.f32.mrf.mxu0
      %v11129 = vadd.f32 %v10858, %v11128
      %11130 = vmatprep.mubr.bf16.mxu0 0
      %11131 = vmatmul.mubr.bf16.gmra.mxu0 %v11043
      %v11132 = vpop.f32.mrf.mxu0
      %v11133 = vadd.f32 %v10854, %v11132
      %v11134 = vpop.f32.mrf.mxu0
      %v11135 = vadd.f32 %v10858, %v11134
      %v11136 = vpop.f32.mrf.mxu0
      %v11137 = vadd.f32 %v10854, %v11136
      %v11138 = vpop.f32.mrf.mxu0
      %v11139 = vadd.f32 %v10858, %v11138
      %11140 = vmatprep.mubr.bf16.mxu0 0
      %11141 = vmatmul.mubr.bf16.gmra.mxu0 %v11046
      %v11142 = vpop.f32.mrf.mxu0
      %v11143 = vadd.f32 %v10854, %v11142
      %v11144 = vpop.f32.mrf.mxu0
      %v11145 = vadd.f32 %v10858, %v11144
      %v11146 = vpop.f32.mrf.mxu0
      %v11147 = vadd.f32 %v10854, %v11146
      %v11148 = vpop.f32.mrf.mxu0
      %v11149 = vadd.f32 %v10858, %v11148
      %11150 = vmatprep.mubr.bf16.mxu0 0
      %11151 = vmatmul.mubr.bf16.gmra.mxu0 %v11049
      %v11152 = vpop.f32.mrf.mxu0
      %v11153 = vadd.f32 %v10854, %v11152
      %v11154 = vpop.f32.mrf.mxu0
      %v11155 = vadd.f32 %v10858, %v11154
      %v11156 = vpop.f32.mrf.mxu0
      %v11157 = vadd.f32 %v10854, %v11156
      %v11158 = vpop.f32.mrf.mxu0
      %v11159 = vadd.f32 %v10858, %v11158
      %11160 = vmatprep.mubr.bf16.mxu0 0
      %11161 = vmatmul.mubr.bf16.gmra.mxu0 %v11052
      %v11162 = vpop.f32.mrf.mxu0
      %v11163 = vadd.f32 %v10854, %v11162
      %v11164 = vpop.f32.mrf.mxu0
      %v11165 = vadd.f32 %v10858, %v11164
      %v11166 = vpop.f32.mrf.mxu0
      %v11167 = vadd.f32 %v10854, %v11166
      %v11168 = vpop.f32.mrf.mxu0
      %v11169 = vadd.f32 %v10858, %v11168
      %11170 = vmatprep.mubr.bf16.mxu0 0
      %11171 = vmatmul.mubr.bf16.gmra.mxu0 %v11055
      %v11172 = vpop.f32.mrf.mxu0
      %v11173 = vadd.f32 %v10854, %v11172
      %v11174 = vpop.f32.mrf.mxu0
      %v11175 = vadd.f32 %v10858, %v11174
      %v11176 = vpop.f32.mrf.mxu0
      %v11177 = vadd.f32 %v10854, %v11176
      %v11178 = vpop.f32.mrf.mxu0
      %v11179 = vadd.f32 %v10858, %v11178
      %11180 = vmatprep.mubr.bf16.mxu0 0
      %11181 = vmatmul.mubr.bf16.gmra.mxu0 %v11058
      %v11182 = vpop.f32.mrf.mxu0
      %v11183 = vadd.f32 %v10854, %v11182
      %v11184 = vpop.f32.mrf.mxu0
      %v11185 = vadd.f32 %v10858, %v11184
      %v11186 = vpop.f32.mrf.mxu0
      %v11187 = vadd.f32 %v10854, %v11186
      %v11188 = vpop.f32.mrf.mxu0
      %v11189 = vadd.f32 %v10858, %v11188
      %11190 = vmatprep.mubr.bf16.mxu0 0
      %11191 = vmatmul.mubr.bf16.gmra.mxu0 %v11061
      %v11192 = vpop.f32.mrf.mxu0
      %v11193 = vadd.f32 %v10854, %v11192
      %v11194 = vpop.f32.mrf.mxu0
      %v11195 = vadd.f32 %v10858, %v11194
      %v11196 = vpop.f32.mrf.mxu0
      %v11197 = vadd.f32 %v10854, %v11196
      %v11198 = vpop.f32.mrf.mxu0
      %v11199 = vadd.f32 %v10858, %v11198
      %11200 = vmatprep.mubr.bf16.mxu0 0
      %11201 = vmatmul.mubr.bf16.gmra.mxu0 %v11064
      %v11202 = vpop.f32.mrf.mxu0
      %v11203 = vadd.f32 %v10854, %v11202
      %v11204 = vpop.f32.mrf.mxu0
      %v11205 = vadd.f32 %v10858, %v11204
      %v11206 = vpop.f32.mrf.mxu0
      %v11207 = vadd.f32 %v10854, %v11206
      %v11208 = vpop.f32.mrf.mxu0
      %v11209 = vadd.f32 %v10858, %v11208
      %11210 = vmatprep.mubr.bf16.mxu0 0
      %11211 = vmatmul.mubr.bf16.gmra.mxu0 %v11067
      %v11212 = vpop.f32.mrf.mxu0
      %v11213 = vadd.f32 %v10854, %v11212
      %v11214 = vpop.f32.mrf.mxu0
      %v11215 = vadd.f32 %v10858, %v11214
      %v11216 = vpop.f32.mrf.mxu0
      %v11217 = vadd.f32 %v10854, %v11216
      %v11218 = vpop.f32.mrf.mxu0
      %v11219 = vadd.f32 %v10858, %v11218
      %11220 = vmatprep.mubr.bf16.mxu0 0
      %11221 = vmatmul.mubr.bf16.gmra.mxu0 %v11070
      %v11222 = vpop.f32.mrf.mxu0
      %v11223 = vadd.f32 %v10854, %v11222
      %v11224 = vpop.f32.mrf.mxu0
      %v11225 = vadd.f32 %v10858, %v11224
      %v11226 = vpop.f32.mrf.mxu0
      %v11227 = vadd.f32 %v10854, %v11226
      %v11228 = vpop.f32.mrf.mxu0
      %v11229 = vadd.f32 %v10858, %v11228
      %11230 = vmatprep.mubr.bf16.mxu0 0
      %11231 = vmatmul.mubr.bf16.gmra.mxu0 %v11073
      %v11232 = vpop.f32.mrf.mxu0
      %v11233 = vadd.f32 %v10854, %v11232
      %v11234 = vpop.f32.mrf.mxu0
      %v11235 = vadd.f32 %v10858, %v11234
      %v11236 = vpop.f32.mrf.mxu0
      %v11237 = vadd.f32 %v10854, %v11236
      %v11238 = vpop.f32.mrf.mxu0
      %v11239 = vadd.f32 %v10858, %v11238
      %11240 = vmatprep.mubr.bf16.mxu0 0
      %11241 = vmatmul.mubr.bf16.gmra.mxu0 %v11076
      %v11242 = vpop.f32.mrf.mxu0
      %v11243 = vadd.f32 %v10854, %v11242
      %v11244 = vpop.f32.mrf.mxu0
      %v11245 = vadd.f32 %v10858, %v11244
      %v11246 = vpop.f32.mrf.mxu0
      %v11247 = vadd.f32 %v10854, %v11246
      %v11248 = vpop.f32.mrf.mxu0
      %v11249 = vadd.f32 %v10858, %v11248
      %11250 = vdwg.mxu0
      %v11251 = vmax.f32 %v11113, 0.0
      %v11252 = vmax.f32 %v11115, 0.0
      %v11253 = vmax.f32 %v11117, 0.0
      %v11254 = vmax.f32 %v11119, 0.0
      %v11255 = vmax.f32 %v11123, 0.0
      %v11256 = vmax.f32 %v11125, 0.0
      %v11257 = vmax.f32 %v11127, 0.0
      %v11258 = vmax.f32 %v11129, 0.0
      %v11259 = vmax.f32 %v11133, 0.0
      %v11260 = vmax.f32 %v11135, 0.0
      %v11261 = vmax.f32 %v11137, 0.0
      %v11262 = vmax.f32 %v11139, 0.0
      %v11263 = vmax.f32 %v11143, 0.0
      %v11264 = vmax.f32 %v11145, 0.0
      %v11265 = vmax.f32 %v11147, 0.0
      %v11266 = vmax.f32 %v11149, 0.0
      %v11267 = vmax.f32 %v11153, 0.0
      %v11268 = vmax.f32 %v11155, 0.0
      %v11269 = vmax.f32 %v11157, 0.0
      %v11270 = vmax.f32 %v11159, 0.0
      %v11271 = vmax.f32 %v11163, 0.0
      %v11272 = vmax.f32 %v11165, 0.0
      %v11273 = vmax.f32 %v11167, 0.0
      %v11274 = vmax.f32 %v11169, 0.0
      %v11275 = vmax.f32 %v11173, 0.0
      %v11276 = vmax.f32 %v11175, 0.0
      %v11277 = vmax.f32 %v11177, 0.0
      %v11278 = vmax.f32 %v11179, 0.0
      %v11279 = vmax.f32 %v11183, 0.0
      %v11280 = vmax.f32 %v11185, 0.0
      %v11281 = vmax.f32 %v11187, 0.0
      %v11282 = vmax.f32 %v11189, 0.0
      %v11283 = vmax.f32 %v11193, 0.0
      %v11284 = vmax.f32 %v11195, 0.0
      %v11285 = vmax.f32 %v11197, 0.0
      %v11286 = vmax.f32 %v11199, 0.0
      %v11287 = vmax.f32 %v11203, 0.0
      %v11288 = vmax.f32 %v11205, 0.0
      %v11289 = vmax.f32 %v11207, 0.0
      %v11290 = vmax.f32 %v11209, 0.0
      %v11291 = vmax.f32 %v11213, 0.0
      %v11292 = vmax.f32 %v11215, 0.0
      %v11293 = vmax.f32 %v11217, 0.0
      %v11294 = vmax.f32 %v11219, 0.0
      %v11295 = vmax.f32 %v11223, 0.0
      %v11296 = vmax.f32 %v11225, 0.0
      %v11297 = vmax.f32 %v11227, 0.0
      %v11298 = vmax.f32 %v11229, 0.0
      %v11299 = vmax.f32 %v11233, 0.0
      %v11300 = vmax.f32 %v11235, 0.0
      %v11301 = vmax.f32 %v11237, 0.0
      %v11302 = vmax.f32 %v11239, 0.0
      %v11303 = vmax.f32 %v11243, 0.0
      %v11304 = vmax.f32 %v11245, 0.0
      %v11305 = vmax.f32 %v11247, 0.0
      %v11306 = vmax.f32 %v11249, 0.0
      %v11307 = vpack.c.bf16 %v11253, %v11251
      %v11308 = vpack.c.bf16 %v11254, %v11252
      %v11309 = vpack.c.bf16 %v11257, %v11255
      %v11310 = vpack.c.bf16 %v11258, %v11256
      %v11311 = vpack.c.bf16 %v11261, %v11259
      %v11312 = vpack.c.bf16 %v11262, %v11260
      %v11313 = vpack.c.bf16 %v11265, %v11263
      %v11314 = vpack.c.bf16 %v11266, %v11264
      %v11315 = vpack.c.bf16 %v11269, %v11267
      %v11316 = vpack.c.bf16 %v11270, %v11268
      %v11317 = vpack.c.bf16 %v11273, %v11271
      %v11318 = vpack.c.bf16 %v11274, %v11272
      %v11319 = vpack.c.bf16 %v11277, %v11275
      %v11320 = vpack.c.bf16 %v11278, %v11276
      %v11321 = vpack.c.bf16 %v11281, %v11279
      %v11322 = vpack.c.bf16 %v11282, %v11280
      %v11323 = vpack.c.bf16 %v11285, %v11283
      %v11324 = vpack.c.bf16 %v11286, %v11284
      %v11325 = vpack.c.bf16 %v11289, %v11287
      %v11326 = vpack.c.bf16 %v11290, %v11288
      %v11327 = vpack.c.bf16 %v11293, %v11291
      %v11328 = vpack.c.bf16 %v11294, %v11292
      %v11329 = vpack.c.bf16 %v11297, %v11295
      %v11330 = vpack.c.bf16 %v11298, %v11296
      %v11331 = vpack.c.bf16 %v11301, %v11299
      %v11332 = vpack.c.bf16 %v11302, %v11300
      %v11333 = vpack.c.bf16 %v11305, %v11303
      %v11334 = vpack.c.bf16 %v11306, %v11304
      %v11363 = vunpack.c.l.b16 %v11307
      %v11364 = vunpack.c.l.b16 %v11308
      %v11365 = vunpack.c.h.b16 %v11307
      %v11366 = vunpack.c.h.b16 %v11308
      %v11367 = vunpack.c.l.b16 %v11309
      %v11368 = vunpack.c.l.b16 %v11310
      %v11369 = vunpack.c.h.b16 %v11309
      %v11370 = vunpack.c.h.b16 %v11310
      %v11371 = vunpack.c.l.b16 %v11311
      %v11372 = vunpack.c.l.b16 %v11312
      %v11373 = vunpack.c.h.b16 %v11311
      %v11374 = vunpack.c.h.b16 %v11312
      %v11375 = vunpack.c.l.b16 %v11313
      %v11376 = vunpack.c.l.b16 %v11314
      %v11377 = vunpack.c.h.b16 %v11313
      %v11378 = vunpack.c.h.b16 %v11314
      %v11379 = vunpack.c.l.b16 %v11315
      %v11380 = vunpack.c.l.b16 %v11316
      %v11381 = vunpack.c.h.b16 %v11315
      %v11382 = vunpack.c.h.b16 %v11316
      %v11383 = vunpack.c.l.b16 %v11317
      %v11384 = vunpack.c.l.b16 %v11318
      %v11385 = vunpack.c.h.b16 %v11317
      %v11386 = vunpack.c.h.b16 %v11318
      %v11387 = vunpack.c.l.b16 %v11319
      %v11388 = vunpack.c.l.b16 %v11320
      %v11389 = vunpack.c.h.b16 %v11319
      %v11390 = vunpack.c.h.b16 %v11320
      %v11391 = vunpack.c.l.b16 %v11321
      %v11392 = vunpack.c.l.b16 %v11322
      %v11393 = vunpack.c.h.b16 %v11321
      %v11394 = vunpack.c.h.b16 %v11322
      %v11395 = vunpack.c.l.b16 %v11323
      %v11396 = vunpack.c.l.b16 %v11324
      %v11397 = vunpack.c.h.b16 %v11323
      %v11398 = vunpack.c.h.b16 %v11324
      %v11399 = vunpack.c.l.b16 %v11325
      %v11400 = vunpack.c.l.b16 %v11326
      %v11401 = vunpack.c.h.b16 %v11325
      %v11402 = vunpack.c.h.b16 %v11326
      %v11403 = vunpack.c.l.b16 %v11327
      %v11404 = vunpack.c.l.b16 %v11328
      %v11405 = vunpack.c.h.b16 %v11327
      %v11406 = vunpack.c.h.b16 %v11328
      %v11407 = vunpack.c.l.b16 %v11329
      %v11408 = vunpack.c.l.b16 %v11330
      %v11409 = vunpack.c.h.b16 %v11329
      %v11410 = vunpack.c.h.b16 %v11330
      %v11411 = vunpack.c.l.b16 %v11331
      %v11412 = vunpack.c.l.b16 %v11332
      %v11413 = vunpack.c.h.b16 %v11331
      %v11414 = vunpack.c.h.b16 %v11332
      %v11415 = vunpack.c.l.b16 %v11333
      %v11416 = vunpack.c.l.b16 %v11334
      %v11417 = vunpack.c.h.b16 %v11333
      %v11418 = vunpack.c.h.b16 %v11334
      %v11419 = vpack.c.b16 %v11364, %v11363
      %v11420 = vpack.c.b16 %v11366, %v11365
      %v11421 = vpack.c.b16 %v11368, %v11367
      %v11422 = vpack.c.b16 %v11370, %v11369
      %v11423 = vpack.c.b16 %v11372, %v11371
      %v11424 = vpack.c.b16 %v11374, %v11373
      %v11425 = vpack.c.b16 %v11376, %v11375
      %v11426 = vpack.c.b16 %v11378, %v11377
      %v11427 = vpack.c.b16 %v11380, %v11379
      %v11428 = vpack.c.b16 %v11382, %v11381
      %v11429 = vpack.c.b16 %v11384, %v11383
      %v11430 = vpack.c.b16 %v11386, %v11385
      %v11431 = vpack.c.b16 %v11388, %v11387
      %v11432 = vpack.c.b16 %v11390, %v11389
      %v11433 = vpack.c.b16 %v11392, %v11391
      %v11434 = vpack.c.b16 %v11394, %v11393
      %v11435 = vpack.c.b16 %v11396, %v11395
      %v11436 = vpack.c.b16 %v11398, %v11397
      %v11437 = vpack.c.b16 %v11400, %v11399
      %v11438 = vpack.c.b16 %v11402, %v11401
      %v11439 = vpack.c.b16 %v11404, %v11403
      %v11440 = vpack.c.b16 %v11406, %v11405
      %v11441 = vpack.c.b16 %v11408, %v11407
      %v11442 = vpack.c.b16 %v11410, %v11409
      %v11443 = vpack.c.b16 %v11412, %v11411
      %v11444 = vpack.c.b16 %v11414, %v11413
      %v11445 = vpack.c.b16 %v11416, %v11415
      %v11446 = vpack.c.b16 %v11418, %v11417
      %s11475 = scalar_lea.vmem %s683, 672
      %11476 = vst.msk [vmem:[%s11475] sm:$0xff] %vm1338, %v11419
      %11477 = vst.msk [vmem:[%s11475 + $0x8] sm:$0xff] %vm1338, %v11420
      %11478 = vst.msk [vmem:[%s11475 + $0x10] sm:$0xff] %vm1338, %v11421
      %11479 = vst.msk [vmem:[%s11475 + $0x18] sm:$0xff] %vm1338, %v11422
      %11480 = vst.msk [vmem:[%s11475 + $0x20] sm:$0xff] %vm1338, %v11423
      %11481 = vst.msk [vmem:[%s11475 + $0x28] sm:$0xff] %vm1338, %v11424
      %11482 = vst.msk [vmem:[%s11475 + $0x30] sm:$0xff] %vm1338, %v11425
      %11483 = vst.msk [vmem:[%s11475 + $0x38] sm:$0xff] %vm1338, %v11426
      %11484 = vst.msk [vmem:[%s11475 + $0x40] sm:$0xff] %vm1338, %v11427
      %11485 = vst.msk [vmem:[%s11475 + $0x48] sm:$0xff] %vm1338, %v11428
      %11486 = vst.msk [vmem:[%s11475 + $0x50] sm:$0xff] %vm1338, %v11429
      %11487 = vst.msk [vmem:[%s11475 + $0x58] sm:$0xff] %vm1338, %v11430
      %11488 = vst.msk [vmem:[%s11475 + $0x60] sm:$0xff] %vm1338, %v11431
      %11489 = vst.msk [vmem:[%s11475 + $0x68] sm:$0xff] %vm1338, %v11432
      %11490 = vst.msk [vmem:[%s11475 + $0x70] sm:$0xff] %vm1338, %v11433
      %11491 = vst.msk [vmem:[%s11475 + $0x78] sm:$0xff] %vm1338, %v11434
      %11492 = vst.msk [vmem:[%s11475 + $0x80] sm:$0xff] %vm1338, %v11435
      %11493 = vst.msk [vmem:[%s11475 + $0x88] sm:$0xff] %vm1338, %v11436
      %11494 = vst.msk [vmem:[%s11475 + $0x90] sm:$0xff] %vm1338, %v11437
      %11495 = vst.msk [vmem:[%s11475 + $0x98] sm:$0xff] %vm1338, %v11438
      %11496 = vst.msk [vmem:[%s11475 + $0xa0] sm:$0xff] %vm1338, %v11439
      %11497 = vst.msk [vmem:[%s11475 + $0xa8] sm:$0xff] %vm1338, %v11440
      %11498 = vst.msk [vmem:[%s11475 + $0xb0] sm:$0xff] %vm1338, %v11441
      %11499 = vst.msk [vmem:[%s11475 + $0xb8] sm:$0xff] %vm1338, %v11442
      %11500 = vst.msk [vmem:[%s11475 + $0xc0] sm:$0xff] %vm1338, %v11443
      %11501 = vst.msk [vmem:[%s11475 + $0xc8] sm:$0xff] %vm1338, %v11444
      %11502 = vst.msk [vmem:[%s11475 + $0xd0] sm:$0xff] %vm1338, %v11445
      %11503 = vst.msk [vmem:[%s11475 + $0xd8] sm:$0xff] %vm1338, %v11446
      %p11504 = scmp.lt.s32.totalorder %s33, 1
      %s11505 = scalar_select %p11504, %s33, 1
      %s11506 = smul.addr %s11505, 224
      %s11507 = smul.addr %s11506, 4
      %s11508 = scalar_lea.vmem %s22, %s11507
      // Predicated region
      $region109: #{tpu_custom_call.1} parent=107 // pred_check
        %p11509 = pneg %p518
      $region110: #{tpu_custom_call.1} parent=107 // pred_check_branch
        %11511 = sbr.rel (%p11509) target = $region112
      $region111: #{tpu_custom_call.1} parent=107 // pred_region
        _
      $region112: #{tpu_custom_call.1} parent=107 // pred_fallthru
        _
    $region108: #{tpu_custom_call.1} parent=5 // pred_fallthru
      _
    %p11512 = scmp.le.s32.totalorder 2, %s28
    // Predicated region
    $region113: #{tpu_custom_call.1} parent=5 // pred_check
      %p11513 = pneg %p11512
    $region114: #{tpu_custom_call.1} parent=5 // pred_check_branch
      %11515 = sbr.rel (%p11513) target = $region116
    $region115: #{tpu_custom_call.1} parent=5 // pred_region
      %s11516 = ssub.s32 %s28, 2
      // Predicated region
      $region117: #{tpu_custom_call.1} parent=115 // pred_check
        %p11517 = pneg %p524
      $region118: #{tpu_custom_call.1} parent=115 // pred_check_branch
        %11519 = sbr.rel (%p11517) target = $region120
      $region119: #{tpu_custom_call.1} parent=115 // pred_region
        %p11520 = scmp.lt.s32.totalorder %s34, 1
        %s11521 = scalar_select %p11520, %s34, 1
        %s11522 = smul.addr %s11521, 224
        %s11523 = smul.addr %s11522, 4
        %s11524 = scalar_lea.vmem %s22, %s11523
      $region120: #{tpu_custom_call.1} parent=115 // pred_fallthru
        _
    $region116: #{tpu_custom_call.1} parent=5 // pred_fallthru
      _
  $region6: #{tpu_custom_call.1} parent=0 // loop_footer
    %s32 = sadd.s32 1, %s28
  $region7: #{tpu_custom_call.1} parent=0 // loop_footer_branch
    %27 = sbr.rel target = $region3
  $region8: #{tpu_custom_call.1} parent=0 // loop_exit
    _

</llo_original>
